<compile_context>
chip_gen: v7x
topology: tpu7x:2x2x1
jax: 0.10.0
libtpu: 0.0.40
codegen_flags: <defaults>
</compile_context>

<pallas_src>
import functools

import jax
import jax.numpy as jnp
from jax.experimental import pallas as pl
from jax.experimental.pallas import tpu as pltpu

_GUARD = 8  # spare elements at both ends of each flattened band so every
            # shifted 3x3-tap window (+-1 / +-Wp lane offsets) stays in-bounds.


# ----------------------------- Pallas kernel -------------------------------

def _drunet_fused_kernel(x_ref, mask_ref, wh_ref, wb_ref, wt_ref, o_ref,
                         abuf, bbuf, *, C, W, TH, n_res):
    """Fused head + residual body + tail over one image row band.

    Activations are row-major-flattened padded planes
    (channels, (band_rows + 2*HALO) * (W + 2)), so every 3x3 tap is a plain
    contiguous lane slice and every matmul is (Cout, Cin) @ (Cin, L) with a
    wide spatial lane dimension L.
    """
    HALO = 2 + 2 * n_res          # one row of halo per fused conv
    Wp = W + 2                    # width incl. the conv zero-pad columns
    Hb = TH + 2 * HALO            # band rows incl. halo
    Nf = Hb * Wp                  # flattened band-plane size
    G = _GUARD

    def conv3x3(src, wref, widx, k, *, relu=False, res=None):
        # conv number k (1-based): valid output rows are k .. Hb-1-k.
        L = (Hb - 2 * k) * Wp
        base = G + k * Wp
        acc = None
        for t in range(9):
            dy, dx = divmod(t, 3)
            off = base + (dy - 1) * Wp + (dx - 1)
            xs = src[:, pl.ds(off, L)].astype(jnp.bfloat16)     # (Cin, L)
            wt = wref[widx + (t,)]                              # (Cout, Cin) bf16
            d = jnp.dot(wt, xs, preferred_element_type=jnp.float32)
            acc = d if acc is None else acc + d
        if res is not None:                                     # residual skip (f32)
            acc = acc + res[:, pl.ds(base, L)]
        if relu:
            acc = jnp.maximum(acc, 0.0)
        # Zero the padding columns and out-of-image rows: exactly the zero
        # padding the next conv must see -> fused band tiling stays exact.
        valid = mask_ref[0, :, pl.ds(k * Wp, L)] > 0.0          # (1, L)
        return jnp.where(valid, acc, 0.0), base, L

    xsrc = x_ref.at[0]                                          # (2, Nf + 2G) ref view

    # head: 2 -> C
    y, base, L = conv3x3(xsrc, wh_ref, (), 1)
    abuf[:, pl.ds(base, L)] = y

    # residual body: conv-relu-conv + skip, n_res times
    k = 2
    for b in range(n_res):
        y, base, L = conv3x3(abuf, wb_ref, (2 * b,), k, relu=True)
        bbuf[:, pl.ds(base, L)] = y
        k += 1
        y, base, L = conv3x3(bbuf, wb_ref, (2 * b + 1,), k, res=abuf)
        abuf[:, pl.ds(base, L)] = y
        k += 1

    # tail: C -> 1; its valid rows are exactly this band's TH output rows.
    y, _, _ = conv3x3(abuf, wt_ref, (), k)
    o_ref[0] = y


# ------------------------------ JAX wrapper ---------------------------------

def init_params(key, channels=32, num_res_blocks=2):
    """Synthetic bias-free DRUNet-style weights, tap-major (9, Cout, Cin)."""
    keys = jax.random.split(key, 2 + 2 * num_res_blocks)
    params = {
        "head": 0.1 * jax.random.normal(keys[0], (9, channels, 2), jnp.float32),
        "body": [],
        "tail": 0.1 * jax.random.normal(keys[1], (9, 1, channels), jnp.float32),
    }
    for b in range(num_res_blocks):
        w1 = 0.05 * jax.random.normal(keys[2 + 2 * b], (9, channels, channels), jnp.float32)
        w2 = 0.05 * jax.random.normal(keys[3 + 2 * b], (9, channels, channels), jnp.float32)
        params["body"].append((w1, w2))
    return params


def drunet_running_forward(x_hw, sigma, params, *, band_rows=None):
    """Mirrors Drunet_running.forward: (H, W) image + scalar sigma -> (1,1,H,W)."""
    H, W = x_hw.shape
    C = params["head"].shape[1]
    n_res = len(params["body"])
    HALO = 2 + 2 * n_res
    Wp = W + 2
    G = _GUARD

    # --- band height: as tall as the VMEM budget allows while dividing H ----
    # Two f32 (C, (TH+2*HALO)*Wp) feature buffers must stay well inside VMEM
    # (v7x only has 64 MiB); budget ~8 MiB for them.
    row_bytes = 2 * C * Wp * 4
    th_cap = max(1, (8 << 20) // row_bytes - 2 * HALO)
    target = min(band_rows if band_rows else max(8, H // 8), th_cap, H)
    TH = next(d for d in range(int(target), 0, -1) if H % d == 0)
    nb = H // TH
    Hb = TH + 2 * HALO
    Nf = Hb * Wp
    Nbuf = Nf + 2 * G

    # --- 2-channel (image, sigma/255) input: pad, flatten, cut into bands ---
    smap = jnp.full((H, W), jnp.float32(sigma) / 255.0, jnp.float32)
    xin = jnp.stack([x_hw.astype(jnp.float32), smap])                 # (2, H, W)
    xpad = jnp.pad(xin, ((0, 0), (HALO, HALO), (1, 1)))               # (2, H+2*HALO, Wp)
    xflat = jnp.pad(xpad.reshape(2, (H + 2 * HALO) * Wp), ((0, 0), (G, G)))
    # Overlapping row bands (+halo, +guard).  The input is only 2 channels, so
    # duplicating the halo is negligible and lets the standard BlockSpec
    # pipeline prefetch band i+1 while band i computes.
    xbands = jnp.stack(
        [xflat[:, i * TH * Wp: i * TH * Wp + Nbuf] for i in range(nb)])

    # --- per-band validity mask (padding columns & out-of-image rows) -------
    rows = TH * jnp.arange(nb)[:, None] + jnp.arange(Hb)[None, :] - HALO
    row_ok = (rows >= 0) & (rows < H)                                  # (nb, Hb)
    col_ok = jnp.zeros((Wp,), jnp.bool_).at[1:W + 1].set(True)         # (Wp,)
    band_mask = (row_ok[:, :, None] & col_ok[None, None, :]).astype(jnp.float32)
    band_mask = band_mask.reshape(nb, 1, Nf)

    # --- weights: bf16, tap-major, VMEM-resident for the whole grid ---------
    wh = params["head"].astype(jnp.bfloat16)                           # (9, C, 2)
    wb = jnp.stack([w for pair in params["body"] for w in pair]).astype(jnp.bfloat16)
    wt = params["tail"].astype(jnp.bfloat16)                           # (9, 1, C)

    kernel = functools.partial(_drunet_fused_kernel, C=C, W=W, TH=TH, n_res=n_res)

    flops = 2 * 9 * H * W * (2 * C + 2 * n_res * C * C + C)
    bytes_accessed = (xbands.size * 4 + band_mask.size * 4 + nb * TH * Wp * 4
                      + (wh.size + wb.size + wt.size) * 2)

    out = pl.pallas_call(
        kernel,
        out_shape=jax.ShapeDtypeStruct((nb, 1, TH * Wp), jnp.float32),
        grid=(nb,),
        in_specs=[
            pl.BlockSpec((1, 2, Nbuf), lambda i: (i, 0, 0)),            # input band
            pl.BlockSpec((1, 1, Nf), lambda i: (i, 0, 0)),              # validity mask
            pl.BlockSpec((9, C, 2), lambda i: (0, 0, 0)),               # head weights
            pl.BlockSpec((2 * n_res, 9, C, C), lambda i: (0, 0, 0, 0)), # body weights
            pl.BlockSpec((9, 1, C), lambda i: (0, 0, 0)),               # tail weights
        ],
        out_specs=pl.BlockSpec((1, 1, TH * Wp), lambda i: (i, 0, 0)),
        scratch_shapes=[
            pltpu.VMEM((C, Nbuf), jnp.float32),                         # 'h' feature band
            pltpu.VMEM((C, Nbuf), jnp.float32),                         # temp feature band
        ],
        compiler_params=pltpu.CompilerParams(
            dimension_semantics=("parallel",),
            vmem_limit_bytes=32 * 1024 * 1024),
        cost_estimate=pl.CostEstimate(flops=flops, transcendentals=0,
                                      bytes_accessed=bytes_accessed),
    )(xbands, band_mask, wh, wb, wt)

    out = out.reshape(H, Wp)[:, 1:W + 1]                               # strip pad columns
    return out[None, None]                                             # (1, 1, H, W)


# ------------------------- pure-JAX reference -------------------------------

def _conv_ref(x_nchw, w_taps):
    co, ci = w_taps.shape[1], w_taps.shape[2]
    w = jnp.transpose(w_taps.reshape(3, 3, co, ci), (2, 3, 0, 1))      # OIHW
    return jax.lax.conv_general_dilated(
        x_nchw, w, (1, 1), ((1, 1), (1, 1)),
        dimension_numbers=("NCHW", "OIHW", "NCHW"),
        precision=jax.lax.Precision.HIGHEST)


def drunet_reference(x_hw, sigma, params):
    H, W = x_hw.shape
    smap = jnp.full((H, W), jnp.float32(sigma) / 255.0, jnp.float32)
    h = jnp.stack([x_hw.astype(jnp.float32), smap])[None]              # (1, 2, H, W)
    h = _conv_ref(h, params["head"])
    for w1, w2 in params["body"]:
        t = jnp.maximum(_conv_ref(h, w1), 0.0)
        h = _conv_ref(t, w2) + h
    return _conv_ref(h, params["tail"])                                # (1, 1, H, W)


# --------------------------------- main --------------------------------------

if __name__ == "__main__":
    key = jax.random.PRNGKey(0)
    k_img, k_par = jax.random.split(key)

    H = W = 16
    x = jax.random.uniform(k_img, (H, W), jnp.float32)   # grayscale image in [0, 1]
    sigma = 15.0

    params = init_params(k_par, channels=32, num_res_blocks=2)

    fwd = jax.jit(lambda img: drunet_running_forward(img, sigma, params))
    y = fwd(x)
    jax.block_until_ready(y)

    assert y.shape == (1, 1, H, W), y.shape
    assert y.dtype == jnp.float32

    y_ref = drunet_reference(x, sigma, params)
    err = float(jnp.max(jnp.abs(y - y_ref)))
    assert err < 5e-2, f"max |pallas - reference| = {err}"

    print("KERNEL_OK")
</pallas_src>

<mosaic_0001>
module attributes {stable_mosaic.version = 11 : i64} {
  func.func @_drunet_fused_kernel(%arg0: i32, %arg1: memref<1x2x376xf32, #tpu.memory_space<vmem>>, %arg2: memref<1x1x360xf32, #tpu.memory_space<vmem>>, %arg3: memref<9x32x2xbf16, #tpu.memory_space<vmem>>, %arg4: memref<4x9x32x32xbf16, #tpu.memory_space<vmem>>, %arg5: memref<9x1x32xbf16, #tpu.memory_space<vmem>>, %arg6: memref<1x1x144xf32, #tpu.memory_space<vmem>>, %arg7: memref<32x376xf32, #tpu.memory_space<vmem>>, %arg8: memref<32x376xf32, #tpu.memory_space<vmem>>) attributes {dimension_semantics = [#tpu.dimension_semantics<parallel>], iteration_bounds = array<i64: 2>, scalar_prefetch = 0 : i64, scratch_operands = 2 : i64, tpu.core_type = #tpu.core_type<tc>, window_params = [{transform_indices = @transform_0, window_bounds = array<i64: 1, 2, 376>}, {transform_indices = @transform_1, window_bounds = array<i64: 1, 1, 360>}, {pipeline_mode = #tpu.pipeline_mode<synchronous>, transform_indices = @transform_2, window_bounds = array<i64: 9, 32, 2>}, {pipeline_mode = #tpu.pipeline_mode<synchronous>, transform_indices = @transform_3, window_bounds = array<i64: 4, 9, 32, 32>}, {pipeline_mode = #tpu.pipeline_mode<synchronous>, transform_indices = @transform_4, window_bounds = array<i64: 9, 1, 32>}, {transform_indices = @transform_5, window_bounds = array<i64: 1, 1, 144>}]} {
    %c0_i32 = arith.constant 0 : i32
    %c0_i32_0 = arith.constant 0 : i32
    %c0_i32_1 = arith.constant 0 : i32
    %0 = tpu.memref_slice %arg1[%c0_i32, %c0_i32_0, %c0_i32_1] : memref<1x2x376xf32, #tpu.memory_space<vmem>> -> memref<1x2x376xf32, #tpu.memory_space<vmem>>
    %1 = tpu.memref_squeeze %0 : memref<1x2x376xf32, #tpu.memory_space<vmem>> -> memref<2x376xf32, #tpu.memory_space<vmem>>
    %c0 = arith.constant 0 : index
    %c7 = arith.constant 7 : index
    %2 = vector.load %1[%c0, %c7] : memref<2x376xf32, #tpu.memory_space<vmem>>, vector<2x324xf32>
    %3 = arith.truncf %2 : vector<2x324xf32> to vector<2x324xbf16>
    %c0_2 = arith.constant 0 : index
    %c0_3 = arith.constant 0 : index
    %c0_4 = arith.constant 0 : index
    %4 = vector.load %arg3[%c0_2, %c0_3, %c0_4] : memref<9x32x2xbf16, #tpu.memory_space<vmem>>, vector<1x32x2xbf16>
    %5 = vector.shape_cast %4 : vector<1x32x2xbf16> to vector<32x2xbf16>
    %cst = arith.constant dense<0.000000e+00> : vector<32x324xf32>
    %6 = tpu.matmul %5, %3, %cst {dimension_numbers = #tpu.dot_dimension_numbers<[1], [0], [0], [1], [0, 0, 1, 1], [], []>} : vector<32x2xbf16>, vector<2x324xbf16>, vector<32x324xf32> -> vector<32x324xf32>
    %c0_i32_5 = arith.constant 0 : i32
    %c0_i32_6 = arith.constant 0 : i32
    %c0_i32_7 = arith.constant 0 : i32
    %7 = tpu.memref_slice %arg1[%c0_i32_5, %c0_i32_6, %c0_i32_7] : memref<1x2x376xf32, #tpu.memory_space<vmem>> -> memref<1x2x376xf32, #tpu.memory_space<vmem>>
    %8 = tpu.memref_squeeze %7 : memref<1x2x376xf32, #tpu.memory_space<vmem>> -> memref<2x376xf32, #tpu.memory_space<vmem>>
    %c0_8 = arith.constant 0 : index
    %c8 = arith.constant 8 : index
    %9 = vector.load %8[%c0_8, %c8] : memref<2x376xf32, #tpu.memory_space<vmem>>, vector<2x324xf32>
    %10 = arith.truncf %9 : vector<2x324xf32> to vector<2x324xbf16>
    %c1 = arith.constant 1 : index
    %c0_9 = arith.constant 0 : index
    %c0_10 = arith.constant 0 : index
    %11 = vector.load %arg3[%c1, %c0_9, %c0_10] : memref<9x32x2xbf16, #tpu.memory_space<vmem>>, vector<1x32x2xbf16>
    %12 = vector.shape_cast %11 : vector<1x32x2xbf16> to vector<32x2xbf16>
    %cst_11 = arith.constant dense<0.000000e+00> : vector<32x324xf32>
    %13 = tpu.matmul %12, %10, %cst_11 {dimension_numbers = #tpu.dot_dimension_numbers<[1], [0], [0], [1], [0, 0, 1, 1], [], []>} : vector<32x2xbf16>, vector<2x324xbf16>, vector<32x324xf32> -> vector<32x324xf32>
    %14 = arith.addf %6, %13 : vector<32x324xf32>
    %c0_i32_12 = arith.constant 0 : i32
    %c0_i32_13 = arith.constant 0 : i32
    %c0_i32_14 = arith.constant 0 : i32
    %15 = tpu.memref_slice %arg1[%c0_i32_12, %c0_i32_13, %c0_i32_14] : memref<1x2x376xf32, #tpu.memory_space<vmem>> -> memref<1x2x376xf32, #tpu.memory_space<vmem>>
    %16 = tpu.memref_squeeze %15 : memref<1x2x376xf32, #tpu.memory_space<vmem>> -> memref<2x376xf32, #tpu.memory_space<vmem>>
    %c0_15 = arith.constant 0 : index
    %c9 = arith.constant 9 : index
    %17 = vector.load %16[%c0_15, %c9] : memref<2x376xf32, #tpu.memory_space<vmem>>, vector<2x324xf32>
    %18 = arith.truncf %17 : vector<2x324xf32> to vector<2x324xbf16>
    %c2 = arith.constant 2 : index
    %c0_16 = arith.constant 0 : index
    %c0_17 = arith.constant 0 : index
    %19 = vector.load %arg3[%c2, %c0_16, %c0_17] : memref<9x32x2xbf16, #tpu.memory_space<vmem>>, vector<1x32x2xbf16>
    %20 = vector.shape_cast %19 : vector<1x32x2xbf16> to vector<32x2xbf16>
    %cst_18 = arith.constant dense<0.000000e+00> : vector<32x324xf32>
    %21 = tpu.matmul %20, %18, %cst_18 {dimension_numbers = #tpu.dot_dimension_numbers<[1], [0], [0], [1], [0, 0, 1, 1], [], []>} : vector<32x2xbf16>, vector<2x324xbf16>, vector<32x324xf32> -> vector<32x324xf32>
    %22 = arith.addf %14, %21 : vector<32x324xf32>
    %c0_i32_19 = arith.constant 0 : i32
    %c0_i32_20 = arith.constant 0 : i32
    %c0_i32_21 = arith.constant 0 : i32
    %23 = tpu.memref_slice %arg1[%c0_i32_19, %c0_i32_20, %c0_i32_21] : memref<1x2x376xf32, #tpu.memory_space<vmem>> -> memref<1x2x376xf32, #tpu.memory_space<vmem>>
    %24 = tpu.memref_squeeze %23 : memref<1x2x376xf32, #tpu.memory_space<vmem>> -> memref<2x376xf32, #tpu.memory_space<vmem>>
    %c0_22 = arith.constant 0 : index
    %c25 = arith.constant 25 : index
    %25 = vector.load %24[%c0_22, %c25] : memref<2x376xf32, #tpu.memory_space<vmem>>, vector<2x324xf32>
    %26 = arith.truncf %25 : vector<2x324xf32> to vector<2x324xbf16>
    %c3 = arith.constant 3 : index
    %c0_23 = arith.constant 0 : index
    %c0_24 = arith.constant 0 : index
    %27 = vector.load %arg3[%c3, %c0_23, %c0_24] : memref<9x32x2xbf16, #tpu.memory_space<vmem>>, vector<1x32x2xbf16>
    %28 = vector.shape_cast %27 : vector<1x32x2xbf16> to vector<32x2xbf16>
    %cst_25 = arith.constant dense<0.000000e+00> : vector<32x324xf32>
    %29 = tpu.matmul %28, %26, %cst_25 {dimension_numbers = #tpu.dot_dimension_numbers<[1], [0], [0], [1], [0, 0, 1, 1], [], []>} : vector<32x2xbf16>, vector<2x324xbf16>, vector<32x324xf32> -> vector<32x324xf32>
    %30 = arith.addf %22, %29 : vector<32x324xf32>
    %c0_i32_26 = arith.constant 0 : i32
    %c0_i32_27 = arith.constant 0 : i32
    %c0_i32_28 = arith.constant 0 : i32
    %31 = tpu.memref_slice %arg1[%c0_i32_26, %c0_i32_27, %c0_i32_28] : memref<1x2x376xf32, #tpu.memory_space<vmem>> -> memref<1x2x376xf32, #tpu.memory_space<vmem>>
    %32 = tpu.memref_squeeze %31 : memref<1x2x376xf32, #tpu.memory_space<vmem>> -> memref<2x376xf32, #tpu.memory_space<vmem>>
    %c0_29 = arith.constant 0 : index
    %c26 = arith.constant 26 : index
    %33 = vector.load %32[%c0_29, %c26] : memref<2x376xf32, #tpu.memory_space<vmem>>, vector<2x324xf32>
    %34 = arith.truncf %33 : vector<2x324xf32> to vector<2x324xbf16>
    %c4 = arith.constant 4 : index
    %c0_30 = arith.constant 0 : index
    %c0_31 = arith.constant 0 : index
    %35 = vector.load %arg3[%c4, %c0_30, %c0_31] : memref<9x32x2xbf16, #tpu.memory_space<vmem>>, vector<1x32x2xbf16>
    %36 = vector.shape_cast %35 : vector<1x32x2xbf16> to vector<32x2xbf16>
    %cst_32 = arith.constant dense<0.000000e+00> : vector<32x324xf32>
    %37 = tpu.matmul %36, %34, %cst_32 {dimension_numbers = #tpu.dot_dimension_numbers<[1], [0], [0], [1], [0, 0, 1, 1], [], []>} : vector<32x2xbf16>, vector<2x324xbf16>, vector<32x324xf32> -> vector<32x324xf32>
    %38 = arith.addf %30, %37 : vector<32x324xf32>
    %c0_i32_33 = arith.constant 0 : i32
    %c0_i32_34 = arith.constant 0 : i32
    %c0_i32_35 = arith.constant 0 : i32
    %39 = tpu.memref_slice %arg1[%c0_i32_33, %c0_i32_34, %c0_i32_35] : memref<1x2x376xf32, #tpu.memory_space<vmem>> -> memref<1x2x376xf32, #tpu.memory_space<vmem>>
    %40 = tpu.memref_squeeze %39 : memref<1x2x376xf32, #tpu.memory_space<vmem>> -> memref<2x376xf32, #tpu.memory_space<vmem>>
    %c0_36 = arith.constant 0 : index
    %c27 = arith.constant 27 : index
    %41 = vector.load %40[%c0_36, %c27] : memref<2x376xf32, #tpu.memory_space<vmem>>, vector<2x324xf32>
    %42 = arith.truncf %41 : vector<2x324xf32> to vector<2x324xbf16>
    %c5 = arith.constant 5 : index
    %c0_37 = arith.constant 0 : index
    %c0_38 = arith.constant 0 : index
    %43 = vector.load %arg3[%c5, %c0_37, %c0_38] : memref<9x32x2xbf16, #tpu.memory_space<vmem>>, vector<1x32x2xbf16>
    %44 = vector.shape_cast %43 : vector<1x32x2xbf16> to vector<32x2xbf16>
    %cst_39 = arith.constant dense<0.000000e+00> : vector<32x324xf32>
    %45 = tpu.matmul %44, %42, %cst_39 {dimension_numbers = #tpu.dot_dimension_numbers<[1], [0], [0], [1], [0, 0, 1, 1], [], []>} : vector<32x2xbf16>, vector<2x324xbf16>, vector<32x324xf32> -> vector<32x324xf32>
    %46 = arith.addf %38, %45 : vector<32x324xf32>
    %c0_i32_40 = arith.constant 0 : i32
    %c0_i32_41 = arith.constant 0 : i32
    %c0_i32_42 = arith.constant 0 : i32
    %47 = tpu.memref_slice %arg1[%c0_i32_40, %c0_i32_41, %c0_i32_42] : memref<1x2x376xf32, #tpu.memory_space<vmem>> -> memref<1x2x376xf32, #tpu.memory_space<vmem>>
    %48 = tpu.memref_squeeze %47 : memref<1x2x376xf32, #tpu.memory_space<vmem>> -> memref<2x376xf32, #tpu.memory_space<vmem>>
    %c0_43 = arith.constant 0 : index
    %c43 = arith.constant 43 : index
    %49 = vector.load %48[%c0_43, %c43] : memref<2x376xf32, #tpu.memory_space<vmem>>, vector<2x324xf32>
    %50 = arith.truncf %49 : vector<2x324xf32> to vector<2x324xbf16>
    %c6 = arith.constant 6 : index
    %c0_44 = arith.constant 0 : index
    %c0_45 = arith.constant 0 : index
    %51 = vector.load %arg3[%c6, %c0_44, %c0_45] : memref<9x32x2xbf16, #tpu.memory_space<vmem>>, vector<1x32x2xbf16>
    %52 = vector.shape_cast %51 : vector<1x32x2xbf16> to vector<32x2xbf16>
    %cst_46 = arith.constant dense<0.000000e+00> : vector<32x324xf32>
    %53 = tpu.matmul %52, %50, %cst_46 {dimension_numbers = #tpu.dot_dimension_numbers<[1], [0], [0], [1], [0, 0, 1, 1], [], []>} : vector<32x2xbf16>, vector<2x324xbf16>, vector<32x324xf32> -> vector<32x324xf32>
    %54 = arith.addf %46, %53 : vector<32x324xf32>
    %c0_i32_47 = arith.constant 0 : i32
    %c0_i32_48 = arith.constant 0 : i32
    %c0_i32_49 = arith.constant 0 : i32
    %55 = tpu.memref_slice %arg1[%c0_i32_47, %c0_i32_48, %c0_i32_49] : memref<1x2x376xf32, #tpu.memory_space<vmem>> -> memref<1x2x376xf32, #tpu.memory_space<vmem>>
    %56 = tpu.memref_squeeze %55 : memref<1x2x376xf32, #tpu.memory_space<vmem>> -> memref<2x376xf32, #tpu.memory_space<vmem>>
    %c0_50 = arith.constant 0 : index
    %c44 = arith.constant 44 : index
    %57 = vector.load %56[%c0_50, %c44] : memref<2x376xf32, #tpu.memory_space<vmem>>, vector<2x324xf32>
    %58 = arith.truncf %57 : vector<2x324xf32> to vector<2x324xbf16>
    %c7_51 = arith.constant 7 : index
    %c0_52 = arith.constant 0 : index
    %c0_53 = arith.constant 0 : index
    %59 = vector.load %arg3[%c7_51, %c0_52, %c0_53] : memref<9x32x2xbf16, #tpu.memory_space<vmem>>, vector<1x32x2xbf16>
    %60 = vector.shape_cast %59 : vector<1x32x2xbf16> to vector<32x2xbf16>
    %cst_54 = arith.constant dense<0.000000e+00> : vector<32x324xf32>
    %61 = tpu.matmul %60, %58, %cst_54 {dimension_numbers = #tpu.dot_dimension_numbers<[1], [0], [0], [1], [0, 0, 1, 1], [], []>} : vector<32x2xbf16>, vector<2x324xbf16>, vector<32x324xf32> -> vector<32x324xf32>
    %62 = arith.addf %54, %61 : vector<32x324xf32>
    %c0_i32_55 = arith.constant 0 : i32
    %c0_i32_56 = arith.constant 0 : i32
    %c0_i32_57 = arith.constant 0 : i32
    %63 = tpu.memref_slice %arg1[%c0_i32_55, %c0_i32_56, %c0_i32_57] : memref<1x2x376xf32, #tpu.memory_space<vmem>> -> memref<1x2x376xf32, #tpu.memory_space<vmem>>
    %64 = tpu.memref_squeeze %63 : memref<1x2x376xf32, #tpu.memory_space<vmem>> -> memref<2x376xf32, #tpu.memory_space<vmem>>
    %c0_58 = arith.constant 0 : index
    %c45 = arith.constant 45 : index
    %65 = vector.load %64[%c0_58, %c45] : memref<2x376xf32, #tpu.memory_space<vmem>>, vector<2x324xf32>
    %66 = arith.truncf %65 : vector<2x324xf32> to vector<2x324xbf16>
    %c8_59 = arith.constant 8 : index
    %c0_60 = arith.constant 0 : index
    %c0_61 = arith.constant 0 : index
    %67 = vector.load %arg3[%c8_59, %c0_60, %c0_61] : memref<9x32x2xbf16, #tpu.memory_space<vmem>>, vector<1x32x2xbf16>
    %68 = vector.shape_cast %67 : vector<1x32x2xbf16> to vector<32x2xbf16>
    %cst_62 = arith.constant dense<0.000000e+00> : vector<32x324xf32>
    %69 = tpu.matmul %68, %66, %cst_62 {dimension_numbers = #tpu.dot_dimension_numbers<[1], [0], [0], [1], [0, 0, 1, 1], [], []>} : vector<32x2xbf16>, vector<2x324xbf16>, vector<32x324xf32> -> vector<32x324xf32>
    %70 = arith.addf %62, %69 : vector<32x324xf32>
    %c0_63 = arith.constant 0 : index
    %c0_64 = arith.constant 0 : index
    %c18 = arith.constant 18 : index
    %71 = vector.load %arg2[%c0_63, %c0_64, %c18] : memref<1x1x360xf32, #tpu.memory_space<vmem>>, vector<1x1x324xf32>
    %72 = vector.shape_cast %71 : vector<1x1x324xf32> to vector<1x324xf32>
    %cst_65 = arith.constant 0.000000e+00 : f32
    %73 = vector.broadcast %cst_65 : f32 to vector<1x324xf32>
    %74 = arith.cmpf ogt, %72, %73 : vector<1x324xf32>
    %cst_66 = arith.constant 0.000000e+00 : f32
    %75 = vector.shape_cast %74 : vector<1x324xi1> to vector<1x324xi1>
    %76 = vector.broadcast %75 : vector<1x324xi1> to vector<32x324xi1>
    %77 = vector.broadcast %cst_66 : f32 to vector<32x324xf32>
    %78 = arith.select %76, %70, %77 : vector<32x324xi1>, vector<32x324xf32>
    %c0_67 = arith.constant 0 : index
    %c26_68 = arith.constant 26 : index
    %79 = vector.load %arg7[%c0_67, %c26_68] : memref<32x376xf32, #tpu.memory_space<vmem>>, vector<32x324xf32>
    tpu.vector_store %arg7[%c0_67, %c26_68], %78 {strides = array<i32>} : memref<32x376xf32, #tpu.memory_space<vmem>>, vector<32x324xf32>,
    %c0_69 = arith.constant 0 : index
    %c25_70 = arith.constant 25 : index
    %80 = vector.load %arg7[%c0_69, %c25_70] : memref<32x376xf32, #tpu.memory_space<vmem>>, vector<32x288xf32>
    %81 = arith.truncf %80 : vector<32x288xf32> to vector<32x288xbf16>
    %c0_71 = arith.constant 0 : index
    %c0_72 = arith.constant 0 : index
    %c0_73 = arith.constant 0 : index
    %c0_74 = arith.constant 0 : index
    %82 = vector.load %arg4[%c0_71, %c0_72, %c0_73, %c0_74] : memref<4x9x32x32xbf16, #tpu.memory_space<vmem>>, vector<1x1x32x32xbf16>
    %83 = vector.shape_cast %82 : vector<1x1x32x32xbf16> to vector<32x32xbf16>
    %cst_75 = arith.constant dense<0.000000e+00> : vector<32x288xf32>
    %84 = tpu.matmul %83, %81, %cst_75 {dimension_numbers = #tpu.dot_dimension_numbers<[1], [0], [0], [1], [0, 0, 1, 1], [], []>} : vector<32x32xbf16>, vector<32x288xbf16>, vector<32x288xf32> -> vector<32x288xf32>
    %c0_76 = arith.constant 0 : index
    %c26_77 = arith.constant 26 : index
    %85 = vector.load %arg7[%c0_76, %c26_77] : memref<32x376xf32, #tpu.memory_space<vmem>>, vector<32x288xf32>
    %86 = arith.truncf %85 : vector<32x288xf32> to vector<32x288xbf16>
    %c0_78 = arith.constant 0 : index
    %c1_79 = arith.constant 1 : index
    %c0_80 = arith.constant 0 : index
    %c0_81 = arith.constant 0 : index
    %87 = vector.load %arg4[%c0_78, %c1_79, %c0_80, %c0_81] : memref<4x9x32x32xbf16, #tpu.memory_space<vmem>>, vector<1x1x32x32xbf16>
    %88 = vector.shape_cast %87 : vector<1x1x32x32xbf16> to vector<32x32xbf16>
    %cst_82 = arith.constant dense<0.000000e+00> : vector<32x288xf32>
    %89 = tpu.matmul %88, %86, %cst_82 {dimension_numbers = #tpu.dot_dimension_numbers<[1], [0], [0], [1], [0, 0, 1, 1], [], []>} : vector<32x32xbf16>, vector<32x288xbf16>, vector<32x288xf32> -> vector<32x288xf32>
    %90 = arith.addf %84, %89 : vector<32x288xf32>
    %c0_83 = arith.constant 0 : index
    %c27_84 = arith.constant 27 : index
    %91 = vector.load %arg7[%c0_83, %c27_84] : memref<32x376xf32, #tpu.memory_space<vmem>>, vector<32x288xf32>
    %92 = arith.truncf %91 : vector<32x288xf32> to vector<32x288xbf16>
    %c0_85 = arith.constant 0 : index
    %c2_86 = arith.constant 2 : index
    %c0_87 = arith.constant 0 : index
    %c0_88 = arith.constant 0 : index
    %93 = vector.load %arg4[%c0_85, %c2_86, %c0_87, %c0_88] : memref<4x9x32x32xbf16, #tpu.memory_space<vmem>>, vector<1x1x32x32xbf16>
    %94 = vector.shape_cast %93 : vector<1x1x32x32xbf16> to vector<32x32xbf16>
    %cst_89 = arith.constant dense<0.000000e+00> : vector<32x288xf32>
    %95 = tpu.matmul %94, %92, %cst_89 {dimension_numbers = #tpu.dot_dimension_numbers<[1], [0], [0], [1], [0, 0, 1, 1], [], []>} : vector<32x32xbf16>, vector<32x288xbf16>, vector<32x288xf32> -> vector<32x288xf32>
    %96 = arith.addf %90, %95 : vector<32x288xf32>
    %c0_90 = arith.constant 0 : index
    %c43_91 = arith.constant 43 : index
    %97 = vector.load %arg7[%c0_90, %c43_91] : memref<32x376xf32, #tpu.memory_space<vmem>>, vector<32x288xf32>
    %98 = arith.truncf %97 : vector<32x288xf32> to vector<32x288xbf16>
    %c0_92 = arith.constant 0 : index
    %c3_93 = arith.constant 3 : index
    %c0_94 = arith.constant 0 : index
    %c0_95 = arith.constant 0 : index
    %99 = vector.load %arg4[%c0_92, %c3_93, %c0_94, %c0_95] : memref<4x9x32x32xbf16, #tpu.memory_space<vmem>>, vector<1x1x32x32xbf16>
    %100 = vector.shape_cast %99 : vector<1x1x32x32xbf16> to vector<32x32xbf16>
    %cst_96 = arith.constant dense<0.000000e+00> : vector<32x288xf32>
    %101 = tpu.matmul %100, %98, %cst_96 {dimension_numbers = #tpu.dot_dimension_numbers<[1], [0], [0], [1], [0, 0, 1, 1], [], []>} : vector<32x32xbf16>, vector<32x288xbf16>, vector<32x288xf32> -> vector<32x288xf32>
    %102 = arith.addf %96, %101 : vector<32x288xf32>
    %c0_97 = arith.constant 0 : index
    %c44_98 = arith.constant 44 : index
    %103 = vector.load %arg7[%c0_97, %c44_98] : memref<32x376xf32, #tpu.memory_space<vmem>>, vector<32x288xf32>
    %104 = arith.truncf %103 : vector<32x288xf32> to vector<32x288xbf16>
    %c0_99 = arith.constant 0 : index
    %c4_100 = arith.constant 4 : index
    %c0_101 = arith.constant 0 : index
    %c0_102 = arith.constant 0 : index
    %105 = vector.load %arg4[%c0_99, %c4_100, %c0_101, %c0_102] : memref<4x9x32x32xbf16, #tpu.memory_space<vmem>>, vector<1x1x32x32xbf16>
    %106 = vector.shape_cast %105 : vector<1x1x32x32xbf16> to vector<32x32xbf16>
    %cst_103 = arith.constant dense<0.000000e+00> : vector<32x288xf32>
    %107 = tpu.matmul %106, %104, %cst_103 {dimension_numbers = #tpu.dot_dimension_numbers<[1], [0], [0], [1], [0, 0, 1, 1], [], []>} : vector<32x32xbf16>, vector<32x288xbf16>, vector<32x288xf32> -> vector<32x288xf32>
    %108 = arith.addf %102, %107 : vector<32x288xf32>
    %c0_104 = arith.constant 0 : index
    %c45_105 = arith.constant 45 : index
    %109 = vector.load %arg7[%c0_104, %c45_105] : memref<32x376xf32, #tpu.memory_space<vmem>>, vector<32x288xf32>
    %110 = arith.truncf %109 : vector<32x288xf32> to vector<32x288xbf16>
    %c0_106 = arith.constant 0 : index
    %c5_107 = arith.constant 5 : index
    %c0_108 = arith.constant 0 : index
    %c0_109 = arith.constant 0 : index
    %111 = vector.load %arg4[%c0_106, %c5_107, %c0_108, %c0_109] : memref<4x9x32x32xbf16, #tpu.memory_space<vmem>>, vector<1x1x32x32xbf16>
    %112 = vector.shape_cast %111 : vector<1x1x32x32xbf16> to vector<32x32xbf16>
    %cst_110 = arith.constant dense<0.000000e+00> : vector<32x288xf32>
    %113 = tpu.matmul %112, %110, %cst_110 {dimension_numbers = #tpu.dot_dimension_numbers<[1], [0], [0], [1], [0, 0, 1, 1], [], []>} : vector<32x32xbf16>, vector<32x288xbf16>, vector<32x288xf32> -> vector<32x288xf32>
    %114 = arith.addf %108, %113 : vector<32x288xf32>
    %c0_111 = arith.constant 0 : index
    %c61 = arith.constant 61 : index
    %115 = vector.load %arg7[%c0_111, %c61] : memref<32x376xf32, #tpu.memory_space<vmem>>, vector<32x288xf32>
    %116 = arith.truncf %115 : vector<32x288xf32> to vector<32x288xbf16>
    %c0_112 = arith.constant 0 : index
    %c6_113 = arith.constant 6 : index
    %c0_114 = arith.constant 0 : index
    %c0_115 = arith.constant 0 : index
    %117 = vector.load %arg4[%c0_112, %c6_113, %c0_114, %c0_115] : memref<4x9x32x32xbf16, #tpu.memory_space<vmem>>, vector<1x1x32x32xbf16>
    %118 = vector.shape_cast %117 : vector<1x1x32x32xbf16> to vector<32x32xbf16>
    %cst_116 = arith.constant dense<0.000000e+00> : vector<32x288xf32>
    %119 = tpu.matmul %118, %116, %cst_116 {dimension_numbers = #tpu.dot_dimension_numbers<[1], [0], [0], [1], [0, 0, 1, 1], [], []>} : vector<32x32xbf16>, vector<32x288xbf16>, vector<32x288xf32> -> vector<32x288xf32>
    %120 = arith.addf %114, %119 : vector<32x288xf32>
    %c0_117 = arith.constant 0 : index
    %c62 = arith.constant 62 : index
    %121 = vector.load %arg7[%c0_117, %c62] : memref<32x376xf32, #tpu.memory_space<vmem>>, vector<32x288xf32>
    %122 = arith.truncf %121 : vector<32x288xf32> to vector<32x288xbf16>
    %c0_118 = arith.constant 0 : index
    %c7_119 = arith.constant 7 : index
    %c0_120 = arith.constant 0 : index
    %c0_121 = arith.constant 0 : index
    %123 = vector.load %arg4[%c0_118, %c7_119, %c0_120, %c0_121] : memref<4x9x32x32xbf16, #tpu.memory_space<vmem>>, vector<1x1x32x32xbf16>
    %124 = vector.shape_cast %123 : vector<1x1x32x32xbf16> to vector<32x32xbf16>
    %cst_122 = arith.constant dense<0.000000e+00> : vector<32x288xf32>
    %125 = tpu.matmul %124, %122, %cst_122 {dimension_numbers = #tpu.dot_dimension_numbers<[1], [0], [0], [1], [0, 0, 1, 1], [], []>} : vector<32x32xbf16>, vector<32x288xbf16>, vector<32x288xf32> -> vector<32x288xf32>
    %126 = arith.addf %120, %125 : vector<32x288xf32>
    %c0_123 = arith.constant 0 : index
    %c63 = arith.constant 63 : index
    %127 = vector.load %arg7[%c0_123, %c63] : memref<32x376xf32, #tpu.memory_space<vmem>>, vector<32x288xf32>
    %128 = arith.truncf %127 : vector<32x288xf32> to vector<32x288xbf16>
    %c0_124 = arith.constant 0 : index
    %c8_125 = arith.constant 8 : index
    %c0_126 = arith.constant 0 : index
    %c0_127 = arith.constant 0 : index
    %129 = vector.load %arg4[%c0_124, %c8_125, %c0_126, %c0_127] : memref<4x9x32x32xbf16, #tpu.memory_space<vmem>>, vector<1x1x32x32xbf16>
    %130 = vector.shape_cast %129 : vector<1x1x32x32xbf16> to vector<32x32xbf16>
    %cst_128 = arith.constant dense<0.000000e+00> : vector<32x288xf32>
    %131 = tpu.matmul %130, %128, %cst_128 {dimension_numbers = #tpu.dot_dimension_numbers<[1], [0], [0], [1], [0, 0, 1, 1], [], []>} : vector<32x32xbf16>, vector<32x288xbf16>, vector<32x288xf32> -> vector<32x288xf32>
    %132 = arith.addf %126, %131 : vector<32x288xf32>
    %cst_129 = arith.constant 0.000000e+00 : f32
    %133 = vector.broadcast %cst_129 : f32 to vector<32x288xf32>
    %134 = arith.maximumf %132, %133 : vector<32x288xf32>
    %c0_130 = arith.constant 0 : index
    %c0_131 = arith.constant 0 : index
    %c36 = arith.constant 36 : index
    %135 = vector.load %arg2[%c0_130, %c0_131, %c36] : memref<1x1x360xf32, #tpu.memory_space<vmem>>, vector<1x1x288xf32>
    %136 = vector.shape_cast %135 : vector<1x1x288xf32> to vector<1x288xf32>
    %cst_132 = arith.constant 0.000000e+00 : f32
    %137 = vector.broadcast %cst_132 : f32 to vector<1x288xf32>
    %138 = arith.cmpf ogt, %136, %137 : vector<1x288xf32>
    %cst_133 = arith.constant 0.000000e+00 : f32
    %139 = vector.shape_cast %138 : vector<1x288xi1> to vector<1x288xi1>
    %140 = vector.broadcast %139 : vector<1x288xi1> to vector<32x288xi1>
    %141 = vector.broadcast %cst_133 : f32 to vector<32x288xf32>
    %142 = arith.select %140, %134, %141 : vector<32x288xi1>, vector<32x288xf32>
    %c0_134 = arith.constant 0 : index
    %c44_135 = arith.constant 44 : index
    %143 = vector.load %arg8[%c0_134, %c44_135] : memref<32x376xf32, #tpu.memory_space<vmem>>, vector<32x288xf32>
    tpu.vector_store %arg8[%c0_134, %c44_135], %142 {strides = array<i32>} : memref<32x376xf32, #tpu.memory_space<vmem>>, vector<32x288xf32>,
    %c0_136 = arith.constant 0 : index
    %c43_137 = arith.constant 43 : index
    %144 = vector.load %arg8[%c0_136, %c43_137] : memref<32x376xf32, #tpu.memory_space<vmem>>, vector<32x252xf32>
    %145 = arith.truncf %144 : vector<32x252xf32> to vector<32x252xbf16>
    %c1_138 = arith.constant 1 : index
    %c0_139 = arith.constant 0 : index
    %c0_140 = arith.constant 0 : index
    %c0_141 = arith.constant 0 : index
    %146 = vector.load %arg4[%c1_138, %c0_139, %c0_140, %c0_141] : memref<4x9x32x32xbf16, #tpu.memory_space<vmem>>, vector<1x1x32x32xbf16>
    %147 = vector.shape_cast %146 : vector<1x1x32x32xbf16> to vector<32x32xbf16>
    %cst_142 = arith.constant dense<0.000000e+00> : vector<32x252xf32>
    %148 = tpu.matmul %147, %145, %cst_142 {dimension_numbers = #tpu.dot_dimension_numbers<[1], [0], [0], [1], [0, 0, 1, 1], [], []>} : vector<32x32xbf16>, vector<32x252xbf16>, vector<32x252xf32> -> vector<32x252xf32>
    %c0_143 = arith.constant 0 : index
    %c44_144 = arith.constant 44 : index
    %149 = vector.load %arg8[%c0_143, %c44_144] : memref<32x376xf32, #tpu.memory_space<vmem>>, vector<32x252xf32>
    %150 = arith.truncf %149 : vector<32x252xf32> to vector<32x252xbf16>
    %c1_145 = arith.constant 1 : index
    %c1_146 = arith.constant 1 : index
    %c0_147 = arith.constant 0 : index
    %c0_148 = arith.constant 0 : index
    %151 = vector.load %arg4[%c1_145, %c1_146, %c0_147, %c0_148] : memref<4x9x32x32xbf16, #tpu.memory_space<vmem>>, vector<1x1x32x32xbf16>
    %152 = vector.shape_cast %151 : vector<1x1x32x32xbf16> to vector<32x32xbf16>
    %cst_149 = arith.constant dense<0.000000e+00> : vector<32x252xf32>
    %153 = tpu.matmul %152, %150, %cst_149 {dimension_numbers = #tpu.dot_dimension_numbers<[1], [0], [0], [1], [0, 0, 1, 1], [], []>} : vector<32x32xbf16>, vector<32x252xbf16>, vector<32x252xf32> -> vector<32x252xf32>
    %154 = arith.addf %148, %153 : vector<32x252xf32>
    %c0_150 = arith.constant 0 : index
    %c45_151 = arith.constant 45 : index
    %155 = vector.load %arg8[%c0_150, %c45_151] : memref<32x376xf32, #tpu.memory_space<vmem>>, vector<32x252xf32>
    %156 = arith.truncf %155 : vector<32x252xf32> to vector<32x252xbf16>
    %c1_152 = arith.constant 1 : index
    %c2_153 = arith.constant 2 : index
    %c0_154 = arith.constant 0 : index
    %c0_155 = arith.constant 0 : index
    %157 = vector.load %arg4[%c1_152, %c2_153, %c0_154, %c0_155] : memref<4x9x32x32xbf16, #tpu.memory_space<vmem>>, vector<1x1x32x32xbf16>
    %158 = vector.shape_cast %157 : vector<1x1x32x32xbf16> to vector<32x32xbf16>
    %cst_156 = arith.constant dense<0.000000e+00> : vector<32x252xf32>
    %159 = tpu.matmul %158, %156, %cst_156 {dimension_numbers = #tpu.dot_dimension_numbers<[1], [0], [0], [1], [0, 0, 1, 1], [], []>} : vector<32x32xbf16>, vector<32x252xbf16>, vector<32x252xf32> -> vector<32x252xf32>
    %160 = arith.addf %154, %159 : vector<32x252xf32>
    %c0_157 = arith.constant 0 : index
    %c61_158 = arith.constant 61 : index
    %161 = vector.load %arg8[%c0_157, %c61_158] : memref<32x376xf32, #tpu.memory_space<vmem>>, vector<32x252xf32>
    %162 = arith.truncf %161 : vector<32x252xf32> to vector<32x252xbf16>
    %c1_159 = arith.constant 1 : index
    %c3_160 = arith.constant 3 : index
    %c0_161 = arith.constant 0 : index
    %c0_162 = arith.constant 0 : index
    %163 = vector.load %arg4[%c1_159, %c3_160, %c0_161, %c0_162] : memref<4x9x32x32xbf16, #tpu.memory_space<vmem>>, vector<1x1x32x32xbf16>
    %164 = vector.shape_cast %163 : vector<1x1x32x32xbf16> to vector<32x32xbf16>
    %cst_163 = arith.constant dense<0.000000e+00> : vector<32x252xf32>
    %165 = tpu.matmul %164, %162, %cst_163 {dimension_numbers = #tpu.dot_dimension_numbers<[1], [0], [0], [1], [0, 0, 1, 1], [], []>} : vector<32x32xbf16>, vector<32x252xbf16>, vector<32x252xf32> -> vector<32x252xf32>
    %166 = arith.addf %160, %165 : vector<32x252xf32>
    %c0_164 = arith.constant 0 : index
    %c62_165 = arith.constant 62 : index
    %167 = vector.load %arg8[%c0_164, %c62_165] : memref<32x376xf32, #tpu.memory_space<vmem>>, vector<32x252xf32>
    %168 = arith.truncf %167 : vector<32x252xf32> to vector<32x252xbf16>
    %c1_166 = arith.constant 1 : index
    %c4_167 = arith.constant 4 : index
    %c0_168 = arith.constant 0 : index
    %c0_169 = arith.constant 0 : index
    %169 = vector.load %arg4[%c1_166, %c4_167, %c0_168, %c0_169] : memref<4x9x32x32xbf16, #tpu.memory_space<vmem>>, vector<1x1x32x32xbf16>
    %170 = vector.shape_cast %169 : vector<1x1x32x32xbf16> to vector<32x32xbf16>
    %cst_170 = arith.constant dense<0.000000e+00> : vector<32x252xf32>
    %171 = tpu.matmul %170, %168, %cst_170 {dimension_numbers = #tpu.dot_dimension_numbers<[1], [0], [0], [1], [0, 0, 1, 1], [], []>} : vector<32x32xbf16>, vector<32x252xbf16>, vector<32x252xf32> -> vector<32x252xf32>
    %172 = arith.addf %166, %171 : vector<32x252xf32>
    %c0_171 = arith.constant 0 : index
    %c63_172 = arith.constant 63 : index
    %173 = vector.load %arg8[%c0_171, %c63_172] : memref<32x376xf32, #tpu.memory_space<vmem>>, vector<32x252xf32>
    %174 = arith.truncf %173 : vector<32x252xf32> to vector<32x252xbf16>
    %c1_173 = arith.constant 1 : index
    %c5_174 = arith.constant 5 : index
    %c0_175 = arith.constant 0 : index
    %c0_176 = arith.constant 0 : index
    %175 = vector.load %arg4[%c1_173, %c5_174, %c0_175, %c0_176] : memref<4x9x32x32xbf16, #tpu.memory_space<vmem>>, vector<1x1x32x32xbf16>
    %176 = vector.shape_cast %175 : vector<1x1x32x32xbf16> to vector<32x32xbf16>
    %cst_177 = arith.constant dense<0.000000e+00> : vector<32x252xf32>
    %177 = tpu.matmul %176, %174, %cst_177 {dimension_numbers = #tpu.dot_dimension_numbers<[1], [0], [0], [1], [0, 0, 1, 1], [], []>} : vector<32x32xbf16>, vector<32x252xbf16>, vector<32x252xf32> -> vector<32x252xf32>
    %178 = arith.addf %172, %177 : vector<32x252xf32>
    %c0_178 = arith.constant 0 : index
    %c79 = arith.constant 79 : index
    %179 = vector.load %arg8[%c0_178, %c79] : memref<32x376xf32, #tpu.memory_space<vmem>>, vector<32x252xf32>
    %180 = arith.truncf %179 : vector<32x252xf32> to vector<32x252xbf16>
    %c1_179 = arith.constant 1 : index
    %c6_180 = arith.constant 6 : index
    %c0_181 = arith.constant 0 : index
    %c0_182 = arith.constant 0 : index
    %181 = vector.load %arg4[%c1_179, %c6_180, %c0_181, %c0_182] : memref<4x9x32x32xbf16, #tpu.memory_space<vmem>>, vector<1x1x32x32xbf16>
    %182 = vector.shape_cast %181 : vector<1x1x32x32xbf16> to vector<32x32xbf16>
    %cst_183 = arith.constant dense<0.000000e+00> : vector<32x252xf32>
    %183 = tpu.matmul %182, %180, %cst_183 {dimension_numbers = #tpu.dot_dimension_numbers<[1], [0], [0], [1], [0, 0, 1, 1], [], []>} : vector<32x32xbf16>, vector<32x252xbf16>, vector<32x252xf32> -> vector<32x252xf32>
    %184 = arith.addf %178, %183 : vector<32x252xf32>
    %c0_184 = arith.constant 0 : index
    %c80 = arith.constant 80 : index
    %185 = vector.load %arg8[%c0_184, %c80] : memref<32x376xf32, #tpu.memory_space<vmem>>, vector<32x252xf32>
    %186 = arith.truncf %185 : vector<32x252xf32> to vector<32x252xbf16>
    %c1_185 = arith.constant 1 : index
    %c7_186 = arith.constant 7 : index
    %c0_187 = arith.constant 0 : index
    %c0_188 = arith.constant 0 : index
    %187 = vector.load %arg4[%c1_185, %c7_186, %c0_187, %c0_188] : memref<4x9x32x32xbf16, #tpu.memory_space<vmem>>, vector<1x1x32x32xbf16>
    %188 = vector.shape_cast %187 : vector<1x1x32x32xbf16> to vector<32x32xbf16>
    %cst_189 = arith.constant dense<0.000000e+00> : vector<32x252xf32>
    %189 = tpu.matmul %188, %186, %cst_189 {dimension_numbers = #tpu.dot_dimension_numbers<[1], [0], [0], [1], [0, 0, 1, 1], [], []>} : vector<32x32xbf16>, vector<32x252xbf16>, vector<32x252xf32> -> vector<32x252xf32>
    %190 = arith.addf %184, %189 : vector<32x252xf32>
    %c0_190 = arith.constant 0 : index
    %c81 = arith.constant 81 : index
    %191 = vector.load %arg8[%c0_190, %c81] : memref<32x376xf32, #tpu.memory_space<vmem>>, vector<32x252xf32>
    %192 = arith.truncf %191 : vector<32x252xf32> to vector<32x252xbf16>
    %c1_191 = arith.constant 1 : index
    %c8_192 = arith.constant 8 : index
    %c0_193 = arith.constant 0 : index
    %c0_194 = arith.constant 0 : index
    %193 = vector.load %arg4[%c1_191, %c8_192, %c0_193, %c0_194] : memref<4x9x32x32xbf16, #tpu.memory_space<vmem>>, vector<1x1x32x32xbf16>
    %194 = vector.shape_cast %193 : vector<1x1x32x32xbf16> to vector<32x32xbf16>
    %cst_195 = arith.constant dense<0.000000e+00> : vector<32x252xf32>
    %195 = tpu.matmul %194, %192, %cst_195 {dimension_numbers = #tpu.dot_dimension_numbers<[1], [0], [0], [1], [0, 0, 1, 1], [], []>} : vector<32x32xbf16>, vector<32x252xbf16>, vector<32x252xf32> -> vector<32x252xf32>
    %196 = arith.addf %190, %195 : vector<32x252xf32>
    %c0_196 = arith.constant 0 : index
    %c62_197 = arith.constant 62 : index
    %197 = vector.load %arg7[%c0_196, %c62_197] : memref<32x376xf32, #tpu.memory_space<vmem>>, vector<32x252xf32>
    %198 = arith.addf %196, %197 : vector<32x252xf32>
    %c0_198 = arith.constant 0 : index
    %c0_199 = arith.constant 0 : index
    %c54 = arith.constant 54 : index
    %199 = vector.load %arg2[%c0_198, %c0_199, %c54] : memref<1x1x360xf32, #tpu.memory_space<vmem>>, vector<1x1x252xf32>
    %200 = vector.shape_cast %199 : vector<1x1x252xf32> to vector<1x252xf32>
    %cst_200 = arith.constant 0.000000e+00 : f32
    %201 = vector.broadcast %cst_200 : f32 to vector<1x252xf32>
    %202 = arith.cmpf ogt, %200, %201 : vector<1x252xf32>
    %cst_201 = arith.constant 0.000000e+00 : f32
    %203 = vector.shape_cast %202 : vector<1x252xi1> to vector<1x252xi1>
    %204 = vector.broadcast %203 : vector<1x252xi1> to vector<32x252xi1>
    %205 = vector.broadcast %cst_201 : f32 to vector<32x252xf32>
    %206 = arith.select %204, %198, %205 : vector<32x252xi1>, vector<32x252xf32>
    %c0_202 = arith.constant 0 : index
    %c62_203 = arith.constant 62 : index
    %207 = vector.load %arg7[%c0_202, %c62_203] : memref<32x376xf32, #tpu.memory_space<vmem>>, vector<32x252xf32>
    tpu.vector_store %arg7[%c0_202, %c62_203], %206 {strides = array<i32>} : memref<32x376xf32, #tpu.memory_space<vmem>>, vector<32x252xf32>,
    %c0_204 = arith.constant 0 : index
    %c61_205 = arith.constant 61 : index
    %208 = vector.load %arg7[%c0_204, %c61_205] : memref<32x376xf32, #tpu.memory_space<vmem>>, vector<32x216xf32>
    %209 = arith.truncf %208 : vector<32x216xf32> to vector<32x216xbf16>
    %c2_206 = arith.constant 2 : index
    %c0_207 = arith.constant 0 : index
    %c0_208 = arith.constant 0 : index
    %c0_209 = arith.constant 0 : index
    %210 = vector.load %arg4[%c2_206, %c0_207, %c0_208, %c0_209] : memref<4x9x32x32xbf16, #tpu.memory_space<vmem>>, vector<1x1x32x32xbf16>
    %211 = vector.shape_cast %210 : vector<1x1x32x32xbf16> to vector<32x32xbf16>
    %cst_210 = arith.constant dense<0.000000e+00> : vector<32x216xf32>
    %212 = tpu.matmul %211, %209, %cst_210 {dimension_numbers = #tpu.dot_dimension_numbers<[1], [0], [0], [1], [0, 0, 1, 1], [], []>} : vector<32x32xbf16>, vector<32x216xbf16>, vector<32x216xf32> -> vector<32x216xf32>
    %c0_211 = arith.constant 0 : index
    %c62_212 = arith.constant 62 : index
    %213 = vector.load %arg7[%c0_211, %c62_212] : memref<32x376xf32, #tpu.memory_space<vmem>>, vector<32x216xf32>
    %214 = arith.truncf %213 : vector<32x216xf32> to vector<32x216xbf16>
    %c2_213 = arith.constant 2 : index
    %c1_214 = arith.constant 1 : index
    %c0_215 = arith.constant 0 : index
    %c0_216 = arith.constant 0 : index
    %215 = vector.load %arg4[%c2_213, %c1_214, %c0_215, %c0_216] : memref<4x9x32x32xbf16, #tpu.memory_space<vmem>>, vector<1x1x32x32xbf16>
    %216 = vector.shape_cast %215 : vector<1x1x32x32xbf16> to vector<32x32xbf16>
    %cst_217 = arith.constant dense<0.000000e+00> : vector<32x216xf32>
    %217 = tpu.matmul %216, %214, %cst_217 {dimension_numbers = #tpu.dot_dimension_numbers<[1], [0], [0], [1], [0, 0, 1, 1], [], []>} : vector<32x32xbf16>, vector<32x216xbf16>, vector<32x216xf32> -> vector<32x216xf32>
    %218 = arith.addf %212, %217 : vector<32x216xf32>
    %c0_218 = arith.constant 0 : index
    %c63_219 = arith.constant 63 : index
    %219 = vector.load %arg7[%c0_218, %c63_219] : memref<32x376xf32, #tpu.memory_space<vmem>>, vector<32x216xf32>
    %220 = arith.truncf %219 : vector<32x216xf32> to vector<32x216xbf16>
    %c2_220 = arith.constant 2 : index
    %c2_221 = arith.constant 2 : index
    %c0_222 = arith.constant 0 : index
    %c0_223 = arith.constant 0 : index
    %221 = vector.load %arg4[%c2_220, %c2_221, %c0_222, %c0_223] : memref<4x9x32x32xbf16, #tpu.memory_space<vmem>>, vector<1x1x32x32xbf16>
    %222 = vector.shape_cast %221 : vector<1x1x32x32xbf16> to vector<32x32xbf16>
    %cst_224 = arith.constant dense<0.000000e+00> : vector<32x216xf32>
    %223 = tpu.matmul %222, %220, %cst_224 {dimension_numbers = #tpu.dot_dimension_numbers<[1], [0], [0], [1], [0, 0, 1, 1], [], []>} : vector<32x32xbf16>, vector<32x216xbf16>, vector<32x216xf32> -> vector<32x216xf32>
    %224 = arith.addf %218, %223 : vector<32x216xf32>
    %c0_225 = arith.constant 0 : index
    %c79_226 = arith.constant 79 : index
    %225 = vector.load %arg7[%c0_225, %c79_226] : memref<32x376xf32, #tpu.memory_space<vmem>>, vector<32x216xf32>
    %226 = arith.truncf %225 : vector<32x216xf32> to vector<32x216xbf16>
    %c2_227 = arith.constant 2 : index
    %c3_228 = arith.constant 3 : index
    %c0_229 = arith.constant 0 : index
    %c0_230 = arith.constant 0 : index
    %227 = vector.load %arg4[%c2_227, %c3_228, %c0_229, %c0_230] : memref<4x9x32x32xbf16, #tpu.memory_space<vmem>>, vector<1x1x32x32xbf16>
    %228 = vector.shape_cast %227 : vector<1x1x32x32xbf16> to vector<32x32xbf16>
    %cst_231 = arith.constant dense<0.000000e+00> : vector<32x216xf32>
    %229 = tpu.matmul %228, %226, %cst_231 {dimension_numbers = #tpu.dot_dimension_numbers<[1], [0], [0], [1], [0, 0, 1, 1], [], []>} : vector<32x32xbf16>, vector<32x216xbf16>, vector<32x216xf32> -> vector<32x216xf32>
    %230 = arith.addf %224, %229 : vector<32x216xf32>
    %c0_232 = arith.constant 0 : index
    %c80_233 = arith.constant 80 : index
    %231 = vector.load %arg7[%c0_232, %c80_233] : memref<32x376xf32, #tpu.memory_space<vmem>>, vector<32x216xf32>
    %232 = arith.truncf %231 : vector<32x216xf32> to vector<32x216xbf16>
    %c2_234 = arith.constant 2 : index
    %c4_235 = arith.constant 4 : index
    %c0_236 = arith.constant 0 : index
    %c0_237 = arith.constant 0 : index
    %233 = vector.load %arg4[%c2_234, %c4_235, %c0_236, %c0_237] : memref<4x9x32x32xbf16, #tpu.memory_space<vmem>>, vector<1x1x32x32xbf16>
    %234 = vector.shape_cast %233 : vector<1x1x32x32xbf16> to vector<32x32xbf16>
    %cst_238 = arith.constant dense<0.000000e+00> : vector<32x216xf32>
    %235 = tpu.matmul %234, %232, %cst_238 {dimension_numbers = #tpu.dot_dimension_numbers<[1], [0], [0], [1], [0, 0, 1, 1], [], []>} : vector<32x32xbf16>, vector<32x216xbf16>, vector<32x216xf32> -> vector<32x216xf32>
    %236 = arith.addf %230, %235 : vector<32x216xf32>
    %c0_239 = arith.constant 0 : index
    %c81_240 = arith.constant 81 : index
    %237 = vector.load %arg7[%c0_239, %c81_240] : memref<32x376xf32, #tpu.memory_space<vmem>>, vector<32x216xf32>
    %238 = arith.truncf %237 : vector<32x216xf32> to vector<32x216xbf16>
    %c2_241 = arith.constant 2 : index
    %c5_242 = arith.constant 5 : index
    %c0_243 = arith.constant 0 : index
    %c0_244 = arith.constant 0 : index
    %239 = vector.load %arg4[%c2_241, %c5_242, %c0_243, %c0_244] : memref<4x9x32x32xbf16, #tpu.memory_space<vmem>>, vector<1x1x32x32xbf16>
    %240 = vector.shape_cast %239 : vector<1x1x32x32xbf16> to vector<32x32xbf16>
    %cst_245 = arith.constant dense<0.000000e+00> : vector<32x216xf32>
    %241 = tpu.matmul %240, %238, %cst_245 {dimension_numbers = #tpu.dot_dimension_numbers<[1], [0], [0], [1], [0, 0, 1, 1], [], []>} : vector<32x32xbf16>, vector<32x216xbf16>, vector<32x216xf32> -> vector<32x216xf32>
    %242 = arith.addf %236, %241 : vector<32x216xf32>
    %c0_246 = arith.constant 0 : index
    %c97 = arith.constant 97 : index
    %243 = vector.load %arg7[%c0_246, %c97] : memref<32x376xf32, #tpu.memory_space<vmem>>, vector<32x216xf32>
    %244 = arith.truncf %243 : vector<32x216xf32> to vector<32x216xbf16>
    %c2_247 = arith.constant 2 : index
    %c6_248 = arith.constant 6 : index
    %c0_249 = arith.constant 0 : index
    %c0_250 = arith.constant 0 : index
    %245 = vector.load %arg4[%c2_247, %c6_248, %c0_249, %c0_250] : memref<4x9x32x32xbf16, #tpu.memory_space<vmem>>, vector<1x1x32x32xbf16>
    %246 = vector.shape_cast %245 : vector<1x1x32x32xbf16> to vector<32x32xbf16>
    %cst_251 = arith.constant dense<0.000000e+00> : vector<32x216xf32>
    %247 = tpu.matmul %246, %244, %cst_251 {dimension_numbers = #tpu.dot_dimension_numbers<[1], [0], [0], [1], [0, 0, 1, 1], [], []>} : vector<32x32xbf16>, vector<32x216xbf16>, vector<32x216xf32> -> vector<32x216xf32>
    %248 = arith.addf %242, %247 : vector<32x216xf32>
    %c0_252 = arith.constant 0 : index
    %c98 = arith.constant 98 : index
    %249 = vector.load %arg7[%c0_252, %c98] : memref<32x376xf32, #tpu.memory_space<vmem>>, vector<32x216xf32>
    %250 = arith.truncf %249 : vector<32x216xf32> to vector<32x216xbf16>
    %c2_253 = arith.constant 2 : index
    %c7_254 = arith.constant 7 : index
    %c0_255 = arith.constant 0 : index
    %c0_256 = arith.constant 0 : index
    %251 = vector.load %arg4[%c2_253, %c7_254, %c0_255, %c0_256] : memref<4x9x32x32xbf16, #tpu.memory_space<vmem>>, vector<1x1x32x32xbf16>
    %252 = vector.shape_cast %251 : vector<1x1x32x32xbf16> to vector<32x32xbf16>
    %cst_257 = arith.constant dense<0.000000e+00> : vector<32x216xf32>
    %253 = tpu.matmul %252, %250, %cst_257 {dimension_numbers = #tpu.dot_dimension_numbers<[1], [0], [0], [1], [0, 0, 1, 1], [], []>} : vector<32x32xbf16>, vector<32x216xbf16>, vector<32x216xf32> -> vector<32x216xf32>
    %254 = arith.addf %248, %253 : vector<32x216xf32>
    %c0_258 = arith.constant 0 : index
    %c99 = arith.constant 99 : index
    %255 = vector.load %arg7[%c0_258, %c99] : memref<32x376xf32, #tpu.memory_space<vmem>>, vector<32x216xf32>
    %256 = arith.truncf %255 : vector<32x216xf32> to vector<32x216xbf16>
    %c2_259 = arith.constant 2 : index
    %c8_260 = arith.constant 8 : index
    %c0_261 = arith.constant 0 : index
    %c0_262 = arith.constant 0 : index
    %257 = vector.load %arg4[%c2_259, %c8_260, %c0_261, %c0_262] : memref<4x9x32x32xbf16, #tpu.memory_space<vmem>>, vector<1x1x32x32xbf16>
    %258 = vector.shape_cast %257 : vector<1x1x32x32xbf16> to vector<32x32xbf16>
    %cst_263 = arith.constant dense<0.000000e+00> : vector<32x216xf32>
    %259 = tpu.matmul %258, %256, %cst_263 {dimension_numbers = #tpu.dot_dimension_numbers<[1], [0], [0], [1], [0, 0, 1, 1], [], []>} : vector<32x32xbf16>, vector<32x216xbf16>, vector<32x216xf32> -> vector<32x216xf32>
    %260 = arith.addf %254, %259 : vector<32x216xf32>
    %cst_264 = arith.constant 0.000000e+00 : f32
    %261 = vector.broadcast %cst_264 : f32 to vector<32x216xf32>
    %262 = arith.maximumf %260, %261 : vector<32x216xf32>
    %c0_265 = arith.constant 0 : index
    %c0_266 = arith.constant 0 : index
    %c72 = arith.constant 72 : index
    %263 = vector.load %arg2[%c0_265, %c0_266, %c72] : memref<1x1x360xf32, #tpu.memory_space<vmem>>, vector<1x1x216xf32>
    %264 = vector.shape_cast %263 : vector<1x1x216xf32> to vector<1x216xf32>
    %cst_267 = arith.constant 0.000000e+00 : f32
    %265 = vector.broadcast %cst_267 : f32 to vector<1x216xf32>
    %266 = arith.cmpf ogt, %264, %265 : vector<1x216xf32>
    %cst_268 = arith.constant 0.000000e+00 : f32
    %267 = vector.shape_cast %266 : vector<1x216xi1> to vector<1x216xi1>
    %268 = vector.broadcast %267 : vector<1x216xi1> to vector<32x216xi1>
    %269 = vector.broadcast %cst_268 : f32 to vector<32x216xf32>
    %270 = arith.select %268, %262, %269 : vector<32x216xi1>, vector<32x216xf32>
    %c0_269 = arith.constant 0 : index
    %c80_270 = arith.constant 80 : index
    %271 = vector.load %arg8[%c0_269, %c80_270] : memref<32x376xf32, #tpu.memory_space<vmem>>, vector<32x216xf32>
    tpu.vector_store %arg8[%c0_269, %c80_270], %270 {strides = array<i32>} : memref<32x376xf32, #tpu.memory_space<vmem>>, vector<32x216xf32>,
    %c0_271 = arith.constant 0 : index
    %c79_272 = arith.constant 79 : index
    %272 = vector.load %arg8[%c0_271, %c79_272] : memref<32x376xf32, #tpu.memory_space<vmem>>, vector<32x180xf32>
    %273 = arith.truncf %272 : vector<32x180xf32> to vector<32x180xbf16>
    %c3_273 = arith.constant 3 : index
    %c0_274 = arith.constant 0 : index
    %c0_275 = arith.constant 0 : index
    %c0_276 = arith.constant 0 : index
    %274 = vector.load %arg4[%c3_273, %c0_274, %c0_275, %c0_276] : memref<4x9x32x32xbf16, #tpu.memory_space<vmem>>, vector<1x1x32x32xbf16>
    %275 = vector.shape_cast %274 : vector<1x1x32x32xbf16> to vector<32x32xbf16>
    %cst_277 = arith.constant dense<0.000000e+00> : vector<32x180xf32>
    %276 = tpu.matmul %275, %273, %cst_277 {dimension_numbers = #tpu.dot_dimension_numbers<[1], [0], [0], [1], [0, 0, 1, 1], [], []>} : vector<32x32xbf16>, vector<32x180xbf16>, vector<32x180xf32> -> vector<32x180xf32>
    %c0_278 = arith.constant 0 : index
    %c80_279 = arith.constant 80 : index
    %277 = vector.load %arg8[%c0_278, %c80_279] : memref<32x376xf32, #tpu.memory_space<vmem>>, vector<32x180xf32>
    %278 = arith.truncf %277 : vector<32x180xf32> to vector<32x180xbf16>
    %c3_280 = arith.constant 3 : index
    %c1_281 = arith.constant 1 : index
    %c0_282 = arith.constant 0 : index
    %c0_283 = arith.constant 0 : index
    %279 = vector.load %arg4[%c3_280, %c1_281, %c0_282, %c0_283] : memref<4x9x32x32xbf16, #tpu.memory_space<vmem>>, vector<1x1x32x32xbf16>
    %280 = vector.shape_cast %279 : vector<1x1x32x32xbf16> to vector<32x32xbf16>
    %cst_284 = arith.constant dense<0.000000e+00> : vector<32x180xf32>
    %281 = tpu.matmul %280, %278, %cst_284 {dimension_numbers = #tpu.dot_dimension_numbers<[1], [0], [0], [1], [0, 0, 1, 1], [], []>} : vector<32x32xbf16>, vector<32x180xbf16>, vector<32x180xf32> -> vector<32x180xf32>
    %282 = arith.addf %276, %281 : vector<32x180xf32>
    %c0_285 = arith.constant 0 : index
    %c81_286 = arith.constant 81 : index
    %283 = vector.load %arg8[%c0_285, %c81_286] : memref<32x376xf32, #tpu.memory_space<vmem>>, vector<32x180xf32>
    %284 = arith.truncf %283 : vector<32x180xf32> to vector<32x180xbf16>
    %c3_287 = arith.constant 3 : index
    %c2_288 = arith.constant 2 : index
    %c0_289 = arith.constant 0 : index
    %c0_290 = arith.constant 0 : index
    %285 = vector.load %arg4[%c3_287, %c2_288, %c0_289, %c0_290] : memref<4x9x32x32xbf16, #tpu.memory_space<vmem>>, vector<1x1x32x32xbf16>
    %286 = vector.shape_cast %285 : vector<1x1x32x32xbf16> to vector<32x32xbf16>
    %cst_291 = arith.constant dense<0.000000e+00> : vector<32x180xf32>
    %287 = tpu.matmul %286, %284, %cst_291 {dimension_numbers = #tpu.dot_dimension_numbers<[1], [0], [0], [1], [0, 0, 1, 1], [], []>} : vector<32x32xbf16>, vector<32x180xbf16>, vector<32x180xf32> -> vector<32x180xf32>
    %288 = arith.addf %282, %287 : vector<32x180xf32>
    %c0_292 = arith.constant 0 : index
    %c97_293 = arith.constant 97 : index
    %289 = vector.load %arg8[%c0_292, %c97_293] : memref<32x376xf32, #tpu.memory_space<vmem>>, vector<32x180xf32>
    %290 = arith.truncf %289 : vector<32x180xf32> to vector<32x180xbf16>
    %c3_294 = arith.constant 3 : index
    %c3_295 = arith.constant 3 : index
    %c0_296 = arith.constant 0 : index
    %c0_297 = arith.constant 0 : index
    %291 = vector.load %arg4[%c3_294, %c3_295, %c0_296, %c0_297] : memref<4x9x32x32xbf16, #tpu.memory_space<vmem>>, vector<1x1x32x32xbf16>
    %292 = vector.shape_cast %291 : vector<1x1x32x32xbf16> to vector<32x32xbf16>
    %cst_298 = arith.constant dense<0.000000e+00> : vector<32x180xf32>
    %293 = tpu.matmul %292, %290, %cst_298 {dimension_numbers = #tpu.dot_dimension_numbers<[1], [0], [0], [1], [0, 0, 1, 1], [], []>} : vector<32x32xbf16>, vector<32x180xbf16>, vector<32x180xf32> -> vector<32x180xf32>
    %294 = arith.addf %288, %293 : vector<32x180xf32>
    %c0_299 = arith.constant 0 : index
    %c98_300 = arith.constant 98 : index
    %295 = vector.load %arg8[%c0_299, %c98_300] : memref<32x376xf32, #tpu.memory_space<vmem>>, vector<32x180xf32>
    %296 = arith.truncf %295 : vector<32x180xf32> to vector<32x180xbf16>
    %c3_301 = arith.constant 3 : index
    %c4_302 = arith.constant 4 : index
    %c0_303 = arith.constant 0 : index
    %c0_304 = arith.constant 0 : index
    %297 = vector.load %arg4[%c3_301, %c4_302, %c0_303, %c0_304] : memref<4x9x32x32xbf16, #tpu.memory_space<vmem>>, vector<1x1x32x32xbf16>
    %298 = vector.shape_cast %297 : vector<1x1x32x32xbf16> to vector<32x32xbf16>
    %cst_305 = arith.constant dense<0.000000e+00> : vector<32x180xf32>
    %299 = tpu.matmul %298, %296, %cst_305 {dimension_numbers = #tpu.dot_dimension_numbers<[1], [0], [0], [1], [0, 0, 1, 1], [], []>} : vector<32x32xbf16>, vector<32x180xbf16>, vector<32x180xf32> -> vector<32x180xf32>
    %300 = arith.addf %294, %299 : vector<32x180xf32>
    %c0_306 = arith.constant 0 : index
    %c99_307 = arith.constant 99 : index
    %301 = vector.load %arg8[%c0_306, %c99_307] : memref<32x376xf32, #tpu.memory_space<vmem>>, vector<32x180xf32>
    %302 = arith.truncf %301 : vector<32x180xf32> to vector<32x180xbf16>
    %c3_308 = arith.constant 3 : index
    %c5_309 = arith.constant 5 : index
    %c0_310 = arith.constant 0 : index
    %c0_311 = arith.constant 0 : index
    %303 = vector.load %arg4[%c3_308, %c5_309, %c0_310, %c0_311] : memref<4x9x32x32xbf16, #tpu.memory_space<vmem>>, vector<1x1x32x32xbf16>
    %304 = vector.shape_cast %303 : vector<1x1x32x32xbf16> to vector<32x32xbf16>
    %cst_312 = arith.constant dense<0.000000e+00> : vector<32x180xf32>
    %305 = tpu.matmul %304, %302, %cst_312 {dimension_numbers = #tpu.dot_dimension_numbers<[1], [0], [0], [1], [0, 0, 1, 1], [], []>} : vector<32x32xbf16>, vector<32x180xbf16>, vector<32x180xf32> -> vector<32x180xf32>
    %306 = arith.addf %300, %305 : vector<32x180xf32>
    %c0_313 = arith.constant 0 : index
    %c115 = arith.constant 115 : index
    %307 = vector.load %arg8[%c0_313, %c115] : memref<32x376xf32, #tpu.memory_space<vmem>>, vector<32x180xf32>
    %308 = arith.truncf %307 : vector<32x180xf32> to vector<32x180xbf16>
    %c3_314 = arith.constant 3 : index
    %c6_315 = arith.constant 6 : index
    %c0_316 = arith.constant 0 : index
    %c0_317 = arith.constant 0 : index
    %309 = vector.load %arg4[%c3_314, %c6_315, %c0_316, %c0_317] : memref<4x9x32x32xbf16, #tpu.memory_space<vmem>>, vector<1x1x32x32xbf16>
    %310 = vector.shape_cast %309 : vector<1x1x32x32xbf16> to vector<32x32xbf16>
    %cst_318 = arith.constant dense<0.000000e+00> : vector<32x180xf32>
    %311 = tpu.matmul %310, %308, %cst_318 {dimension_numbers = #tpu.dot_dimension_numbers<[1], [0], [0], [1], [0, 0, 1, 1], [], []>} : vector<32x32xbf16>, vector<32x180xbf16>, vector<32x180xf32> -> vector<32x180xf32>
    %312 = arith.addf %306, %311 : vector<32x180xf32>
    %c0_319 = arith.constant 0 : index
    %c116 = arith.constant 116 : index
    %313 = vector.load %arg8[%c0_319, %c116] : memref<32x376xf32, #tpu.memory_space<vmem>>, vector<32x180xf32>
    %314 = arith.truncf %313 : vector<32x180xf32> to vector<32x180xbf16>
    %c3_320 = arith.constant 3 : index
    %c7_321 = arith.constant 7 : index
    %c0_322 = arith.constant 0 : index
    %c0_323 = arith.constant 0 : index
    %315 = vector.load %arg4[%c3_320, %c7_321, %c0_322, %c0_323] : memref<4x9x32x32xbf16, #tpu.memory_space<vmem>>, vector<1x1x32x32xbf16>
    %316 = vector.shape_cast %315 : vector<1x1x32x32xbf16> to vector<32x32xbf16>
    %cst_324 = arith.constant dense<0.000000e+00> : vector<32x180xf32>
    %317 = tpu.matmul %316, %314, %cst_324 {dimension_numbers = #tpu.dot_dimension_numbers<[1], [0], [0], [1], [0, 0, 1, 1], [], []>} : vector<32x32xbf16>, vector<32x180xbf16>, vector<32x180xf32> -> vector<32x180xf32>
    %318 = arith.addf %312, %317 : vector<32x180xf32>
    %c0_325 = arith.constant 0 : index
    %c117 = arith.constant 117 : index
    %319 = vector.load %arg8[%c0_325, %c117] : memref<32x376xf32, #tpu.memory_space<vmem>>, vector<32x180xf32>
    %320 = arith.truncf %319 : vector<32x180xf32> to vector<32x180xbf16>
    %c3_326 = arith.constant 3 : index
    %c8_327 = arith.constant 8 : index
    %c0_328 = arith.constant 0 : index
    %c0_329 = arith.constant 0 : index
    %321 = vector.load %arg4[%c3_326, %c8_327, %c0_328, %c0_329] : memref<4x9x32x32xbf16, #tpu.memory_space<vmem>>, vector<1x1x32x32xbf16>
    %322 = vector.shape_cast %321 : vector<1x1x32x32xbf16> to vector<32x32xbf16>
    %cst_330 = arith.constant dense<0.000000e+00> : vector<32x180xf32>
    %323 = tpu.matmul %322, %320, %cst_330 {dimension_numbers = #tpu.dot_dimension_numbers<[1], [0], [0], [1], [0, 0, 1, 1], [], []>} : vector<32x32xbf16>, vector<32x180xbf16>, vector<32x180xf32> -> vector<32x180xf32>
    %324 = arith.addf %318, %323 : vector<32x180xf32>
    %c0_331 = arith.constant 0 : index
    %c98_332 = arith.constant 98 : index
    %325 = vector.load %arg7[%c0_331, %c98_332] : memref<32x376xf32, #tpu.memory_space<vmem>>, vector<32x180xf32>
    %326 = arith.addf %324, %325 : vector<32x180xf32>
    %c0_333 = arith.constant 0 : index
    %c0_334 = arith.constant 0 : index
    %c90 = arith.constant 90 : index
    %327 = vector.load %arg2[%c0_333, %c0_334, %c90] : memref<1x1x360xf32, #tpu.memory_space<vmem>>, vector<1x1x180xf32>
    %328 = vector.shape_cast %327 : vector<1x1x180xf32> to vector<1x180xf32>
    %cst_335 = arith.constant 0.000000e+00 : f32
    %329 = vector.broadcast %cst_335 : f32 to vector<1x180xf32>
    %330 = arith.cmpf ogt, %328, %329 : vector<1x180xf32>
    %cst_336 = arith.constant 0.000000e+00 : f32
    %331 = vector.shape_cast %330 : vector<1x180xi1> to vector<1x180xi1>
    %332 = vector.broadcast %331 : vector<1x180xi1> to vector<32x180xi1>
    %333 = vector.broadcast %cst_336 : f32 to vector<32x180xf32>
    %334 = arith.select %332, %326, %333 : vector<32x180xi1>, vector<32x180xf32>
    %c0_337 = arith.constant 0 : index
    %c98_338 = arith.constant 98 : index
    %335 = vector.load %arg7[%c0_337, %c98_338] : memref<32x376xf32, #tpu.memory_space<vmem>>, vector<32x180xf32>
    tpu.vector_store %arg7[%c0_337, %c98_338], %334 {strides = array<i32>} : memref<32x376xf32, #tpu.memory_space<vmem>>, vector<32x180xf32>,
    %c0_339 = arith.constant 0 : index
    %c97_340 = arith.constant 97 : index
    %336 = vector.load %arg7[%c0_339, %c97_340] : memref<32x376xf32, #tpu.memory_space<vmem>>, vector<32x144xf32>
    %337 = arith.truncf %336 : vector<32x144xf32> to vector<32x144xbf16>
    %c0_341 = arith.constant 0 : index
    %c0_342 = arith.constant 0 : index
    %c0_343 = arith.constant 0 : index
    %338 = vector.load %arg5[%c0_341, %c0_342, %c0_343] : memref<9x1x32xbf16, #tpu.memory_space<vmem>>, vector<1x1x32xbf16>
    %339 = vector.shape_cast %338 : vector<1x1x32xbf16> to vector<1x32xbf16>
    %cst_344 = arith.constant dense<0.000000e+00> : vector<1x144xf32>
    %340 = tpu.matmul %339, %337, %cst_344 {dimension_numbers = #tpu.dot_dimension_numbers<[1], [0], [0], [1], [0, 0, 1, 1], [], []>} : vector<1x32xbf16>, vector<32x144xbf16>, vector<1x144xf32> -> vector<1x144xf32>
    %c0_345 = arith.constant 0 : index
    %c98_346 = arith.constant 98 : index
    %341 = vector.load %arg7[%c0_345, %c98_346] : memref<32x376xf32, #tpu.memory_space<vmem>>, vector<32x144xf32>
    %342 = arith.truncf %341 : vector<32x144xf32> to vector<32x144xbf16>
    %c1_347 = arith.constant 1 : index
    %c0_348 = arith.constant 0 : index
    %c0_349 = arith.constant 0 : index
    %343 = vector.load %arg5[%c1_347, %c0_348, %c0_349] : memref<9x1x32xbf16, #tpu.memory_space<vmem>>, vector<1x1x32xbf16>
    %344 = vector.shape_cast %343 : vector<1x1x32xbf16> to vector<1x32xbf16>
    %cst_350 = arith.constant dense<0.000000e+00> : vector<1x144xf32>
    %345 = tpu.matmul %344, %342, %cst_350 {dimension_numbers = #tpu.dot_dimension_numbers<[1], [0], [0], [1], [0, 0, 1, 1], [], []>} : vector<1x32xbf16>, vector<32x144xbf16>, vector<1x144xf32> -> vector<1x144xf32>
    %346 = arith.addf %340, %345 : vector<1x144xf32>
    %c0_351 = arith.constant 0 : index
    %c99_352 = arith.constant 99 : index
    %347 = vector.load %arg7[%c0_351, %c99_352] : memref<32x376xf32, #tpu.memory_space<vmem>>, vector<32x144xf32>
    %348 = arith.truncf %347 : vector<32x144xf32> to vector<32x144xbf16>
    %c2_353 = arith.constant 2 : index
    %c0_354 = arith.constant 0 : index
    %c0_355 = arith.constant 0 : index
    %349 = vector.load %arg5[%c2_353, %c0_354, %c0_355] : memref<9x1x32xbf16, #tpu.memory_space<vmem>>, vector<1x1x32xbf16>
    %350 = vector.shape_cast %349 : vector<1x1x32xbf16> to vector<1x32xbf16>
    %cst_356 = arith.constant dense<0.000000e+00> : vector<1x144xf32>
    %351 = tpu.matmul %350, %348, %cst_356 {dimension_numbers = #tpu.dot_dimension_numbers<[1], [0], [0], [1], [0, 0, 1, 1], [], []>} : vector<1x32xbf16>, vector<32x144xbf16>, vector<1x144xf32> -> vector<1x144xf32>
    %352 = arith.addf %346, %351 : vector<1x144xf32>
    %c0_357 = arith.constant 0 : index
    %c115_358 = arith.constant 115 : index
    %353 = vector.load %arg7[%c0_357, %c115_358] : memref<32x376xf32, #tpu.memory_space<vmem>>, vector<32x144xf32>
    %354 = arith.truncf %353 : vector<32x144xf32> to vector<32x144xbf16>
    %c3_359 = arith.constant 3 : index
    %c0_360 = arith.constant 0 : index
    %c0_361 = arith.constant 0 : index
    %355 = vector.load %arg5[%c3_359, %c0_360, %c0_361] : memref<9x1x32xbf16, #tpu.memory_space<vmem>>, vector<1x1x32xbf16>
    %356 = vector.shape_cast %355 : vector<1x1x32xbf16> to vector<1x32xbf16>
    %cst_362 = arith.constant dense<0.000000e+00> : vector<1x144xf32>
    %357 = tpu.matmul %356, %354, %cst_362 {dimension_numbers = #tpu.dot_dimension_numbers<[1], [0], [0], [1], [0, 0, 1, 1], [], []>} : vector<1x32xbf16>, vector<32x144xbf16>, vector<1x144xf32> -> vector<1x144xf32>
    %358 = arith.addf %352, %357 : vector<1x144xf32>
    %c0_363 = arith.constant 0 : index
    %c116_364 = arith.constant 116 : index
    %359 = vector.load %arg7[%c0_363, %c116_364] : memref<32x376xf32, #tpu.memory_space<vmem>>, vector<32x144xf32>
    %360 = arith.truncf %359 : vector<32x144xf32> to vector<32x144xbf16>
    %c4_365 = arith.constant 4 : index
    %c0_366 = arith.constant 0 : index
    %c0_367 = arith.constant 0 : index
    %361 = vector.load %arg5[%c4_365, %c0_366, %c0_367] : memref<9x1x32xbf16, #tpu.memory_space<vmem>>, vector<1x1x32xbf16>
    %362 = vector.shape_cast %361 : vector<1x1x32xbf16> to vector<1x32xbf16>
    %cst_368 = arith.constant dense<0.000000e+00> : vector<1x144xf32>
    %363 = tpu.matmul %362, %360, %cst_368 {dimension_numbers = #tpu.dot_dimension_numbers<[1], [0], [0], [1], [0, 0, 1, 1], [], []>} : vector<1x32xbf16>, vector<32x144xbf16>, vector<1x144xf32> -> vector<1x144xf32>
    %364 = arith.addf %358, %363 : vector<1x144xf32>
    %c0_369 = arith.constant 0 : index
    %c117_370 = arith.constant 117 : index
    %365 = vector.load %arg7[%c0_369, %c117_370] : memref<32x376xf32, #tpu.memory_space<vmem>>, vector<32x144xf32>
    %366 = arith.truncf %365 : vector<32x144xf32> to vector<32x144xbf16>
    %c5_371 = arith.constant 5 : index
    %c0_372 = arith.constant 0 : index
    %c0_373 = arith.constant 0 : index
    %367 = vector.load %arg5[%c5_371, %c0_372, %c0_373] : memref<9x1x32xbf16, #tpu.memory_space<vmem>>, vector<1x1x32xbf16>
    %368 = vector.shape_cast %367 : vector<1x1x32xbf16> to vector<1x32xbf16>
    %cst_374 = arith.constant dense<0.000000e+00> : vector<1x144xf32>
    %369 = tpu.matmul %368, %366, %cst_374 {dimension_numbers = #tpu.dot_dimension_numbers<[1], [0], [0], [1], [0, 0, 1, 1], [], []>} : vector<1x32xbf16>, vector<32x144xbf16>, vector<1x144xf32> -> vector<1x144xf32>
    %370 = arith.addf %364, %369 : vector<1x144xf32>
    %c0_375 = arith.constant 0 : index
    %c133 = arith.constant 133 : index
    %371 = vector.load %arg7[%c0_375, %c133] : memref<32x376xf32, #tpu.memory_space<vmem>>, vector<32x144xf32>
    %372 = arith.truncf %371 : vector<32x144xf32> to vector<32x144xbf16>
    %c6_376 = arith.constant 6 : index
    %c0_377 = arith.constant 0 : index
    %c0_378 = arith.constant 0 : index
    %373 = vector.load %arg5[%c6_376, %c0_377, %c0_378] : memref<9x1x32xbf16, #tpu.memory_space<vmem>>, vector<1x1x32xbf16>
    %374 = vector.shape_cast %373 : vector<1x1x32xbf16> to vector<1x32xbf16>
    %cst_379 = arith.constant dense<0.000000e+00> : vector<1x144xf32>
    %375 = tpu.matmul %374, %372, %cst_379 {dimension_numbers = #tpu.dot_dimension_numbers<[1], [0], [0], [1], [0, 0, 1, 1], [], []>} : vector<1x32xbf16>, vector<32x144xbf16>, vector<1x144xf32> -> vector<1x144xf32>
    %376 = arith.addf %370, %375 : vector<1x144xf32>
    %c0_380 = arith.constant 0 : index
    %c134 = arith.constant 134 : index
    %377 = vector.load %arg7[%c0_380, %c134] : memref<32x376xf32, #tpu.memory_space<vmem>>, vector<32x144xf32>
    %378 = arith.truncf %377 : vector<32x144xf32> to vector<32x144xbf16>
    %c7_381 = arith.constant 7 : index
    %c0_382 = arith.constant 0 : index
    %c0_383 = arith.constant 0 : index
    %379 = vector.load %arg5[%c7_381, %c0_382, %c0_383] : memref<9x1x32xbf16, #tpu.memory_space<vmem>>, vector<1x1x32xbf16>
    %380 = vector.shape_cast %379 : vector<1x1x32xbf16> to vector<1x32xbf16>
    %cst_384 = arith.constant dense<0.000000e+00> : vector<1x144xf32>
    %381 = tpu.matmul %380, %378, %cst_384 {dimension_numbers = #tpu.dot_dimension_numbers<[1], [0], [0], [1], [0, 0, 1, 1], [], []>} : vector<1x32xbf16>, vector<32x144xbf16>, vector<1x144xf32> -> vector<1x144xf32>
    %382 = arith.addf %376, %381 : vector<1x144xf32>
    %c0_385 = arith.constant 0 : index
    %c135 = arith.constant 135 : index
    %383 = vector.load %arg7[%c0_385, %c135] : memref<32x376xf32, #tpu.memory_space<vmem>>, vector<32x144xf32>
    %384 = arith.truncf %383 : vector<32x144xf32> to vector<32x144xbf16>
    %c8_386 = arith.constant 8 : index
    %c0_387 = arith.constant 0 : index
    %c0_388 = arith.constant 0 : index
    %385 = vector.load %arg5[%c8_386, %c0_387, %c0_388] : memref<9x1x32xbf16, #tpu.memory_space<vmem>>, vector<1x1x32xbf16>
    %386 = vector.shape_cast %385 : vector<1x1x32xbf16> to vector<1x32xbf16>
    %cst_389 = arith.constant dense<0.000000e+00> : vector<1x144xf32>
    %387 = tpu.matmul %386, %384, %cst_389 {dimension_numbers = #tpu.dot_dimension_numbers<[1], [0], [0], [1], [0, 0, 1, 1], [], []>} : vector<1x32xbf16>, vector<32x144xbf16>, vector<1x144xf32> -> vector<1x144xf32>
    %388 = arith.addf %382, %387 : vector<1x144xf32>
    %c0_390 = arith.constant 0 : index
    %c0_391 = arith.constant 0 : index
    %c108 = arith.constant 108 : index
    %389 = vector.load %arg2[%c0_390, %c0_391, %c108] : memref<1x1x360xf32, #tpu.memory_space<vmem>>, vector<1x1x144xf32>
    %390 = vector.shape_cast %389 : vector<1x1x144xf32> to vector<1x144xf32>
    %cst_392 = arith.constant 0.000000e+00 : f32
    %391 = vector.broadcast %cst_392 : f32 to vector<1x144xf32>
    %392 = arith.cmpf ogt, %390, %391 : vector<1x144xf32>
    %cst_393 = arith.constant 0.000000e+00 : f32
    %393 = vector.broadcast %cst_393 : f32 to vector<1x144xf32>
    %394 = arith.select %392, %388, %393 : vector<1x144xi1>, vector<1x144xf32>
    %c0_394 = arith.constant 0 : index
    %c0_395 = arith.constant 0 : index
    %c0_396 = arith.constant 0 : index
    %395 = vector.load %arg6[%c0_394, %c0_395, %c0_396] : memref<1x1x144xf32, #tpu.memory_space<vmem>>, vector<1x1x144xf32>
    %396 = vector.shape_cast %395 : vector<1x1x144xf32> to vector<1x144xf32>
    %397 = vector.shape_cast %394 : vector<1x144xf32> to vector<1x1x144xf32>
    tpu.vector_store %arg6[%c0_394, %c0_395, %c0_396], %397 {strides = array<i32>} : memref<1x1x144xf32, #tpu.memory_space<vmem>>, vector<1x1x144xf32>,
    return
  }
  func.func @transform_0(%arg0: i32) -> (i32, i32, i32) {
    %c0_i32 = arith.constant 0 : i32
    %c0_i32_0 = arith.constant 0 : i32
    %c0_i32_1 = arith.constant 0 : i32
    return %arg0, %c0_i32, %c0_i32_0 : i32, i32, i32
  }
  func.func @transform_1(%arg0: i32) -> (i32, i32, i32) {
    %c0_i32 = arith.constant 0 : i32
    %c0_i32_0 = arith.constant 0 : i32
    %c0_i32_1 = arith.constant 0 : i32
    return %arg0, %c0_i32, %c0_i32_0 : i32, i32, i32
  }
  func.func @transform_2(%arg0: i32) -> (i32, i32, i32) {
    %c0_i32 = arith.constant 0 : i32
    %c0_i32_0 = arith.constant 0 : i32
    %c0_i32_1 = arith.constant 0 : i32
    %c0_i32_2 = arith.constant 0 : i32
    return %c0_i32, %c0_i32_0, %c0_i32_1 : i32, i32, i32
  }
  func.func @transform_3(%arg0: i32) -> (i32, i32, i32, i32) {
    %c0_i32 = arith.constant 0 : i32
    %c0_i32_0 = arith.constant 0 : i32
    %c0_i32_1 = arith.constant 0 : i32
    %c0_i32_2 = arith.constant 0 : i32
    %c0_i32_3 = arith.constant 0 : i32
    return %c0_i32, %c0_i32_0, %c0_i32_1, %c0_i32_2 : i32, i32, i32, i32
  }
  func.func @transform_4(%arg0: i32) -> (i32, i32, i32) {
    %c0_i32 = arith.constant 0 : i32
    %c0_i32_0 = arith.constant 0 : i32
    %c0_i32_1 = arith.constant 0 : i32
    %c0_i32_2 = arith.constant 0 : i32
    return %c0_i32, %c0_i32_0, %c0_i32_1 : i32, i32, i32
  }
  func.func @transform_5(%arg0: i32) -> (i32, i32, i32) {
    %c0_i32 = arith.constant 0 : i32
    %c0_i32_0 = arith.constant 0 : i32
    %c0_i32_1 = arith.constant 0 : i32
    return %arg0, %c0_i32, %c0_i32_0 : i32, i32, i32
  }
}

</mosaic_0001>

<llo_original>
// kernel: _lambda_.1
$region0: #{_lambda_.1}
  #allocation0 [shape = 'u32[]', space=smem, size = 0x4, offset = 0x4, fixed_abs, tag = 'smem constant byte address 0x4 - core index']
  #allocation1 [shape = 'u32[144,128]{1,0:T(1,128)}', space=vmem, size = 0x12000, scoped, tag = 'internal scratch']
  #allocation2 [shape = 'f32[32,376]{1,0:T(8,128)}', space=vmem, size = 0xc000, scoped, tag = 'scratch operand']
  #allocation3 [shape = 'f32[32,376]{1,0:T(8,128)}', space=vmem, size = 0xc000, scoped, tag = 'scratch operand']
  %s0 = inlined_call_operand.vmem [shape: f32[2,2,376], index: 0, kind: input, shape index: {}]
  %s1 = inlined_call_operand.vmem [shape: f32[2,1,360], index: 1, kind: input, shape index: {}]
  %s2 = inlined_call_operand.vmem [shape: bf16[9,32,2], index: 2, kind: input, shape index: {}]
  %s3 = inlined_call_operand.hbm [shape: bf16[4,9,32,32], index: 3, kind: input, shape index: {}]
  %s4 = inlined_call_operand.vmem [shape: bf16[9,1,32], index: 4, kind: input, shape index: {}]
  %s5 = inlined_call_operand.vmem [shape: f32[2,1,144], index: 5, kind: output, shape index: {}]
  %s6 = sld [smem:[#allocation0]]
  $region57: #{_lambda_.1} parent=0
    _
  %s8 = ssub.s32 1, %s6
  %s9 = scalar_select 0, %s8, %s6
  $region1: #{_lambda_.1} parent=0
    #allocation4 [shape = 'u8[294912]{0}', space=vmem, size = 0x48000, scoped, tag = 'input window, operand 3, single buffered']
    #allocation5 [shape = 's32[2]{0}', space=sflag, size = 0x8, scoped, tag = 'scoped memory for _lambda_.1']
    %10 = vsyncpa [#allocation5], 0
    loop: start=0, step=1, limit=4
    $region2: #{_lambda_.1} parent=1 // loop_pre_header
      _
    $region3: #{_lambda_.1} parent=1 // loop_header
      %s12 = sphi 0, %s16
      %p13 = scmp.ge.s32.totalorder %s12, 4
      %s22 = sphi 0, %s24
      %s25 = sphi 0, %s22
      %s26 = sphi 0, %s25
      %s42 = sphi 0, %s26
      %s48 = sphi 0, %s50
      %s51 = sphi 0, %s48
      %s52 = sphi 0, %s51
      %s68 = sphi 0, %s52
      %s72 = sphi 0, %s72
      %s74 = sphi 0, %s72
      %s75 = sphi 0, %s74
      %s89 = sphi 0, %s75
      %s93 = sphi 0, %s93
      %s95 = sphi 0, %s93
      %s96 = sphi 0, %s95
      %s110 = sphi 0, %s96
      %s114 = sphi 0, %s114
      %s116 = sphi 0, %s114
      %s117 = sphi 0, %s116
      %s131 = sphi 0, %s117
      %s137 = sphi 0, %s139
      %s140 = sphi 0, %s137
      %s141 = sphi 0, %s140
      %s157 = sphi 0, %s141
    $region4: #{_lambda_.1} parent=1 // loop_header_branch
      %15 = sbr.rel (%p13) target = $region8
    $region5: #{_lambda_.1} parent=1 // loop_body
      %s17 = ssub.s32 %s12, 1
      %s18 = ssub.s32 %s12, 2
      %s19 = sadd.s32 %s12, 1
      %s20 = ssub.s32 %s12, %s19
      %p21 = scmp.eq.s32.totalorder %s20, 0
      %s23 = sadd.s32 %s22, 1
      %s24 = scalar_select %p21, %s22, %s23
      %p27 = pneg %p21
      %p28 = scmp.eq.s32.totalorder %s12, 1
      %p29 = por %p27, %p28
      %p30 = scmp.ne.s32.totalorder %s22, %s25
      %p31 = scmp.eq.s32.totalorder %s12, 0
      %p32 = por %p30, %p31
      %p33 = scmp.ne.s32.totalorder %s22, %s25
      %p34 = scmp.eq.s32.totalorder %s17, 1
      %p35 = por %p33, %p34
      %p36 = scmp.ne.s32.totalorder %s25, %s26
      %p37 = scmp.eq.s32.totalorder %s17, 0
      %p38 = por %p36, %p37
      %p39 = scmp.ne.s32.totalorder %s25, %s26
      %p40 = scmp.eq.s32.totalorder %s18, 1
      %p41 = por %p39, %p40
      %p43 = scmp.ne.s32.totalorder %s26, %s42
      %p44 = scmp.eq.s32.totalorder %s18, 0
      %p45 = por %p43, %p44
      %s46 = ssub.s32 %s12, %s19
      %p47 = scmp.eq.s32.totalorder %s46, 0
      %s49 = sadd.s32 %s48, 1
      %s50 = scalar_select %p47, %s48, %s49
      %p53 = pneg %p47
      %p54 = scmp.eq.s32.totalorder %s12, 1
      %p55 = por %p53, %p54
      %p56 = scmp.ne.s32.totalorder %s48, %s51
      %p57 = scmp.eq.s32.totalorder %s12, 0
      %p58 = por %p56, %p57
      %p59 = scmp.ne.s32.totalorder %s48, %s51
      %p60 = scmp.eq.s32.totalorder %s17, 1
      %p61 = por %p59, %p60
      %p62 = scmp.ne.s32.totalorder %s51, %s52
      %p63 = scmp.eq.s32.totalorder %s17, 0
      %p64 = por %p62, %p63
      %p65 = scmp.ne.s32.totalorder %s51, %s52
      %p66 = scmp.eq.s32.totalorder %s18, 1
      %p67 = por %p65, %p66
      %p69 = scmp.ne.s32.totalorder %s52, %s68
      %p70 = scmp.eq.s32.totalorder %s18, 0
      %p71 = por %p69, %p70
      %s73 = sadd.s32 %s72, 1
      %p76 = scmp.eq.s32.totalorder %s12, 1
      %p77 = scmp.ne.s32.totalorder %s72, %s74
      %p78 = scmp.eq.s32.totalorder %s12, 0
      %p79 = por %p77, %p78
      %p80 = scmp.ne.s32.totalorder %s72, %s74
      %p81 = scmp.eq.s32.totalorder %s17, 1
      %p82 = por %p80, %p81
      %p83 = scmp.ne.s32.totalorder %s74, %s75
      %p84 = scmp.eq.s32.totalorder %s17, 0
      %p85 = por %p83, %p84
      %p86 = scmp.ne.s32.totalorder %s74, %s75
      %p87 = scmp.eq.s32.totalorder %s18, 1
      %p88 = por %p86, %p87
      %p90 = scmp.ne.s32.totalorder %s75, %s89
      %p91 = scmp.eq.s32.totalorder %s18, 0
      %p92 = por %p90, %p91
      %s94 = sadd.s32 %s93, 1
      %p97 = scmp.eq.s32.totalorder %s12, 1
      %p98 = scmp.ne.s32.totalorder %s93, %s95
      %p99 = scmp.eq.s32.totalorder %s12, 0
      %p100 = por %p98, %p99
      %p101 = scmp.ne.s32.totalorder %s93, %s95
      %p102 = scmp.eq.s32.totalorder %s17, 1
      %p103 = por %p101, %p102
      %p104 = scmp.ne.s32.totalorder %s95, %s96
      %p105 = scmp.eq.s32.totalorder %s17, 0
      %p106 = por %p104, %p105
      %p107 = scmp.ne.s32.totalorder %s95, %s96
      %p108 = scmp.eq.s32.totalorder %s18, 1
      %p109 = por %p107, %p108
      %p111 = scmp.ne.s32.totalorder %s96, %s110
      %p112 = scmp.eq.s32.totalorder %s18, 0
      %p113 = por %p111, %p112
      %s115 = sadd.s32 %s114, 1
      %p118 = scmp.eq.s32.totalorder %s12, 1
      %p119 = scmp.ne.s32.totalorder %s114, %s116
      %p120 = scmp.eq.s32.totalorder %s12, 0
      %p121 = por %p119, %p120
      %p122 = scmp.ne.s32.totalorder %s114, %s116
      %p123 = scmp.eq.s32.totalorder %s17, 1
      %p124 = por %p122, %p123
      %p125 = scmp.ne.s32.totalorder %s116, %s117
      %p126 = scmp.eq.s32.totalorder %s17, 0
      %p127 = por %p125, %p126
      %p128 = scmp.ne.s32.totalorder %s116, %s117
      %p129 = scmp.eq.s32.totalorder %s18, 1
      %p130 = por %p128, %p129
      %p132 = scmp.ne.s32.totalorder %s117, %s131
      %p133 = scmp.eq.s32.totalorder %s18, 0
      %p134 = por %p132, %p133
      %s135 = ssub.s32 %s12, %s19
      %p136 = scmp.eq.s32.totalorder %s135, 0
      %s138 = sadd.s32 %s137, 1
      %s139 = scalar_select %p136, %s137, %s138
      %p142 = pneg %p136
      %p143 = scmp.eq.s32.totalorder %s12, 1
      %p144 = por %p142, %p143
      %p145 = scmp.ne.s32.totalorder %s137, %s140
      %p146 = scmp.eq.s32.totalorder %s12, 0
      %p147 = por %p145, %p146
      %p148 = scmp.ne.s32.totalorder %s137, %s140
      %p149 = scmp.eq.s32.totalorder %s17, 1
      %p150 = por %p148, %p149
      %p151 = scmp.ne.s32.totalorder %s140, %s141
      %p152 = scmp.eq.s32.totalorder %s17, 0
      %p153 = por %p151, %p152
      %p154 = scmp.ne.s32.totalorder %s140, %s141
      %p155 = scmp.eq.s32.totalorder %s18, 1
      %p156 = por %p154, %p155
      %p158 = scmp.ne.s32.totalorder %s141, %s157
      %p159 = scmp.eq.s32.totalorder %s18, 0
      %p160 = por %p158, %p159
      %p161 = scmp.le.s32.totalorder 1, %s12
      %p162 = scmp.lt.s32.totalorder %s12, 3
      %p163 = pnand %p161, %p162
      %p164 = pneg %p163
      // Predicated region
      $region9: #{_lambda_.1} parent=5 // pred_check
        _
      $region10: #{_lambda_.1} parent=5 // pred_check_branch
        %166 = sbr.rel (%p163) target = $region12
      $region11: #{_lambda_.1} parent=5 // pred_region
        %s167 = ssub.s32 %s12, 1
        // Predicated region
        $region13: #{_lambda_.1} parent=11 // pred_check
          %p168 = pneg %p85
        $region14: #{_lambda_.1} parent=11 // pred_check_branch
          %170 = sbr.rel (%p168) target = $region16
        $region15: #{_lambda_.1} parent=11 // pred_region
          _
        $region16: #{_lambda_.1} parent=11 // pred_fallthru
          _
        // Predicated region
        $region17: #{_lambda_.1} parent=11 // pred_check
          %p171 = pneg %p106
        $region18: #{_lambda_.1} parent=11 // pred_check_branch
          %173 = sbr.rel (%p171) target = $region20
        $region19: #{_lambda_.1} parent=11 // pred_region
          %s175 = ssub.s32 9216, 9216
          %176 = vsyncadd [#allocation5], %s175
          %s177 = sshll.u32 [#allocation4], 4
          %s178 = int_to_ptr.vmem [resolvable:$true] %s177
          %183 = dma.hbm_to_vmem [thread:$0]  %s3, 9216, %s178, [#allocation5], 64, 64, 4
        $region20: #{_lambda_.1} parent=11 // pred_fallthru
          _
        // Predicated region
        $region21: #{_lambda_.1} parent=11 // pred_check
          %p184 = pneg %p127
        $region22: #{_lambda_.1} parent=11 // pred_check_branch
          %186 = sbr.rel (%p184) target = $region24
        $region23: #{_lambda_.1} parent=11 // pred_region
          _
        $region24: #{_lambda_.1} parent=11 // pred_fallthru
          _
      $region12: #{_lambda_.1} parent=5 // pred_fallthru
        _
      %p187 = scmp.lt.s32.totalorder %s12, 2
      // Predicated region
      $region25: #{_lambda_.1} parent=5 // pred_check
        %p188 = pneg %p187
      $region26: #{_lambda_.1} parent=5 // pred_check_branch
        %190 = sbr.rel (%p188) target = $region28
      $region27: #{_lambda_.1} parent=5 // pred_region
        // Predicated region
        $region29: #{_lambda_.1} parent=27 // pred_check
          %p191 = pneg %p32
        $region30: #{_lambda_.1} parent=27 // pred_check_branch
          %193 = sbr.rel (%p191) target = $region32
        $region31: #{_lambda_.1} parent=27 // pred_region
          %p194 = scmp.lt.s32.totalorder %s12, 1
          %s195 = scalar_select %p194, %s12, 1
          %s196 = smul.addr %s195, 3
          %s197 = smul.addr %s196, 2
          %s198 = scalar_lea.vmem %s0, %s197
        $region32: #{_lambda_.1} parent=27 // pred_fallthru
          _
        // Predicated region
        $region33: #{_lambda_.1} parent=27 // pred_check
          %p199 = pneg %p58
        $region34: #{_lambda_.1} parent=27 // pred_check_branch
          %201 = sbr.rel (%p199) target = $region36
        $region35: #{_lambda_.1} parent=27 // pred_region
          %p202 = scmp.lt.s32.totalorder %s12, 1
          %s203 = scalar_select %p202, %s12, 1
          %s204 = smul.addr %s203, 3
          %s205 = scalar_lea.vmem %s1, %s204
        $region36: #{_lambda_.1} parent=27 // pred_fallthru
          _
      $region28: #{_lambda_.1} parent=5 // pred_fallthru
        _
      %p206 = scmp.le.s32.totalorder 1, %s12
      %p207 = scmp.lt.s32.totalorder %s12, 3
      %p208 = pnand %p206, %p207
      %p209 = pneg %p208
      // Predicated region
      $region37: #{_lambda_.1} parent=5 // pred_check
        _
      $region38: #{_lambda_.1} parent=5 // pred_check_branch
        %211 = sbr.rel (%p208) target = $region40
      $region39: #{_lambda_.1} parent=5 // pred_region
        %s212 = ssub.s32 %s12, 1
        // Predicated region
        $region41: #{_lambda_.1} parent=39 // pred_check
          %p213 = pneg %p106
        $region42: #{_lambda_.1} parent=39 // pred_check_branch
          %215 = sbr.rel (%p213) target = $region44
        $region43: #{_lambda_.1} parent=39 // pred_region
          %216 = dma.done [#allocation5], 9216
        $region44: #{_lambda_.1} parent=39 // pred_fallthru
          _
        %p217 = scmp.lt.s32.totalorder %s17, 1
        %s218 = scalar_select %p217, %s17, 1
        %s219 = smul.addr %s218, 3
        %s220 = smul.addr %s219, 2
        %s221 = scalar_lea.vmem %s0, %s220
        %p222 = pneg %p38
        %p223 = pneg %p35
        %p224 = scmp.lt.s32.totalorder %s17, 1
        %s225 = scalar_select %p224, %s17, 1
        %s226 = smul.addr %s225, 3
        %s227 = scalar_lea.vmem %s1, %s226
        %p228 = pneg %p64
        %p229 = pneg %p61
        %p230 = pneg %p85
        %p231 = pneg %p82
        %p232 = pneg %p106
        %p233 = pneg %p103
        %p234 = pneg %p127
        %p235 = pneg %p124
        %p236 = pneg %p153
        %p237 = pneg %p150
        %p238 = scmp.lt.s32.totalorder %s17, 1
        %s239 = scalar_select %p238, %s17, 1
        %s240 = smul.addr %s239, 2
        %s241 = scalar_lea.vmem %s5, %s240
        %p242 = scmp.lt.s32.totalorder %s17, 1
        %s243 = scalar_select %p242, %s17, 1
        %s244 = smul.addr %s243, 3
        %s245 = smul.addr %s244, 2
        %s246 = scalar_lea.vmem %s0, %s245
        %p247 = scmp.lt.s32.totalorder %s17, 1
        %s248 = scalar_select %p247, %s17, 1
        %s249 = smul.addr %s248, 3
        %s250 = scalar_lea.vmem %s1, %s249
        %p251 = scmp.lt.s32.totalorder %s17, 1
        %s252 = scalar_select %p251, %s17, 1
        %s253 = smul.addr %s252, 2
        %s254 = scalar_lea.vmem %s5, %s253
        %v256 = vld [vmem:[%s246] sm:$0x3f]
        %v258 = vcombine.high %v256, %v256
        %v260 = vunpack.c.l.s4 1983009808
        %v261 = vunpack.c.0.s8 %v260
        %v262 = vlaneseq
        %v263 = vshrl.u32 %v262, 7
        %v264 = vsub.s32 %v261, %v263
        %v265 = vrot.slane %v256, %v264
        %v267 = vunpack.c.l.s4 1983009808
        %v268 = vunpack.c.0.s8 %v267
        %v269 = vlaneseq
        %v270 = vshrl.u32 %v269, 7
        %v271 = vsub.s32 %v268, %v270
        %v272 = vrot.slane %v258, %v271
        %v273 = vcombine.high %v265, %v265
        %v277 = vpack.c.bf16 %v265, %v265
        %v278 = vpack.c.bf16 %v273, %v273
        %v279 = vpack.c.bf16 %v272, %v272
        %v280 = vld [vmem:[%s2] sm:$0xf]
        %v281 = vld [vmem:[%s2 + $0x4] sm:$0xf]
        %v282 = vld [vmem:[%s2 + $0x8] sm:$0xf]
        %v283 = vld [vmem:[%s2 + $0xc] sm:$0xf]
        %s284 = scalar_lea.vmem %s2, 16
        %v285 = vld [vmem:[%s284] sm:$0xf]
        %v286 = vld [vmem:[%s284 + $0x4] sm:$0xf]
        %v287 = vld [vmem:[%s284 + $0x8] sm:$0xf]
        %v288 = vld [vmem:[%s284 + $0xc] sm:$0xf]
        %v293 = vunpack.c.l.b16 %v285
        %v294 = vunpack.c.l.b16 %v286
        %v295 = vunpack.c.l.b16 %v287
        %v296 = vunpack.c.l.b16 %v288
        %v297 = vpack.c.b16 %v294, %v293
        %v298 = vpack.c.b16 %v296, %v295
        %302 = vrot.lane.b32.xlu0 %v277, 120
        %v303 = vpop.permute.xlu0 %302
        %304 = vrot.lane.b32.xlu0 %v278, 120
        %v305 = vpop.permute.xlu0 %304
        %306 = vrot.lane.b32.xlu0 %v279, 120
        %v307 = vpop.permute.xlu0 %306
        %vm308 = vcmask 982016
        %v309 = vsel %vm308, %v303, %v305
        %v310 = vsel %vm308, %v305, %v307
        %vm311 = vcmask 15360
        %v313 = vsel %vm311, %v297, 0
        %v316 = vsel %vm311, %v298, 0
        %vm318 = vcmask 1040384
        %v320 = vsel %vm318, %v309, 0
        %v323 = vsel %vm318, %v310, 0
        %v326 = vsel %vm318, %v307, 0
        %328 = vmatprep.subr.bf16.mxu0 %v323
        %329 = vmatpush1.bf16.msra.mxu0 %v320
        %330 = vmatprep.subr.bf16.mxu0 0
        %331 = vmatpush1.bf16.msra.mxu0 0
        %332 = vmatprep.subr.bf16.mxu0 0
        %333 = vmatpush1.bf16.msra.mxu0 0
        %334 = vmatprep.subr.bf16.mxu0 0
        %335 = vmatpush1.bf16.msra.mxu0 0
        %336 = vmatprep.subr.bf16.mxu0 0
        %337 = vmatpush1.bf16.msra.mxu0 0
        %338 = vmatprep.subr.bf16.mxu0 0
        %339 = vmatpush1.bf16.msra.mxu0 0
        %340 = vmatprep.subr.bf16.mxu0 0
        %341 = vmatpush1.bf16.msra.mxu0 0
        %342 = vmatprep.subr.bf16.mxu0 0
        %343 = vmatpush1.bf16.msra.mxu0 0
        %344 = vmatprep.subr.bf16.mxu0 0
        %345 = vmatpush1.bf16.msra.mxu0 0
        %346 = vmatprep.subr.bf16.mxu0 0
        %347 = vmatpush1.bf16.msra.mxu0 0
        %348 = vmatprep.subr.bf16.mxu0 0
        %349 = vmatpush1.bf16.msra.mxu0 0
        %350 = vmatprep.subr.bf16.mxu0 0
        %351 = vmatpush1.bf16.msra.mxu0 0
        %352 = vmatprep.subr.bf16.mxu0 0
        %353 = vmatpush1.bf16.msra.mxu0 0
        %354 = vmatprep.subr.bf16.mxu0 0
        %355 = vmatpush1.bf16.msra.mxu0 0
        %356 = vmatprep.subr.bf16.mxu0 0
        %357 = vmatpush1.bf16.msra.mxu0 0
        %358 = vmatprep.subr.bf16.mxu0 0
        %359 = vmatpush1.bf16.msra.mxu0 0
        %360 = vmatprep.mubr.bf16.mxu0 0
        %361 = vmatmul.mubr.bf16.gmra.mrb[0].mxu0 %v313
        %v362 = vpop.f32.mrb[0].mxu0
        %v363 = vadd.f32 0.0, %v362
        %v364 = vpop.f32.mrb[0].mxu0
        %v365 = vadd.f32 0.0, %v364
        %v366 = vpop.f32.mrb[0].mxu0
        %v367 = vadd.f32 0.0, %v366
        %v368 = vpop.f32.mrb[0].mxu0
        %v369 = vadd.f32 0.0, %v368
        %370 = vmatprep.mubr.bf16.mxu0 0
        %371 = vmatmul.mubr.bf16.gmra.mrb[0].mxu0 %v316
        %v372 = vpop.f32.mrb[0].mxu0
        %v373 = vadd.f32 0.0, %v372
        %v374 = vpop.f32.mrb[0].mxu0
        %v375 = vadd.f32 0.0, %v374
        %v376 = vpop.f32.mrb[0].mxu0
        %v377 = vadd.f32 0.0, %v376
        %v378 = vpop.f32.mrb[0].mxu0
        %v379 = vadd.f32 0.0, %v378
        %380 = vdwg.mxu0
        %381 = vmatprep.subr.bf16.mxu0 0
        %382 = vmatpush1.bf16.msra.mxu0 %v326
        %383 = vmatprep.subr.bf16.mxu0 0
        %384 = vmatpush1.bf16.msra.mxu0 0
        %385 = vmatprep.subr.bf16.mxu0 0
        %386 = vmatpush1.bf16.msra.mxu0 0
        %387 = vmatprep.subr.bf16.mxu0 0
        %388 = vmatpush1.bf16.msra.mxu0 0
        %389 = vmatprep.subr.bf16.mxu0 0
        %390 = vmatpush1.bf16.msra.mxu0 0
        %391 = vmatprep.subr.bf16.mxu0 0
        %392 = vmatpush1.bf16.msra.mxu0 0
        %393 = vmatprep.subr.bf16.mxu0 0
        %394 = vmatpush1.bf16.msra.mxu0 0
        %395 = vmatprep.subr.bf16.mxu0 0
        %396 = vmatpush1.bf16.msra.mxu0 0
        %397 = vmatprep.subr.bf16.mxu0 0
        %398 = vmatpush1.bf16.msra.mxu0 0
        %399 = vmatprep.subr.bf16.mxu0 0
        %400 = vmatpush1.bf16.msra.mxu0 0
        %401 = vmatprep.subr.bf16.mxu0 0
        %402 = vmatpush1.bf16.msra.mxu0 0
        %403 = vmatprep.subr.bf16.mxu0 0
        %404 = vmatpush1.bf16.msra.mxu0 0
        %405 = vmatprep.subr.bf16.mxu0 0
        %406 = vmatpush1.bf16.msra.mxu0 0
        %407 = vmatprep.subr.bf16.mxu0 0
        %408 = vmatpush1.bf16.msra.mxu0 0
        %409 = vmatprep.subr.bf16.mxu0 0
        %410 = vmatpush1.bf16.msra.mxu0 0
        %411 = vmatprep.subr.bf16.mxu0 0
        %412 = vmatpush1.bf16.msra.mxu0 0
        %413 = vmatprep.mubr.bf16.mxu0 0
        %414 = vmatmul.mubr.bf16.gmra.mrb[0].mxu0 %v313
        %v415 = vpop.f32.mrb[0].mxu0
        %v416 = vadd.f32 0.0, %v415
        %v417 = vpop.f32.mrb[0].mxu0
        %v418 = vpop.f32.mrb[0].mxu0
        %v419 = vadd.f32 0.0, %v418
        %v420 = vpop.f32.mrb[0].mxu0
        %421 = vmatprep.mubr.bf16.mxu0 0
        %422 = vmatmul.mubr.bf16.gmra.mrb[0].mxu0 %v316
        %v423 = vpop.f32.mrb[0].mxu0
        %v424 = vadd.f32 0.0, %v423
        %v425 = vpop.f32.mrb[0].mxu0
        %v426 = vpop.f32.mrb[0].mxu0
        %v427 = vadd.f32 0.0, %v426
        %v428 = vpop.f32.mrb[0].mxu0
        %429 = vdwg.mxu0
        %v434 = vunpack.c.l.b16 %v280
        %v435 = vunpack.c.l.b16 %v281
        %v436 = vunpack.c.l.b16 %v282
        %v437 = vunpack.c.l.b16 %v283
        %v438 = vpack.c.b16 %v435, %v434
        %v439 = vpack.c.b16 %v437, %v436
        %440 = vrot.lane.b32.xlu0 %v277, 121
        %v441 = vpop.permute.xlu0 %440
        %442 = vrot.lane.b32.xlu0 %v278, 121
        %v443 = vpop.permute.xlu0 %442
        %444 = vrot.lane.b32.xlu0 %v279, 121
        %v445 = vpop.permute.xlu0 %444
        %vm446 = vcmask 990208
        %v447 = vsel %vm446, %v441, %v443
        %v448 = vsel %vm446, %v443, %v445
        %v450 = vsel %vm311, %v438, 0
        %v453 = vsel %vm311, %v439, 0
        %v456 = vsel %vm318, %v447, 0
        %v459 = vsel %vm318, %v448, 0
        %v462 = vsel %vm318, %v445, 0
        %464 = vmatprep.subr.bf16.mxu0 %v459
        %465 = vmatpush1.bf16.msra.mxu0 %v456
        %466 = vmatprep.subr.bf16.mxu0 0
        %467 = vmatpush1.bf16.msra.mxu0 0
        %468 = vmatprep.subr.bf16.mxu0 0
        %469 = vmatpush1.bf16.msra.mxu0 0
        %470 = vmatprep.subr.bf16.mxu0 0
        %471 = vmatpush1.bf16.msra.mxu0 0
        %472 = vmatprep.subr.bf16.mxu0 0
        %473 = vmatpush1.bf16.msra.mxu0 0
        %474 = vmatprep.subr.bf16.mxu0 0
        %475 = vmatpush1.bf16.msra.mxu0 0
        %476 = vmatprep.subr.bf16.mxu0 0
        %477 = vmatpush1.bf16.msra.mxu0 0
        %478 = vmatprep.subr.bf16.mxu0 0
        %479 = vmatpush1.bf16.msra.mxu0 0
        %480 = vmatprep.subr.bf16.mxu0 0
        %481 = vmatpush1.bf16.msra.mxu0 0
        %482 = vmatprep.subr.bf16.mxu0 0
        %483 = vmatpush1.bf16.msra.mxu0 0
        %484 = vmatprep.subr.bf16.mxu0 0
        %485 = vmatpush1.bf16.msra.mxu0 0
        %486 = vmatprep.subr.bf16.mxu0 0
        %487 = vmatpush1.bf16.msra.mxu0 0
        %488 = vmatprep.subr.bf16.mxu0 0
        %489 = vmatpush1.bf16.msra.mxu0 0
        %490 = vmatprep.subr.bf16.mxu0 0
        %491 = vmatpush1.bf16.msra.mxu0 0
        %492 = vmatprep.subr.bf16.mxu0 0
        %493 = vmatpush1.bf16.msra.mxu0 0
        %494 = vmatprep.subr.bf16.mxu0 0
        %495 = vmatpush1.bf16.msra.mxu0 0
        %496 = vmatprep.mubr.bf16.mxu0 0
        %497 = vmatmul.mubr.bf16.gmra.mrb[0].mxu0 %v450
        %v498 = vpop.f32.mrb[0].mxu0
        %v499 = vadd.f32 %v363, %v498
        %v500 = vpop.f32.mrb[0].mxu0
        %v501 = vadd.f32 %v365, %v500
        %v502 = vpop.f32.mrb[0].mxu0
        %v503 = vadd.f32 %v367, %v502
        %v504 = vpop.f32.mrb[0].mxu0
        %v505 = vadd.f32 %v369, %v504
        %506 = vmatprep.mubr.bf16.mxu0 0
        %507 = vmatmul.mubr.bf16.gmra.mrb[0].mxu0 %v453
        %v508 = vpop.f32.mrb[0].mxu0
        %v509 = vadd.f32 %v373, %v508
        %v510 = vpop.f32.mrb[0].mxu0
        %v511 = vadd.f32 %v375, %v510
        %v512 = vpop.f32.mrb[0].mxu0
        %v513 = vadd.f32 %v377, %v512
        %v514 = vpop.f32.mrb[0].mxu0
        %v515 = vadd.f32 %v379, %v514
        %516 = vdwg.mxu0
        %517 = vmatprep.subr.bf16.mxu0 0
        %518 = vmatpush1.bf16.msra.mxu0 %v462
        %519 = vmatprep.subr.bf16.mxu0 0
        %520 = vmatpush1.bf16.msra.mxu0 0
        %521 = vmatprep.subr.bf16.mxu0 0
        %522 = vmatpush1.bf16.msra.mxu0 0
        %523 = vmatprep.subr.bf16.mxu0 0
        %524 = vmatpush1.bf16.msra.mxu0 0
        %525 = vmatprep.subr.bf16.mxu0 0
        %526 = vmatpush1.bf16.msra.mxu0 0
        %527 = vmatprep.subr.bf16.mxu0 0
        %528 = vmatpush1.bf16.msra.mxu0 0
        %529 = vmatprep.subr.bf16.mxu0 0
        %530 = vmatpush1.bf16.msra.mxu0 0
        %531 = vmatprep.subr.bf16.mxu0 0
        %532 = vmatpush1.bf16.msra.mxu0 0
        %533 = vmatprep.subr.bf16.mxu0 0
        %534 = vmatpush1.bf16.msra.mxu0 0
        %535 = vmatprep.subr.bf16.mxu0 0
        %536 = vmatpush1.bf16.msra.mxu0 0
        %537 = vmatprep.subr.bf16.mxu0 0
        %538 = vmatpush1.bf16.msra.mxu0 0
        %539 = vmatprep.subr.bf16.mxu0 0
        %540 = vmatpush1.bf16.msra.mxu0 0
        %541 = vmatprep.subr.bf16.mxu0 0
        %542 = vmatpush1.bf16.msra.mxu0 0
        %543 = vmatprep.subr.bf16.mxu0 0
        %544 = vmatpush1.bf16.msra.mxu0 0
        %545 = vmatprep.subr.bf16.mxu0 0
        %546 = vmatpush1.bf16.msra.mxu0 0
        %547 = vmatprep.subr.bf16.mxu0 0
        %548 = vmatpush1.bf16.msra.mxu0 0
        %549 = vmatprep.mubr.bf16.mxu0 0
        %550 = vmatmul.mubr.bf16.gmra.mrb[0].mxu0 %v450
        %v551 = vpop.f32.mrb[0].mxu0
        %v552 = vadd.f32 %v416, %v551
        %v553 = vpop.f32.mrb[0].mxu0
        %v554 = vpop.f32.mrb[0].mxu0
        %v555 = vadd.f32 %v419, %v554
        %v556 = vpop.f32.mrb[0].mxu0
        %557 = vmatprep.mubr.bf16.mxu0 0
        %558 = vmatmul.mubr.bf16.gmra.mrb[0].mxu0 %v453
        %v559 = vpop.f32.mrb[0].mxu0
        %v560 = vadd.f32 %v424, %v559
        %v561 = vpop.f32.mrb[0].mxu0
        %v562 = vpop.f32.mrb[0].mxu0
        %v563 = vadd.f32 %v427, %v562
        %v564 = vpop.f32.mrb[0].mxu0
        %565 = vdwg.mxu0
        %v566 = vld [vmem:[%s246] sm:$0x3f]
        %v568 = vcombine.high %v566, %v566
        %v570 = vunpack.c.l.s4 1983009808
        %v571 = vunpack.c.0.s8 %v570
        %v572 = vlaneseq
        %v573 = vshrl.u32 %v572, 7
        %v574 = vsub.s32 %v571, %v573
        %v575 = vrot.slane %v566, %v574
        %v577 = vunpack.c.l.s4 1983009808
        %v578 = vunpack.c.0.s8 %v577
        %v579 = vlaneseq
        %v580 = vshrl.u32 %v579, 7
        %v581 = vsub.s32 %v578, %v580
        %v582 = vrot.slane %v568, %v581
        %v583 = vcombine.high %v575, %v575
        %v587 = vpack.c.bf16 %v575, %v575
        %v588 = vpack.c.bf16 %v583, %v583
        %v589 = vpack.c.bf16 %v582, %v582
        %s590 = scalar_lea.vmem %s2, 32
        %v591 = vld [vmem:[%s590] sm:$0xf]
        %v592 = vld [vmem:[%s590 + $0x4] sm:$0xf]
        %v593 = vld [vmem:[%s590 + $0x8] sm:$0xf]
        %v594 = vld [vmem:[%s590 + $0xc] sm:$0xf]
        %v599 = vunpack.c.l.b16 %v591
        %v600 = vunpack.c.l.b16 %v592
        %v601 = vunpack.c.l.b16 %v593
        %v602 = vunpack.c.l.b16 %v594
        %v603 = vpack.c.b16 %v600, %v599
        %v604 = vpack.c.b16 %v602, %v601
        %608 = vrot.lane.b32.xlu0 %v587, 119
        %v609 = vpop.permute.xlu0 %608
        %610 = vrot.lane.b32.xlu0 %v588, 119
        %v611 = vpop.permute.xlu0 %610
        %612 = vrot.lane.b32.xlu0 %v589, 119
        %v613 = vpop.permute.xlu0 %612
        %vm614 = vcmask 973824
        %v615 = vsel %vm614, %v609, %v611
        %v616 = vsel %vm614, %v611, %v613
        %v618 = vsel %vm311, %v603, 0
        %v621 = vsel %vm311, %v604, 0
        %v624 = vsel %vm318, %v615, 0
        %v627 = vsel %vm318, %v616, 0
        %v630 = vsel %vm318, %v613, 0
        %632 = vmatprep.subr.bf16.mxu0 %v627
        %633 = vmatpush1.bf16.msra.mxu0 %v624
        %634 = vmatprep.subr.bf16.mxu0 0
        %635 = vmatpush1.bf16.msra.mxu0 0
        %636 = vmatprep.subr.bf16.mxu0 0
        %637 = vmatpush1.bf16.msra.mxu0 0
        %638 = vmatprep.subr.bf16.mxu0 0
        %639 = vmatpush1.bf16.msra.mxu0 0
        %640 = vmatprep.subr.bf16.mxu0 0
        %641 = vmatpush1.bf16.msra.mxu0 0
        %642 = vmatprep.subr.bf16.mxu0 0
        %643 = vmatpush1.bf16.msra.mxu0 0
        %644 = vmatprep.subr.bf16.mxu0 0
        %645 = vmatpush1.bf16.msra.mxu0 0
        %646 = vmatprep.subr.bf16.mxu0 0
        %647 = vmatpush1.bf16.msra.mxu0 0
        %648 = vmatprep.subr.bf16.mxu0 0
        %649 = vmatpush1.bf16.msra.mxu0 0
        %650 = vmatprep.subr.bf16.mxu0 0
        %651 = vmatpush1.bf16.msra.mxu0 0
        %652 = vmatprep.subr.bf16.mxu0 0
        %653 = vmatpush1.bf16.msra.mxu0 0
        %654 = vmatprep.subr.bf16.mxu0 0
        %655 = vmatpush1.bf16.msra.mxu0 0
        %656 = vmatprep.subr.bf16.mxu0 0
        %657 = vmatpush1.bf16.msra.mxu0 0
        %658 = vmatprep.subr.bf16.mxu0 0
        %659 = vmatpush1.bf16.msra.mxu0 0
        %660 = vmatprep.subr.bf16.mxu0 0
        %661 = vmatpush1.bf16.msra.mxu0 0
        %662 = vmatprep.subr.bf16.mxu0 0
        %663 = vmatpush1.bf16.msra.mxu0 0
        %664 = vmatprep.mubr.bf16.mxu0 0
        %665 = vmatmul.mubr.bf16.gmra.mrb[0].mxu0 %v618
        %v666 = vpop.f32.mrb[0].mxu0
        %v667 = vadd.f32 0.0, %v666
        %v668 = vpop.f32.mrb[0].mxu0
        %v669 = vadd.f32 0.0, %v668
        %v670 = vpop.f32.mrb[0].mxu0
        %v671 = vadd.f32 0.0, %v670
        %v672 = vpop.f32.mrb[0].mxu0
        %v673 = vadd.f32 0.0, %v672
        %674 = vmatprep.mubr.bf16.mxu0 0
        %675 = vmatmul.mubr.bf16.gmra.mrb[0].mxu0 %v621
        %v676 = vpop.f32.mrb[0].mxu0
        %v677 = vadd.f32 0.0, %v676
        %v678 = vpop.f32.mrb[0].mxu0
        %v679 = vadd.f32 0.0, %v678
        %v680 = vpop.f32.mrb[0].mxu0
        %v681 = vadd.f32 0.0, %v680
        %v682 = vpop.f32.mrb[0].mxu0
        %v683 = vadd.f32 0.0, %v682
        %684 = vdwg.mxu0
        %685 = vmatprep.subr.bf16.mxu0 0
        %686 = vmatpush1.bf16.msra.mxu0 %v630
        %687 = vmatprep.subr.bf16.mxu0 0
        %688 = vmatpush1.bf16.msra.mxu0 0
        %689 = vmatprep.subr.bf16.mxu0 0
        %690 = vmatpush1.bf16.msra.mxu0 0
        %691 = vmatprep.subr.bf16.mxu0 0
        %692 = vmatpush1.bf16.msra.mxu0 0
        %693 = vmatprep.subr.bf16.mxu0 0
        %694 = vmatpush1.bf16.msra.mxu0 0
        %695 = vmatprep.subr.bf16.mxu0 0
        %696 = vmatpush1.bf16.msra.mxu0 0
        %697 = vmatprep.subr.bf16.mxu0 0
        %698 = vmatpush1.bf16.msra.mxu0 0
        %699 = vmatprep.subr.bf16.mxu0 0
        %700 = vmatpush1.bf16.msra.mxu0 0
        %701 = vmatprep.subr.bf16.mxu0 0
        %702 = vmatpush1.bf16.msra.mxu0 0
        %703 = vmatprep.subr.bf16.mxu0 0
        %704 = vmatpush1.bf16.msra.mxu0 0
        %705 = vmatprep.subr.bf16.mxu0 0
        %706 = vmatpush1.bf16.msra.mxu0 0
        %707 = vmatprep.subr.bf16.mxu0 0
        %708 = vmatpush1.bf16.msra.mxu0 0
        %709 = vmatprep.subr.bf16.mxu0 0
        %710 = vmatpush1.bf16.msra.mxu0 0
        %711 = vmatprep.subr.bf16.mxu0 0
        %712 = vmatpush1.bf16.msra.mxu0 0
        %713 = vmatprep.subr.bf16.mxu0 0
        %714 = vmatpush1.bf16.msra.mxu0 0
        %715 = vmatprep.subr.bf16.mxu0 0
        %716 = vmatpush1.bf16.msra.mxu0 0
        %717 = vmatprep.mubr.bf16.mxu0 0
        %718 = vmatmul.mubr.bf16.gmra.mrb[0].mxu0 %v618
        %v719 = vpop.f32.mrb[0].mxu0
        %v720 = vadd.f32 0.0, %v719
        %v721 = vpop.f32.mrb[0].mxu0
        %v722 = vpop.f32.mrb[0].mxu0
        %v723 = vadd.f32 0.0, %v722
        %v724 = vpop.f32.mrb[0].mxu0
        %725 = vmatprep.mubr.bf16.mxu0 0
        %726 = vmatmul.mubr.bf16.gmra.mrb[0].mxu0 %v621
        %v727 = vpop.f32.mrb[0].mxu0
        %v728 = vadd.f32 0.0, %v727
        %v729 = vpop.f32.mrb[0].mxu0
        %v730 = vpop.f32.mrb[0].mxu0
        %v731 = vadd.f32 0.0, %v730
        %v732 = vpop.f32.mrb[0].mxu0
        %733 = vdwg.mxu0
        %v734 = vadd.f32 %v499, %v667
        %v735 = vadd.f32 %v501, %v669
        %v736 = vadd.f32 %v552, %v720
        %v737 = vadd.f32 %v503, %v671
        %v738 = vadd.f32 %v505, %v673
        %v739 = vadd.f32 %v555, %v723
        %v740 = vadd.f32 %v509, %v677
        %v741 = vadd.f32 %v511, %v679
        %v742 = vadd.f32 %v560, %v728
        %v743 = vadd.f32 %v513, %v681
        %v744 = vadd.f32 %v515, %v683
        %v745 = vadd.f32 %v563, %v731
        %v746 = vld [vmem:[%s246] sm:$0x3f]
        %v748 = vcombine.high %v746, %v746
        %v750 = vunpack.c.l.s4 1983009808
        %v751 = vunpack.c.0.s8 %v750
        %v752 = vlaneseq
        %v753 = vshrl.u32 %v752, 7
        %v754 = vsub.s32 %v751, %v753
        %v755 = vrot.slane %v746, %v754
        %v757 = vunpack.c.l.s4 1983009808
        %v758 = vunpack.c.0.s8 %v757
        %v759 = vlaneseq
        %v760 = vshrl.u32 %v759, 7
        %v761 = vsub.s32 %v758, %v760
        %v762 = vrot.slane %v748, %v761
        %v763 = vcombine.high %v755, %v755
        %v767 = vpack.c.bf16 %v755, %v755
        %v768 = vpack.c.bf16 %v763, %v763
        %v769 = vpack.c.bf16 %v762, %v762
        %s770 = scalar_lea.vmem %s2, 48
        %v771 = vld [vmem:[%s770] sm:$0xf]
        %v772 = vld [vmem:[%s770 + $0x4] sm:$0xf]
        %v773 = vld [vmem:[%s770 + $0x8] sm:$0xf]
        %v774 = vld [vmem:[%s770 + $0xc] sm:$0xf]
        %v779 = vunpack.c.l.b16 %v771
        %v780 = vunpack.c.l.b16 %v772
        %v781 = vunpack.c.l.b16 %v773
        %v782 = vunpack.c.l.b16 %v774
        %v783 = vpack.c.b16 %v780, %v779
        %v784 = vpack.c.b16 %v782, %v781
        %788 = vrot.lane.b32.xlu0 %v767, 103
        %v789 = vpop.permute.xlu0 %788
        %790 = vrot.lane.b32.xlu0 %v768, 103
        %v791 = vpop.permute.xlu0 %790
        %792 = vrot.lane.b32.xlu0 %v769, 103
        %v793 = vpop.permute.xlu0 %792
        %vm794 = vcmask 842752
        %v795 = vsel %vm794, %v789, %v791
        %v796 = vsel %vm794, %v791, %v793
        %v798 = vsel %vm311, %v783, 0
        %v801 = vsel %vm311, %v784, 0
        %v804 = vsel %vm318, %v795, 0
        %v807 = vsel %vm318, %v796, 0
        %v810 = vsel %vm318, %v793, 0
        %812 = vmatprep.subr.bf16.mxu0 %v807
        %813 = vmatpush1.bf16.msra.mxu0 %v804
        %814 = vmatprep.subr.bf16.mxu0 0
        %815 = vmatpush1.bf16.msra.mxu0 0
        %816 = vmatprep.subr.bf16.mxu0 0
        %817 = vmatpush1.bf16.msra.mxu0 0
        %818 = vmatprep.subr.bf16.mxu0 0
        %819 = vmatpush1.bf16.msra.mxu0 0
        %820 = vmatprep.subr.bf16.mxu0 0
        %821 = vmatpush1.bf16.msra.mxu0 0
        %822 = vmatprep.subr.bf16.mxu0 0
        %823 = vmatpush1.bf16.msra.mxu0 0
        %824 = vmatprep.subr.bf16.mxu0 0
        %825 = vmatpush1.bf16.msra.mxu0 0
        %826 = vmatprep.subr.bf16.mxu0 0
        %827 = vmatpush1.bf16.msra.mxu0 0
        %828 = vmatprep.subr.bf16.mxu0 0
        %829 = vmatpush1.bf16.msra.mxu0 0
        %830 = vmatprep.subr.bf16.mxu0 0
        %831 = vmatpush1.bf16.msra.mxu0 0
        %832 = vmatprep.subr.bf16.mxu0 0
        %833 = vmatpush1.bf16.msra.mxu0 0
        %834 = vmatprep.subr.bf16.mxu0 0
        %835 = vmatpush1.bf16.msra.mxu0 0
        %836 = vmatprep.subr.bf16.mxu0 0
        %837 = vmatpush1.bf16.msra.mxu0 0
        %838 = vmatprep.subr.bf16.mxu0 0
        %839 = vmatpush1.bf16.msra.mxu0 0
        %840 = vmatprep.subr.bf16.mxu0 0
        %841 = vmatpush1.bf16.msra.mxu0 0
        %842 = vmatprep.subr.bf16.mxu0 0
        %843 = vmatpush1.bf16.msra.mxu0 0
        %844 = vmatprep.mubr.bf16.mxu0 0
        %845 = vmatmul.mubr.bf16.gmra.mrb[0].mxu0 %v798
        %v846 = vpop.f32.mrb[0].mxu0
        %v847 = vadd.f32 0.0, %v846
        %v848 = vpop.f32.mrb[0].mxu0
        %v849 = vadd.f32 0.0, %v848
        %v850 = vpop.f32.mrb[0].mxu0
        %v851 = vadd.f32 0.0, %v850
        %v852 = vpop.f32.mrb[0].mxu0
        %v853 = vadd.f32 0.0, %v852
        %854 = vmatprep.mubr.bf16.mxu0 0
        %855 = vmatmul.mubr.bf16.gmra.mrb[0].mxu0 %v801
        %v856 = vpop.f32.mrb[0].mxu0
        %v857 = vadd.f32 0.0, %v856
        %v858 = vpop.f32.mrb[0].mxu0
        %v859 = vadd.f32 0.0, %v858
        %v860 = vpop.f32.mrb[0].mxu0
        %v861 = vadd.f32 0.0, %v860
        %v862 = vpop.f32.mrb[0].mxu0
        %v863 = vadd.f32 0.0, %v862
        %864 = vdwg.mxu0
        %865 = vmatprep.subr.bf16.mxu0 0
        %866 = vmatpush1.bf16.msra.mxu0 %v810
        %867 = vmatprep.subr.bf16.mxu0 0
        %868 = vmatpush1.bf16.msra.mxu0 0
        %869 = vmatprep.subr.bf16.mxu0 0
        %870 = vmatpush1.bf16.msra.mxu0 0
        %871 = vmatprep.subr.bf16.mxu0 0
        %872 = vmatpush1.bf16.msra.mxu0 0
        %873 = vmatprep.subr.bf16.mxu0 0
        %874 = vmatpush1.bf16.msra.mxu0 0
        %875 = vmatprep.subr.bf16.mxu0 0
        %876 = vmatpush1.bf16.msra.mxu0 0
        %877 = vmatprep.subr.bf16.mxu0 0
        %878 = vmatpush1.bf16.msra.mxu0 0
        %879 = vmatprep.subr.bf16.mxu0 0
        %880 = vmatpush1.bf16.msra.mxu0 0
        %881 = vmatprep.subr.bf16.mxu0 0
        %882 = vmatpush1.bf16.msra.mxu0 0
        %883 = vmatprep.subr.bf16.mxu0 0
        %884 = vmatpush1.bf16.msra.mxu0 0
        %885 = vmatprep.subr.bf16.mxu0 0
        %886 = vmatpush1.bf16.msra.mxu0 0
        %887 = vmatprep.subr.bf16.mxu0 0
        %888 = vmatpush1.bf16.msra.mxu0 0
        %889 = vmatprep.subr.bf16.mxu0 0
        %890 = vmatpush1.bf16.msra.mxu0 0
        %891 = vmatprep.subr.bf16.mxu0 0
        %892 = vmatpush1.bf16.msra.mxu0 0
        %893 = vmatprep.subr.bf16.mxu0 0
        %894 = vmatpush1.bf16.msra.mxu0 0
        %895 = vmatprep.subr.bf16.mxu0 0
        %896 = vmatpush1.bf16.msra.mxu0 0
        %897 = vmatprep.mubr.bf16.mxu0 0
        %898 = vmatmul.mubr.bf16.gmra.mrb[0].mxu0 %v798
        %v899 = vpop.f32.mrb[0].mxu0
        %v900 = vadd.f32 0.0, %v899
        %v901 = vpop.f32.mrb[0].mxu0
        %v902 = vpop.f32.mrb[0].mxu0
        %v903 = vadd.f32 0.0, %v902
        %v904 = vpop.f32.mrb[0].mxu0
        %905 = vmatprep.mubr.bf16.mxu0 0
        %906 = vmatmul.mubr.bf16.gmra.mrb[0].mxu0 %v801
        %v907 = vpop.f32.mrb[0].mxu0
        %v908 = vadd.f32 0.0, %v907
        %v909 = vpop.f32.mrb[0].mxu0
        %v910 = vpop.f32.mrb[0].mxu0
        %v911 = vadd.f32 0.0, %v910
        %v912 = vpop.f32.mrb[0].mxu0
        %913 = vdwg.mxu0
        %v914 = vadd.f32 %v734, %v847
        %v915 = vadd.f32 %v735, %v849
        %v916 = vadd.f32 %v736, %v900
        %v917 = vadd.f32 %v737, %v851
        %v918 = vadd.f32 %v738, %v853
        %v919 = vadd.f32 %v739, %v903
        %v920 = vadd.f32 %v740, %v857
        %v921 = vadd.f32 %v741, %v859
        %v922 = vadd.f32 %v742, %v908
        %v923 = vadd.f32 %v743, %v861
        %v924 = vadd.f32 %v744, %v863
        %v925 = vadd.f32 %v745, %v911
        %v926 = vld [vmem:[%s246] sm:$0x3f]
        %v928 = vcombine.high %v926, %v926
        %v930 = vunpack.c.l.s4 1983009808
        %v931 = vunpack.c.0.s8 %v930
        %v932 = vlaneseq
        %v933 = vshrl.u32 %v932, 7
        %v934 = vsub.s32 %v931, %v933
        %v935 = vrot.slane %v926, %v934
        %v937 = vunpack.c.l.s4 1983009808
        %v938 = vunpack.c.0.s8 %v937
        %v939 = vlaneseq
        %v940 = vshrl.u32 %v939, 7
        %v941 = vsub.s32 %v938, %v940
        %v942 = vrot.slane %v928, %v941
        %v943 = vcombine.high %v935, %v935
        %v947 = vpack.c.bf16 %v935, %v935
        %v948 = vpack.c.bf16 %v943, %v943
        %v949 = vpack.c.bf16 %v942, %v942
        %s950 = scalar_lea.vmem %s2, 64
        %v951 = vld [vmem:[%s950] sm:$0xf]
        %v952 = vld [vmem:[%s950 + $0x4] sm:$0xf]
        %v953 = vld [vmem:[%s950 + $0x8] sm:$0xf]
        %v954 = vld [vmem:[%s950 + $0xc] sm:$0xf]
        %v959 = vunpack.c.l.b16 %v951
        %v960 = vunpack.c.l.b16 %v952
        %v961 = vunpack.c.l.b16 %v953
        %v962 = vunpack.c.l.b16 %v954
        %v963 = vpack.c.b16 %v960, %v959
        %v964 = vpack.c.b16 %v962, %v961
        %968 = vrot.lane.b32.xlu0 %v947, 102
        %v969 = vpop.permute.xlu0 %968
        %970 = vrot.lane.b32.xlu0 %v948, 102
        %v971 = vpop.permute.xlu0 %970
        %972 = vrot.lane.b32.xlu0 %v949, 102
        %v973 = vpop.permute.xlu0 %972
        %vm974 = vcmask 834560
        %v975 = vsel %vm974, %v969, %v971
        %v976 = vsel %vm974, %v971, %v973
        %v978 = vsel %vm311, %v963, 0
        %v981 = vsel %vm311, %v964, 0
        %v984 = vsel %vm318, %v975, 0
        %v987 = vsel %vm318, %v976, 0
        %v990 = vsel %vm318, %v973, 0
        %992 = vmatprep.subr.bf16.mxu0 %v987
        %993 = vmatpush1.bf16.msra.mxu0 %v984
        %994 = vmatprep.subr.bf16.mxu0 0
        %995 = vmatpush1.bf16.msra.mxu0 0
        %996 = vmatprep.subr.bf16.mxu0 0
        %997 = vmatpush1.bf16.msra.mxu0 0
        %998 = vmatprep.subr.bf16.mxu0 0
        %999 = vmatpush1.bf16.msra.mxu0 0
        %1000 = vmatprep.subr.bf16.mxu0 0
        %1001 = vmatpush1.bf16.msra.mxu0 0
        %1002 = vmatprep.subr.bf16.mxu0 0
        %1003 = vmatpush1.bf16.msra.mxu0 0
        %1004 = vmatprep.subr.bf16.mxu0 0
        %1005 = vmatpush1.bf16.msra.mxu0 0
        %1006 = vmatprep.subr.bf16.mxu0 0
        %1007 = vmatpush1.bf16.msra.mxu0 0
        %1008 = vmatprep.subr.bf16.mxu0 0
        %1009 = vmatpush1.bf16.msra.mxu0 0
        %1010 = vmatprep.subr.bf16.mxu0 0
        %1011 = vmatpush1.bf16.msra.mxu0 0
        %1012 = vmatprep.subr.bf16.mxu0 0
        %1013 = vmatpush1.bf16.msra.mxu0 0
        %1014 = vmatprep.subr.bf16.mxu0 0
        %1015 = vmatpush1.bf16.msra.mxu0 0
        %1016 = vmatprep.subr.bf16.mxu0 0
        %1017 = vmatpush1.bf16.msra.mxu0 0
        %1018 = vmatprep.subr.bf16.mxu0 0
        %1019 = vmatpush1.bf16.msra.mxu0 0
        %1020 = vmatprep.subr.bf16.mxu0 0
        %1021 = vmatpush1.bf16.msra.mxu0 0
        %1022 = vmatprep.subr.bf16.mxu0 0
        %1023 = vmatpush1.bf16.msra.mxu0 0
        %1024 = vmatprep.mubr.bf16.mxu0 0
        %1025 = vmatmul.mubr.bf16.gmra.mrb[0].mxu0 %v978
        %v1026 = vpop.f32.mrb[0].mxu0
        %v1027 = vadd.f32 0.0, %v1026
        %v1028 = vpop.f32.mrb[0].mxu0
        %v1029 = vadd.f32 0.0, %v1028
        %v1030 = vpop.f32.mrb[0].mxu0
        %v1031 = vadd.f32 0.0, %v1030
        %v1032 = vpop.f32.mrb[0].mxu0
        %v1033 = vadd.f32 0.0, %v1032
        %1034 = vmatprep.mubr.bf16.mxu0 0
        %1035 = vmatmul.mubr.bf16.gmra.mrb[0].mxu0 %v981
        %v1036 = vpop.f32.mrb[0].mxu0
        %v1037 = vadd.f32 0.0, %v1036
        %v1038 = vpop.f32.mrb[0].mxu0
        %v1039 = vadd.f32 0.0, %v1038
        %v1040 = vpop.f32.mrb[0].mxu0
        %v1041 = vadd.f32 0.0, %v1040
        %v1042 = vpop.f32.mrb[0].mxu0
        %v1043 = vadd.f32 0.0, %v1042
        %1044 = vdwg.mxu0
        %1045 = vmatprep.subr.bf16.mxu0 0
        %1046 = vmatpush1.bf16.msra.mxu0 %v990
        %1047 = vmatprep.subr.bf16.mxu0 0
        %1048 = vmatpush1.bf16.msra.mxu0 0
        %1049 = vmatprep.subr.bf16.mxu0 0
        %1050 = vmatpush1.bf16.msra.mxu0 0
        %1051 = vmatprep.subr.bf16.mxu0 0
        %1052 = vmatpush1.bf16.msra.mxu0 0
        %1053 = vmatprep.subr.bf16.mxu0 0
        %1054 = vmatpush1.bf16.msra.mxu0 0
        %1055 = vmatprep.subr.bf16.mxu0 0
        %1056 = vmatpush1.bf16.msra.mxu0 0
        %1057 = vmatprep.subr.bf16.mxu0 0
        %1058 = vmatpush1.bf16.msra.mxu0 0
        %1059 = vmatprep.subr.bf16.mxu0 0
        %1060 = vmatpush1.bf16.msra.mxu0 0
        %1061 = vmatprep.subr.bf16.mxu0 0
        %1062 = vmatpush1.bf16.msra.mxu0 0
        %1063 = vmatprep.subr.bf16.mxu0 0
        %1064 = vmatpush1.bf16.msra.mxu0 0
        %1065 = vmatprep.subr.bf16.mxu0 0
        %1066 = vmatpush1.bf16.msra.mxu0 0
        %1067 = vmatprep.subr.bf16.mxu0 0
        %1068 = vmatpush1.bf16.msra.mxu0 0
        %1069 = vmatprep.subr.bf16.mxu0 0
        %1070 = vmatpush1.bf16.msra.mxu0 0
        %1071 = vmatprep.subr.bf16.mxu0 0
        %1072 = vmatpush1.bf16.msra.mxu0 0
        %1073 = vmatprep.subr.bf16.mxu0 0
        %1074 = vmatpush1.bf16.msra.mxu0 0
        %1075 = vmatprep.subr.bf16.mxu0 0
        %1076 = vmatpush1.bf16.msra.mxu0 0
        %1077 = vmatprep.mubr.bf16.mxu0 0
        %1078 = vmatmul.mubr.bf16.gmra.mrb[0].mxu0 %v978
        %v1079 = vpop.f32.mrb[0].mxu0
        %v1080 = vadd.f32 0.0, %v1079
        %v1081 = vpop.f32.mrb[0].mxu0
        %v1082 = vpop.f32.mrb[0].mxu0
        %v1083 = vadd.f32 0.0, %v1082
        %v1084 = vpop.f32.mrb[0].mxu0
        %1085 = vmatprep.mubr.bf16.mxu0 0
        %1086 = vmatmul.mubr.bf16.gmra.mrb[0].mxu0 %v981
        %v1087 = vpop.f32.mrb[0].mxu0
        %v1088 = vadd.f32 0.0, %v1087
        %v1089 = vpop.f32.mrb[0].mxu0
        %v1090 = vpop.f32.mrb[0].mxu0
        %v1091 = vadd.f32 0.0, %v1090
        %v1092 = vpop.f32.mrb[0].mxu0
        %1093 = vdwg.mxu0
        %v1094 = vadd.f32 %v914, %v1027
        %v1095 = vadd.f32 %v915, %v1029
        %v1096 = vadd.f32 %v916, %v1080
        %v1097 = vadd.f32 %v917, %v1031
        %v1098 = vadd.f32 %v918, %v1033
        %v1099 = vadd.f32 %v919, %v1083
        %v1100 = vadd.f32 %v920, %v1037
        %v1101 = vadd.f32 %v921, %v1039
        %v1102 = vadd.f32 %v922, %v1088
        %v1103 = vadd.f32 %v923, %v1041
        %v1104 = vadd.f32 %v924, %v1043
        %v1105 = vadd.f32 %v925, %v1091
        %v1106 = vld [vmem:[%s246] sm:$0x3f]
        %v1108 = vcombine.high %v1106, %v1106
        %v1110 = vunpack.c.l.s4 1983009808
        %v1111 = vunpack.c.0.s8 %v1110
        %v1112 = vlaneseq
        %v1113 = vshrl.u32 %v1112, 7
        %v1114 = vsub.s32 %v1111, %v1113
        %v1115 = vrot.slane %v1106, %v1114
        %v1117 = vunpack.c.l.s4 1983009808
        %v1118 = vunpack.c.0.s8 %v1117
        %v1119 = vlaneseq
        %v1120 = vshrl.u32 %v1119, 7
        %v1121 = vsub.s32 %v1118, %v1120
        %v1122 = vrot.slane %v1108, %v1121
        %v1123 = vcombine.high %v1115, %v1115
        %v1127 = vpack.c.bf16 %v1115, %v1115
        %v1128 = vpack.c.bf16 %v1123, %v1123
        %v1129 = vpack.c.bf16 %v1122, %v1122
        %s1130 = scalar_lea.vmem %s2, 80
        %v1131 = vld [vmem:[%s1130] sm:$0xf]
        %v1132 = vld [vmem:[%s1130 + $0x4] sm:$0xf]
        %v1133 = vld [vmem:[%s1130 + $0x8] sm:$0xf]
        %v1134 = vld [vmem:[%s1130 + $0xc] sm:$0xf]
        %v1139 = vunpack.c.l.b16 %v1131
        %v1140 = vunpack.c.l.b16 %v1132
        %v1141 = vunpack.c.l.b16 %v1133
        %v1142 = vunpack.c.l.b16 %v1134
        %v1143 = vpack.c.b16 %v1140, %v1139
        %v1144 = vpack.c.b16 %v1142, %v1141
        %1148 = vrot.lane.b32.xlu0 %v1127, 101
        %v1149 = vpop.permute.xlu0 %1148
        %1150 = vrot.lane.b32.xlu0 %v1128, 101
        %v1151 = vpop.permute.xlu0 %1150
        %1152 = vrot.lane.b32.xlu0 %v1129, 101
        %v1153 = vpop.permute.xlu0 %1152
        %vm1154 = vcmask 826368
        %v1155 = vsel %vm1154, %v1149, %v1151
        %v1156 = vsel %vm1154, %v1151, %v1153
        %v1158 = vsel %vm311, %v1143, 0
        %v1161 = vsel %vm311, %v1144, 0
        %v1164 = vsel %vm318, %v1155, 0
        %v1167 = vsel %vm318, %v1156, 0
        %v1170 = vsel %vm318, %v1153, 0
        %1172 = vmatprep.subr.bf16.mxu0 %v1167
        %1173 = vmatpush1.bf16.msra.mxu0 %v1164
        %1174 = vmatprep.subr.bf16.mxu0 0
        %1175 = vmatpush1.bf16.msra.mxu0 0
        %1176 = vmatprep.subr.bf16.mxu0 0
        %1177 = vmatpush1.bf16.msra.mxu0 0
        %1178 = vmatprep.subr.bf16.mxu0 0
        %1179 = vmatpush1.bf16.msra.mxu0 0
        %1180 = vmatprep.subr.bf16.mxu0 0
        %1181 = vmatpush1.bf16.msra.mxu0 0
        %1182 = vmatprep.subr.bf16.mxu0 0
        %1183 = vmatpush1.bf16.msra.mxu0 0
        %1184 = vmatprep.subr.bf16.mxu0 0
        %1185 = vmatpush1.bf16.msra.mxu0 0
        %1186 = vmatprep.subr.bf16.mxu0 0
        %1187 = vmatpush1.bf16.msra.mxu0 0
        %1188 = vmatprep.subr.bf16.mxu0 0
        %1189 = vmatpush1.bf16.msra.mxu0 0
        %1190 = vmatprep.subr.bf16.mxu0 0
        %1191 = vmatpush1.bf16.msra.mxu0 0
        %1192 = vmatprep.subr.bf16.mxu0 0
        %1193 = vmatpush1.bf16.msra.mxu0 0
        %1194 = vmatprep.subr.bf16.mxu0 0
        %1195 = vmatpush1.bf16.msra.mxu0 0
        %1196 = vmatprep.subr.bf16.mxu0 0
        %1197 = vmatpush1.bf16.msra.mxu0 0
        %1198 = vmatprep.subr.bf16.mxu0 0
        %1199 = vmatpush1.bf16.msra.mxu0 0
        %1200 = vmatprep.subr.bf16.mxu0 0
        %1201 = vmatpush1.bf16.msra.mxu0 0
        %1202 = vmatprep.subr.bf16.mxu0 0
        %1203 = vmatpush1.bf16.msra.mxu0 0
        %1204 = vmatprep.mubr.bf16.mxu0 0
        %1205 = vmatmul.mubr.bf16.gmra.mrb[0].mxu0 %v1158
        %v1206 = vpop.f32.mrb[0].mxu0
        %v1207 = vadd.f32 0.0, %v1206
        %v1208 = vpop.f32.mrb[0].mxu0
        %v1209 = vadd.f32 0.0, %v1208
        %v1210 = vpop.f32.mrb[0].mxu0
        %v1211 = vadd.f32 0.0, %v1210
        %v1212 = vpop.f32.mrb[0].mxu0
        %v1213 = vadd.f32 0.0, %v1212
        %1214 = vmatprep.mubr.bf16.mxu0 0
        %1215 = vmatmul.mubr.bf16.gmra.mrb[0].mxu0 %v1161
        %v1216 = vpop.f32.mrb[0].mxu0
        %v1217 = vadd.f32 0.0, %v1216
        %v1218 = vpop.f32.mrb[0].mxu0
        %v1219 = vadd.f32 0.0, %v1218
        %v1220 = vpop.f32.mrb[0].mxu0
        %v1221 = vadd.f32 0.0, %v1220
        %v1222 = vpop.f32.mrb[0].mxu0
        %v1223 = vadd.f32 0.0, %v1222
        %1224 = vdwg.mxu0
        %1225 = vmatprep.subr.bf16.mxu0 0
        %1226 = vmatpush1.bf16.msra.mxu0 %v1170
        %1227 = vmatprep.subr.bf16.mxu0 0
        %1228 = vmatpush1.bf16.msra.mxu0 0
        %1229 = vmatprep.subr.bf16.mxu0 0
        %1230 = vmatpush1.bf16.msra.mxu0 0
        %1231 = vmatprep.subr.bf16.mxu0 0
        %1232 = vmatpush1.bf16.msra.mxu0 0
        %1233 = vmatprep.subr.bf16.mxu0 0
        %1234 = vmatpush1.bf16.msra.mxu0 0
        %1235 = vmatprep.subr.bf16.mxu0 0
        %1236 = vmatpush1.bf16.msra.mxu0 0
        %1237 = vmatprep.subr.bf16.mxu0 0
        %1238 = vmatpush1.bf16.msra.mxu0 0
        %1239 = vmatprep.subr.bf16.mxu0 0
        %1240 = vmatpush1.bf16.msra.mxu0 0
        %1241 = vmatprep.subr.bf16.mxu0 0
        %1242 = vmatpush1.bf16.msra.mxu0 0
        %1243 = vmatprep.subr.bf16.mxu0 0
        %1244 = vmatpush1.bf16.msra.mxu0 0
        %1245 = vmatprep.subr.bf16.mxu0 0
        %1246 = vmatpush1.bf16.msra.mxu0 0
        %1247 = vmatprep.subr.bf16.mxu0 0
        %1248 = vmatpush1.bf16.msra.mxu0 0
        %1249 = vmatprep.subr.bf16.mxu0 0
        %1250 = vmatpush1.bf16.msra.mxu0 0
        %1251 = vmatprep.subr.bf16.mxu0 0
        %1252 = vmatpush1.bf16.msra.mxu0 0
        %1253 = vmatprep.subr.bf16.mxu0 0
        %1254 = vmatpush1.bf16.msra.mxu0 0
        %1255 = vmatprep.subr.bf16.mxu0 0
        %1256 = vmatpush1.bf16.msra.mxu0 0
        %1257 = vmatprep.mubr.bf16.mxu0 0
        %1258 = vmatmul.mubr.bf16.gmra.mrb[0].mxu0 %v1158
        %v1259 = vpop.f32.mrb[0].mxu0
        %v1260 = vadd.f32 0.0, %v1259
        %v1261 = vpop.f32.mrb[0].mxu0
        %v1262 = vpop.f32.mrb[0].mxu0
        %v1263 = vadd.f32 0.0, %v1262
        %v1264 = vpop.f32.mrb[0].mxu0
        %1265 = vmatprep.mubr.bf16.mxu0 0
        %1266 = vmatmul.mubr.bf16.gmra.mrb[0].mxu0 %v1161
        %v1267 = vpop.f32.mrb[0].mxu0
        %v1268 = vadd.f32 0.0, %v1267
        %v1269 = vpop.f32.mrb[0].mxu0
        %v1270 = vpop.f32.mrb[0].mxu0
        %v1271 = vadd.f32 0.0, %v1270
        %v1272 = vpop.f32.mrb[0].mxu0
        %1273 = vdwg.mxu0
        %v1274 = vadd.f32 %v1094, %v1207
        %v1275 = vadd.f32 %v1095, %v1209
        %v1276 = vadd.f32 %v1096, %v1260
        %v1277 = vadd.f32 %v1097, %v1211
        %v1278 = vadd.f32 %v1098, %v1213
        %v1279 = vadd.f32 %v1099, %v1263
        %v1280 = vadd.f32 %v1100, %v1217
        %v1281 = vadd.f32 %v1101, %v1219
        %v1282 = vadd.f32 %v1102, %v1268
        %v1283 = vadd.f32 %v1103, %v1221
        %v1284 = vadd.f32 %v1104, %v1223
        %v1285 = vadd.f32 %v1105, %v1271
        %v1286 = vld [vmem:[%s246] sm:$0x3f]
        %v1288 = vcombine.high %v1286, %v1286
        %v1290 = vunpack.c.l.s4 1983009808
        %v1291 = vunpack.c.0.s8 %v1290
        %v1292 = vlaneseq
        %v1293 = vshrl.u32 %v1292, 7
        %v1294 = vsub.s32 %v1291, %v1293
        %v1295 = vrot.slane %v1286, %v1294
        %v1297 = vunpack.c.l.s4 1983009808
        %v1298 = vunpack.c.0.s8 %v1297
        %v1299 = vlaneseq
        %v1300 = vshrl.u32 %v1299, 7
        %v1301 = vsub.s32 %v1298, %v1300
        %v1302 = vrot.slane %v1288, %v1301
        %v1303 = vcombine.high %v1295, %v1295
        %v1307 = vpack.c.bf16 %v1295, %v1295
        %v1308 = vpack.c.bf16 %v1303, %v1303
        %v1309 = vpack.c.bf16 %v1302, %v1302
        %s1310 = scalar_lea.vmem %s2, 96
        %v1311 = vld [vmem:[%s1310] sm:$0xf]
        %v1312 = vld [vmem:[%s1310 + $0x4] sm:$0xf]
        %v1313 = vld [vmem:[%s1310 + $0x8] sm:$0xf]
        %v1314 = vld [vmem:[%s1310 + $0xc] sm:$0xf]
        %v1319 = vunpack.c.l.b16 %v1311
        %v1320 = vunpack.c.l.b16 %v1312
        %v1321 = vunpack.c.l.b16 %v1313
        %v1322 = vunpack.c.l.b16 %v1314
        %v1323 = vpack.c.b16 %v1320, %v1319
        %v1324 = vpack.c.b16 %v1322, %v1321
        %1328 = vrot.lane.b32.xlu0 %v1307, 85
        %v1329 = vpop.permute.xlu0 %1328
        %1330 = vrot.lane.b32.xlu0 %v1308, 85
        %v1331 = vpop.permute.xlu0 %1330
        %1332 = vrot.lane.b32.xlu0 %v1309, 85
        %v1333 = vpop.permute.xlu0 %1332
        %vm1334 = vcmask 695296
        %v1335 = vsel %vm1334, %v1329, %v1331
        %v1336 = vsel %vm1334, %v1331, %v1333
        %v1338 = vsel %vm311, %v1323, 0
        %v1341 = vsel %vm311, %v1324, 0
        %v1344 = vsel %vm318, %v1335, 0
        %v1347 = vsel %vm318, %v1336, 0
        %v1350 = vsel %vm318, %v1333, 0
        %1352 = vmatprep.subr.bf16.mxu0 %v1347
        %1353 = vmatpush1.bf16.msra.mxu0 %v1344
        %1354 = vmatprep.subr.bf16.mxu0 0
        %1355 = vmatpush1.bf16.msra.mxu0 0
        %1356 = vmatprep.subr.bf16.mxu0 0
        %1357 = vmatpush1.bf16.msra.mxu0 0
        %1358 = vmatprep.subr.bf16.mxu0 0
        %1359 = vmatpush1.bf16.msra.mxu0 0
        %1360 = vmatprep.subr.bf16.mxu0 0
        %1361 = vmatpush1.bf16.msra.mxu0 0
        %1362 = vmatprep.subr.bf16.mxu0 0
        %1363 = vmatpush1.bf16.msra.mxu0 0
        %1364 = vmatprep.subr.bf16.mxu0 0
        %1365 = vmatpush1.bf16.msra.mxu0 0
        %1366 = vmatprep.subr.bf16.mxu0 0
        %1367 = vmatpush1.bf16.msra.mxu0 0
        %1368 = vmatprep.subr.bf16.mxu0 0
        %1369 = vmatpush1.bf16.msra.mxu0 0
        %1370 = vmatprep.subr.bf16.mxu0 0
        %1371 = vmatpush1.bf16.msra.mxu0 0
        %1372 = vmatprep.subr.bf16.mxu0 0
        %1373 = vmatpush1.bf16.msra.mxu0 0
        %1374 = vmatprep.subr.bf16.mxu0 0
        %1375 = vmatpush1.bf16.msra.mxu0 0
        %1376 = vmatprep.subr.bf16.mxu0 0
        %1377 = vmatpush1.bf16.msra.mxu0 0
        %1378 = vmatprep.subr.bf16.mxu0 0
        %1379 = vmatpush1.bf16.msra.mxu0 0
        %1380 = vmatprep.subr.bf16.mxu0 0
        %1381 = vmatpush1.bf16.msra.mxu0 0
        %1382 = vmatprep.subr.bf16.mxu0 0
        %1383 = vmatpush1.bf16.msra.mxu0 0
        %1384 = vmatprep.mubr.bf16.mxu0 0
        %1385 = vmatmul.mubr.bf16.gmra.mrb[0].mxu0 %v1338
        %v1386 = vpop.f32.mrb[0].mxu0
        %v1387 = vadd.f32 0.0, %v1386
        %v1388 = vpop.f32.mrb[0].mxu0
        %v1389 = vadd.f32 0.0, %v1388
        %v1390 = vpop.f32.mrb[0].mxu0
        %v1391 = vadd.f32 0.0, %v1390
        %v1392 = vpop.f32.mrb[0].mxu0
        %v1393 = vadd.f32 0.0, %v1392
        %1394 = vmatprep.mubr.bf16.mxu0 0
        %1395 = vmatmul.mubr.bf16.gmra.mrb[0].mxu0 %v1341
        %v1396 = vpop.f32.mrb[0].mxu0
        %v1397 = vadd.f32 0.0, %v1396
        %v1398 = vpop.f32.mrb[0].mxu0
        %v1399 = vadd.f32 0.0, %v1398
        %v1400 = vpop.f32.mrb[0].mxu0
        %v1401 = vadd.f32 0.0, %v1400
        %v1402 = vpop.f32.mrb[0].mxu0
        %v1403 = vadd.f32 0.0, %v1402
        %1404 = vdwg.mxu0
        %1405 = vmatprep.subr.bf16.mxu0 0
        %1406 = vmatpush1.bf16.msra.mxu0 %v1350
        %1407 = vmatprep.subr.bf16.mxu0 0
        %1408 = vmatpush1.bf16.msra.mxu0 0
        %1409 = vmatprep.subr.bf16.mxu0 0
        %1410 = vmatpush1.bf16.msra.mxu0 0
        %1411 = vmatprep.subr.bf16.mxu0 0
        %1412 = vmatpush1.bf16.msra.mxu0 0
        %1413 = vmatprep.subr.bf16.mxu0 0
        %1414 = vmatpush1.bf16.msra.mxu0 0
        %1415 = vmatprep.subr.bf16.mxu0 0
        %1416 = vmatpush1.bf16.msra.mxu0 0
        %1417 = vmatprep.subr.bf16.mxu0 0
        %1418 = vmatpush1.bf16.msra.mxu0 0
        %1419 = vmatprep.subr.bf16.mxu0 0
        %1420 = vmatpush1.bf16.msra.mxu0 0
        %1421 = vmatprep.subr.bf16.mxu0 0
        %1422 = vmatpush1.bf16.msra.mxu0 0
        %1423 = vmatprep.subr.bf16.mxu0 0
        %1424 = vmatpush1.bf16.msra.mxu0 0
        %1425 = vmatprep.subr.bf16.mxu0 0
        %1426 = vmatpush1.bf16.msra.mxu0 0
        %1427 = vmatprep.subr.bf16.mxu0 0
        %1428 = vmatpush1.bf16.msra.mxu0 0
        %1429 = vmatprep.subr.bf16.mxu0 0
        %1430 = vmatpush1.bf16.msra.mxu0 0
        %1431 = vmatprep.subr.bf16.mxu0 0
        %1432 = vmatpush1.bf16.msra.mxu0 0
        %1433 = vmatprep.subr.bf16.mxu0 0
        %1434 = vmatpush1.bf16.msra.mxu0 0
        %1435 = vmatprep.subr.bf16.mxu0 0
        %1436 = vmatpush1.bf16.msra.mxu0 0
        %1437 = vmatprep.mubr.bf16.mxu0 0
        %1438 = vmatmul.mubr.bf16.gmra.mrb[0].mxu0 %v1338
        %v1439 = vpop.f32.mrb[0].mxu0
        %v1440 = vadd.f32 0.0, %v1439
        %v1441 = vpop.f32.mrb[0].mxu0
        %v1442 = vpop.f32.mrb[0].mxu0
        %v1443 = vadd.f32 0.0, %v1442
        %v1444 = vpop.f32.mrb[0].mxu0
        %1445 = vmatprep.mubr.bf16.mxu0 0
        %1446 = vmatmul.mubr.bf16.gmra.mrb[0].mxu0 %v1341
        %v1447 = vpop.f32.mrb[0].mxu0
        %v1448 = vadd.f32 0.0, %v1447
        %v1449 = vpop.f32.mrb[0].mxu0
        %v1450 = vpop.f32.mrb[0].mxu0
        %v1451 = vadd.f32 0.0, %v1450
        %v1452 = vpop.f32.mrb[0].mxu0
        %1453 = vdwg.mxu0
        %v1454 = vadd.f32 %v1274, %v1387
        %v1455 = vadd.f32 %v1275, %v1389
        %v1456 = vadd.f32 %v1276, %v1440
        %v1457 = vadd.f32 %v1277, %v1391
        %v1458 = vadd.f32 %v1278, %v1393
        %v1459 = vadd.f32 %v1279, %v1443
        %v1460 = vadd.f32 %v1280, %v1397
        %v1461 = vadd.f32 %v1281, %v1399
        %v1462 = vadd.f32 %v1282, %v1448
        %v1463 = vadd.f32 %v1283, %v1401
        %v1464 = vadd.f32 %v1284, %v1403
        %v1465 = vadd.f32 %v1285, %v1451
        %v1466 = vld [vmem:[%s246] sm:$0x3f]
        %v1468 = vcombine.high %v1466, %v1466
        %v1470 = vunpack.c.l.s4 1983009808
        %v1471 = vunpack.c.0.s8 %v1470
        %v1472 = vlaneseq
        %v1473 = vshrl.u32 %v1472, 7
        %v1474 = vsub.s32 %v1471, %v1473
        %v1475 = vrot.slane %v1466, %v1474
        %v1477 = vunpack.c.l.s4 1983009808
        %v1478 = vunpack.c.0.s8 %v1477
        %v1479 = vlaneseq
        %v1480 = vshrl.u32 %v1479, 7
        %v1481 = vsub.s32 %v1478, %v1480
        %v1482 = vrot.slane %v1468, %v1481
        %v1483 = vcombine.high %v1475, %v1475
        %v1487 = vpack.c.bf16 %v1475, %v1475
        %v1488 = vpack.c.bf16 %v1483, %v1483
        %v1489 = vpack.c.bf16 %v1482, %v1482
        %s1490 = scalar_lea.vmem %s2, 112
        %v1491 = vld [vmem:[%s1490] sm:$0xf]
        %v1492 = vld [vmem:[%s1490 + $0x4] sm:$0xf]
        %v1493 = vld [vmem:[%s1490 + $0x8] sm:$0xf]
        %v1494 = vld [vmem:[%s1490 + $0xc] sm:$0xf]
        %v1499 = vunpack.c.l.b16 %v1491
        %v1500 = vunpack.c.l.b16 %v1492
        %v1501 = vunpack.c.l.b16 %v1493
        %v1502 = vunpack.c.l.b16 %v1494
        %v1503 = vpack.c.b16 %v1500, %v1499
        %v1504 = vpack.c.b16 %v1502, %v1501
        %1508 = vrot.lane.b32.xlu0 %v1487, 84
        %v1509 = vpop.permute.xlu0 %1508
        %1510 = vrot.lane.b32.xlu0 %v1488, 84
        %v1511 = vpop.permute.xlu0 %1510
        %1512 = vrot.lane.b32.xlu0 %v1489, 84
        %v1513 = vpop.permute.xlu0 %1512
        %vm1514 = vcmask 687104
        %v1515 = vsel %vm1514, %v1509, %v1511
        %v1516 = vsel %vm1514, %v1511, %v1513
        %v1518 = vsel %vm311, %v1503, 0
        %v1521 = vsel %vm311, %v1504, 0
        %v1524 = vsel %vm318, %v1515, 0
        %v1527 = vsel %vm318, %v1516, 0
        %v1530 = vsel %vm318, %v1513, 0
        %1532 = vmatprep.subr.bf16.mxu0 %v1527
        %1533 = vmatpush1.bf16.msra.mxu0 %v1524
        %1534 = vmatprep.subr.bf16.mxu0 0
        %1535 = vmatpush1.bf16.msra.mxu0 0
        %1536 = vmatprep.subr.bf16.mxu0 0
        %1537 = vmatpush1.bf16.msra.mxu0 0
        %1538 = vmatprep.subr.bf16.mxu0 0
        %1539 = vmatpush1.bf16.msra.mxu0 0
        %1540 = vmatprep.subr.bf16.mxu0 0
        %1541 = vmatpush1.bf16.msra.mxu0 0
        %1542 = vmatprep.subr.bf16.mxu0 0
        %1543 = vmatpush1.bf16.msra.mxu0 0
        %1544 = vmatprep.subr.bf16.mxu0 0
        %1545 = vmatpush1.bf16.msra.mxu0 0
        %1546 = vmatprep.subr.bf16.mxu0 0
        %1547 = vmatpush1.bf16.msra.mxu0 0
        %1548 = vmatprep.subr.bf16.mxu0 0
        %1549 = vmatpush1.bf16.msra.mxu0 0
        %1550 = vmatprep.subr.bf16.mxu0 0
        %1551 = vmatpush1.bf16.msra.mxu0 0
        %1552 = vmatprep.subr.bf16.mxu0 0
        %1553 = vmatpush1.bf16.msra.mxu0 0
        %1554 = vmatprep.subr.bf16.mxu0 0
        %1555 = vmatpush1.bf16.msra.mxu0 0
        %1556 = vmatprep.subr.bf16.mxu0 0
        %1557 = vmatpush1.bf16.msra.mxu0 0
        %1558 = vmatprep.subr.bf16.mxu0 0
        %1559 = vmatpush1.bf16.msra.mxu0 0
        %1560 = vmatprep.subr.bf16.mxu0 0
        %1561 = vmatpush1.bf16.msra.mxu0 0
        %1562 = vmatprep.subr.bf16.mxu0 0
        %1563 = vmatpush1.bf16.msra.mxu0 0
        %1564 = vmatprep.mubr.bf16.mxu0 0
        %1565 = vmatmul.mubr.bf16.gmra.mrb[0].mxu0 %v1518
        %v1566 = vpop.f32.mrb[0].mxu0
        %v1567 = vadd.f32 0.0, %v1566
        %v1568 = vpop.f32.mrb[0].mxu0
        %v1569 = vadd.f32 0.0, %v1568
        %v1570 = vpop.f32.mrb[0].mxu0
        %v1571 = vadd.f32 0.0, %v1570
        %v1572 = vpop.f32.mrb[0].mxu0
        %v1573 = vadd.f32 0.0, %v1572
        %1574 = vmatprep.mubr.bf16.mxu0 0
        %1575 = vmatmul.mubr.bf16.gmra.mrb[0].mxu0 %v1521
        %v1576 = vpop.f32.mrb[0].mxu0
        %v1577 = vadd.f32 0.0, %v1576
        %v1578 = vpop.f32.mrb[0].mxu0
        %v1579 = vadd.f32 0.0, %v1578
        %v1580 = vpop.f32.mrb[0].mxu0
        %v1581 = vadd.f32 0.0, %v1580
        %v1582 = vpop.f32.mrb[0].mxu0
        %v1583 = vadd.f32 0.0, %v1582
        %1584 = vdwg.mxu0
        %1585 = vmatprep.subr.bf16.mxu0 0
        %1586 = vmatpush1.bf16.msra.mxu0 %v1530
        %1587 = vmatprep.subr.bf16.mxu0 0
        %1588 = vmatpush1.bf16.msra.mxu0 0
        %1589 = vmatprep.subr.bf16.mxu0 0
        %1590 = vmatpush1.bf16.msra.mxu0 0
        %1591 = vmatprep.subr.bf16.mxu0 0
        %1592 = vmatpush1.bf16.msra.mxu0 0
        %1593 = vmatprep.subr.bf16.mxu0 0
        %1594 = vmatpush1.bf16.msra.mxu0 0
        %1595 = vmatprep.subr.bf16.mxu0 0
        %1596 = vmatpush1.bf16.msra.mxu0 0
        %1597 = vmatprep.subr.bf16.mxu0 0
        %1598 = vmatpush1.bf16.msra.mxu0 0
        %1599 = vmatprep.subr.bf16.mxu0 0
        %1600 = vmatpush1.bf16.msra.mxu0 0
        %1601 = vmatprep.subr.bf16.mxu0 0
        %1602 = vmatpush1.bf16.msra.mxu0 0
        %1603 = vmatprep.subr.bf16.mxu0 0
        %1604 = vmatpush1.bf16.msra.mxu0 0
        %1605 = vmatprep.subr.bf16.mxu0 0
        %1606 = vmatpush1.bf16.msra.mxu0 0
        %1607 = vmatprep.subr.bf16.mxu0 0
        %1608 = vmatpush1.bf16.msra.mxu0 0
        %1609 = vmatprep.subr.bf16.mxu0 0
        %1610 = vmatpush1.bf16.msra.mxu0 0
        %1611 = vmatprep.subr.bf16.mxu0 0
        %1612 = vmatpush1.bf16.msra.mxu0 0
        %1613 = vmatprep.subr.bf16.mxu0 0
        %1614 = vmatpush1.bf16.msra.mxu0 0
        %1615 = vmatprep.subr.bf16.mxu0 0
        %1616 = vmatpush1.bf16.msra.mxu0 0
        %1617 = vmatprep.mubr.bf16.mxu0 0
        %1618 = vmatmul.mubr.bf16.gmra.mrb[0].mxu0 %v1518
        %v1619 = vpop.f32.mrb[0].mxu0
        %v1620 = vadd.f32 0.0, %v1619
        %v1621 = vpop.f32.mrb[0].mxu0
        %v1622 = vpop.f32.mrb[0].mxu0
        %v1623 = vadd.f32 0.0, %v1622
        %v1624 = vpop.f32.mrb[0].mxu0
        %1625 = vmatprep.mubr.bf16.mxu0 0
        %1626 = vmatmul.mubr.bf16.gmra.mrb[0].mxu0 %v1521
        %v1627 = vpop.f32.mrb[0].mxu0
        %v1628 = vadd.f32 0.0, %v1627
        %v1629 = vpop.f32.mrb[0].mxu0
        %v1630 = vpop.f32.mrb[0].mxu0
        %v1631 = vadd.f32 0.0, %v1630
        %v1632 = vpop.f32.mrb[0].mxu0
        %1633 = vdwg.mxu0
        %v1634 = vadd.f32 %v1454, %v1567
        %v1635 = vadd.f32 %v1455, %v1569
        %v1636 = vadd.f32 %v1456, %v1620
        %v1637 = vadd.f32 %v1457, %v1571
        %v1638 = vadd.f32 %v1458, %v1573
        %v1639 = vadd.f32 %v1459, %v1623
        %v1640 = vadd.f32 %v1460, %v1577
        %v1641 = vadd.f32 %v1461, %v1579
        %v1642 = vadd.f32 %v1462, %v1628
        %v1643 = vadd.f32 %v1463, %v1581
        %v1644 = vadd.f32 %v1464, %v1583
        %v1645 = vadd.f32 %v1465, %v1631
        %v1646 = vld [vmem:[%s246] sm:$0x3f]
        %v1648 = vcombine.high %v1646, %v1646
        %v1650 = vunpack.c.l.s4 1983009808
        %v1651 = vunpack.c.0.s8 %v1650
        %v1652 = vlaneseq
        %v1653 = vshrl.u32 %v1652, 7
        %v1654 = vsub.s32 %v1651, %v1653
        %v1655 = vrot.slane %v1646, %v1654
        %v1657 = vunpack.c.l.s4 1983009808
        %v1658 = vunpack.c.0.s8 %v1657
        %v1659 = vlaneseq
        %v1660 = vshrl.u32 %v1659, 7
        %v1661 = vsub.s32 %v1658, %v1660
        %v1662 = vrot.slane %v1648, %v1661
        %v1663 = vcombine.high %v1655, %v1655
        %v1667 = vpack.c.bf16 %v1655, %v1655
        %v1668 = vpack.c.bf16 %v1663, %v1663
        %v1669 = vpack.c.bf16 %v1662, %v1662
        %s1670 = scalar_lea.vmem %s2, 128
        %v1671 = vld [vmem:[%s1670] sm:$0xf]
        %v1672 = vld [vmem:[%s1670 + $0x4] sm:$0xf]
        %v1673 = vld [vmem:[%s1670 + $0x8] sm:$0xf]
        %v1674 = vld [vmem:[%s1670 + $0xc] sm:$0xf]
        %v1679 = vunpack.c.l.b16 %v1671
        %v1680 = vunpack.c.l.b16 %v1672
        %v1681 = vunpack.c.l.b16 %v1673
        %v1682 = vunpack.c.l.b16 %v1674
        %v1683 = vpack.c.b16 %v1680, %v1679
        %v1684 = vpack.c.b16 %v1682, %v1681
        %1688 = vrot.lane.b32.xlu0 %v1667, 83
        %v1689 = vpop.permute.xlu0 %1688
        %1690 = vrot.lane.b32.xlu0 %v1668, 83
        %v1691 = vpop.permute.xlu0 %1690
        %1692 = vrot.lane.b32.xlu0 %v1669, 83
        %v1693 = vpop.permute.xlu0 %1692
        %vm1694 = vcmask 678912
        %v1695 = vsel %vm1694, %v1689, %v1691
        %v1696 = vsel %vm1694, %v1691, %v1693
        %v1698 = vsel %vm311, %v1683, 0
        %v1701 = vsel %vm311, %v1684, 0
        %v1704 = vsel %vm318, %v1695, 0
        %v1707 = vsel %vm318, %v1696, 0
        %v1710 = vsel %vm318, %v1693, 0
        %1712 = vmatprep.subr.bf16.mxu0 %v1707
        %1713 = vmatpush1.bf16.msra.mxu0 %v1704
        %1714 = vmatprep.subr.bf16.mxu0 0
        %1715 = vmatpush1.bf16.msra.mxu0 0
        %1716 = vmatprep.subr.bf16.mxu0 0
        %1717 = vmatpush1.bf16.msra.mxu0 0
        %1718 = vmatprep.subr.bf16.mxu0 0
        %1719 = vmatpush1.bf16.msra.mxu0 0
        %1720 = vmatprep.subr.bf16.mxu0 0
        %1721 = vmatpush1.bf16.msra.mxu0 0
        %1722 = vmatprep.subr.bf16.mxu0 0
        %1723 = vmatpush1.bf16.msra.mxu0 0
        %1724 = vmatprep.subr.bf16.mxu0 0
        %1725 = vmatpush1.bf16.msra.mxu0 0
        %1726 = vmatprep.subr.bf16.mxu0 0
        %1727 = vmatpush1.bf16.msra.mxu0 0
        %1728 = vmatprep.subr.bf16.mxu0 0
        %1729 = vmatpush1.bf16.msra.mxu0 0
        %1730 = vmatprep.subr.bf16.mxu0 0
        %1731 = vmatpush1.bf16.msra.mxu0 0
        %1732 = vmatprep.subr.bf16.mxu0 0
        %1733 = vmatpush1.bf16.msra.mxu0 0
        %1734 = vmatprep.subr.bf16.mxu0 0
        %1735 = vmatpush1.bf16.msra.mxu0 0
        %1736 = vmatprep.subr.bf16.mxu0 0
        %1737 = vmatpush1.bf16.msra.mxu0 0
        %1738 = vmatprep.subr.bf16.mxu0 0
        %1739 = vmatpush1.bf16.msra.mxu0 0
        %1740 = vmatprep.subr.bf16.mxu0 0
        %1741 = vmatpush1.bf16.msra.mxu0 0
        %1742 = vmatprep.subr.bf16.mxu0 0
        %1743 = vmatpush1.bf16.msra.mxu0 0
        %1744 = vmatprep.mubr.bf16.mxu0 0
        %1745 = vmatmul.mubr.bf16.gmra.mrb[0].mxu0 %v1698
        %v1746 = vpop.f32.mrb[0].mxu0
        %v1747 = vadd.f32 0.0, %v1746
        %v1748 = vpop.f32.mrb[0].mxu0
        %v1749 = vadd.f32 0.0, %v1748
        %v1750 = vpop.f32.mrb[0].mxu0
        %v1751 = vadd.f32 0.0, %v1750
        %v1752 = vpop.f32.mrb[0].mxu0
        %v1753 = vadd.f32 0.0, %v1752
        %1754 = vmatprep.mubr.bf16.mxu0 0
        %1755 = vmatmul.mubr.bf16.gmra.mrb[0].mxu0 %v1701
        %v1756 = vpop.f32.mrb[0].mxu0
        %v1757 = vadd.f32 0.0, %v1756
        %v1758 = vpop.f32.mrb[0].mxu0
        %v1759 = vadd.f32 0.0, %v1758
        %v1760 = vpop.f32.mrb[0].mxu0
        %v1761 = vadd.f32 0.0, %v1760
        %v1762 = vpop.f32.mrb[0].mxu0
        %v1763 = vadd.f32 0.0, %v1762
        %1764 = vdwg.mxu0
        %1765 = vmatprep.subr.bf16.mxu0 0
        %1766 = vmatpush1.bf16.msra.mxu0 %v1710
        %1767 = vmatprep.subr.bf16.mxu0 0
        %1768 = vmatpush1.bf16.msra.mxu0 0
        %1769 = vmatprep.subr.bf16.mxu0 0
        %1770 = vmatpush1.bf16.msra.mxu0 0
        %1771 = vmatprep.subr.bf16.mxu0 0
        %1772 = vmatpush1.bf16.msra.mxu0 0
        %1773 = vmatprep.subr.bf16.mxu0 0
        %1774 = vmatpush1.bf16.msra.mxu0 0
        %1775 = vmatprep.subr.bf16.mxu0 0
        %1776 = vmatpush1.bf16.msra.mxu0 0
        %1777 = vmatprep.subr.bf16.mxu0 0
        %1778 = vmatpush1.bf16.msra.mxu0 0
        %1779 = vmatprep.subr.bf16.mxu0 0
        %1780 = vmatpush1.bf16.msra.mxu0 0
        %1781 = vmatprep.subr.bf16.mxu0 0
        %1782 = vmatpush1.bf16.msra.mxu0 0
        %1783 = vmatprep.subr.bf16.mxu0 0
        %1784 = vmatpush1.bf16.msra.mxu0 0
        %1785 = vmatprep.subr.bf16.mxu0 0
        %1786 = vmatpush1.bf16.msra.mxu0 0
        %1787 = vmatprep.subr.bf16.mxu0 0
        %1788 = vmatpush1.bf16.msra.mxu0 0
        %1789 = vmatprep.subr.bf16.mxu0 0
        %1790 = vmatpush1.bf16.msra.mxu0 0
        %1791 = vmatprep.subr.bf16.mxu0 0
        %1792 = vmatpush1.bf16.msra.mxu0 0
        %1793 = vmatprep.subr.bf16.mxu0 0
        %1794 = vmatpush1.bf16.msra.mxu0 0
        %1795 = vmatprep.subr.bf16.mxu0 0
        %1796 = vmatpush1.bf16.msra.mxu0 0
        %1797 = vmatprep.mubr.bf16.mxu0 0
        %1798 = vmatmul.mubr.bf16.gmra.mrb[0].mxu0 %v1698
        %v1799 = vpop.f32.mrb[0].mxu0
        %v1800 = vadd.f32 0.0, %v1799
        %v1801 = vpop.f32.mrb[0].mxu0
        %v1802 = vpop.f32.mrb[0].mxu0
        %v1803 = vadd.f32 0.0, %v1802
        %v1804 = vpop.f32.mrb[0].mxu0
        %1805 = vmatprep.mubr.bf16.mxu0 0
        %1806 = vmatmul.mubr.bf16.gmra.mrb[0].mxu0 %v1701
        %v1807 = vpop.f32.mrb[0].mxu0
        %v1808 = vadd.f32 0.0, %v1807
        %v1809 = vpop.f32.mrb[0].mxu0
        %v1810 = vpop.f32.mrb[0].mxu0
        %v1811 = vadd.f32 0.0, %v1810
        %v1812 = vpop.f32.mrb[0].mxu0
        %1813 = vdwg.mxu0
        %v1814 = vadd.f32 %v1634, %v1747
        %v1815 = vadd.f32 %v1635, %v1749
        %v1816 = vadd.f32 %v1636, %v1800
        %v1817 = vadd.f32 %v1637, %v1751
        %v1818 = vadd.f32 %v1638, %v1753
        %v1819 = vadd.f32 %v1639, %v1803
        %v1820 = vadd.f32 %v1640, %v1757
        %v1821 = vadd.f32 %v1641, %v1759
        %v1822 = vadd.f32 %v1642, %v1808
        %v1823 = vadd.f32 %v1643, %v1761
        %v1824 = vadd.f32 %v1644, %v1763
        %v1825 = vadd.f32 %v1645, %v1811
        %v1826 = vld [vmem:[%s250] sm:$0x7]
        %vm1827 = vcmp.gt.f32.partialorder %v1826, 0.0
        %v1828 = vsel %vm1827, 1, 0
        %v1829 = vlaneseq
        %v1830 = vshrl.u32 %v1829, 7
        %v1831 = vsub.s32 0, %v1830
        %v1832 = vrot.slane %v1828, %v1831
        %v1833 = vlaneseq
        %v1834 = vshrl.u32 %v1833, 7
        %v1835 = vsub.s32 1, %v1834
        %v1836 = vrot.slane %v1828, %v1835
        %v1837 = vlaneseq
        %v1838 = vshrl.u32 %v1837, 7
        %v1839 = vsub.s32 2, %v1838
        %v1840 = vrot.slane %v1828, %v1839
        %vm1841 = vcmp.eq.s32.totalorder %v1832, 1
        %vm1842 = vcmp.eq.s32.totalorder %v1836, 1
        %vm1843 = vcmp.eq.s32.totalorder %v1840, 1
        %1856 = vrot.lane.b32.xlu0 %v1814, 18
        %v1857 = vpop.permute.xlu0 %1856
        %1858 = vrot.lane.b32.xlu0 %v1815, 18
        %v1859 = vpop.permute.xlu0 %1858
        %1860 = vrot.lane.b32.xlu0 %v1816, 18
        %v1861 = vpop.permute.xlu0 %1860
        %1862 = vrot.lane.b32.xlu0 %v1817, 18
        %v1863 = vpop.permute.xlu0 %1862
        %1864 = vrot.lane.b32.xlu0 %v1818, 18
        %v1865 = vpop.permute.xlu0 %1864
        %1866 = vrot.lane.b32.xlu0 %v1819, 18
        %v1867 = vpop.permute.xlu0 %1866
        %1868 = vrot.lane.b32.xlu0 %v1820, 18
        %v1869 = vpop.permute.xlu0 %1868
        %1870 = vrot.lane.b32.xlu0 %v1821, 18
        %v1871 = vpop.permute.xlu0 %1870
        %1872 = vrot.lane.b32.xlu0 %v1822, 18
        %v1873 = vpop.permute.xlu0 %1872
        %1874 = vrot.lane.b32.xlu0 %v1823, 18
        %v1875 = vpop.permute.xlu0 %1874
        %1876 = vrot.lane.b32.xlu0 %v1824, 18
        %v1877 = vpop.permute.xlu0 %1876
        %1878 = vrot.lane.b32.xlu0 %v1825, 18
        %v1879 = vpop.permute.xlu0 %1878
        %vm1880 = vcmask 146432
        %v1881 = vsel %vm1880, %v1857, %v1859
        %v1882 = vsel %vm1880, %v1859, %v1861
        %v1883 = vsel %vm1880, %v1863, %v1865
        %v1884 = vsel %vm1880, %v1865, %v1867
        %v1885 = vsel %vm1880, %v1869, %v1871
        %v1886 = vsel %vm1880, %v1871, %v1873
        %v1887 = vsel %vm1880, %v1875, %v1877
        %v1888 = vsel %vm1880, %v1877, %v1879
        %v1901 = vsel %vm1841, %v1857, 0.0
        %v1902 = vsel %vm1842, %v1881, 0.0
        %v1903 = vsel %vm1843, %v1882, 0.0
        %v1904 = vsel %vm1841, %v1863, 0.0
        %v1905 = vsel %vm1842, %v1883, 0.0
        %v1906 = vsel %vm1843, %v1884, 0.0
        %v1907 = vsel %vm1841, %v1869, 0.0
        %v1908 = vsel %vm1842, %v1885, 0.0
        %v1909 = vsel %vm1843, %v1886, 0.0
        %v1910 = vsel %vm1841, %v1875, 0.0
        %v1911 = vsel %vm1842, %v1887, 0.0
        %v1912 = vsel %vm1843, %v1888, 0.0
        %1925 = vrot.lane.b32.xlu0 %v1901, 8
        %v1926 = vpop.permute.xlu0 %1925
        %1927 = vrot.lane.b32.xlu0 %v1902, 8
        %v1928 = vpop.permute.xlu0 %1927
        %1929 = vrot.lane.b32.xlu0 %v1903, 8
        %v1930 = vpop.permute.xlu0 %1929
        %1931 = vrot.lane.b32.xlu0 %v1904, 8
        %v1932 = vpop.permute.xlu0 %1931
        %1933 = vrot.lane.b32.xlu0 %v1905, 8
        %v1934 = vpop.permute.xlu0 %1933
        %1935 = vrot.lane.b32.xlu0 %v1906, 8
        %v1936 = vpop.permute.xlu0 %1935
        %1937 = vrot.lane.b32.xlu0 %v1907, 8
        %v1938 = vpop.permute.xlu0 %1937
        %1939 = vrot.lane.b32.xlu0 %v1908, 8
        %v1940 = vpop.permute.xlu0 %1939
        %1941 = vrot.lane.b32.xlu0 %v1909, 8
        %v1942 = vpop.permute.xlu0 %1941
        %1943 = vrot.lane.b32.xlu0 %v1910, 8
        %v1944 = vpop.permute.xlu0 %1943
        %1945 = vrot.lane.b32.xlu0 %v1911, 8
        %v1946 = vpop.permute.xlu0 %1945
        %1947 = vrot.lane.b32.xlu0 %v1912, 8
        %v1948 = vpop.permute.xlu0 %1947
        %vm1949 = vcmask 64512
        %v1950 = vsel %vm1949, %v1926, %v1928
        %v1951 = vsel %vm1949, %v1928, %v1930
        %v1952 = vsel %vm1949, %v1932, %v1934
        %v1953 = vsel %vm1949, %v1934, %v1936
        %v1954 = vsel %vm1949, %v1938, %v1940
        %v1955 = vsel %vm1949, %v1940, %v1942
        %v1956 = vsel %vm1949, %v1944, %v1946
        %v1957 = vsel %vm1949, %v1946, %v1948
        %vm1970 = vcmask 1047760
        %1971 = vst.msk [vmem:[#allocation2] sm:$0xff] %vm1970, %v1926
        %1972 = vst [vmem:[#allocation2 + $0x8] sm:$0xff] %v1950
        %vm1973 = vcmask 769024
        %1974 = vst.msk [vmem:[#allocation2 + $0x10] sm:$0xff] %vm1973, %v1951
        %1975 = vst.msk [vmem:[#allocation2 + $0x18] sm:$0xff] %vm1970, %v1932
        %1976 = vst [vmem:[#allocation2 + $0x20] sm:$0xff] %v1952
        %1977 = vst.msk [vmem:[#allocation2 + $0x28] sm:$0xff] %vm1973, %v1953
        %1978 = vst.msk [vmem:[#allocation2 + $0x30] sm:$0xff] %vm1970, %v1938
        %1979 = vst [vmem:[#allocation2 + $0x38] sm:$0xff] %v1954
        %1980 = vst.msk [vmem:[#allocation2 + $0x40] sm:$0xff] %vm1973, %v1955
        %1981 = vst.msk [vmem:[#allocation2 + $0x48] sm:$0xff] %vm1970, %v1944
        %1982 = vst [vmem:[#allocation2 + $0x50] sm:$0xff] %v1956
        %1983 = vst.msk [vmem:[#allocation2 + $0x58] sm:$0xff] %vm1973, %v1957
        %v1984 = vld [vmem:[#allocation2] sm:$0xff]
        %v1985 = vld [vmem:[#allocation2 + $0x8] sm:$0xff]
        %v1986 = vld [vmem:[#allocation2 + $0x10] sm:$0xff]
        %v1987 = vld [vmem:[#allocation2 + $0x18] sm:$0xff]
        %v1988 = vld [vmem:[#allocation2 + $0x20] sm:$0xff]
        %v1989 = vld [vmem:[#allocation2 + $0x28] sm:$0xff]
        %v1990 = vld [vmem:[#allocation2 + $0x30] sm:$0xff]
        %v1991 = vld [vmem:[#allocation2 + $0x38] sm:$0xff]
        %v1992 = vld [vmem:[#allocation2 + $0x40] sm:$0xff]
        %v1993 = vld [vmem:[#allocation2 + $0x48] sm:$0xff]
        %v1994 = vld [vmem:[#allocation2 + $0x50] sm:$0xff]
        %v1995 = vld [vmem:[#allocation2 + $0x58] sm:$0xff]
        %v1996 = vpack.c.bf16 %v1987, %v1984
        %v1997 = vpack.c.bf16 %v1988, %v1985
        %v1998 = vpack.c.bf16 %v1989, %v1986
        %v1999 = vpack.c.bf16 %v1993, %v1990
        %v2000 = vpack.c.bf16 %v1994, %v1991
        %v2001 = vpack.c.bf16 %v1995, %v1992
        %v2002 = vld [vmem:[#allocation4] sm:$0xf]
        %v2003 = vld [vmem:[#allocation4 + $0x4] sm:$0xf]
        %v2004 = vld [vmem:[#allocation4 + $0x8] sm:$0xf]
        %v2005 = vld [vmem:[#allocation4 + $0xc] sm:$0xf]
        %s2006 = scalar_lea.vmem [#allocation4], 16
        %v2007 = vld [vmem:[%s2006] sm:$0xf]
        %v2008 = vld [vmem:[%s2006 + $0x4] sm:$0xf]
        %v2009 = vld [vmem:[%s2006 + $0x8] sm:$0xf]
        %v2010 = vld [vmem:[%s2006 + $0xc] sm:$0xf]
        %v2015 = vunpack.c.l.b16 %v2007
        %v2016 = vunpack.c.l.b16 %v2008
        %v2017 = vunpack.c.l.b16 %v2009
        %v2018 = vunpack.c.l.b16 %v2010
        %v2019 = vpack.c.b16 %v2016, %v2015
        %v2020 = vpack.c.b16 %v2018, %v2017
        %2027 = vrot.lane.b32.xlu0 %v1996, 102
        %v2028 = vpop.permute.xlu0 %2027
        %2029 = vrot.lane.b32.xlu0 %v1997, 102
        %v2030 = vpop.permute.xlu0 %2029
        %2031 = vrot.lane.b32.xlu0 %v1998, 102
        %v2032 = vpop.permute.xlu0 %2031
        %2033 = vrot.lane.b32.xlu0 %v1999, 102
        %v2034 = vpop.permute.xlu0 %2033
        %2035 = vrot.lane.b32.xlu0 %v2000, 102
        %v2036 = vpop.permute.xlu0 %2035
        %2037 = vrot.lane.b32.xlu0 %v2001, 102
        %v2038 = vpop.permute.xlu0 %2037
        %v2039 = vsel %vm974, %v2028, %v2030
        %v2040 = vsel %vm974, %v2030, %v2032
        %v2041 = vsel %vm974, %v2034, %v2036
        %v2042 = vsel %vm974, %v2036, %v2038
        %vm2049 = vcmask 261120
        %v2051 = vsel %vm2049, %v2019, 0
        %v2054 = vsel %vm2049, %v2020, 0
        %2056 = vmatprep.subr.bf16.mxu0 %v2040
        %2057 = vmatpush1.bf16.msra.mxu0 %v2039
        %2058 = vmatprep.subr.bf16.mxu0 %v2042
        %2059 = vmatpush1.bf16.msra.mxu0 %v2041
        %2060 = vmatprep.subr.bf16.mxu0 0
        %2061 = vmatpush1.bf16.msra.mxu0 0
        %2062 = vmatprep.subr.bf16.mxu0 0
        %2063 = vmatpush1.bf16.msra.mxu0 0
        %2064 = vmatprep.subr.bf16.mxu0 0
        %2065 = vmatpush1.bf16.msra.mxu0 0
        %2066 = vmatprep.subr.bf16.mxu0 0
        %2067 = vmatpush1.bf16.msra.mxu0 0
        %2068 = vmatprep.subr.bf16.mxu0 0
        %2069 = vmatpush1.bf16.msra.mxu0 0
        %2070 = vmatprep.subr.bf16.mxu0 0
        %2071 = vmatpush1.bf16.msra.mxu0 0
        %2072 = vmatprep.subr.bf16.mxu0 0
        %2073 = vmatpush1.bf16.msra.mxu0 0
        %2074 = vmatprep.subr.bf16.mxu0 0
        %2075 = vmatpush1.bf16.msra.mxu0 0
        %2076 = vmatprep.subr.bf16.mxu0 0
        %2077 = vmatpush1.bf16.msra.mxu0 0
        %2078 = vmatprep.subr.bf16.mxu0 0
        %2079 = vmatpush1.bf16.msra.mxu0 0
        %2080 = vmatprep.subr.bf16.mxu0 0
        %2081 = vmatpush1.bf16.msra.mxu0 0
        %2082 = vmatprep.subr.bf16.mxu0 0
        %2083 = vmatpush1.bf16.msra.mxu0 0
        %2084 = vmatprep.subr.bf16.mxu0 0
        %2085 = vmatpush1.bf16.msra.mxu0 0
        %2086 = vmatprep.subr.bf16.mxu0 0
        %2087 = vmatpush1.bf16.msra.mxu0 0
        %2088 = vmatprep.mubr.bf16.mxu0 0
        %2089 = vmatmul.mubr.bf16.gmra.mrb[0].mxu0 %v2051
        %v2090 = vpop.f32.mrb[0].mxu0
        %v2091 = vadd.f32 0.0, %v2090
        %v2092 = vpop.f32.mrb[0].mxu0
        %v2093 = vadd.f32 0.0, %v2092
        %v2094 = vpop.f32.mrb[0].mxu0
        %v2095 = vadd.f32 0.0, %v2094
        %v2096 = vpop.f32.mrb[0].mxu0
        %v2097 = vadd.f32 0.0, %v2096
        %2098 = vmatprep.mubr.bf16.mxu0 0
        %2099 = vmatmul.mubr.bf16.gmra.mrb[0].mxu0 %v2054
        %v2100 = vpop.f32.mrb[0].mxu0
        %v2101 = vadd.f32 0.0, %v2100
        %v2102 = vpop.f32.mrb[0].mxu0
        %v2103 = vadd.f32 0.0, %v2102
        %v2104 = vpop.f32.mrb[0].mxu0
        %v2105 = vadd.f32 0.0, %v2104
        %v2106 = vpop.f32.mrb[0].mxu0
        %v2107 = vadd.f32 0.0, %v2106
        %2108 = vdwg.mxu0
        %2109 = vmatprep.subr.bf16.mxu0 0
        %2110 = vmatpush1.bf16.msra.mxu0 %v2032
        %2111 = vmatprep.subr.bf16.mxu0 0
        %2112 = vmatpush1.bf16.msra.mxu0 %v2038
        %2113 = vmatprep.subr.bf16.mxu0 0
        %2114 = vmatpush1.bf16.msra.mxu0 0
        %2115 = vmatprep.subr.bf16.mxu0 0
        %2116 = vmatpush1.bf16.msra.mxu0 0
        %2117 = vmatprep.subr.bf16.mxu0 0
        %2118 = vmatpush1.bf16.msra.mxu0 0
        %2119 = vmatprep.subr.bf16.mxu0 0
        %2120 = vmatpush1.bf16.msra.mxu0 0
        %2121 = vmatprep.subr.bf16.mxu0 0
        %2122 = vmatpush1.bf16.msra.mxu0 0
        %2123 = vmatprep.subr.bf16.mxu0 0
        %2124 = vmatpush1.bf16.msra.mxu0 0
        %2125 = vmatprep.subr.bf16.mxu0 0
        %2126 = vmatpush1.bf16.msra.mxu0 0
        %2127 = vmatprep.subr.bf16.mxu0 0
        %2128 = vmatpush1.bf16.msra.mxu0 0
        %2129 = vmatprep.subr.bf16.mxu0 0
        %2130 = vmatpush1.bf16.msra.mxu0 0
        %2131 = vmatprep.subr.bf16.mxu0 0
        %2132 = vmatpush1.bf16.msra.mxu0 0
        %2133 = vmatprep.subr.bf16.mxu0 0
        %2134 = vmatpush1.bf16.msra.mxu0 0
        %2135 = vmatprep.subr.bf16.mxu0 0
        %2136 = vmatpush1.bf16.msra.mxu0 0
        %2137 = vmatprep.subr.bf16.mxu0 0
        %2138 = vmatpush1.bf16.msra.mxu0 0
        %2139 = vmatprep.subr.bf16.mxu0 0
        %2140 = vmatpush1.bf16.msra.mxu0 0
        %2141 = vmatprep.mubr.bf16.mxu0 0
        %2142 = vmatmul.mubr.bf16.gmra.mrb[0].mxu0 %v2051
        %v2143 = vpop.f32.mrb[0].mxu0
        %v2144 = vadd.f32 0.0, %v2143
        %v2145 = vpop.f32.mrb[0].mxu0
        %v2146 = vpop.f32.mrb[0].mxu0
        %v2147 = vadd.f32 0.0, %v2146
        %v2148 = vpop.f32.mrb[0].mxu0
        %2149 = vmatprep.mubr.bf16.mxu0 0
        %2150 = vmatmul.mubr.bf16.gmra.mrb[0].mxu0 %v2054
        %v2151 = vpop.f32.mrb[0].mxu0
        %v2152 = vadd.f32 0.0, %v2151
        %v2153 = vpop.f32.mrb[0].mxu0
        %v2154 = vpop.f32.mrb[0].mxu0
        %v2155 = vadd.f32 0.0, %v2154
        %v2156 = vpop.f32.mrb[0].mxu0
        %2157 = vdwg.mxu0
        %v2162 = vunpack.c.l.b16 %v2002
        %v2163 = vunpack.c.l.b16 %v2003
        %v2164 = vunpack.c.l.b16 %v2004
        %v2165 = vunpack.c.l.b16 %v2005
        %v2166 = vpack.c.b16 %v2163, %v2162
        %v2167 = vpack.c.b16 %v2165, %v2164
        %2168 = vrot.lane.b32.xlu0 %v1996, 103
        %v2169 = vpop.permute.xlu0 %2168
        %2170 = vrot.lane.b32.xlu0 %v1997, 103
        %v2171 = vpop.permute.xlu0 %2170
        %2172 = vrot.lane.b32.xlu0 %v1998, 103
        %v2173 = vpop.permute.xlu0 %2172
        %2174 = vrot.lane.b32.xlu0 %v1999, 103
        %v2175 = vpop.permute.xlu0 %2174
        %2176 = vrot.lane.b32.xlu0 %v2000, 103
        %v2177 = vpop.permute.xlu0 %2176
        %2178 = vrot.lane.b32.xlu0 %v2001, 103
        %v2179 = vpop.permute.xlu0 %2178
        %v2180 = vsel %vm794, %v2169, %v2171
        %v2181 = vsel %vm794, %v2171, %v2173
        %v2182 = vsel %vm794, %v2175, %v2177
        %v2183 = vsel %vm794, %v2177, %v2179
        %v2191 = vsel %vm2049, %v2166, 0
        %v2194 = vsel %vm2049, %v2167, 0
        %2196 = vmatprep.subr.bf16.mxu0 %v2181
        %2197 = vmatpush1.bf16.msra.mxu0 %v2180
        %2198 = vmatprep.subr.bf16.mxu0 %v2183
        %2199 = vmatpush1.bf16.msra.mxu0 %v2182
        %2200 = vmatprep.subr.bf16.mxu0 0
        %2201 = vmatpush1.bf16.msra.mxu0 0
        %2202 = vmatprep.subr.bf16.mxu0 0
        %2203 = vmatpush1.bf16.msra.mxu0 0
        %2204 = vmatprep.subr.bf16.mxu0 0
        %2205 = vmatpush1.bf16.msra.mxu0 0
        %2206 = vmatprep.subr.bf16.mxu0 0
        %2207 = vmatpush1.bf16.msra.mxu0 0
        %2208 = vmatprep.subr.bf16.mxu0 0
        %2209 = vmatpush1.bf16.msra.mxu0 0
        %2210 = vmatprep.subr.bf16.mxu0 0
        %2211 = vmatpush1.bf16.msra.mxu0 0
        %2212 = vmatprep.subr.bf16.mxu0 0
        %2213 = vmatpush1.bf16.msra.mxu0 0
        %2214 = vmatprep.subr.bf16.mxu0 0
        %2215 = vmatpush1.bf16.msra.mxu0 0
        %2216 = vmatprep.subr.bf16.mxu0 0
        %2217 = vmatpush1.bf16.msra.mxu0 0
        %2218 = vmatprep.subr.bf16.mxu0 0
        %2219 = vmatpush1.bf16.msra.mxu0 0
        %2220 = vmatprep.subr.bf16.mxu0 0
        %2221 = vmatpush1.bf16.msra.mxu0 0
        %2222 = vmatprep.subr.bf16.mxu0 0
        %2223 = vmatpush1.bf16.msra.mxu0 0
        %2224 = vmatprep.subr.bf16.mxu0 0
        %2225 = vmatpush1.bf16.msra.mxu0 0
        %2226 = vmatprep.subr.bf16.mxu0 0
        %2227 = vmatpush1.bf16.msra.mxu0 0
        %2228 = vmatprep.mubr.bf16.mxu0 0
        %2229 = vmatmul.mubr.bf16.gmra.mrb[0].mxu0 %v2191
        %v2230 = vpop.f32.mrb[0].mxu0
        %v2231 = vadd.f32 %v2091, %v2230
        %v2232 = vpop.f32.mrb[0].mxu0
        %v2233 = vadd.f32 %v2093, %v2232
        %v2234 = vpop.f32.mrb[0].mxu0
        %v2235 = vadd.f32 %v2095, %v2234
        %v2236 = vpop.f32.mrb[0].mxu0
        %v2237 = vadd.f32 %v2097, %v2236
        %2238 = vmatprep.mubr.bf16.mxu0 0
        %2239 = vmatmul.mubr.bf16.gmra.mrb[0].mxu0 %v2194
        %v2240 = vpop.f32.mrb[0].mxu0
        %v2241 = vadd.f32 %v2101, %v2240
        %v2242 = vpop.f32.mrb[0].mxu0
        %v2243 = vadd.f32 %v2103, %v2242
        %v2244 = vpop.f32.mrb[0].mxu0
        %v2245 = vadd.f32 %v2105, %v2244
        %v2246 = vpop.f32.mrb[0].mxu0
        %v2247 = vadd.f32 %v2107, %v2246
        %2248 = vdwg.mxu0
        %2249 = vmatprep.subr.bf16.mxu0 0
        %2250 = vmatpush1.bf16.msra.mxu0 %v2173
        %2251 = vmatprep.subr.bf16.mxu0 0
        %2252 = vmatpush1.bf16.msra.mxu0 %v2179
        %2253 = vmatprep.subr.bf16.mxu0 0
        %2254 = vmatpush1.bf16.msra.mxu0 0
        %2255 = vmatprep.subr.bf16.mxu0 0
        %2256 = vmatpush1.bf16.msra.mxu0 0
        %2257 = vmatprep.subr.bf16.mxu0 0
        %2258 = vmatpush1.bf16.msra.mxu0 0
        %2259 = vmatprep.subr.bf16.mxu0 0
        %2260 = vmatpush1.bf16.msra.mxu0 0
        %2261 = vmatprep.subr.bf16.mxu0 0
        %2262 = vmatpush1.bf16.msra.mxu0 0
        %2263 = vmatprep.subr.bf16.mxu0 0
        %2264 = vmatpush1.bf16.msra.mxu0 0
        %2265 = vmatprep.subr.bf16.mxu0 0
        %2266 = vmatpush1.bf16.msra.mxu0 0
        %2267 = vmatprep.subr.bf16.mxu0 0
        %2268 = vmatpush1.bf16.msra.mxu0 0
        %2269 = vmatprep.subr.bf16.mxu0 0
        %2270 = vmatpush1.bf16.msra.mxu0 0
        %2271 = vmatprep.subr.bf16.mxu0 0
        %2272 = vmatpush1.bf16.msra.mxu0 0
        %2273 = vmatprep.subr.bf16.mxu0 0
        %2274 = vmatpush1.bf16.msra.mxu0 0
        %2275 = vmatprep.subr.bf16.mxu0 0
        %2276 = vmatpush1.bf16.msra.mxu0 0
        %2277 = vmatprep.subr.bf16.mxu0 0
        %2278 = vmatpush1.bf16.msra.mxu0 0
        %2279 = vmatprep.subr.bf16.mxu0 0
        %2280 = vmatpush1.bf16.msra.mxu0 0
        %2281 = vmatprep.mubr.bf16.mxu0 0
        %2282 = vmatmul.mubr.bf16.gmra.mrb[0].mxu0 %v2191
        %v2283 = vpop.f32.mrb[0].mxu0
        %v2284 = vadd.f32 %v2144, %v2283
        %v2285 = vpop.f32.mrb[0].mxu0
        %v2286 = vpop.f32.mrb[0].mxu0
        %v2287 = vadd.f32 %v2147, %v2286
        %v2288 = vpop.f32.mrb[0].mxu0
        %2289 = vmatprep.mubr.bf16.mxu0 0
        %2290 = vmatmul.mubr.bf16.gmra.mrb[0].mxu0 %v2194
        %v2291 = vpop.f32.mrb[0].mxu0
        %v2292 = vadd.f32 %v2152, %v2291
        %v2293 = vpop.f32.mrb[0].mxu0
        %v2294 = vpop.f32.mrb[0].mxu0
        %v2295 = vadd.f32 %v2155, %v2294
        %v2296 = vpop.f32.mrb[0].mxu0
        %2297 = vdwg.mxu0
        %s2298 = scalar_lea.vmem [#allocation4], 32
        %v2299 = vld [vmem:[%s2298] sm:$0xf]
        %v2300 = vld [vmem:[%s2298 + $0x4] sm:$0xf]
        %v2301 = vld [vmem:[%s2298 + $0x8] sm:$0xf]
        %v2302 = vld [vmem:[%s2298 + $0xc] sm:$0xf]
        %v2307 = vunpack.c.l.b16 %v2299
        %v2308 = vunpack.c.l.b16 %v2300
        %v2309 = vunpack.c.l.b16 %v2301
        %v2310 = vunpack.c.l.b16 %v2302
        %v2311 = vpack.c.b16 %v2308, %v2307
        %v2312 = vpack.c.b16 %v2310, %v2309
        %2313 = vrot.lane.b32.xlu0 %v1996, 101
        %v2314 = vpop.permute.xlu0 %2313
        %2315 = vrot.lane.b32.xlu0 %v1997, 101
        %v2316 = vpop.permute.xlu0 %2315
        %2317 = vrot.lane.b32.xlu0 %v1998, 101
        %v2318 = vpop.permute.xlu0 %2317
        %2319 = vrot.lane.b32.xlu0 %v1999, 101
        %v2320 = vpop.permute.xlu0 %2319
        %2321 = vrot.lane.b32.xlu0 %v2000, 101
        %v2322 = vpop.permute.xlu0 %2321
        %2323 = vrot.lane.b32.xlu0 %v2001, 101
        %v2324 = vpop.permute.xlu0 %2323
        %v2325 = vsel %vm1154, %v2314, %v2316
        %v2326 = vsel %vm1154, %v2316, %v2318
        %v2327 = vsel %vm1154, %v2320, %v2322
        %v2328 = vsel %vm1154, %v2322, %v2324
        %v2336 = vsel %vm2049, %v2311, 0
        %v2339 = vsel %vm2049, %v2312, 0
        %2341 = vmatprep.subr.bf16.mxu0 %v2326
        %2342 = vmatpush1.bf16.msra.mxu0 %v2325
        %2343 = vmatprep.subr.bf16.mxu0 %v2328
        %2344 = vmatpush1.bf16.msra.mxu0 %v2327
        %2345 = vmatprep.subr.bf16.mxu0 0
        %2346 = vmatpush1.bf16.msra.mxu0 0
        %2347 = vmatprep.subr.bf16.mxu0 0
        %2348 = vmatpush1.bf16.msra.mxu0 0
        %2349 = vmatprep.subr.bf16.mxu0 0
        %2350 = vmatpush1.bf16.msra.mxu0 0
        %2351 = vmatprep.subr.bf16.mxu0 0
        %2352 = vmatpush1.bf16.msra.mxu0 0
        %2353 = vmatprep.subr.bf16.mxu0 0
        %2354 = vmatpush1.bf16.msra.mxu0 0
        %2355 = vmatprep.subr.bf16.mxu0 0
        %2356 = vmatpush1.bf16.msra.mxu0 0
        %2357 = vmatprep.subr.bf16.mxu0 0
        %2358 = vmatpush1.bf16.msra.mxu0 0
        %2359 = vmatprep.subr.bf16.mxu0 0
        %2360 = vmatpush1.bf16.msra.mxu0 0
        %2361 = vmatprep.subr.bf16.mxu0 0
        %2362 = vmatpush1.bf16.msra.mxu0 0
        %2363 = vmatprep.subr.bf16.mxu0 0
        %2364 = vmatpush1.bf16.msra.mxu0 0
        %2365 = vmatprep.subr.bf16.mxu0 0
        %2366 = vmatpush1.bf16.msra.mxu0 0
        %2367 = vmatprep.subr.bf16.mxu0 0
        %2368 = vmatpush1.bf16.msra.mxu0 0
        %2369 = vmatprep.subr.bf16.mxu0 0
        %2370 = vmatpush1.bf16.msra.mxu0 0
        %2371 = vmatprep.subr.bf16.mxu0 0
        %2372 = vmatpush1.bf16.msra.mxu0 0
        %2373 = vmatprep.mubr.bf16.mxu0 0
        %2374 = vmatmul.mubr.bf16.gmra.mrb[0].mxu0 %v2336
        %v2375 = vpop.f32.mrb[0].mxu0
        %v2376 = vadd.f32 0.0, %v2375
        %v2377 = vpop.f32.mrb[0].mxu0
        %v2378 = vadd.f32 0.0, %v2377
        %v2379 = vpop.f32.mrb[0].mxu0
        %v2380 = vadd.f32 0.0, %v2379
        %v2381 = vpop.f32.mrb[0].mxu0
        %v2382 = vadd.f32 0.0, %v2381
        %2383 = vmatprep.mubr.bf16.mxu0 0
        %2384 = vmatmul.mubr.bf16.gmra.mrb[0].mxu0 %v2339
        %v2385 = vpop.f32.mrb[0].mxu0
        %v2386 = vadd.f32 0.0, %v2385
        %v2387 = vpop.f32.mrb[0].mxu0
        %v2388 = vadd.f32 0.0, %v2387
        %v2389 = vpop.f32.mrb[0].mxu0
        %v2390 = vadd.f32 0.0, %v2389
        %v2391 = vpop.f32.mrb[0].mxu0
        %v2392 = vadd.f32 0.0, %v2391
        %2393 = vdwg.mxu0
        %2394 = vmatprep.subr.bf16.mxu0 0
        %2395 = vmatpush1.bf16.msra.mxu0 %v2318
        %2396 = vmatprep.subr.bf16.mxu0 0
        %2397 = vmatpush1.bf16.msra.mxu0 %v2324
        %2398 = vmatprep.subr.bf16.mxu0 0
        %2399 = vmatpush1.bf16.msra.mxu0 0
        %2400 = vmatprep.subr.bf16.mxu0 0
        %2401 = vmatpush1.bf16.msra.mxu0 0
        %2402 = vmatprep.subr.bf16.mxu0 0
        %2403 = vmatpush1.bf16.msra.mxu0 0
        %2404 = vmatprep.subr.bf16.mxu0 0
        %2405 = vmatpush1.bf16.msra.mxu0 0
        %2406 = vmatprep.subr.bf16.mxu0 0
        %2407 = vmatpush1.bf16.msra.mxu0 0
        %2408 = vmatprep.subr.bf16.mxu0 0
        %2409 = vmatpush1.bf16.msra.mxu0 0
        %2410 = vmatprep.subr.bf16.mxu0 0
        %2411 = vmatpush1.bf16.msra.mxu0 0
        %2412 = vmatprep.subr.bf16.mxu0 0
        %2413 = vmatpush1.bf16.msra.mxu0 0
        %2414 = vmatprep.subr.bf16.mxu0 0
        %2415 = vmatpush1.bf16.msra.mxu0 0
        %2416 = vmatprep.subr.bf16.mxu0 0
        %2417 = vmatpush1.bf16.msra.mxu0 0
        %2418 = vmatprep.subr.bf16.mxu0 0
        %2419 = vmatpush1.bf16.msra.mxu0 0
        %2420 = vmatprep.subr.bf16.mxu0 0
        %2421 = vmatpush1.bf16.msra.mxu0 0
        %2422 = vmatprep.subr.bf16.mxu0 0
        %2423 = vmatpush1.bf16.msra.mxu0 0
        %2424 = vmatprep.subr.bf16.mxu0 0
        %2425 = vmatpush1.bf16.msra.mxu0 0
        %2426 = vmatprep.mubr.bf16.mxu0 0
        %2427 = vmatmul.mubr.bf16.gmra.mrb[0].mxu0 %v2336
        %v2428 = vpop.f32.mrb[0].mxu0
        %v2429 = vadd.f32 0.0, %v2428
        %v2430 = vpop.f32.mrb[0].mxu0
        %v2431 = vpop.f32.mrb[0].mxu0
        %v2432 = vadd.f32 0.0, %v2431
        %v2433 = vpop.f32.mrb[0].mxu0
        %2434 = vmatprep.mubr.bf16.mxu0 0
        %2435 = vmatmul.mubr.bf16.gmra.mrb[0].mxu0 %v2339
        %v2436 = vpop.f32.mrb[0].mxu0
        %v2437 = vadd.f32 0.0, %v2436
        %v2438 = vpop.f32.mrb[0].mxu0
        %v2439 = vpop.f32.mrb[0].mxu0
        %v2440 = vadd.f32 0.0, %v2439
        %v2441 = vpop.f32.mrb[0].mxu0
        %2442 = vdwg.mxu0
        %v2443 = vadd.f32 %v2231, %v2376
        %v2444 = vadd.f32 %v2233, %v2378
        %v2445 = vadd.f32 %v2284, %v2429
        %v2446 = vadd.f32 %v2235, %v2380
        %v2447 = vadd.f32 %v2237, %v2382
        %v2448 = vadd.f32 %v2287, %v2432
        %v2449 = vadd.f32 %v2241, %v2386
        %v2450 = vadd.f32 %v2243, %v2388
        %v2451 = vadd.f32 %v2292, %v2437
        %v2452 = vadd.f32 %v2245, %v2390
        %v2453 = vadd.f32 %v2247, %v2392
        %v2454 = vadd.f32 %v2295, %v2440
        %s2455 = scalar_lea.vmem [#allocation4], 48
        %v2456 = vld [vmem:[%s2455] sm:$0xf]
        %v2457 = vld [vmem:[%s2455 + $0x4] sm:$0xf]
        %v2458 = vld [vmem:[%s2455 + $0x8] sm:$0xf]
        %v2459 = vld [vmem:[%s2455 + $0xc] sm:$0xf]
        %v2464 = vunpack.c.l.b16 %v2456
        %v2465 = vunpack.c.l.b16 %v2457
        %v2466 = vunpack.c.l.b16 %v2458
        %v2467 = vunpack.c.l.b16 %v2459
        %v2468 = vpack.c.b16 %v2465, %v2464
        %v2469 = vpack.c.b16 %v2467, %v2466
        %2470 = vrot.lane.b32.xlu0 %v1996, 85
        %v2471 = vpop.permute.xlu0 %2470
        %2472 = vrot.lane.b32.xlu0 %v1997, 85
        %v2473 = vpop.permute.xlu0 %2472
        %2474 = vrot.lane.b32.xlu0 %v1998, 85
        %v2475 = vpop.permute.xlu0 %2474
        %2476 = vrot.lane.b32.xlu0 %v1999, 85
        %v2477 = vpop.permute.xlu0 %2476
        %2478 = vrot.lane.b32.xlu0 %v2000, 85
        %v2479 = vpop.permute.xlu0 %2478
        %2480 = vrot.lane.b32.xlu0 %v2001, 85
        %v2481 = vpop.permute.xlu0 %2480
        %v2482 = vsel %vm1334, %v2471, %v2473
        %v2483 = vsel %vm1334, %v2473, %v2475
        %v2484 = vsel %vm1334, %v2477, %v2479
        %v2485 = vsel %vm1334, %v2479, %v2481
        %v2493 = vsel %vm2049, %v2468, 0
        %v2496 = vsel %vm2049, %v2469, 0
        %2498 = vmatprep.subr.bf16.mxu0 %v2483
        %2499 = vmatpush1.bf16.msra.mxu0 %v2482
        %2500 = vmatprep.subr.bf16.mxu0 %v2485
        %2501 = vmatpush1.bf16.msra.mxu0 %v2484
        %2502 = vmatprep.subr.bf16.mxu0 0
        %2503 = vmatpush1.bf16.msra.mxu0 0
        %2504 = vmatprep.subr.bf16.mxu0 0
        %2505 = vmatpush1.bf16.msra.mxu0 0
        %2506 = vmatprep.subr.bf16.mxu0 0
        %2507 = vmatpush1.bf16.msra.mxu0 0
        %2508 = vmatprep.subr.bf16.mxu0 0
        %2509 = vmatpush1.bf16.msra.mxu0 0
        %2510 = vmatprep.subr.bf16.mxu0 0
        %2511 = vmatpush1.bf16.msra.mxu0 0
        %2512 = vmatprep.subr.bf16.mxu0 0
        %2513 = vmatpush1.bf16.msra.mxu0 0
        %2514 = vmatprep.subr.bf16.mxu0 0
        %2515 = vmatpush1.bf16.msra.mxu0 0
        %2516 = vmatprep.subr.bf16.mxu0 0
        %2517 = vmatpush1.bf16.msra.mxu0 0
        %2518 = vmatprep.subr.bf16.mxu0 0
        %2519 = vmatpush1.bf16.msra.mxu0 0
        %2520 = vmatprep.subr.bf16.mxu0 0
        %2521 = vmatpush1.bf16.msra.mxu0 0
        %2522 = vmatprep.subr.bf16.mxu0 0
        %2523 = vmatpush1.bf16.msra.mxu0 0
        %2524 = vmatprep.subr.bf16.mxu0 0
        %2525 = vmatpush1.bf16.msra.mxu0 0
        %2526 = vmatprep.subr.bf16.mxu0 0
        %2527 = vmatpush1.bf16.msra.mxu0 0
        %2528 = vmatprep.subr.bf16.mxu0 0
        %2529 = vmatpush1.bf16.msra.mxu0 0
        %2530 = vmatprep.mubr.bf16.mxu0 0
        %2531 = vmatmul.mubr.bf16.gmra.mrb[0].mxu0 %v2493
        %v2532 = vpop.f32.mrb[0].mxu0
        %v2533 = vadd.f32 0.0, %v2532
        %v2534 = vpop.f32.mrb[0].mxu0
        %v2535 = vadd.f32 0.0, %v2534
        %v2536 = vpop.f32.mrb[0].mxu0
        %v2537 = vadd.f32 0.0, %v2536
        %v2538 = vpop.f32.mrb[0].mxu0
        %v2539 = vadd.f32 0.0, %v2538
        %2540 = vmatprep.mubr.bf16.mxu0 0
        %2541 = vmatmul.mubr.bf16.gmra.mrb[0].mxu0 %v2496
        %v2542 = vpop.f32.mrb[0].mxu0
        %v2543 = vadd.f32 0.0, %v2542
        %v2544 = vpop.f32.mrb[0].mxu0
        %v2545 = vadd.f32 0.0, %v2544
        %v2546 = vpop.f32.mrb[0].mxu0
        %v2547 = vadd.f32 0.0, %v2546
        %v2548 = vpop.f32.mrb[0].mxu0
        %v2549 = vadd.f32 0.0, %v2548
        %2550 = vdwg.mxu0
        %2551 = vmatprep.subr.bf16.mxu0 0
        %2552 = vmatpush1.bf16.msra.mxu0 %v2475
        %2553 = vmatprep.subr.bf16.mxu0 0
        %2554 = vmatpush1.bf16.msra.mxu0 %v2481
        %2555 = vmatprep.subr.bf16.mxu0 0
        %2556 = vmatpush1.bf16.msra.mxu0 0
        %2557 = vmatprep.subr.bf16.mxu0 0
        %2558 = vmatpush1.bf16.msra.mxu0 0
        %2559 = vmatprep.subr.bf16.mxu0 0
        %2560 = vmatpush1.bf16.msra.mxu0 0
        %2561 = vmatprep.subr.bf16.mxu0 0
        %2562 = vmatpush1.bf16.msra.mxu0 0
        %2563 = vmatprep.subr.bf16.mxu0 0
        %2564 = vmatpush1.bf16.msra.mxu0 0
        %2565 = vmatprep.subr.bf16.mxu0 0
        %2566 = vmatpush1.bf16.msra.mxu0 0
        %2567 = vmatprep.subr.bf16.mxu0 0
        %2568 = vmatpush1.bf16.msra.mxu0 0
        %2569 = vmatprep.subr.bf16.mxu0 0
        %2570 = vmatpush1.bf16.msra.mxu0 0
        %2571 = vmatprep.subr.bf16.mxu0 0
        %2572 = vmatpush1.bf16.msra.mxu0 0
        %2573 = vmatprep.subr.bf16.mxu0 0
        %2574 = vmatpush1.bf16.msra.mxu0 0
        %2575 = vmatprep.subr.bf16.mxu0 0
        %2576 = vmatpush1.bf16.msra.mxu0 0
        %2577 = vmatprep.subr.bf16.mxu0 0
        %2578 = vmatpush1.bf16.msra.mxu0 0
        %2579 = vmatprep.subr.bf16.mxu0 0
        %2580 = vmatpush1.bf16.msra.mxu0 0
        %2581 = vmatprep.subr.bf16.mxu0 0
        %2582 = vmatpush1.bf16.msra.mxu0 0
        %2583 = vmatprep.mubr.bf16.mxu0 0
        %2584 = vmatmul.mubr.bf16.gmra.mrb[0].mxu0 %v2493
        %v2585 = vpop.f32.mrb[0].mxu0
        %v2586 = vadd.f32 0.0, %v2585
        %v2587 = vpop.f32.mrb[0].mxu0
        %v2588 = vpop.f32.mrb[0].mxu0
        %v2589 = vadd.f32 0.0, %v2588
        %v2590 = vpop.f32.mrb[0].mxu0
        %2591 = vmatprep.mubr.bf16.mxu0 0
        %2592 = vmatmul.mubr.bf16.gmra.mrb[0].mxu0 %v2496
        %v2593 = vpop.f32.mrb[0].mxu0
        %v2594 = vadd.f32 0.0, %v2593
        %v2595 = vpop.f32.mrb[0].mxu0
        %v2596 = vpop.f32.mrb[0].mxu0
        %v2597 = vadd.f32 0.0, %v2596
        %v2598 = vpop.f32.mrb[0].mxu0
        %2599 = vdwg.mxu0
        %v2600 = vadd.f32 %v2443, %v2533
        %v2601 = vadd.f32 %v2444, %v2535
        %v2602 = vadd.f32 %v2445, %v2586
        %v2603 = vadd.f32 %v2446, %v2537
        %v2604 = vadd.f32 %v2447, %v2539
        %v2605 = vadd.f32 %v2448, %v2589
        %v2606 = vadd.f32 %v2449, %v2543
        %v2607 = vadd.f32 %v2450, %v2545
        %v2608 = vadd.f32 %v2451, %v2594
        %v2609 = vadd.f32 %v2452, %v2547
        %v2610 = vadd.f32 %v2453, %v2549
        %v2611 = vadd.f32 %v2454, %v2597
        %s2612 = scalar_lea.vmem [#allocation4], 64
        %v2613 = vld [vmem:[%s2612] sm:$0xf]
        %v2614 = vld [vmem:[%s2612 + $0x4] sm:$0xf]
        %v2615 = vld [vmem:[%s2612 + $0x8] sm:$0xf]
        %v2616 = vld [vmem:[%s2612 + $0xc] sm:$0xf]
        %v2621 = vunpack.c.l.b16 %v2613
        %v2622 = vunpack.c.l.b16 %v2614
        %v2623 = vunpack.c.l.b16 %v2615
        %v2624 = vunpack.c.l.b16 %v2616
        %v2625 = vpack.c.b16 %v2622, %v2621
        %v2626 = vpack.c.b16 %v2624, %v2623
        %2627 = vrot.lane.b32.xlu0 %v1996, 84
        %v2628 = vpop.permute.xlu0 %2627
        %2629 = vrot.lane.b32.xlu0 %v1997, 84
        %v2630 = vpop.permute.xlu0 %2629
        %2631 = vrot.lane.b32.xlu0 %v1998, 84
        %v2632 = vpop.permute.xlu0 %2631
        %2633 = vrot.lane.b32.xlu0 %v1999, 84
        %v2634 = vpop.permute.xlu0 %2633
        %2635 = vrot.lane.b32.xlu0 %v2000, 84
        %v2636 = vpop.permute.xlu0 %2635
        %2637 = vrot.lane.b32.xlu0 %v2001, 84
        %v2638 = vpop.permute.xlu0 %2637
        %v2639 = vsel %vm1514, %v2628, %v2630
        %v2640 = vsel %vm1514, %v2630, %v2632
        %v2641 = vsel %vm1514, %v2634, %v2636
        %v2642 = vsel %vm1514, %v2636, %v2638
        %v2650 = vsel %vm2049, %v2625, 0
        %v2653 = vsel %vm2049, %v2626, 0
        %2655 = vmatprep.subr.bf16.mxu0 %v2640
        %2656 = vmatpush1.bf16.msra.mxu0 %v2639
        %2657 = vmatprep.subr.bf16.mxu0 %v2642
        %2658 = vmatpush1.bf16.msra.mxu0 %v2641
        %2659 = vmatprep.subr.bf16.mxu0 0
        %2660 = vmatpush1.bf16.msra.mxu0 0
        %2661 = vmatprep.subr.bf16.mxu0 0
        %2662 = vmatpush1.bf16.msra.mxu0 0
        %2663 = vmatprep.subr.bf16.mxu0 0
        %2664 = vmatpush1.bf16.msra.mxu0 0
        %2665 = vmatprep.subr.bf16.mxu0 0
        %2666 = vmatpush1.bf16.msra.mxu0 0
        %2667 = vmatprep.subr.bf16.mxu0 0
        %2668 = vmatpush1.bf16.msra.mxu0 0
        %2669 = vmatprep.subr.bf16.mxu0 0
        %2670 = vmatpush1.bf16.msra.mxu0 0
        %2671 = vmatprep.subr.bf16.mxu0 0
        %2672 = vmatpush1.bf16.msra.mxu0 0
        %2673 = vmatprep.subr.bf16.mxu0 0
        %2674 = vmatpush1.bf16.msra.mxu0 0
        %2675 = vmatprep.subr.bf16.mxu0 0
        %2676 = vmatpush1.bf16.msra.mxu0 0
        %2677 = vmatprep.subr.bf16.mxu0 0
        %2678 = vmatpush1.bf16.msra.mxu0 0
        %2679 = vmatprep.subr.bf16.mxu0 0
        %2680 = vmatpush1.bf16.msra.mxu0 0
        %2681 = vmatprep.subr.bf16.mxu0 0
        %2682 = vmatpush1.bf16.msra.mxu0 0
        %2683 = vmatprep.subr.bf16.mxu0 0
        %2684 = vmatpush1.bf16.msra.mxu0 0
        %2685 = vmatprep.subr.bf16.mxu0 0
        %2686 = vmatpush1.bf16.msra.mxu0 0
        %2687 = vmatprep.mubr.bf16.mxu0 0
        %2688 = vmatmul.mubr.bf16.gmra.mrb[0].mxu0 %v2650
        %v2689 = vpop.f32.mrb[0].mxu0
        %v2690 = vadd.f32 0.0, %v2689
        %v2691 = vpop.f32.mrb[0].mxu0
        %v2692 = vadd.f32 0.0, %v2691
        %v2693 = vpop.f32.mrb[0].mxu0
        %v2694 = vadd.f32 0.0, %v2693
        %v2695 = vpop.f32.mrb[0].mxu0
        %v2696 = vadd.f32 0.0, %v2695
        %2697 = vmatprep.mubr.bf16.mxu0 0
        %2698 = vmatmul.mubr.bf16.gmra.mrb[0].mxu0 %v2653
        %v2699 = vpop.f32.mrb[0].mxu0
        %v2700 = vadd.f32 0.0, %v2699
        %v2701 = vpop.f32.mrb[0].mxu0
        %v2702 = vadd.f32 0.0, %v2701
        %v2703 = vpop.f32.mrb[0].mxu0
        %v2704 = vadd.f32 0.0, %v2703
        %v2705 = vpop.f32.mrb[0].mxu0
        %v2706 = vadd.f32 0.0, %v2705
        %2707 = vdwg.mxu0
        %2708 = vmatprep.subr.bf16.mxu0 0
        %2709 = vmatpush1.bf16.msra.mxu0 %v2632
        %2710 = vmatprep.subr.bf16.mxu0 0
        %2711 = vmatpush1.bf16.msra.mxu0 %v2638
        %2712 = vmatprep.subr.bf16.mxu0 0
        %2713 = vmatpush1.bf16.msra.mxu0 0
        %2714 = vmatprep.subr.bf16.mxu0 0
        %2715 = vmatpush1.bf16.msra.mxu0 0
        %2716 = vmatprep.subr.bf16.mxu0 0
        %2717 = vmatpush1.bf16.msra.mxu0 0
        %2718 = vmatprep.subr.bf16.mxu0 0
        %2719 = vmatpush1.bf16.msra.mxu0 0
        %2720 = vmatprep.subr.bf16.mxu0 0
        %2721 = vmatpush1.bf16.msra.mxu0 0
        %2722 = vmatprep.subr.bf16.mxu0 0
        %2723 = vmatpush1.bf16.msra.mxu0 0
        %2724 = vmatprep.subr.bf16.mxu0 0
        %2725 = vmatpush1.bf16.msra.mxu0 0
        %2726 = vmatprep.subr.bf16.mxu0 0
        %2727 = vmatpush1.bf16.msra.mxu0 0
        %2728 = vmatprep.subr.bf16.mxu0 0
        %2729 = vmatpush1.bf16.msra.mxu0 0
        %2730 = vmatprep.subr.bf16.mxu0 0
        %2731 = vmatpush1.bf16.msra.mxu0 0
        %2732 = vmatprep.subr.bf16.mxu0 0
        %2733 = vmatpush1.bf16.msra.mxu0 0
        %2734 = vmatprep.subr.bf16.mxu0 0
        %2735 = vmatpush1.bf16.msra.mxu0 0
        %2736 = vmatprep.subr.bf16.mxu0 0
        %2737 = vmatpush1.bf16.msra.mxu0 0
        %2738 = vmatprep.subr.bf16.mxu0 0
        %2739 = vmatpush1.bf16.msra.mxu0 0
        %2740 = vmatprep.mubr.bf16.mxu0 0
        %2741 = vmatmul.mubr.bf16.gmra.mrb[0].mxu0 %v2650
        %v2742 = vpop.f32.mrb[0].mxu0
        %v2743 = vadd.f32 0.0, %v2742
        %v2744 = vpop.f32.mrb[0].mxu0
        %v2745 = vpop.f32.mrb[0].mxu0
        %v2746 = vadd.f32 0.0, %v2745
        %v2747 = vpop.f32.mrb[0].mxu0
        %2748 = vmatprep.mubr.bf16.mxu0 0
        %2749 = vmatmul.mubr.bf16.gmra.mrb[0].mxu0 %v2653
        %v2750 = vpop.f32.mrb[0].mxu0
        %v2751 = vadd.f32 0.0, %v2750
        %v2752 = vpop.f32.mrb[0].mxu0
        %v2753 = vpop.f32.mrb[0].mxu0
        %v2754 = vadd.f32 0.0, %v2753
        %v2755 = vpop.f32.mrb[0].mxu0
        %2756 = vdwg.mxu0
        %v2757 = vadd.f32 %v2600, %v2690
        %v2758 = vadd.f32 %v2601, %v2692
        %v2759 = vadd.f32 %v2602, %v2743
        %v2760 = vadd.f32 %v2603, %v2694
        %v2761 = vadd.f32 %v2604, %v2696
        %v2762 = vadd.f32 %v2605, %v2746
        %v2763 = vadd.f32 %v2606, %v2700
        %v2764 = vadd.f32 %v2607, %v2702
        %v2765 = vadd.f32 %v2608, %v2751
        %v2766 = vadd.f32 %v2609, %v2704
        %v2767 = vadd.f32 %v2610, %v2706
        %v2768 = vadd.f32 %v2611, %v2754
        %s2769 = scalar_lea.vmem [#allocation4], 80
        %v2770 = vld [vmem:[%s2769] sm:$0xf]
        %v2771 = vld [vmem:[%s2769 + $0x4] sm:$0xf]
        %v2772 = vld [vmem:[%s2769 + $0x8] sm:$0xf]
        %v2773 = vld [vmem:[%s2769 + $0xc] sm:$0xf]
        %v2778 = vunpack.c.l.b16 %v2770
        %v2779 = vunpack.c.l.b16 %v2771
        %v2780 = vunpack.c.l.b16 %v2772
        %v2781 = vunpack.c.l.b16 %v2773
        %v2782 = vpack.c.b16 %v2779, %v2778
        %v2783 = vpack.c.b16 %v2781, %v2780
        %2784 = vrot.lane.b32.xlu0 %v1996, 83
        %v2785 = vpop.permute.xlu0 %2784
        %2786 = vrot.lane.b32.xlu0 %v1997, 83
        %v2787 = vpop.permute.xlu0 %2786
        %2788 = vrot.lane.b32.xlu0 %v1998, 83
        %v2789 = vpop.permute.xlu0 %2788
        %2790 = vrot.lane.b32.xlu0 %v1999, 83
        %v2791 = vpop.permute.xlu0 %2790
        %2792 = vrot.lane.b32.xlu0 %v2000, 83
        %v2793 = vpop.permute.xlu0 %2792
        %2794 = vrot.lane.b32.xlu0 %v2001, 83
        %v2795 = vpop.permute.xlu0 %2794
        %v2796 = vsel %vm1694, %v2785, %v2787
        %v2797 = vsel %vm1694, %v2787, %v2789
        %v2798 = vsel %vm1694, %v2791, %v2793
        %v2799 = vsel %vm1694, %v2793, %v2795
        %v2807 = vsel %vm2049, %v2782, 0
        %v2810 = vsel %vm2049, %v2783, 0
        %2812 = vmatprep.subr.bf16.mxu0 %v2797
        %2813 = vmatpush1.bf16.msra.mxu0 %v2796
        %2814 = vmatprep.subr.bf16.mxu0 %v2799
        %2815 = vmatpush1.bf16.msra.mxu0 %v2798
        %2816 = vmatprep.subr.bf16.mxu0 0
        %2817 = vmatpush1.bf16.msra.mxu0 0
        %2818 = vmatprep.subr.bf16.mxu0 0
        %2819 = vmatpush1.bf16.msra.mxu0 0
        %2820 = vmatprep.subr.bf16.mxu0 0
        %2821 = vmatpush1.bf16.msra.mxu0 0
        %2822 = vmatprep.subr.bf16.mxu0 0
        %2823 = vmatpush1.bf16.msra.mxu0 0
        %2824 = vmatprep.subr.bf16.mxu0 0
        %2825 = vmatpush1.bf16.msra.mxu0 0
        %2826 = vmatprep.subr.bf16.mxu0 0
        %2827 = vmatpush1.bf16.msra.mxu0 0
        %2828 = vmatprep.subr.bf16.mxu0 0
        %2829 = vmatpush1.bf16.msra.mxu0 0
        %2830 = vmatprep.subr.bf16.mxu0 0
        %2831 = vmatpush1.bf16.msra.mxu0 0
        %2832 = vmatprep.subr.bf16.mxu0 0
        %2833 = vmatpush1.bf16.msra.mxu0 0
        %2834 = vmatprep.subr.bf16.mxu0 0
        %2835 = vmatpush1.bf16.msra.mxu0 0
        %2836 = vmatprep.subr.bf16.mxu0 0
        %2837 = vmatpush1.bf16.msra.mxu0 0
        %2838 = vmatprep.subr.bf16.mxu0 0
        %2839 = vmatpush1.bf16.msra.mxu0 0
        %2840 = vmatprep.subr.bf16.mxu0 0
        %2841 = vmatpush1.bf16.msra.mxu0 0
        %2842 = vmatprep.subr.bf16.mxu0 0
        %2843 = vmatpush1.bf16.msra.mxu0 0
        %2844 = vmatprep.mubr.bf16.mxu0 0
        %2845 = vmatmul.mubr.bf16.gmra.mrb[0].mxu0 %v2807
        %v2846 = vpop.f32.mrb[0].mxu0
        %v2847 = vadd.f32 0.0, %v2846
        %v2848 = vpop.f32.mrb[0].mxu0
        %v2849 = vadd.f32 0.0, %v2848
        %v2850 = vpop.f32.mrb[0].mxu0
        %v2851 = vadd.f32 0.0, %v2850
        %v2852 = vpop.f32.mrb[0].mxu0
        %v2853 = vadd.f32 0.0, %v2852
        %2854 = vmatprep.mubr.bf16.mxu0 0
        %2855 = vmatmul.mubr.bf16.gmra.mrb[0].mxu0 %v2810
        %v2856 = vpop.f32.mrb[0].mxu0
        %v2857 = vadd.f32 0.0, %v2856
        %v2858 = vpop.f32.mrb[0].mxu0
        %v2859 = vadd.f32 0.0, %v2858
        %v2860 = vpop.f32.mrb[0].mxu0
        %v2861 = vadd.f32 0.0, %v2860
        %v2862 = vpop.f32.mrb[0].mxu0
        %v2863 = vadd.f32 0.0, %v2862
        %2864 = vdwg.mxu0
        %2865 = vmatprep.subr.bf16.mxu0 0
        %2866 = vmatpush1.bf16.msra.mxu0 %v2789
        %2867 = vmatprep.subr.bf16.mxu0 0
        %2868 = vmatpush1.bf16.msra.mxu0 %v2795
        %2869 = vmatprep.subr.bf16.mxu0 0
        %2870 = vmatpush1.bf16.msra.mxu0 0
        %2871 = vmatprep.subr.bf16.mxu0 0
        %2872 = vmatpush1.bf16.msra.mxu0 0
        %2873 = vmatprep.subr.bf16.mxu0 0
        %2874 = vmatpush1.bf16.msra.mxu0 0
        %2875 = vmatprep.subr.bf16.mxu0 0
        %2876 = vmatpush1.bf16.msra.mxu0 0
        %2877 = vmatprep.subr.bf16.mxu0 0
        %2878 = vmatpush1.bf16.msra.mxu0 0
        %2879 = vmatprep.subr.bf16.mxu0 0
        %2880 = vmatpush1.bf16.msra.mxu0 0
        %2881 = vmatprep.subr.bf16.mxu0 0
        %2882 = vmatpush1.bf16.msra.mxu0 0
        %2883 = vmatprep.subr.bf16.mxu0 0
        %2884 = vmatpush1.bf16.msra.mxu0 0
        %2885 = vmatprep.subr.bf16.mxu0 0
        %2886 = vmatpush1.bf16.msra.mxu0 0
        %2887 = vmatprep.subr.bf16.mxu0 0
        %2888 = vmatpush1.bf16.msra.mxu0 0
        %2889 = vmatprep.subr.bf16.mxu0 0
        %2890 = vmatpush1.bf16.msra.mxu0 0
        %2891 = vmatprep.subr.bf16.mxu0 0
        %2892 = vmatpush1.bf16.msra.mxu0 0
        %2893 = vmatprep.subr.bf16.mxu0 0
        %2894 = vmatpush1.bf16.msra.mxu0 0
        %2895 = vmatprep.subr.bf16.mxu0 0
        %2896 = vmatpush1.bf16.msra.mxu0 0
        %2897 = vmatprep.mubr.bf16.mxu0 0
        %2898 = vmatmul.mubr.bf16.gmra.mrb[0].mxu0 %v2807
        %v2899 = vpop.f32.mrb[0].mxu0
        %v2900 = vadd.f32 0.0, %v2899
        %v2901 = vpop.f32.mrb[0].mxu0
        %v2902 = vpop.f32.mrb[0].mxu0
        %v2903 = vadd.f32 0.0, %v2902
        %v2904 = vpop.f32.mrb[0].mxu0
        %2905 = vmatprep.mubr.bf16.mxu0 0
        %2906 = vmatmul.mubr.bf16.gmra.mrb[0].mxu0 %v2810
        %v2907 = vpop.f32.mrb[0].mxu0
        %v2908 = vadd.f32 0.0, %v2907
        %v2909 = vpop.f32.mrb[0].mxu0
        %v2910 = vpop.f32.mrb[0].mxu0
        %v2911 = vadd.f32 0.0, %v2910
        %v2912 = vpop.f32.mrb[0].mxu0
        %2913 = vdwg.mxu0
        %v2914 = vadd.f32 %v2757, %v2847
        %v2915 = vadd.f32 %v2758, %v2849
        %v2916 = vadd.f32 %v2759, %v2900
        %v2917 = vadd.f32 %v2760, %v2851
        %v2918 = vadd.f32 %v2761, %v2853
        %v2919 = vadd.f32 %v2762, %v2903
        %v2920 = vadd.f32 %v2763, %v2857
        %v2921 = vadd.f32 %v2764, %v2859
        %v2922 = vadd.f32 %v2765, %v2908
        %v2923 = vadd.f32 %v2766, %v2861
        %v2924 = vadd.f32 %v2767, %v2863
        %v2925 = vadd.f32 %v2768, %v2911
        %s2926 = scalar_lea.vmem [#allocation4], 96
        %v2927 = vld [vmem:[%s2926] sm:$0xf]
        %v2928 = vld [vmem:[%s2926 + $0x4] sm:$0xf]
        %v2929 = vld [vmem:[%s2926 + $0x8] sm:$0xf]
        %v2930 = vld [vmem:[%s2926 + $0xc] sm:$0xf]
        %v2935 = vunpack.c.l.b16 %v2927
        %v2936 = vunpack.c.l.b16 %v2928
        %v2937 = vunpack.c.l.b16 %v2929
        %v2938 = vunpack.c.l.b16 %v2930
        %v2939 = vpack.c.b16 %v2936, %v2935
        %v2940 = vpack.c.b16 %v2938, %v2937
        %2941 = vrot.lane.b32.xlu0 %v1996, 67
        %v2942 = vpop.permute.xlu0 %2941
        %2943 = vrot.lane.b32.xlu0 %v1997, 67
        %v2944 = vpop.permute.xlu0 %2943
        %2945 = vrot.lane.b32.xlu0 %v1998, 67
        %v2946 = vpop.permute.xlu0 %2945
        %2947 = vrot.lane.b32.xlu0 %v1999, 67
        %v2948 = vpop.permute.xlu0 %2947
        %2949 = vrot.lane.b32.xlu0 %v2000, 67
        %v2950 = vpop.permute.xlu0 %2949
        %2951 = vrot.lane.b32.xlu0 %v2001, 67
        %v2952 = vpop.permute.xlu0 %2951
        %vm2953 = vcmask 547840
        %v2954 = vsel %vm2953, %v2942, %v2944
        %v2955 = vsel %vm2953, %v2944, %v2946
        %v2956 = vsel %vm2953, %v2948, %v2950
        %v2957 = vsel %vm2953, %v2950, %v2952
        %v2965 = vsel %vm2049, %v2939, 0
        %v2968 = vsel %vm2049, %v2940, 0
        %2970 = vmatprep.subr.bf16.mxu0 %v2955
        %2971 = vmatpush1.bf16.msra.mxu0 %v2954
        %2972 = vmatprep.subr.bf16.mxu0 %v2957
        %2973 = vmatpush1.bf16.msra.mxu0 %v2956
        %2974 = vmatprep.subr.bf16.mxu0 0
        %2975 = vmatpush1.bf16.msra.mxu0 0
        %2976 = vmatprep.subr.bf16.mxu0 0
        %2977 = vmatpush1.bf16.msra.mxu0 0
        %2978 = vmatprep.subr.bf16.mxu0 0
        %2979 = vmatpush1.bf16.msra.mxu0 0
        %2980 = vmatprep.subr.bf16.mxu0 0
        %2981 = vmatpush1.bf16.msra.mxu0 0
        %2982 = vmatprep.subr.bf16.mxu0 0
        %2983 = vmatpush1.bf16.msra.mxu0 0
        %2984 = vmatprep.subr.bf16.mxu0 0
        %2985 = vmatpush1.bf16.msra.mxu0 0
        %2986 = vmatprep.subr.bf16.mxu0 0
        %2987 = vmatpush1.bf16.msra.mxu0 0
        %2988 = vmatprep.subr.bf16.mxu0 0
        %2989 = vmatpush1.bf16.msra.mxu0 0
        %2990 = vmatprep.subr.bf16.mxu0 0
        %2991 = vmatpush1.bf16.msra.mxu0 0
        %2992 = vmatprep.subr.bf16.mxu0 0
        %2993 = vmatpush1.bf16.msra.mxu0 0
        %2994 = vmatprep.subr.bf16.mxu0 0
        %2995 = vmatpush1.bf16.msra.mxu0 0
        %2996 = vmatprep.subr.bf16.mxu0 0
        %2997 = vmatpush1.bf16.msra.mxu0 0
        %2998 = vmatprep.subr.bf16.mxu0 0
        %2999 = vmatpush1.bf16.msra.mxu0 0
        %3000 = vmatprep.subr.bf16.mxu0 0
        %3001 = vmatpush1.bf16.msra.mxu0 0
        %3002 = vmatprep.mubr.bf16.mxu0 0
        %3003 = vmatmul.mubr.bf16.gmra.mrb[0].mxu0 %v2965
        %v3004 = vpop.f32.mrb[0].mxu0
        %v3005 = vadd.f32 0.0, %v3004
        %v3006 = vpop.f32.mrb[0].mxu0
        %v3007 = vadd.f32 0.0, %v3006
        %v3008 = vpop.f32.mrb[0].mxu0
        %v3009 = vadd.f32 0.0, %v3008
        %v3010 = vpop.f32.mrb[0].mxu0
        %v3011 = vadd.f32 0.0, %v3010
        %3012 = vmatprep.mubr.bf16.mxu0 0
        %3013 = vmatmul.mubr.bf16.gmra.mrb[0].mxu0 %v2968
        %v3014 = vpop.f32.mrb[0].mxu0
        %v3015 = vadd.f32 0.0, %v3014
        %v3016 = vpop.f32.mrb[0].mxu0
        %v3017 = vadd.f32 0.0, %v3016
        %v3018 = vpop.f32.mrb[0].mxu0
        %v3019 = vadd.f32 0.0, %v3018
        %v3020 = vpop.f32.mrb[0].mxu0
        %v3021 = vadd.f32 0.0, %v3020
        %3022 = vdwg.mxu0
        %3023 = vmatprep.subr.bf16.mxu0 0
        %3024 = vmatpush1.bf16.msra.mxu0 %v2946
        %3025 = vmatprep.subr.bf16.mxu0 0
        %3026 = vmatpush1.bf16.msra.mxu0 %v2952
        %3027 = vmatprep.subr.bf16.mxu0 0
        %3028 = vmatpush1.bf16.msra.mxu0 0
        %3029 = vmatprep.subr.bf16.mxu0 0
        %3030 = vmatpush1.bf16.msra.mxu0 0
        %3031 = vmatprep.subr.bf16.mxu0 0
        %3032 = vmatpush1.bf16.msra.mxu0 0
        %3033 = vmatprep.subr.bf16.mxu0 0
        %3034 = vmatpush1.bf16.msra.mxu0 0
        %3035 = vmatprep.subr.bf16.mxu0 0
        %3036 = vmatpush1.bf16.msra.mxu0 0
        %3037 = vmatprep.subr.bf16.mxu0 0
        %3038 = vmatpush1.bf16.msra.mxu0 0
        %3039 = vmatprep.subr.bf16.mxu0 0
        %3040 = vmatpush1.bf16.msra.mxu0 0
        %3041 = vmatprep.subr.bf16.mxu0 0
        %3042 = vmatpush1.bf16.msra.mxu0 0
        %3043 = vmatprep.subr.bf16.mxu0 0
        %3044 = vmatpush1.bf16.msra.mxu0 0
        %3045 = vmatprep.subr.bf16.mxu0 0
        %3046 = vmatpush1.bf16.msra.mxu0 0
        %3047 = vmatprep.subr.bf16.mxu0 0
        %3048 = vmatpush1.bf16.msra.mxu0 0
        %3049 = vmatprep.subr.bf16.mxu0 0
        %3050 = vmatpush1.bf16.msra.mxu0 0
        %3051 = vmatprep.subr.bf16.mxu0 0
        %3052 = vmatpush1.bf16.msra.mxu0 0
        %3053 = vmatprep.subr.bf16.mxu0 0
        %3054 = vmatpush1.bf16.msra.mxu0 0
        %3055 = vmatprep.mubr.bf16.mxu0 0
        %3056 = vmatmul.mubr.bf16.gmra.mrb[0].mxu0 %v2965
        %v3057 = vpop.f32.mrb[0].mxu0
        %v3058 = vadd.f32 0.0, %v3057
        %v3059 = vpop.f32.mrb[0].mxu0
        %v3060 = vpop.f32.mrb[0].mxu0
        %v3061 = vadd.f32 0.0, %v3060
        %v3062 = vpop.f32.mrb[0].mxu0
        %3063 = vmatprep.mubr.bf16.mxu0 0
        %3064 = vmatmul.mubr.bf16.gmra.mrb[0].mxu0 %v2968
        %v3065 = vpop.f32.mrb[0].mxu0
        %v3066 = vadd.f32 0.0, %v3065
        %v3067 = vpop.f32.mrb[0].mxu0
        %v3068 = vpop.f32.mrb[0].mxu0
        %v3069 = vadd.f32 0.0, %v3068
        %v3070 = vpop.f32.mrb[0].mxu0
        %3071 = vdwg.mxu0
        %v3072 = vadd.f32 %v2914, %v3005
        %v3073 = vadd.f32 %v2915, %v3007
        %v3074 = vadd.f32 %v2916, %v3058
        %v3075 = vadd.f32 %v2917, %v3009
        %v3076 = vadd.f32 %v2918, %v3011
        %v3077 = vadd.f32 %v2919, %v3061
        %v3078 = vadd.f32 %v2920, %v3015
        %v3079 = vadd.f32 %v2921, %v3017
        %v3080 = vadd.f32 %v2922, %v3066
        %v3081 = vadd.f32 %v2923, %v3019
        %v3082 = vadd.f32 %v2924, %v3021
        %v3083 = vadd.f32 %v2925, %v3069
        %s3084 = scalar_lea.vmem [#allocation4], 112
        %v3085 = vld [vmem:[%s3084] sm:$0xf]
        %v3086 = vld [vmem:[%s3084 + $0x4] sm:$0xf]
        %v3087 = vld [vmem:[%s3084 + $0x8] sm:$0xf]
        %v3088 = vld [vmem:[%s3084 + $0xc] sm:$0xf]
        %v3093 = vunpack.c.l.b16 %v3085
        %v3094 = vunpack.c.l.b16 %v3086
        %v3095 = vunpack.c.l.b16 %v3087
        %v3096 = vunpack.c.l.b16 %v3088
        %v3097 = vpack.c.b16 %v3094, %v3093
        %v3098 = vpack.c.b16 %v3096, %v3095
        %3099 = vrot.lane.b32.xlu0 %v1996, 66
        %v3100 = vpop.permute.xlu0 %3099
        %3101 = vrot.lane.b32.xlu0 %v1997, 66
        %v3102 = vpop.permute.xlu0 %3101
        %3103 = vrot.lane.b32.xlu0 %v1998, 66
        %v3104 = vpop.permute.xlu0 %3103
        %3105 = vrot.lane.b32.xlu0 %v1999, 66
        %v3106 = vpop.permute.xlu0 %3105
        %3107 = vrot.lane.b32.xlu0 %v2000, 66
        %v3108 = vpop.permute.xlu0 %3107
        %3109 = vrot.lane.b32.xlu0 %v2001, 66
        %v3110 = vpop.permute.xlu0 %3109
        %vm3111 = vcmask 539648
        %v3112 = vsel %vm3111, %v3100, %v3102
        %v3113 = vsel %vm3111, %v3102, %v3104
        %v3114 = vsel %vm3111, %v3106, %v3108
        %v3115 = vsel %vm3111, %v3108, %v3110
        %v3123 = vsel %vm2049, %v3097, 0
        %v3126 = vsel %vm2049, %v3098, 0
        %3128 = vmatprep.subr.bf16.mxu0 %v3113
        %3129 = vmatpush1.bf16.msra.mxu0 %v3112
        %3130 = vmatprep.subr.bf16.mxu0 %v3115
        %3131 = vmatpush1.bf16.msra.mxu0 %v3114
        %3132 = vmatprep.subr.bf16.mxu0 0
        %3133 = vmatpush1.bf16.msra.mxu0 0
        %3134 = vmatprep.subr.bf16.mxu0 0
        %3135 = vmatpush1.bf16.msra.mxu0 0
        %3136 = vmatprep.subr.bf16.mxu0 0
        %3137 = vmatpush1.bf16.msra.mxu0 0
        %3138 = vmatprep.subr.bf16.mxu0 0
        %3139 = vmatpush1.bf16.msra.mxu0 0
        %3140 = vmatprep.subr.bf16.mxu0 0
        %3141 = vmatpush1.bf16.msra.mxu0 0
        %3142 = vmatprep.subr.bf16.mxu0 0
        %3143 = vmatpush1.bf16.msra.mxu0 0
        %3144 = vmatprep.subr.bf16.mxu0 0
        %3145 = vmatpush1.bf16.msra.mxu0 0
        %3146 = vmatprep.subr.bf16.mxu0 0
        %3147 = vmatpush1.bf16.msra.mxu0 0
        %3148 = vmatprep.subr.bf16.mxu0 0
        %3149 = vmatpush1.bf16.msra.mxu0 0
        %3150 = vmatprep.subr.bf16.mxu0 0
        %3151 = vmatpush1.bf16.msra.mxu0 0
        %3152 = vmatprep.subr.bf16.mxu0 0
        %3153 = vmatpush1.bf16.msra.mxu0 0
        %3154 = vmatprep.subr.bf16.mxu0 0
        %3155 = vmatpush1.bf16.msra.mxu0 0
        %3156 = vmatprep.subr.bf16.mxu0 0
        %3157 = vmatpush1.bf16.msra.mxu0 0
        %3158 = vmatprep.subr.bf16.mxu0 0
        %3159 = vmatpush1.bf16.msra.mxu0 0
        %3160 = vmatprep.mubr.bf16.mxu0 0
        %3161 = vmatmul.mubr.bf16.gmra.mrb[0].mxu0 %v3123
        %v3162 = vpop.f32.mrb[0].mxu0
        %v3163 = vadd.f32 0.0, %v3162
        %v3164 = vpop.f32.mrb[0].mxu0
        %v3165 = vadd.f32 0.0, %v3164
        %v3166 = vpop.f32.mrb[0].mxu0
        %v3167 = vadd.f32 0.0, %v3166
        %v3168 = vpop.f32.mrb[0].mxu0
        %v3169 = vadd.f32 0.0, %v3168
        %3170 = vmatprep.mubr.bf16.mxu0 0
        %3171 = vmatmul.mubr.bf16.gmra.mrb[0].mxu0 %v3126
        %v3172 = vpop.f32.mrb[0].mxu0
        %v3173 = vadd.f32 0.0, %v3172
        %v3174 = vpop.f32.mrb[0].mxu0
        %v3175 = vadd.f32 0.0, %v3174
        %v3176 = vpop.f32.mrb[0].mxu0
        %v3177 = vadd.f32 0.0, %v3176
        %v3178 = vpop.f32.mrb[0].mxu0
        %v3179 = vadd.f32 0.0, %v3178
        %3180 = vdwg.mxu0
        %3181 = vmatprep.subr.bf16.mxu0 0
        %3182 = vmatpush1.bf16.msra.mxu0 %v3104
        %3183 = vmatprep.subr.bf16.mxu0 0
        %3184 = vmatpush1.bf16.msra.mxu0 %v3110
        %3185 = vmatprep.subr.bf16.mxu0 0
        %3186 = vmatpush1.bf16.msra.mxu0 0
        %3187 = vmatprep.subr.bf16.mxu0 0
        %3188 = vmatpush1.bf16.msra.mxu0 0
        %3189 = vmatprep.subr.bf16.mxu0 0
        %3190 = vmatpush1.bf16.msra.mxu0 0
        %3191 = vmatprep.subr.bf16.mxu0 0
        %3192 = vmatpush1.bf16.msra.mxu0 0
        %3193 = vmatprep.subr.bf16.mxu0 0
        %3194 = vmatpush1.bf16.msra.mxu0 0
        %3195 = vmatprep.subr.bf16.mxu0 0
        %3196 = vmatpush1.bf16.msra.mxu0 0
        %3197 = vmatprep.subr.bf16.mxu0 0
        %3198 = vmatpush1.bf16.msra.mxu0 0
        %3199 = vmatprep.subr.bf16.mxu0 0
        %3200 = vmatpush1.bf16.msra.mxu0 0
        %3201 = vmatprep.subr.bf16.mxu0 0
        %3202 = vmatpush1.bf16.msra.mxu0 0
        %3203 = vmatprep.subr.bf16.mxu0 0
        %3204 = vmatpush1.bf16.msra.mxu0 0
        %3205 = vmatprep.subr.bf16.mxu0 0
        %3206 = vmatpush1.bf16.msra.mxu0 0
        %3207 = vmatprep.subr.bf16.mxu0 0
        %3208 = vmatpush1.bf16.msra.mxu0 0
        %3209 = vmatprep.subr.bf16.mxu0 0
        %3210 = vmatpush1.bf16.msra.mxu0 0
        %3211 = vmatprep.subr.bf16.mxu0 0
        %3212 = vmatpush1.bf16.msra.mxu0 0
        %3213 = vmatprep.mubr.bf16.mxu0 0
        %3214 = vmatmul.mubr.bf16.gmra.mrb[0].mxu0 %v3123
        %v3215 = vpop.f32.mrb[0].mxu0
        %v3216 = vadd.f32 0.0, %v3215
        %v3217 = vpop.f32.mrb[0].mxu0
        %v3218 = vpop.f32.mrb[0].mxu0
        %v3219 = vadd.f32 0.0, %v3218
        %v3220 = vpop.f32.mrb[0].mxu0
        %3221 = vmatprep.mubr.bf16.mxu0 0
        %3222 = vmatmul.mubr.bf16.gmra.mrb[0].mxu0 %v3126
        %v3223 = vpop.f32.mrb[0].mxu0
        %v3224 = vadd.f32 0.0, %v3223
        %v3225 = vpop.f32.mrb[0].mxu0
        %v3226 = vpop.f32.mrb[0].mxu0
        %v3227 = vadd.f32 0.0, %v3226
        %v3228 = vpop.f32.mrb[0].mxu0
        %3229 = vdwg.mxu0
        %v3230 = vadd.f32 %v3072, %v3163
        %v3231 = vadd.f32 %v3073, %v3165
        %v3232 = vadd.f32 %v3074, %v3216
        %v3233 = vadd.f32 %v3075, %v3167
        %v3234 = vadd.f32 %v3076, %v3169
        %v3235 = vadd.f32 %v3077, %v3219
        %v3236 = vadd.f32 %v3078, %v3173
        %v3237 = vadd.f32 %v3079, %v3175
        %v3238 = vadd.f32 %v3080, %v3224
        %v3239 = vadd.f32 %v3081, %v3177
        %v3240 = vadd.f32 %v3082, %v3179
        %v3241 = vadd.f32 %v3083, %v3227
        %s3242 = scalar_lea.vmem [#allocation4], 128
        %v3243 = vld [vmem:[%s3242] sm:$0xf]
        %v3244 = vld [vmem:[%s3242 + $0x4] sm:$0xf]
        %v3245 = vld [vmem:[%s3242 + $0x8] sm:$0xf]
        %v3246 = vld [vmem:[%s3242 + $0xc] sm:$0xf]
        %v3251 = vunpack.c.l.b16 %v3243
        %v3252 = vunpack.c.l.b16 %v3244
        %v3253 = vunpack.c.l.b16 %v3245
        %v3254 = vunpack.c.l.b16 %v3246
        %v3255 = vpack.c.b16 %v3252, %v3251
        %v3256 = vpack.c.b16 %v3254, %v3253
        %3257 = vrot.lane.b32.xlu0 %v1996, 65
        %v3258 = vpop.permute.xlu0 %3257
        %3259 = vrot.lane.b32.xlu0 %v1997, 65
        %v3260 = vpop.permute.xlu0 %3259
        %3261 = vrot.lane.b32.xlu0 %v1998, 65
        %v3262 = vpop.permute.xlu0 %3261
        %3263 = vrot.lane.b32.xlu0 %v1999, 65
        %v3264 = vpop.permute.xlu0 %3263
        %3265 = vrot.lane.b32.xlu0 %v2000, 65
        %v3266 = vpop.permute.xlu0 %3265
        %3267 = vrot.lane.b32.xlu0 %v2001, 65
        %v3268 = vpop.permute.xlu0 %3267
        %vm3269 = vcmask 531456
        %v3270 = vsel %vm3269, %v3258, %v3260
        %v3271 = vsel %vm3269, %v3260, %v3262
        %v3272 = vsel %vm3269, %v3264, %v3266
        %v3273 = vsel %vm3269, %v3266, %v3268
        %v3281 = vsel %vm2049, %v3255, 0
        %v3284 = vsel %vm2049, %v3256, 0
        %3286 = vmatprep.subr.bf16.mxu0 %v3271
        %3287 = vmatpush1.bf16.msra.mxu0 %v3270
        %3288 = vmatprep.subr.bf16.mxu0 %v3273
        %3289 = vmatpush1.bf16.msra.mxu0 %v3272
        %3290 = vmatprep.subr.bf16.mxu0 0
        %3291 = vmatpush1.bf16.msra.mxu0 0
        %3292 = vmatprep.subr.bf16.mxu0 0
        %3293 = vmatpush1.bf16.msra.mxu0 0
        %3294 = vmatprep.subr.bf16.mxu0 0
        %3295 = vmatpush1.bf16.msra.mxu0 0
        %3296 = vmatprep.subr.bf16.mxu0 0
        %3297 = vmatpush1.bf16.msra.mxu0 0
        %3298 = vmatprep.subr.bf16.mxu0 0
        %3299 = vmatpush1.bf16.msra.mxu0 0
        %3300 = vmatprep.subr.bf16.mxu0 0
        %3301 = vmatpush1.bf16.msra.mxu0 0
        %3302 = vmatprep.subr.bf16.mxu0 0
        %3303 = vmatpush1.bf16.msra.mxu0 0
        %3304 = vmatprep.subr.bf16.mxu0 0
        %3305 = vmatpush1.bf16.msra.mxu0 0
        %3306 = vmatprep.subr.bf16.mxu0 0
        %3307 = vmatpush1.bf16.msra.mxu0 0
        %3308 = vmatprep.subr.bf16.mxu0 0
        %3309 = vmatpush1.bf16.msra.mxu0 0
        %3310 = vmatprep.subr.bf16.mxu0 0
        %3311 = vmatpush1.bf16.msra.mxu0 0
        %3312 = vmatprep.subr.bf16.mxu0 0
        %3313 = vmatpush1.bf16.msra.mxu0 0
        %3314 = vmatprep.subr.bf16.mxu0 0
        %3315 = vmatpush1.bf16.msra.mxu0 0
        %3316 = vmatprep.subr.bf16.mxu0 0
        %3317 = vmatpush1.bf16.msra.mxu0 0
        %3318 = vmatprep.mubr.bf16.mxu0 0
        %3319 = vmatmul.mubr.bf16.gmra.mrb[0].mxu0 %v3281
        %v3320 = vpop.f32.mrb[0].mxu0
        %v3321 = vadd.f32 0.0, %v3320
        %v3322 = vpop.f32.mrb[0].mxu0
        %v3323 = vadd.f32 0.0, %v3322
        %v3324 = vpop.f32.mrb[0].mxu0
        %v3325 = vadd.f32 0.0, %v3324
        %v3326 = vpop.f32.mrb[0].mxu0
        %v3327 = vadd.f32 0.0, %v3326
        %3328 = vmatprep.mubr.bf16.mxu0 0
        %3329 = vmatmul.mubr.bf16.gmra.mrb[0].mxu0 %v3284
        %v3330 = vpop.f32.mrb[0].mxu0
        %v3331 = vadd.f32 0.0, %v3330
        %v3332 = vpop.f32.mrb[0].mxu0
        %v3333 = vadd.f32 0.0, %v3332
        %v3334 = vpop.f32.mrb[0].mxu0
        %v3335 = vadd.f32 0.0, %v3334
        %v3336 = vpop.f32.mrb[0].mxu0
        %v3337 = vadd.f32 0.0, %v3336
        %3338 = vdwg.mxu0
        %3339 = vmatprep.subr.bf16.mxu0 0
        %3340 = vmatpush1.bf16.msra.mxu0 %v3262
        %3341 = vmatprep.subr.bf16.mxu0 0
        %3342 = vmatpush1.bf16.msra.mxu0 %v3268
        %3343 = vmatprep.subr.bf16.mxu0 0
        %3344 = vmatpush1.bf16.msra.mxu0 0
        %3345 = vmatprep.subr.bf16.mxu0 0
        %3346 = vmatpush1.bf16.msra.mxu0 0
        %3347 = vmatprep.subr.bf16.mxu0 0
        %3348 = vmatpush1.bf16.msra.mxu0 0
        %3349 = vmatprep.subr.bf16.mxu0 0
        %3350 = vmatpush1.bf16.msra.mxu0 0
        %3351 = vmatprep.subr.bf16.mxu0 0
        %3352 = vmatpush1.bf16.msra.mxu0 0
        %3353 = vmatprep.subr.bf16.mxu0 0
        %3354 = vmatpush1.bf16.msra.mxu0 0
        %3355 = vmatprep.subr.bf16.mxu0 0
        %3356 = vmatpush1.bf16.msra.mxu0 0
        %3357 = vmatprep.subr.bf16.mxu0 0
        %3358 = vmatpush1.bf16.msra.mxu0 0
        %3359 = vmatprep.subr.bf16.mxu0 0
        %3360 = vmatpush1.bf16.msra.mxu0 0
        %3361 = vmatprep.subr.bf16.mxu0 0
        %3362 = vmatpush1.bf16.msra.mxu0 0
        %3363 = vmatprep.subr.bf16.mxu0 0
        %3364 = vmatpush1.bf16.msra.mxu0 0
        %3365 = vmatprep.subr.bf16.mxu0 0
        %3366 = vmatpush1.bf16.msra.mxu0 0
        %3367 = vmatprep.subr.bf16.mxu0 0
        %3368 = vmatpush1.bf16.msra.mxu0 0
        %3369 = vmatprep.subr.bf16.mxu0 0
        %3370 = vmatpush1.bf16.msra.mxu0 0
        %3371 = vmatprep.mubr.bf16.mxu0 0
        %3372 = vmatmul.mubr.bf16.gmra.mrb[0].mxu0 %v3281
        %v3373 = vpop.f32.mrb[0].mxu0
        %v3374 = vadd.f32 0.0, %v3373
        %v3375 = vpop.f32.mrb[0].mxu0
        %v3376 = vpop.f32.mrb[0].mxu0
        %v3377 = vadd.f32 0.0, %v3376
        %v3378 = vpop.f32.mrb[0].mxu0
        %3379 = vmatprep.mubr.bf16.mxu0 0
        %3380 = vmatmul.mubr.bf16.gmra.mrb[0].mxu0 %v3284
        %v3381 = vpop.f32.mrb[0].mxu0
        %v3382 = vadd.f32 0.0, %v3381
        %v3383 = vpop.f32.mrb[0].mxu0
        %v3384 = vpop.f32.mrb[0].mxu0
        %v3385 = vadd.f32 0.0, %v3384
        %v3386 = vpop.f32.mrb[0].mxu0
        %3387 = vdwg.mxu0
        %v3388 = vadd.f32 %v3230, %v3321
        %v3389 = vadd.f32 %v3231, %v3323
        %v3390 = vadd.f32 %v3232, %v3374
        %v3391 = vadd.f32 %v3233, %v3325
        %v3392 = vadd.f32 %v3234, %v3327
        %v3393 = vadd.f32 %v3235, %v3377
        %v3394 = vadd.f32 %v3236, %v3331
        %v3395 = vadd.f32 %v3237, %v3333
        %v3396 = vadd.f32 %v3238, %v3382
        %v3397 = vadd.f32 %v3239, %v3335
        %v3398 = vadd.f32 %v3240, %v3337
        %v3399 = vadd.f32 %v3241, %v3385
        %v3400 = vmax.f32 %v3388, 0.0
        %v3401 = vmax.f32 %v3389, 0.0
        %v3402 = vmax.f32 %v3390, 0.0
        %v3403 = vmax.f32 %v3391, 0.0
        %v3404 = vmax.f32 %v3392, 0.0
        %v3405 = vmax.f32 %v3393, 0.0
        %v3406 = vmax.f32 %v3394, 0.0
        %v3407 = vmax.f32 %v3395, 0.0
        %v3408 = vmax.f32 %v3396, 0.0
        %v3409 = vmax.f32 %v3397, 0.0
        %v3410 = vmax.f32 %v3398, 0.0
        %v3411 = vmax.f32 %v3399, 0.0
        %v3412 = vld [vmem:[%s250] sm:$0x7]
        %vm3413 = vcmp.gt.f32.partialorder %v3412, 0.0
        %v3414 = vsel %vm3413, 1, 0
        %v3415 = vlaneseq
        %v3416 = vshrl.u32 %v3415, 7
        %v3417 = vsub.s32 0, %v3416
        %v3418 = vrot.slane %v3414, %v3417
        %v3419 = vlaneseq
        %v3420 = vshrl.u32 %v3419, 7
        %v3421 = vsub.s32 1, %v3420
        %v3422 = vrot.slane %v3414, %v3421
        %v3423 = vlaneseq
        %v3424 = vshrl.u32 %v3423, 7
        %v3425 = vsub.s32 2, %v3424
        %v3426 = vrot.slane %v3414, %v3425
        %vm3427 = vcmp.eq.s32.totalorder %v3418, 1
        %vm3428 = vcmp.eq.s32.totalorder %v3422, 1
        %vm3429 = vcmp.eq.s32.totalorder %v3426, 1
        %3442 = vrot.lane.b32.xlu0 %v3400, 36
        %v3443 = vpop.permute.xlu0 %3442
        %3444 = vrot.lane.b32.xlu0 %v3401, 36
        %v3445 = vpop.permute.xlu0 %3444
        %3446 = vrot.lane.b32.xlu0 %v3402, 36
        %v3447 = vpop.permute.xlu0 %3446
        %3448 = vrot.lane.b32.xlu0 %v3403, 36
        %v3449 = vpop.permute.xlu0 %3448
        %3450 = vrot.lane.b32.xlu0 %v3404, 36
        %v3451 = vpop.permute.xlu0 %3450
        %3452 = vrot.lane.b32.xlu0 %v3405, 36
        %v3453 = vpop.permute.xlu0 %3452
        %3454 = vrot.lane.b32.xlu0 %v3406, 36
        %v3455 = vpop.permute.xlu0 %3454
        %3456 = vrot.lane.b32.xlu0 %v3407, 36
        %v3457 = vpop.permute.xlu0 %3456
        %3458 = vrot.lane.b32.xlu0 %v3408, 36
        %v3459 = vpop.permute.xlu0 %3458
        %3460 = vrot.lane.b32.xlu0 %v3409, 36
        %v3461 = vpop.permute.xlu0 %3460
        %3462 = vrot.lane.b32.xlu0 %v3410, 36
        %v3463 = vpop.permute.xlu0 %3462
        %3464 = vrot.lane.b32.xlu0 %v3411, 36
        %v3465 = vpop.permute.xlu0 %3464
        %vm3466 = vcmask 293888
        %v3467 = vsel %vm3466, %v3443, %v3445
        %v3468 = vsel %vm3466, %v3445, %v3447
        %v3469 = vsel %vm3466, %v3449, %v3451
        %v3470 = vsel %vm3466, %v3451, %v3453
        %v3471 = vsel %vm3466, %v3455, %v3457
        %v3472 = vsel %vm3466, %v3457, %v3459
        %v3473 = vsel %vm3466, %v3461, %v3463
        %v3474 = vsel %vm3466, %v3463, %v3465
        %v3487 = vsel %vm3427, %v3443, 0.0
        %v3488 = vsel %vm3428, %v3467, 0.0
        %v3489 = vsel %vm3429, %v3468, 0.0
        %v3490 = vsel %vm3427, %v3449, 0.0
        %v3491 = vsel %vm3428, %v3469, 0.0
        %v3492 = vsel %vm3429, %v3470, 0.0
        %v3493 = vsel %vm3427, %v3455, 0.0
        %v3494 = vsel %vm3428, %v3471, 0.0
        %v3495 = vsel %vm3429, %v3472, 0.0
        %v3496 = vsel %vm3427, %v3461, 0.0
        %v3497 = vsel %vm3428, %v3473, 0.0
        %v3498 = vsel %vm3429, %v3474, 0.0
        %3511 = vrot.lane.b32.xlu0 %v3487, 8
        %v3512 = vpop.permute.xlu0 %3511
        %3513 = vrot.lane.b32.xlu0 %v3488, 8
        %v3514 = vpop.permute.xlu0 %3513
        %3515 = vrot.lane.b32.xlu0 %v3489, 8
        %v3516 = vpop.permute.xlu0 %3515
        %3517 = vrot.lane.b32.xlu0 %v3490, 8
        %v3518 = vpop.permute.xlu0 %3517
        %3519 = vrot.lane.b32.xlu0 %v3491, 8
        %v3520 = vpop.permute.xlu0 %3519
        %3521 = vrot.lane.b32.xlu0 %v3492, 8
        %v3522 = vpop.permute.xlu0 %3521
        %3523 = vrot.lane.b32.xlu0 %v3493, 8
        %v3524 = vpop.permute.xlu0 %3523
        %3525 = vrot.lane.b32.xlu0 %v3494, 8
        %v3526 = vpop.permute.xlu0 %3525
        %3527 = vrot.lane.b32.xlu0 %v3495, 8
        %v3528 = vpop.permute.xlu0 %3527
        %3529 = vrot.lane.b32.xlu0 %v3496, 8
        %v3530 = vpop.permute.xlu0 %3529
        %3531 = vrot.lane.b32.xlu0 %v3497, 8
        %v3532 = vpop.permute.xlu0 %3531
        %3533 = vrot.lane.b32.xlu0 %v3498, 8
        %v3534 = vpop.permute.xlu0 %3533
        %v3535 = vsel %vm1949, %v3512, %v3514
        %v3536 = vsel %vm1949, %v3514, %v3516
        %v3537 = vsel %vm1949, %v3518, %v3520
        %v3538 = vsel %vm1949, %v3520, %v3522
        %v3539 = vsel %vm1949, %v3524, %v3526
        %v3540 = vsel %vm1949, %v3526, %v3528
        %v3541 = vsel %vm1949, %v3530, %v3532
        %v3542 = vsel %vm1949, %v3532, %v3534
        %vm3555 = vcmask 1047904
        %3556 = vst.msk [vmem:[#allocation3] sm:$0xff] %vm3555, %v3512
        %3557 = vst [vmem:[#allocation3 + $0x8] sm:$0xff] %v3535
        %vm3558 = vcmask 621568
        %3559 = vst.msk [vmem:[#allocation3 + $0x10] sm:$0xff] %vm3558, %v3536
        %3560 = vst.msk [vmem:[#allocation3 + $0x18] sm:$0xff] %vm3555, %v3518
        %3561 = vst [vmem:[#allocation3 + $0x20] sm:$0xff] %v3537
        %3562 = vst.msk [vmem:[#allocation3 + $0x28] sm:$0xff] %vm3558, %v3538
        %3563 = vst.msk [vmem:[#allocation3 + $0x30] sm:$0xff] %vm3555, %v3524
        %3564 = vst [vmem:[#allocation3 + $0x38] sm:$0xff] %v3539
        %3565 = vst.msk [vmem:[#allocation3 + $0x40] sm:$0xff] %vm3558, %v3540
        %3566 = vst.msk [vmem:[#allocation3 + $0x48] sm:$0xff] %vm3555, %v3530
        %3567 = vst [vmem:[#allocation3 + $0x50] sm:$0xff] %v3541
        %3568 = vst.msk [vmem:[#allocation3 + $0x58] sm:$0xff] %vm3558, %v3542
        %v3569 = vld [vmem:[#allocation3] sm:$0xff]
        %v3570 = vld [vmem:[#allocation3 + $0x8] sm:$0xff]
        %v3571 = vld [vmem:[#allocation3 + $0x10] sm:$0xff]
        %v3572 = vld [vmem:[#allocation3 + $0x18] sm:$0xff]
        %v3573 = vld [vmem:[#allocation3 + $0x20] sm:$0xff]
        %v3574 = vld [vmem:[#allocation3 + $0x28] sm:$0xff]
        %v3575 = vld [vmem:[#allocation3 + $0x30] sm:$0xff]
        %v3576 = vld [vmem:[#allocation3 + $0x38] sm:$0xff]
        %v3577 = vld [vmem:[#allocation3 + $0x40] sm:$0xff]
        %v3578 = vld [vmem:[#allocation3 + $0x48] sm:$0xff]
        %v3579 = vld [vmem:[#allocation3 + $0x50] sm:$0xff]
        %v3580 = vld [vmem:[#allocation3 + $0x58] sm:$0xff]
        %v3581 = vpack.c.bf16 %v3572, %v3569
        %v3582 = vpack.c.bf16 %v3573, %v3570
        %v3583 = vpack.c.bf16 %v3574, %v3571
        %v3584 = vpack.c.bf16 %v3578, %v3575
        %v3585 = vpack.c.bf16 %v3579, %v3576
        %v3586 = vpack.c.bf16 %v3580, %v3577
        %s3587 = scalar_lea.vmem [#allocation4], 144
        %v3588 = vld [vmem:[%s3587] sm:$0xf]
        %v3589 = vld [vmem:[%s3587 + $0x4] sm:$0xf]
        %v3590 = vld [vmem:[%s3587 + $0x8] sm:$0xf]
        %v3591 = vld [vmem:[%s3587 + $0xc] sm:$0xf]
        %s3592 = scalar_lea.vmem [#allocation4], 160
        %v3593 = vld [vmem:[%s3592] sm:$0xf]
        %v3594 = vld [vmem:[%s3592 + $0x4] sm:$0xf]
        %v3595 = vld [vmem:[%s3592 + $0x8] sm:$0xf]
        %v3596 = vld [vmem:[%s3592 + $0xc] sm:$0xf]
        %v3601 = vunpack.c.l.b16 %v3593
        %v3602 = vunpack.c.l.b16 %v3594
        %v3603 = vunpack.c.l.b16 %v3595
        %v3604 = vunpack.c.l.b16 %v3596
        %v3605 = vpack.c.b16 %v3602, %v3601
        %v3606 = vpack.c.b16 %v3604, %v3603
        %3613 = vrot.lane.b32.xlu0 %v3581, 84
        %v3614 = vpop.permute.xlu0 %3613
        %3615 = vrot.lane.b32.xlu0 %v3582, 84
        %v3616 = vpop.permute.xlu0 %3615
        %3617 = vrot.lane.b32.xlu0 %v3583, 84
        %v3618 = vpop.permute.xlu0 %3617
        %3619 = vrot.lane.b32.xlu0 %v3584, 84
        %v3620 = vpop.permute.xlu0 %3619
        %3621 = vrot.lane.b32.xlu0 %v3585, 84
        %v3622 = vpop.permute.xlu0 %3621
        %3623 = vrot.lane.b32.xlu0 %v3586, 84
        %v3624 = vpop.permute.xlu0 %3623
        %v3625 = vsel %vm1514, %v3614, %v3616
        %v3626 = vsel %vm1514, %v3616, %v3618
        %v3627 = vsel %vm1514, %v3620, %v3622
        %v3628 = vsel %vm1514, %v3622, %v3624
        %v3634 = vsel %vm2049, %v3605, 0
        %v3637 = vsel %vm2049, %v3606, 0
        %3639 = vmatprep.subr.bf16.mxu0 %v3626
        %3640 = vmatpush1.bf16.msra.mxu0 %v3625
        %3641 = vmatprep.subr.bf16.mxu0 %v3628
        %3642 = vmatpush1.bf16.msra.mxu0 %v3627
        %3643 = vmatprep.subr.bf16.mxu0 0
        %3644 = vmatpush1.bf16.msra.mxu0 0
        %3645 = vmatprep.subr.bf16.mxu0 0
        %3646 = vmatpush1.bf16.msra.mxu0 0
        %3647 = vmatprep.subr.bf16.mxu0 0
        %3648 = vmatpush1.bf16.msra.mxu0 0
        %3649 = vmatprep.subr.bf16.mxu0 0
        %3650 = vmatpush1.bf16.msra.mxu0 0
        %3651 = vmatprep.subr.bf16.mxu0 0
        %3652 = vmatpush1.bf16.msra.mxu0 0
        %3653 = vmatprep.subr.bf16.mxu0 0
        %3654 = vmatpush1.bf16.msra.mxu0 0
        %3655 = vmatprep.subr.bf16.mxu0 0
        %3656 = vmatpush1.bf16.msra.mxu0 0
        %3657 = vmatprep.subr.bf16.mxu0 0
        %3658 = vmatpush1.bf16.msra.mxu0 0
        %3659 = vmatprep.subr.bf16.mxu0 0
        %3660 = vmatpush1.bf16.msra.mxu0 0
        %3661 = vmatprep.subr.bf16.mxu0 0
        %3662 = vmatpush1.bf16.msra.mxu0 0
        %3663 = vmatprep.subr.bf16.mxu0 0
        %3664 = vmatpush1.bf16.msra.mxu0 0
        %3665 = vmatprep.subr.bf16.mxu0 0
        %3666 = vmatpush1.bf16.msra.mxu0 0
        %3667 = vmatprep.subr.bf16.mxu0 0
        %3668 = vmatpush1.bf16.msra.mxu0 0
        %3669 = vmatprep.subr.bf16.mxu0 0
        %3670 = vmatpush1.bf16.msra.mxu0 0
        %3671 = vmatprep.mubr.bf16.mxu0 0
        %3672 = vmatmul.mubr.bf16.gmra.mrb[0].mxu0 %v3634
        %v3673 = vpop.f32.mrb[0].mxu0
        %v3674 = vadd.f32 0.0, %v3673
        %v3675 = vpop.f32.mrb[0].mxu0
        %v3676 = vadd.f32 0.0, %v3675
        %v3677 = vpop.f32.mrb[0].mxu0
        %v3678 = vadd.f32 0.0, %v3677
        %v3679 = vpop.f32.mrb[0].mxu0
        %v3680 = vadd.f32 0.0, %v3679
        %3681 = vmatprep.mubr.bf16.mxu0 0
        %3682 = vmatmul.mubr.bf16.gmra.mrb[0].mxu0 %v3637
        %v3683 = vpop.f32.mrb[0].mxu0
        %v3684 = vadd.f32 0.0, %v3683
        %v3685 = vpop.f32.mrb[0].mxu0
        %v3686 = vadd.f32 0.0, %v3685
        %v3687 = vpop.f32.mrb[0].mxu0
        %v3688 = vadd.f32 0.0, %v3687
        %v3689 = vpop.f32.mrb[0].mxu0
        %v3690 = vadd.f32 0.0, %v3689
        %3691 = vdwg.mxu0
        %v3696 = vunpack.c.l.b16 %v3588
        %v3697 = vunpack.c.l.b16 %v3589
        %v3698 = vunpack.c.l.b16 %v3590
        %v3699 = vunpack.c.l.b16 %v3591
        %v3700 = vpack.c.b16 %v3697, %v3696
        %v3701 = vpack.c.b16 %v3699, %v3698
        %3702 = vrot.lane.b32.xlu0 %v3581, 85
        %v3703 = vpop.permute.xlu0 %3702
        %3704 = vrot.lane.b32.xlu0 %v3582, 85
        %v3705 = vpop.permute.xlu0 %3704
        %3706 = vrot.lane.b32.xlu0 %v3583, 85
        %v3707 = vpop.permute.xlu0 %3706
        %3708 = vrot.lane.b32.xlu0 %v3584, 85
        %v3709 = vpop.permute.xlu0 %3708
        %3710 = vrot.lane.b32.xlu0 %v3585, 85
        %v3711 = vpop.permute.xlu0 %3710
        %3712 = vrot.lane.b32.xlu0 %v3586, 85
        %v3713 = vpop.permute.xlu0 %3712
        %v3714 = vsel %vm1334, %v3703, %v3705
        %v3715 = vsel %vm1334, %v3705, %v3707
        %v3716 = vsel %vm1334, %v3709, %v3711
        %v3717 = vsel %vm1334, %v3711, %v3713
        %v3723 = vsel %vm2049, %v3700, 0
        %v3726 = vsel %vm2049, %v3701, 0
        %3728 = vmatprep.subr.bf16.mxu0 %v3715
        %3729 = vmatpush1.bf16.msra.mxu0 %v3714
        %3730 = vmatprep.subr.bf16.mxu0 %v3717
        %3731 = vmatpush1.bf16.msra.mxu0 %v3716
        %3732 = vmatprep.subr.bf16.mxu0 0
        %3733 = vmatpush1.bf16.msra.mxu0 0
        %3734 = vmatprep.subr.bf16.mxu0 0
        %3735 = vmatpush1.bf16.msra.mxu0 0
        %3736 = vmatprep.subr.bf16.mxu0 0
        %3737 = vmatpush1.bf16.msra.mxu0 0
        %3738 = vmatprep.subr.bf16.mxu0 0
        %3739 = vmatpush1.bf16.msra.mxu0 0
        %3740 = vmatprep.subr.bf16.mxu0 0
        %3741 = vmatpush1.bf16.msra.mxu0 0
        %3742 = vmatprep.subr.bf16.mxu0 0
        %3743 = vmatpush1.bf16.msra.mxu0 0
        %3744 = vmatprep.subr.bf16.mxu0 0
        %3745 = vmatpush1.bf16.msra.mxu0 0
        %3746 = vmatprep.subr.bf16.mxu0 0
        %3747 = vmatpush1.bf16.msra.mxu0 0
        %3748 = vmatprep.subr.bf16.mxu0 0
        %3749 = vmatpush1.bf16.msra.mxu0 0
        %3750 = vmatprep.subr.bf16.mxu0 0
        %3751 = vmatpush1.bf16.msra.mxu0 0
        %3752 = vmatprep.subr.bf16.mxu0 0
        %3753 = vmatpush1.bf16.msra.mxu0 0
        %3754 = vmatprep.subr.bf16.mxu0 0
        %3755 = vmatpush1.bf16.msra.mxu0 0
        %3756 = vmatprep.subr.bf16.mxu0 0
        %3757 = vmatpush1.bf16.msra.mxu0 0
        %3758 = vmatprep.subr.bf16.mxu0 0
        %3759 = vmatpush1.bf16.msra.mxu0 0
        %3760 = vmatprep.mubr.bf16.mxu0 0
        %3761 = vmatmul.mubr.bf16.gmra.mrb[0].mxu0 %v3723
        %v3762 = vpop.f32.mrb[0].mxu0
        %v3763 = vadd.f32 %v3674, %v3762
        %v3764 = vpop.f32.mrb[0].mxu0
        %v3765 = vadd.f32 %v3676, %v3764
        %v3766 = vpop.f32.mrb[0].mxu0
        %v3767 = vadd.f32 %v3678, %v3766
        %v3768 = vpop.f32.mrb[0].mxu0
        %v3769 = vadd.f32 %v3680, %v3768
        %3770 = vmatprep.mubr.bf16.mxu0 0
        %3771 = vmatmul.mubr.bf16.gmra.mrb[0].mxu0 %v3726
        %v3772 = vpop.f32.mrb[0].mxu0
        %v3773 = vadd.f32 %v3684, %v3772
        %v3774 = vpop.f32.mrb[0].mxu0
        %v3775 = vadd.f32 %v3686, %v3774
        %v3776 = vpop.f32.mrb[0].mxu0
        %v3777 = vadd.f32 %v3688, %v3776
        %v3778 = vpop.f32.mrb[0].mxu0
        %v3779 = vadd.f32 %v3690, %v3778
        %3780 = vdwg.mxu0
        %s3781 = scalar_lea.vmem [#allocation4], 176
        %v3782 = vld [vmem:[%s3781] sm:$0xf]
        %v3783 = vld [vmem:[%s3781 + $0x4] sm:$0xf]
        %v3784 = vld [vmem:[%s3781 + $0x8] sm:$0xf]
        %v3785 = vld [vmem:[%s3781 + $0xc] sm:$0xf]
        %v3790 = vunpack.c.l.b16 %v3782
        %v3791 = vunpack.c.l.b16 %v3783
        %v3792 = vunpack.c.l.b16 %v3784
        %v3793 = vunpack.c.l.b16 %v3785
        %v3794 = vpack.c.b16 %v3791, %v3790
        %v3795 = vpack.c.b16 %v3793, %v3792
        %3796 = vrot.lane.b32.xlu0 %v3581, 83
        %v3797 = vpop.permute.xlu0 %3796
        %3798 = vrot.lane.b32.xlu0 %v3582, 83
        %v3799 = vpop.permute.xlu0 %3798
        %3800 = vrot.lane.b32.xlu0 %v3583, 83
        %v3801 = vpop.permute.xlu0 %3800
        %3802 = vrot.lane.b32.xlu0 %v3584, 83
        %v3803 = vpop.permute.xlu0 %3802
        %3804 = vrot.lane.b32.xlu0 %v3585, 83
        %v3805 = vpop.permute.xlu0 %3804
        %3806 = vrot.lane.b32.xlu0 %v3586, 83
        %v3807 = vpop.permute.xlu0 %3806
        %v3808 = vsel %vm1694, %v3797, %v3799
        %v3809 = vsel %vm1694, %v3799, %v3801
        %v3810 = vsel %vm1694, %v3803, %v3805
        %v3811 = vsel %vm1694, %v3805, %v3807
        %v3817 = vsel %vm2049, %v3794, 0
        %v3820 = vsel %vm2049, %v3795, 0
        %3822 = vmatprep.subr.bf16.mxu0 %v3809
        %3823 = vmatpush1.bf16.msra.mxu0 %v3808
        %3824 = vmatprep.subr.bf16.mxu0 %v3811
        %3825 = vmatpush1.bf16.msra.mxu0 %v3810
        %3826 = vmatprep.subr.bf16.mxu0 0
        %3827 = vmatpush1.bf16.msra.mxu0 0
        %3828 = vmatprep.subr.bf16.mxu0 0
        %3829 = vmatpush1.bf16.msra.mxu0 0
        %3830 = vmatprep.subr.bf16.mxu0 0
        %3831 = vmatpush1.bf16.msra.mxu0 0
        %3832 = vmatprep.subr.bf16.mxu0 0
        %3833 = vmatpush1.bf16.msra.mxu0 0
        %3834 = vmatprep.subr.bf16.mxu0 0
        %3835 = vmatpush1.bf16.msra.mxu0 0
        %3836 = vmatprep.subr.bf16.mxu0 0
        %3837 = vmatpush1.bf16.msra.mxu0 0
        %3838 = vmatprep.subr.bf16.mxu0 0
        %3839 = vmatpush1.bf16.msra.mxu0 0
        %3840 = vmatprep.subr.bf16.mxu0 0
        %3841 = vmatpush1.bf16.msra.mxu0 0
        %3842 = vmatprep.subr.bf16.mxu0 0
        %3843 = vmatpush1.bf16.msra.mxu0 0
        %3844 = vmatprep.subr.bf16.mxu0 0
        %3845 = vmatpush1.bf16.msra.mxu0 0
        %3846 = vmatprep.subr.bf16.mxu0 0
        %3847 = vmatpush1.bf16.msra.mxu0 0
        %3848 = vmatprep.subr.bf16.mxu0 0
        %3849 = vmatpush1.bf16.msra.mxu0 0
        %3850 = vmatprep.subr.bf16.mxu0 0
        %3851 = vmatpush1.bf16.msra.mxu0 0
        %3852 = vmatprep.subr.bf16.mxu0 0
        %3853 = vmatpush1.bf16.msra.mxu0 0
        %3854 = vmatprep.mubr.bf16.mxu0 0
        %3855 = vmatmul.mubr.bf16.gmra.mrb[0].mxu0 %v3817
        %v3856 = vpop.f32.mrb[0].mxu0
        %v3857 = vadd.f32 0.0, %v3856
        %v3858 = vpop.f32.mrb[0].mxu0
        %v3859 = vadd.f32 0.0, %v3858
        %v3860 = vpop.f32.mrb[0].mxu0
        %v3861 = vadd.f32 0.0, %v3860
        %v3862 = vpop.f32.mrb[0].mxu0
        %v3863 = vadd.f32 0.0, %v3862
        %3864 = vmatprep.mubr.bf16.mxu0 0
        %3865 = vmatmul.mubr.bf16.gmra.mrb[0].mxu0 %v3820
        %v3866 = vpop.f32.mrb[0].mxu0
        %v3867 = vadd.f32 0.0, %v3866
        %v3868 = vpop.f32.mrb[0].mxu0
        %v3869 = vadd.f32 0.0, %v3868
        %v3870 = vpop.f32.mrb[0].mxu0
        %v3871 = vadd.f32 0.0, %v3870
        %v3872 = vpop.f32.mrb[0].mxu0
        %v3873 = vadd.f32 0.0, %v3872
        %3874 = vdwg.mxu0
        %v3875 = vadd.f32 %v3763, %v3857
        %v3876 = vadd.f32 %v3765, %v3859
        %v3877 = vadd.f32 %v3767, %v3861
        %v3878 = vadd.f32 %v3769, %v3863
        %v3879 = vadd.f32 %v3773, %v3867
        %v3880 = vadd.f32 %v3775, %v3869
        %v3881 = vadd.f32 %v3777, %v3871
        %v3882 = vadd.f32 %v3779, %v3873
        %s3883 = scalar_lea.vmem [#allocation4], 192
        %v3884 = vld [vmem:[%s3883] sm:$0xf]
        %v3885 = vld [vmem:[%s3883 + $0x4] sm:$0xf]
        %v3886 = vld [vmem:[%s3883 + $0x8] sm:$0xf]
        %v3887 = vld [vmem:[%s3883 + $0xc] sm:$0xf]
        %v3892 = vunpack.c.l.b16 %v3884
        %v3893 = vunpack.c.l.b16 %v3885
        %v3894 = vunpack.c.l.b16 %v3886
        %v3895 = vunpack.c.l.b16 %v3887
        %v3896 = vpack.c.b16 %v3893, %v3892
        %v3897 = vpack.c.b16 %v3895, %v3894
        %3898 = vrot.lane.b32.xlu0 %v3581, 67
        %v3899 = vpop.permute.xlu0 %3898
        %3900 = vrot.lane.b32.xlu0 %v3582, 67
        %v3901 = vpop.permute.xlu0 %3900
        %3902 = vrot.lane.b32.xlu0 %v3583, 67
        %v3903 = vpop.permute.xlu0 %3902
        %3904 = vrot.lane.b32.xlu0 %v3584, 67
        %v3905 = vpop.permute.xlu0 %3904
        %3906 = vrot.lane.b32.xlu0 %v3585, 67
        %v3907 = vpop.permute.xlu0 %3906
        %3908 = vrot.lane.b32.xlu0 %v3586, 67
        %v3909 = vpop.permute.xlu0 %3908
        %v3910 = vsel %vm2953, %v3899, %v3901
        %v3911 = vsel %vm2953, %v3901, %v3903
        %v3912 = vsel %vm2953, %v3905, %v3907
        %v3913 = vsel %vm2953, %v3907, %v3909
        %v3919 = vsel %vm2049, %v3896, 0
        %v3922 = vsel %vm2049, %v3897, 0
        %3924 = vmatprep.subr.bf16.mxu0 %v3911
        %3925 = vmatpush1.bf16.msra.mxu0 %v3910
        %3926 = vmatprep.subr.bf16.mxu0 %v3913
        %3927 = vmatpush1.bf16.msra.mxu0 %v3912
        %3928 = vmatprep.subr.bf16.mxu0 0
        %3929 = vmatpush1.bf16.msra.mxu0 0
        %3930 = vmatprep.subr.bf16.mxu0 0
        %3931 = vmatpush1.bf16.msra.mxu0 0
        %3932 = vmatprep.subr.bf16.mxu0 0
        %3933 = vmatpush1.bf16.msra.mxu0 0
        %3934 = vmatprep.subr.bf16.mxu0 0
        %3935 = vmatpush1.bf16.msra.mxu0 0
        %3936 = vmatprep.subr.bf16.mxu0 0
        %3937 = vmatpush1.bf16.msra.mxu0 0
        %3938 = vmatprep.subr.bf16.mxu0 0
        %3939 = vmatpush1.bf16.msra.mxu0 0
        %3940 = vmatprep.subr.bf16.mxu0 0
        %3941 = vmatpush1.bf16.msra.mxu0 0
        %3942 = vmatprep.subr.bf16.mxu0 0
        %3943 = vmatpush1.bf16.msra.mxu0 0
        %3944 = vmatprep.subr.bf16.mxu0 0
        %3945 = vmatpush1.bf16.msra.mxu0 0
        %3946 = vmatprep.subr.bf16.mxu0 0
        %3947 = vmatpush1.bf16.msra.mxu0 0
        %3948 = vmatprep.subr.bf16.mxu0 0
        %3949 = vmatpush1.bf16.msra.mxu0 0
        %3950 = vmatprep.subr.bf16.mxu0 0
        %3951 = vmatpush1.bf16.msra.mxu0 0
        %3952 = vmatprep.subr.bf16.mxu0 0
        %3953 = vmatpush1.bf16.msra.mxu0 0
        %3954 = vmatprep.subr.bf16.mxu0 0
        %3955 = vmatpush1.bf16.msra.mxu0 0
        %3956 = vmatprep.mubr.bf16.mxu0 0
        %3957 = vmatmul.mubr.bf16.gmra.mrb[0].mxu0 %v3919
        %v3958 = vpop.f32.mrb[0].mxu0
        %v3959 = vadd.f32 0.0, %v3958
        %v3960 = vpop.f32.mrb[0].mxu0
        %v3961 = vadd.f32 0.0, %v3960
        %v3962 = vpop.f32.mrb[0].mxu0
        %v3963 = vadd.f32 0.0, %v3962
        %v3964 = vpop.f32.mrb[0].mxu0
        %v3965 = vadd.f32 0.0, %v3964
        %3966 = vmatprep.mubr.bf16.mxu0 0
        %3967 = vmatmul.mubr.bf16.gmra.mrb[0].mxu0 %v3922
        %v3968 = vpop.f32.mrb[0].mxu0
        %v3969 = vadd.f32 0.0, %v3968
        %v3970 = vpop.f32.mrb[0].mxu0
        %v3971 = vadd.f32 0.0, %v3970
        %v3972 = vpop.f32.mrb[0].mxu0
        %v3973 = vadd.f32 0.0, %v3972
        %v3974 = vpop.f32.mrb[0].mxu0
        %v3975 = vadd.f32 0.0, %v3974
        %3976 = vdwg.mxu0
        %v3977 = vadd.f32 %v3875, %v3959
        %v3978 = vadd.f32 %v3876, %v3961
        %v3979 = vadd.f32 %v3877, %v3963
        %v3980 = vadd.f32 %v3878, %v3965
        %v3981 = vadd.f32 %v3879, %v3969
        %v3982 = vadd.f32 %v3880, %v3971
        %v3983 = vadd.f32 %v3881, %v3973
        %v3984 = vadd.f32 %v3882, %v3975
        %s3985 = scalar_lea.vmem [#allocation4], 208
        %v3986 = vld [vmem:[%s3985] sm:$0xf]
        %v3987 = vld [vmem:[%s3985 + $0x4] sm:$0xf]
        %v3988 = vld [vmem:[%s3985 + $0x8] sm:$0xf]
        %v3989 = vld [vmem:[%s3985 + $0xc] sm:$0xf]
        %v3994 = vunpack.c.l.b16 %v3986
        %v3995 = vunpack.c.l.b16 %v3987
        %v3996 = vunpack.c.l.b16 %v3988
        %v3997 = vunpack.c.l.b16 %v3989
        %v3998 = vpack.c.b16 %v3995, %v3994
        %v3999 = vpack.c.b16 %v3997, %v3996
        %4000 = vrot.lane.b32.xlu0 %v3581, 66
        %v4001 = vpop.permute.xlu0 %4000
        %4002 = vrot.lane.b32.xlu0 %v3582, 66
        %v4003 = vpop.permute.xlu0 %4002
        %4004 = vrot.lane.b32.xlu0 %v3583, 66
        %v4005 = vpop.permute.xlu0 %4004
        %4006 = vrot.lane.b32.xlu0 %v3584, 66
        %v4007 = vpop.permute.xlu0 %4006
        %4008 = vrot.lane.b32.xlu0 %v3585, 66
        %v4009 = vpop.permute.xlu0 %4008
        %4010 = vrot.lane.b32.xlu0 %v3586, 66
        %v4011 = vpop.permute.xlu0 %4010
        %v4012 = vsel %vm3111, %v4001, %v4003
        %v4013 = vsel %vm3111, %v4003, %v4005
        %v4014 = vsel %vm3111, %v4007, %v4009
        %v4015 = vsel %vm3111, %v4009, %v4011
        %v4021 = vsel %vm2049, %v3998, 0
        %v4024 = vsel %vm2049, %v3999, 0
        %4026 = vmatprep.subr.bf16.mxu0 %v4013
        %4027 = vmatpush1.bf16.msra.mxu0 %v4012
        %4028 = vmatprep.subr.bf16.mxu0 %v4015
        %4029 = vmatpush1.bf16.msra.mxu0 %v4014
        %4030 = vmatprep.subr.bf16.mxu0 0
        %4031 = vmatpush1.bf16.msra.mxu0 0
        %4032 = vmatprep.subr.bf16.mxu0 0
        %4033 = vmatpush1.bf16.msra.mxu0 0
        %4034 = vmatprep.subr.bf16.mxu0 0
        %4035 = vmatpush1.bf16.msra.mxu0 0
        %4036 = vmatprep.subr.bf16.mxu0 0
        %4037 = vmatpush1.bf16.msra.mxu0 0
        %4038 = vmatprep.subr.bf16.mxu0 0
        %4039 = vmatpush1.bf16.msra.mxu0 0
        %4040 = vmatprep.subr.bf16.mxu0 0
        %4041 = vmatpush1.bf16.msra.mxu0 0
        %4042 = vmatprep.subr.bf16.mxu0 0
        %4043 = vmatpush1.bf16.msra.mxu0 0
        %4044 = vmatprep.subr.bf16.mxu0 0
        %4045 = vmatpush1.bf16.msra.mxu0 0
        %4046 = vmatprep.subr.bf16.mxu0 0
        %4047 = vmatpush1.bf16.msra.mxu0 0
        %4048 = vmatprep.subr.bf16.mxu0 0
        %4049 = vmatpush1.bf16.msra.mxu0 0
        %4050 = vmatprep.subr.bf16.mxu0 0
        %4051 = vmatpush1.bf16.msra.mxu0 0
        %4052 = vmatprep.subr.bf16.mxu0 0
        %4053 = vmatpush1.bf16.msra.mxu0 0
        %4054 = vmatprep.subr.bf16.mxu0 0
        %4055 = vmatpush1.bf16.msra.mxu0 0
        %4056 = vmatprep.subr.bf16.mxu0 0
        %4057 = vmatpush1.bf16.msra.mxu0 0
        %4058 = vmatprep.mubr.bf16.mxu0 0
        %4059 = vmatmul.mubr.bf16.gmra.mrb[0].mxu0 %v4021
        %v4060 = vpop.f32.mrb[0].mxu0
        %v4061 = vadd.f32 0.0, %v4060
        %v4062 = vpop.f32.mrb[0].mxu0
        %v4063 = vadd.f32 0.0, %v4062
        %v4064 = vpop.f32.mrb[0].mxu0
        %v4065 = vadd.f32 0.0, %v4064
        %v4066 = vpop.f32.mrb[0].mxu0
        %v4067 = vadd.f32 0.0, %v4066
        %4068 = vmatprep.mubr.bf16.mxu0 0
        %4069 = vmatmul.mubr.bf16.gmra.mrb[0].mxu0 %v4024
        %v4070 = vpop.f32.mrb[0].mxu0
        %v4071 = vadd.f32 0.0, %v4070
        %v4072 = vpop.f32.mrb[0].mxu0
        %v4073 = vadd.f32 0.0, %v4072
        %v4074 = vpop.f32.mrb[0].mxu0
        %v4075 = vadd.f32 0.0, %v4074
        %v4076 = vpop.f32.mrb[0].mxu0
        %v4077 = vadd.f32 0.0, %v4076
        %4078 = vdwg.mxu0
        %v4079 = vadd.f32 %v3977, %v4061
        %v4080 = vadd.f32 %v3978, %v4063
        %v4081 = vadd.f32 %v3979, %v4065
        %v4082 = vadd.f32 %v3980, %v4067
        %v4083 = vadd.f32 %v3981, %v4071
        %v4084 = vadd.f32 %v3982, %v4073
        %v4085 = vadd.f32 %v3983, %v4075
        %v4086 = vadd.f32 %v3984, %v4077
        %s4087 = scalar_lea.vmem [#allocation4], 224
        %v4088 = vld [vmem:[%s4087] sm:$0xf]
        %v4089 = vld [vmem:[%s4087 + $0x4] sm:$0xf]
        %v4090 = vld [vmem:[%s4087 + $0x8] sm:$0xf]
        %v4091 = vld [vmem:[%s4087 + $0xc] sm:$0xf]
        %v4096 = vunpack.c.l.b16 %v4088
        %v4097 = vunpack.c.l.b16 %v4089
        %v4098 = vunpack.c.l.b16 %v4090
        %v4099 = vunpack.c.l.b16 %v4091
        %v4100 = vpack.c.b16 %v4097, %v4096
        %v4101 = vpack.c.b16 %v4099, %v4098
        %4102 = vrot.lane.b32.xlu0 %v3581, 65
        %v4103 = vpop.permute.xlu0 %4102
        %4104 = vrot.lane.b32.xlu0 %v3582, 65
        %v4105 = vpop.permute.xlu0 %4104
        %4106 = vrot.lane.b32.xlu0 %v3583, 65
        %v4107 = vpop.permute.xlu0 %4106
        %4108 = vrot.lane.b32.xlu0 %v3584, 65
        %v4109 = vpop.permute.xlu0 %4108
        %4110 = vrot.lane.b32.xlu0 %v3585, 65
        %v4111 = vpop.permute.xlu0 %4110
        %4112 = vrot.lane.b32.xlu0 %v3586, 65
        %v4113 = vpop.permute.xlu0 %4112
        %v4114 = vsel %vm3269, %v4103, %v4105
        %v4115 = vsel %vm3269, %v4105, %v4107
        %v4116 = vsel %vm3269, %v4109, %v4111
        %v4117 = vsel %vm3269, %v4111, %v4113
        %v4123 = vsel %vm2049, %v4100, 0
        %v4126 = vsel %vm2049, %v4101, 0
        %4128 = vmatprep.subr.bf16.mxu0 %v4115
        %4129 = vmatpush1.bf16.msra.mxu0 %v4114
        %4130 = vmatprep.subr.bf16.mxu0 %v4117
        %4131 = vmatpush1.bf16.msra.mxu0 %v4116
        %4132 = vmatprep.subr.bf16.mxu0 0
        %4133 = vmatpush1.bf16.msra.mxu0 0
        %4134 = vmatprep.subr.bf16.mxu0 0
        %4135 = vmatpush1.bf16.msra.mxu0 0
        %4136 = vmatprep.subr.bf16.mxu0 0
        %4137 = vmatpush1.bf16.msra.mxu0 0
        %4138 = vmatprep.subr.bf16.mxu0 0
        %4139 = vmatpush1.bf16.msra.mxu0 0
        %4140 = vmatprep.subr.bf16.mxu0 0
        %4141 = vmatpush1.bf16.msra.mxu0 0
        %4142 = vmatprep.subr.bf16.mxu0 0
        %4143 = vmatpush1.bf16.msra.mxu0 0
        %4144 = vmatprep.subr.bf16.mxu0 0
        %4145 = vmatpush1.bf16.msra.mxu0 0
        %4146 = vmatprep.subr.bf16.mxu0 0
        %4147 = vmatpush1.bf16.msra.mxu0 0
        %4148 = vmatprep.subr.bf16.mxu0 0
        %4149 = vmatpush1.bf16.msra.mxu0 0
        %4150 = vmatprep.subr.bf16.mxu0 0
        %4151 = vmatpush1.bf16.msra.mxu0 0
        %4152 = vmatprep.subr.bf16.mxu0 0
        %4153 = vmatpush1.bf16.msra.mxu0 0
        %4154 = vmatprep.subr.bf16.mxu0 0
        %4155 = vmatpush1.bf16.msra.mxu0 0
        %4156 = vmatprep.subr.bf16.mxu0 0
        %4157 = vmatpush1.bf16.msra.mxu0 0
        %4158 = vmatprep.subr.bf16.mxu0 0
        %4159 = vmatpush1.bf16.msra.mxu0 0
        %4160 = vmatprep.mubr.bf16.mxu0 0
        %4161 = vmatmul.mubr.bf16.gmra.mrb[0].mxu0 %v4123
        %v4162 = vpop.f32.mrb[0].mxu0
        %v4163 = vadd.f32 0.0, %v4162
        %v4164 = vpop.f32.mrb[0].mxu0
        %v4165 = vadd.f32 0.0, %v4164
        %v4166 = vpop.f32.mrb[0].mxu0
        %v4167 = vadd.f32 0.0, %v4166
        %v4168 = vpop.f32.mrb[0].mxu0
        %v4169 = vadd.f32 0.0, %v4168
        %4170 = vmatprep.mubr.bf16.mxu0 0
        %4171 = vmatmul.mubr.bf16.gmra.mrb[0].mxu0 %v4126
        %v4172 = vpop.f32.mrb[0].mxu0
        %v4173 = vadd.f32 0.0, %v4172
        %v4174 = vpop.f32.mrb[0].mxu0
        %v4175 = vadd.f32 0.0, %v4174
        %v4176 = vpop.f32.mrb[0].mxu0
        %v4177 = vadd.f32 0.0, %v4176
        %v4178 = vpop.f32.mrb[0].mxu0
        %v4179 = vadd.f32 0.0, %v4178
        %4180 = vdwg.mxu0
        %v4181 = vadd.f32 %v4079, %v4163
        %v4182 = vadd.f32 %v4080, %v4165
        %v4183 = vadd.f32 %v4081, %v4167
        %v4184 = vadd.f32 %v4082, %v4169
        %v4185 = vadd.f32 %v4083, %v4173
        %v4186 = vadd.f32 %v4084, %v4175
        %v4187 = vadd.f32 %v4085, %v4177
        %v4188 = vadd.f32 %v4086, %v4179
        %s4189 = scalar_lea.vmem [#allocation4], 240
        %v4190 = vld [vmem:[%s4189] sm:$0xf]
        %v4191 = vld [vmem:[%s4189 + $0x4] sm:$0xf]
        %v4192 = vld [vmem:[%s4189 + $0x8] sm:$0xf]
        %v4193 = vld [vmem:[%s4189 + $0xc] sm:$0xf]
        %v4198 = vunpack.c.l.b16 %v4190
        %v4199 = vunpack.c.l.b16 %v4191
        %v4200 = vunpack.c.l.b16 %v4192
        %v4201 = vunpack.c.l.b16 %v4193
        %v4202 = vpack.c.b16 %v4199, %v4198
        %v4203 = vpack.c.b16 %v4201, %v4200
        %4204 = vrot.lane.b32.xlu0 %v3581, 49
        %v4205 = vpop.permute.xlu0 %4204
        %4206 = vrot.lane.b32.xlu0 %v3582, 49
        %v4207 = vpop.permute.xlu0 %4206
        %4208 = vrot.lane.b32.xlu0 %v3583, 49
        %v4209 = vpop.permute.xlu0 %4208
        %4210 = vrot.lane.b32.xlu0 %v3584, 49
        %v4211 = vpop.permute.xlu0 %4210
        %4212 = vrot.lane.b32.xlu0 %v3585, 49
        %v4213 = vpop.permute.xlu0 %4212
        %4214 = vrot.lane.b32.xlu0 %v3586, 49
        %v4215 = vpop.permute.xlu0 %4214
        %vm4216 = vcmask 400384
        %v4217 = vsel %vm4216, %v4205, %v4207
        %v4218 = vsel %vm4216, %v4207, %v4209
        %v4219 = vsel %vm4216, %v4211, %v4213
        %v4220 = vsel %vm4216, %v4213, %v4215
        %v4226 = vsel %vm2049, %v4202, 0
        %v4229 = vsel %vm2049, %v4203, 0
        %4231 = vmatprep.subr.bf16.mxu0 %v4218
        %4232 = vmatpush1.bf16.msra.mxu0 %v4217
        %4233 = vmatprep.subr.bf16.mxu0 %v4220
        %4234 = vmatpush1.bf16.msra.mxu0 %v4219
        %4235 = vmatprep.subr.bf16.mxu0 0
        %4236 = vmatpush1.bf16.msra.mxu0 0
        %4237 = vmatprep.subr.bf16.mxu0 0
        %4238 = vmatpush1.bf16.msra.mxu0 0
        %4239 = vmatprep.subr.bf16.mxu0 0
        %4240 = vmatpush1.bf16.msra.mxu0 0
        %4241 = vmatprep.subr.bf16.mxu0 0
        %4242 = vmatpush1.bf16.msra.mxu0 0
        %4243 = vmatprep.subr.bf16.mxu0 0
        %4244 = vmatpush1.bf16.msra.mxu0 0
        %4245 = vmatprep.subr.bf16.mxu0 0
        %4246 = vmatpush1.bf16.msra.mxu0 0
        %4247 = vmatprep.subr.bf16.mxu0 0
        %4248 = vmatpush1.bf16.msra.mxu0 0
        %4249 = vmatprep.subr.bf16.mxu0 0
        %4250 = vmatpush1.bf16.msra.mxu0 0
        %4251 = vmatprep.subr.bf16.mxu0 0
        %4252 = vmatpush1.bf16.msra.mxu0 0
        %4253 = vmatprep.subr.bf16.mxu0 0
        %4254 = vmatpush1.bf16.msra.mxu0 0
        %4255 = vmatprep.subr.bf16.mxu0 0
        %4256 = vmatpush1.bf16.msra.mxu0 0
        %4257 = vmatprep.subr.bf16.mxu0 0
        %4258 = vmatpush1.bf16.msra.mxu0 0
        %4259 = vmatprep.subr.bf16.mxu0 0
        %4260 = vmatpush1.bf16.msra.mxu0 0
        %4261 = vmatprep.subr.bf16.mxu0 0
        %4262 = vmatpush1.bf16.msra.mxu0 0
        %4263 = vmatprep.mubr.bf16.mxu0 0
        %4264 = vmatmul.mubr.bf16.gmra.mrb[0].mxu0 %v4226
        %v4265 = vpop.f32.mrb[0].mxu0
        %v4266 = vadd.f32 0.0, %v4265
        %v4267 = vpop.f32.mrb[0].mxu0
        %v4268 = vadd.f32 0.0, %v4267
        %v4269 = vpop.f32.mrb[0].mxu0
        %v4270 = vadd.f32 0.0, %v4269
        %v4271 = vpop.f32.mrb[0].mxu0
        %v4272 = vadd.f32 0.0, %v4271
        %4273 = vmatprep.mubr.bf16.mxu0 0
        %4274 = vmatmul.mubr.bf16.gmra.mrb[0].mxu0 %v4229
        %v4275 = vpop.f32.mrb[0].mxu0
        %v4276 = vadd.f32 0.0, %v4275
        %v4277 = vpop.f32.mrb[0].mxu0
        %v4278 = vadd.f32 0.0, %v4277
        %v4279 = vpop.f32.mrb[0].mxu0
        %v4280 = vadd.f32 0.0, %v4279
        %v4281 = vpop.f32.mrb[0].mxu0
        %v4282 = vadd.f32 0.0, %v4281
        %4283 = vdwg.mxu0
        %v4284 = vadd.f32 %v4181, %v4266
        %v4285 = vadd.f32 %v4182, %v4268
        %v4286 = vadd.f32 %v4183, %v4270
        %v4287 = vadd.f32 %v4184, %v4272
        %v4288 = vadd.f32 %v4185, %v4276
        %v4289 = vadd.f32 %v4186, %v4278
        %v4290 = vadd.f32 %v4187, %v4280
        %v4291 = vadd.f32 %v4188, %v4282
        %s4292 = scalar_lea.vmem [#allocation4], 256
        %v4293 = vld [vmem:[%s4292] sm:$0xf]
        %v4294 = vld [vmem:[%s4292 + $0x4] sm:$0xf]
        %v4295 = vld [vmem:[%s4292 + $0x8] sm:$0xf]
        %v4296 = vld [vmem:[%s4292 + $0xc] sm:$0xf]
        %v4301 = vunpack.c.l.b16 %v4293
        %v4302 = vunpack.c.l.b16 %v4294
        %v4303 = vunpack.c.l.b16 %v4295
        %v4304 = vunpack.c.l.b16 %v4296
        %v4305 = vpack.c.b16 %v4302, %v4301
        %v4306 = vpack.c.b16 %v4304, %v4303
        %4307 = vrot.lane.b32.xlu0 %v3581, 48
        %v4308 = vpop.permute.xlu0 %4307
        %4309 = vrot.lane.b32.xlu0 %v3582, 48
        %v4310 = vpop.permute.xlu0 %4309
        %4311 = vrot.lane.b32.xlu0 %v3583, 48
        %v4312 = vpop.permute.xlu0 %4311
        %4313 = vrot.lane.b32.xlu0 %v3584, 48
        %v4314 = vpop.permute.xlu0 %4313
        %4315 = vrot.lane.b32.xlu0 %v3585, 48
        %v4316 = vpop.permute.xlu0 %4315
        %4317 = vrot.lane.b32.xlu0 %v3586, 48
        %v4318 = vpop.permute.xlu0 %4317
        %vm4319 = vcmask 392192
        %v4320 = vsel %vm4319, %v4308, %v4310
        %v4321 = vsel %vm4319, %v4310, %v4312
        %v4322 = vsel %vm4319, %v4314, %v4316
        %v4323 = vsel %vm4319, %v4316, %v4318
        %v4329 = vsel %vm2049, %v4305, 0
        %v4332 = vsel %vm2049, %v4306, 0
        %4334 = vmatprep.subr.bf16.mxu0 %v4321
        %4335 = vmatpush1.bf16.msra.mxu0 %v4320
        %4336 = vmatprep.subr.bf16.mxu0 %v4323
        %4337 = vmatpush1.bf16.msra.mxu0 %v4322
        %4338 = vmatprep.subr.bf16.mxu0 0
        %4339 = vmatpush1.bf16.msra.mxu0 0
        %4340 = vmatprep.subr.bf16.mxu0 0
        %4341 = vmatpush1.bf16.msra.mxu0 0
        %4342 = vmatprep.subr.bf16.mxu0 0
        %4343 = vmatpush1.bf16.msra.mxu0 0
        %4344 = vmatprep.subr.bf16.mxu0 0
        %4345 = vmatpush1.bf16.msra.mxu0 0
        %4346 = vmatprep.subr.bf16.mxu0 0
        %4347 = vmatpush1.bf16.msra.mxu0 0
        %4348 = vmatprep.subr.bf16.mxu0 0
        %4349 = vmatpush1.bf16.msra.mxu0 0
        %4350 = vmatprep.subr.bf16.mxu0 0
        %4351 = vmatpush1.bf16.msra.mxu0 0
        %4352 = vmatprep.subr.bf16.mxu0 0
        %4353 = vmatpush1.bf16.msra.mxu0 0
        %4354 = vmatprep.subr.bf16.mxu0 0
        %4355 = vmatpush1.bf16.msra.mxu0 0
        %4356 = vmatprep.subr.bf16.mxu0 0
        %4357 = vmatpush1.bf16.msra.mxu0 0
        %4358 = vmatprep.subr.bf16.mxu0 0
        %4359 = vmatpush1.bf16.msra.mxu0 0
        %4360 = vmatprep.subr.bf16.mxu0 0
        %4361 = vmatpush1.bf16.msra.mxu0 0
        %4362 = vmatprep.subr.bf16.mxu0 0
        %4363 = vmatpush1.bf16.msra.mxu0 0
        %4364 = vmatprep.subr.bf16.mxu0 0
        %4365 = vmatpush1.bf16.msra.mxu0 0
        %4366 = vmatprep.mubr.bf16.mxu0 0
        %4367 = vmatmul.mubr.bf16.gmra.mrb[0].mxu0 %v4329
        %v4368 = vpop.f32.mrb[0].mxu0
        %v4369 = vadd.f32 0.0, %v4368
        %v4370 = vpop.f32.mrb[0].mxu0
        %v4371 = vadd.f32 0.0, %v4370
        %v4372 = vpop.f32.mrb[0].mxu0
        %v4373 = vadd.f32 0.0, %v4372
        %v4374 = vpop.f32.mrb[0].mxu0
        %v4375 = vadd.f32 0.0, %v4374
        %4376 = vmatprep.mubr.bf16.mxu0 0
        %4377 = vmatmul.mubr.bf16.gmra.mrb[0].mxu0 %v4332
        %v4378 = vpop.f32.mrb[0].mxu0
        %v4379 = vadd.f32 0.0, %v4378
        %v4380 = vpop.f32.mrb[0].mxu0
        %v4381 = vadd.f32 0.0, %v4380
        %v4382 = vpop.f32.mrb[0].mxu0
        %v4383 = vadd.f32 0.0, %v4382
        %v4384 = vpop.f32.mrb[0].mxu0
        %v4385 = vadd.f32 0.0, %v4384
        %4386 = vdwg.mxu0
        %v4387 = vadd.f32 %v4284, %v4369
        %v4388 = vadd.f32 %v4285, %v4371
        %v4389 = vadd.f32 %v4286, %v4373
        %v4390 = vadd.f32 %v4287, %v4375
        %v4391 = vadd.f32 %v4288, %v4379
        %v4392 = vadd.f32 %v4289, %v4381
        %v4393 = vadd.f32 %v4290, %v4383
        %v4394 = vadd.f32 %v4291, %v4385
        %s4395 = scalar_lea.vmem [#allocation4], 272
        %v4396 = vld [vmem:[%s4395] sm:$0xf]
        %v4397 = vld [vmem:[%s4395 + $0x4] sm:$0xf]
        %v4398 = vld [vmem:[%s4395 + $0x8] sm:$0xf]
        %v4399 = vld [vmem:[%s4395 + $0xc] sm:$0xf]
        %v4404 = vunpack.c.l.b16 %v4396
        %v4405 = vunpack.c.l.b16 %v4397
        %v4406 = vunpack.c.l.b16 %v4398
        %v4407 = vunpack.c.l.b16 %v4399
        %v4408 = vpack.c.b16 %v4405, %v4404
        %v4409 = vpack.c.b16 %v4407, %v4406
        %4410 = vrot.lane.b32.xlu0 %v3581, 47
        %v4411 = vpop.permute.xlu0 %4410
        %4412 = vrot.lane.b32.xlu0 %v3582, 47
        %v4413 = vpop.permute.xlu0 %4412
        %4414 = vrot.lane.b32.xlu0 %v3583, 47
        %v4415 = vpop.permute.xlu0 %4414
        %4416 = vrot.lane.b32.xlu0 %v3584, 47
        %v4417 = vpop.permute.xlu0 %4416
        %4418 = vrot.lane.b32.xlu0 %v3585, 47
        %v4419 = vpop.permute.xlu0 %4418
        %4420 = vrot.lane.b32.xlu0 %v3586, 47
        %v4421 = vpop.permute.xlu0 %4420
        %vm4422 = vcmask 384000
        %v4423 = vsel %vm4422, %v4411, %v4413
        %v4424 = vsel %vm4422, %v4413, %v4415
        %v4425 = vsel %vm4422, %v4417, %v4419
        %v4426 = vsel %vm4422, %v4419, %v4421
        %v4432 = vsel %vm2049, %v4408, 0
        %v4435 = vsel %vm2049, %v4409, 0
        %4437 = vmatprep.subr.bf16.mxu0 %v4424
        %4438 = vmatpush1.bf16.msra.mxu0 %v4423
        %4439 = vmatprep.subr.bf16.mxu0 %v4426
        %4440 = vmatpush1.bf16.msra.mxu0 %v4425
        %4441 = vmatprep.subr.bf16.mxu0 0
        %4442 = vmatpush1.bf16.msra.mxu0 0
        %4443 = vmatprep.subr.bf16.mxu0 0
        %4444 = vmatpush1.bf16.msra.mxu0 0
        %4445 = vmatprep.subr.bf16.mxu0 0
        %4446 = vmatpush1.bf16.msra.mxu0 0
        %4447 = vmatprep.subr.bf16.mxu0 0
        %4448 = vmatpush1.bf16.msra.mxu0 0
        %4449 = vmatprep.subr.bf16.mxu0 0
        %4450 = vmatpush1.bf16.msra.mxu0 0
        %4451 = vmatprep.subr.bf16.mxu0 0
        %4452 = vmatpush1.bf16.msra.mxu0 0
        %4453 = vmatprep.subr.bf16.mxu0 0
        %4454 = vmatpush1.bf16.msra.mxu0 0
        %4455 = vmatprep.subr.bf16.mxu0 0
        %4456 = vmatpush1.bf16.msra.mxu0 0
        %4457 = vmatprep.subr.bf16.mxu0 0
        %4458 = vmatpush1.bf16.msra.mxu0 0
        %4459 = vmatprep.subr.bf16.mxu0 0
        %4460 = vmatpush1.bf16.msra.mxu0 0
        %4461 = vmatprep.subr.bf16.mxu0 0
        %4462 = vmatpush1.bf16.msra.mxu0 0
        %4463 = vmatprep.subr.bf16.mxu0 0
        %4464 = vmatpush1.bf16.msra.mxu0 0
        %4465 = vmatprep.subr.bf16.mxu0 0
        %4466 = vmatpush1.bf16.msra.mxu0 0
        %4467 = vmatprep.subr.bf16.mxu0 0
        %4468 = vmatpush1.bf16.msra.mxu0 0
        %4469 = vmatprep.mubr.bf16.mxu0 0
        %4470 = vmatmul.mubr.bf16.gmra.mrb[0].mxu0 %v4432
        %v4471 = vpop.f32.mrb[0].mxu0
        %v4472 = vadd.f32 0.0, %v4471
        %v4473 = vpop.f32.mrb[0].mxu0
        %v4474 = vadd.f32 0.0, %v4473
        %v4475 = vpop.f32.mrb[0].mxu0
        %v4476 = vadd.f32 0.0, %v4475
        %v4477 = vpop.f32.mrb[0].mxu0
        %v4478 = vadd.f32 0.0, %v4477
        %4479 = vmatprep.mubr.bf16.mxu0 0
        %4480 = vmatmul.mubr.bf16.gmra.mrb[0].mxu0 %v4435
        %v4481 = vpop.f32.mrb[0].mxu0
        %v4482 = vadd.f32 0.0, %v4481
        %v4483 = vpop.f32.mrb[0].mxu0
        %v4484 = vadd.f32 0.0, %v4483
        %v4485 = vpop.f32.mrb[0].mxu0
        %v4486 = vadd.f32 0.0, %v4485
        %v4487 = vpop.f32.mrb[0].mxu0
        %v4488 = vadd.f32 0.0, %v4487
        %4489 = vdwg.mxu0
        %v4490 = vadd.f32 %v4387, %v4472
        %v4491 = vadd.f32 %v4388, %v4474
        %v4492 = vadd.f32 %v4389, %v4476
        %v4493 = vadd.f32 %v4390, %v4478
        %v4494 = vadd.f32 %v4391, %v4482
        %v4495 = vadd.f32 %v4392, %v4484
        %v4496 = vadd.f32 %v4393, %v4486
        %v4497 = vadd.f32 %v4394, %v4488
        %v4498 = vld [vmem:[#allocation2] sm:$0xff]
        %v4499 = vld [vmem:[#allocation2 + $0x8] sm:$0xff]
        %v4500 = vld [vmem:[#allocation2 + $0x10] sm:$0xff]
        %v4501 = vld [vmem:[#allocation2 + $0x18] sm:$0xff]
        %v4502 = vld [vmem:[#allocation2 + $0x20] sm:$0xff]
        %v4503 = vld [vmem:[#allocation2 + $0x28] sm:$0xff]
        %v4504 = vld [vmem:[#allocation2 + $0x30] sm:$0xff]
        %v4505 = vld [vmem:[#allocation2 + $0x38] sm:$0xff]
        %v4506 = vld [vmem:[#allocation2 + $0x40] sm:$0xff]
        %v4507 = vld [vmem:[#allocation2 + $0x48] sm:$0xff]
        %v4508 = vld [vmem:[#allocation2 + $0x50] sm:$0xff]
        %v4509 = vld [vmem:[#allocation2 + $0x58] sm:$0xff]
        %4522 = vrot.lane.b32.xlu0 %v4498, 66
        %v4523 = vpop.permute.xlu0 %4522
        %4524 = vrot.lane.b32.xlu0 %v4499, 66
        %v4525 = vpop.permute.xlu0 %4524
        %4526 = vrot.lane.b32.xlu0 %v4500, 66
        %v4527 = vpop.permute.xlu0 %4526
        %4528 = vrot.lane.b32.xlu0 %v4501, 66
        %v4529 = vpop.permute.xlu0 %4528
        %4530 = vrot.lane.b32.xlu0 %v4502, 66
        %v4531 = vpop.permute.xlu0 %4530
        %4532 = vrot.lane.b32.xlu0 %v4503, 66
        %v4533 = vpop.permute.xlu0 %4532
        %4534 = vrot.lane.b32.xlu0 %v4504, 66
        %v4535 = vpop.permute.xlu0 %4534
        %4536 = vrot.lane.b32.xlu0 %v4505, 66
        %v4537 = vpop.permute.xlu0 %4536
        %4538 = vrot.lane.b32.xlu0 %v4506, 66
        %v4539 = vpop.permute.xlu0 %4538
        %4540 = vrot.lane.b32.xlu0 %v4507, 66
        %v4541 = vpop.permute.xlu0 %4540
        %4542 = vrot.lane.b32.xlu0 %v4508, 66
        %v4543 = vpop.permute.xlu0 %4542
        %4544 = vrot.lane.b32.xlu0 %v4509, 66
        %v4545 = vpop.permute.xlu0 %4544
        %vm4546 = vcmask 539648
        %v4547 = vsel %vm4546, %v4523, %v4525
        %v4548 = vsel %vm4546, %v4525, %v4527
        %v4549 = vsel %vm4546, %v4529, %v4531
        %v4550 = vsel %vm4546, %v4531, %v4533
        %v4551 = vsel %vm4546, %v4535, %v4537
        %v4552 = vsel %vm4546, %v4537, %v4539
        %v4553 = vsel %vm4546, %v4541, %v4543
        %v4554 = vsel %vm4546, %v4543, %v4545
        %v4563 = vadd.f32 %v4490, %v4547
        %v4564 = vadd.f32 %v4491, %v4548
        %v4565 = vadd.f32 %v4492, %v4549
        %v4566 = vadd.f32 %v4493, %v4550
        %v4567 = vadd.f32 %v4494, %v4551
        %v4568 = vadd.f32 %v4495, %v4552
        %v4569 = vadd.f32 %v4496, %v4553
        %v4570 = vadd.f32 %v4497, %v4554
        %v4571 = vld [vmem:[%s250] sm:$0x7]
        %vm4572 = vcmp.gt.f32.partialorder %v4571, 0.0
        %v4573 = vsel %vm4572, 1, 0
        %v4574 = vlaneseq
        %v4575 = vshrl.u32 %v4574, 7
        %v4576 = vsub.s32 0, %v4575
        %v4577 = vrot.slane %v4573, %v4576
        %v4578 = vlaneseq
        %v4579 = vshrl.u32 %v4578, 7
        %v4580 = vsub.s32 1, %v4579
        %v4581 = vrot.slane %v4573, %v4580
        %v4582 = vlaneseq
        %v4583 = vshrl.u32 %v4582, 7
        %v4584 = vsub.s32 2, %v4583
        %v4585 = vrot.slane %v4573, %v4584
        %vm4586 = vcmp.eq.s32.totalorder %v4577, 1
        %vm4587 = vcmp.eq.s32.totalorder %v4581, 1
        %vm4588 = vcmp.eq.s32.totalorder %v4585, 1
        %4597 = vrot.lane.b32.xlu0 %v4563, 54
        %v4598 = vpop.permute.xlu0 %4597
        %4599 = vrot.lane.b32.xlu0 %v4564, 54
        %v4600 = vpop.permute.xlu0 %4599
        %4601 = vrot.lane.b32.xlu0 %v4565, 54
        %v4602 = vpop.permute.xlu0 %4601
        %4603 = vrot.lane.b32.xlu0 %v4566, 54
        %v4604 = vpop.permute.xlu0 %4603
        %4605 = vrot.lane.b32.xlu0 %v4567, 54
        %v4606 = vpop.permute.xlu0 %4605
        %4607 = vrot.lane.b32.xlu0 %v4568, 54
        %v4608 = vpop.permute.xlu0 %4607
        %4609 = vrot.lane.b32.xlu0 %v4569, 54
        %v4610 = vpop.permute.xlu0 %4609
        %4611 = vrot.lane.b32.xlu0 %v4570, 54
        %v4612 = vpop.permute.xlu0 %4611
        %vm4613 = vcmask 441344
        %v4614 = vsel %vm4613, %v4598, %v4600
        %v4615 = vsel %vm4613, %v4602, %v4604
        %v4616 = vsel %vm4613, %v4606, %v4608
        %v4617 = vsel %vm4613, %v4610, %v4612
        %v4630 = vsel %vm4586, %v4598, 0.0
        %v4631 = vsel %vm4587, %v4614, 0.0
        %v4632 = vsel %vm4588, %v4600, 0.0
        %v4633 = vsel %vm4586, %v4602, 0.0
        %v4634 = vsel %vm4587, %v4615, 0.0
        %v4635 = vsel %vm4588, %v4604, 0.0
        %v4636 = vsel %vm4586, %v4606, 0.0
        %v4637 = vsel %vm4587, %v4616, 0.0
        %v4638 = vsel %vm4588, %v4608, 0.0
        %v4639 = vsel %vm4586, %v4610, 0.0
        %v4640 = vsel %vm4587, %v4617, 0.0
        %v4641 = vsel %vm4588, %v4612, 0.0
        %4654 = vrot.lane.b32.xlu0 %v4630, 8
        %v4655 = vpop.permute.xlu0 %4654
        %4656 = vrot.lane.b32.xlu0 %v4631, 8
        %v4657 = vpop.permute.xlu0 %4656
        %4658 = vrot.lane.b32.xlu0 %v4632, 8
        %v4659 = vpop.permute.xlu0 %4658
        %4660 = vrot.lane.b32.xlu0 %v4633, 8
        %v4661 = vpop.permute.xlu0 %4660
        %4662 = vrot.lane.b32.xlu0 %v4634, 8
        %v4663 = vpop.permute.xlu0 %4662
        %4664 = vrot.lane.b32.xlu0 %v4635, 8
        %v4665 = vpop.permute.xlu0 %4664
        %4666 = vrot.lane.b32.xlu0 %v4636, 8
        %v4667 = vpop.permute.xlu0 %4666
        %4668 = vrot.lane.b32.xlu0 %v4637, 8
        %v4669 = vpop.permute.xlu0 %4668
        %4670 = vrot.lane.b32.xlu0 %v4638, 8
        %v4671 = vpop.permute.xlu0 %4670
        %4672 = vrot.lane.b32.xlu0 %v4639, 8
        %v4673 = vpop.permute.xlu0 %4672
        %4674 = vrot.lane.b32.xlu0 %v4640, 8
        %v4675 = vpop.permute.xlu0 %4674
        %4676 = vrot.lane.b32.xlu0 %v4641, 8
        %v4677 = vpop.permute.xlu0 %4676
        %v4678 = vsel %vm1949, %v4655, %v4657
        %v4679 = vsel %vm1949, %v4657, %v4659
        %v4680 = vsel %vm1949, %v4661, %v4663
        %v4681 = vsel %vm1949, %v4663, %v4665
        %v4682 = vsel %vm1949, %v4667, %v4669
        %v4683 = vsel %vm1949, %v4669, %v4671
        %v4684 = vsel %vm1949, %v4673, %v4675
        %v4685 = vsel %vm1949, %v4675, %v4677
        %vm4698 = vcmask 1048048
        %4699 = vst.msk [vmem:[#allocation2] sm:$0xff] %vm4698, %v4655
        %4700 = vst [vmem:[#allocation2 + $0x8] sm:$0xff] %v4678
        %vm4701 = vcmask 474112
        %4702 = vst.msk [vmem:[#allocation2 + $0x10] sm:$0xff] %vm4701, %v4679
        %4703 = vst.msk [vmem:[#allocation2 + $0x18] sm:$0xff] %vm4698, %v4661
        %4704 = vst [vmem:[#allocation2 + $0x20] sm:$0xff] %v4680
        %4705 = vst.msk [vmem:[#allocation2 + $0x28] sm:$0xff] %vm4701, %v4681
        %4706 = vst.msk [vmem:[#allocation2 + $0x30] sm:$0xff] %vm4698, %v4667
        %4707 = vst [vmem:[#allocation2 + $0x38] sm:$0xff] %v4682
        %4708 = vst.msk [vmem:[#allocation2 + $0x40] sm:$0xff] %vm4701, %v4683
        %4709 = vst.msk [vmem:[#allocation2 + $0x48] sm:$0xff] %vm4698, %v4673
        %4710 = vst [vmem:[#allocation2 + $0x50] sm:$0xff] %v4684
        %4711 = vst.msk [vmem:[#allocation2 + $0x58] sm:$0xff] %vm4701, %v4685
        %v4712 = vld [vmem:[#allocation2] sm:$0xff]
        %v4713 = vld [vmem:[#allocation2 + $0x8] sm:$0xff]
        %v4714 = vld [vmem:[#allocation2 + $0x10] sm:$0xff]
        %v4715 = vld [vmem:[#allocation2 + $0x18] sm:$0xff]
        %v4716 = vld [vmem:[#allocation2 + $0x20] sm:$0xff]
        %v4717 = vld [vmem:[#allocation2 + $0x28] sm:$0xff]
        %v4718 = vld [vmem:[#allocation2 + $0x30] sm:$0xff]
        %v4719 = vld [vmem:[#allocation2 + $0x38] sm:$0xff]
        %v4720 = vld [vmem:[#allocation2 + $0x40] sm:$0xff]
        %v4721 = vld [vmem:[#allocation2 + $0x48] sm:$0xff]
        %v4722 = vld [vmem:[#allocation2 + $0x50] sm:$0xff]
        %v4723 = vld [vmem:[#allocation2 + $0x58] sm:$0xff]
        %v4724 = vpack.c.bf16 %v4715, %v4712
        %v4725 = vpack.c.bf16 %v4716, %v4713
        %v4726 = vpack.c.bf16 %v4717, %v4714
        %v4727 = vpack.c.bf16 %v4721, %v4718
        %v4728 = vpack.c.bf16 %v4722, %v4719
        %v4729 = vpack.c.bf16 %v4723, %v4720
        %s4730 = scalar_lea.vmem [#allocation4], 288
        %v4731 = vld [vmem:[%s4730] sm:$0xf]
        %v4732 = vld [vmem:[%s4730 + $0x4] sm:$0xf]
        %v4733 = vld [vmem:[%s4730 + $0x8] sm:$0xf]
        %v4734 = vld [vmem:[%s4730 + $0xc] sm:$0xf]
        %s4735 = scalar_lea.vmem [#allocation4], 304
        %v4736 = vld [vmem:[%s4735] sm:$0xf]
        %v4737 = vld [vmem:[%s4735 + $0x4] sm:$0xf]
        %v4738 = vld [vmem:[%s4735 + $0x8] sm:$0xf]
        %v4739 = vld [vmem:[%s4735 + $0xc] sm:$0xf]
        %v4744 = vunpack.c.l.b16 %v4736
        %v4745 = vunpack.c.l.b16 %v4737
        %v4746 = vunpack.c.l.b16 %v4738
        %v4747 = vunpack.c.l.b16 %v4739
        %v4748 = vpack.c.b16 %v4745, %v4744
        %v4749 = vpack.c.b16 %v4747, %v4746
        %4756 = vrot.lane.b32.xlu0 %v4724, 66
        %v4757 = vpop.permute.xlu0 %4756
        %4758 = vrot.lane.b32.xlu0 %v4725, 66
        %v4759 = vpop.permute.xlu0 %4758
        %4760 = vrot.lane.b32.xlu0 %v4726, 66
        %v4761 = vpop.permute.xlu0 %4760
        %4762 = vrot.lane.b32.xlu0 %v4727, 66
        %v4763 = vpop.permute.xlu0 %4762
        %4764 = vrot.lane.b32.xlu0 %v4728, 66
        %v4765 = vpop.permute.xlu0 %4764
        %4766 = vrot.lane.b32.xlu0 %v4729, 66
        %v4767 = vpop.permute.xlu0 %4766
        %v4768 = vsel %vm3111, %v4757, %v4759
        %v4769 = vsel %vm3111, %v4759, %v4761
        %v4770 = vsel %vm3111, %v4763, %v4765
        %v4771 = vsel %vm3111, %v4765, %v4767
        %v4777 = vsel %vm2049, %v4748, 0
        %v4780 = vsel %vm2049, %v4749, 0
        %4782 = vmatprep.subr.bf16.mxu0 %v4769
        %4783 = vmatpush1.bf16.msra.mxu0 %v4768
        %4784 = vmatprep.subr.bf16.mxu0 %v4771
        %4785 = vmatpush1.bf16.msra.mxu0 %v4770
        %4786 = vmatprep.subr.bf16.mxu0 0
        %4787 = vmatpush1.bf16.msra.mxu0 0
        %4788 = vmatprep.subr.bf16.mxu0 0
        %4789 = vmatpush1.bf16.msra.mxu0 0
        %4790 = vmatprep.subr.bf16.mxu0 0
        %4791 = vmatpush1.bf16.msra.mxu0 0
        %4792 = vmatprep.subr.bf16.mxu0 0
        %4793 = vmatpush1.bf16.msra.mxu0 0
        %4794 = vmatprep.subr.bf16.mxu0 0
        %4795 = vmatpush1.bf16.msra.mxu0 0
        %4796 = vmatprep.subr.bf16.mxu0 0
        %4797 = vmatpush1.bf16.msra.mxu0 0
        %4798 = vmatprep.subr.bf16.mxu0 0
        %4799 = vmatpush1.bf16.msra.mxu0 0
        %4800 = vmatprep.subr.bf16.mxu0 0
        %4801 = vmatpush1.bf16.msra.mxu0 0
        %4802 = vmatprep.subr.bf16.mxu0 0
        %4803 = vmatpush1.bf16.msra.mxu0 0
        %4804 = vmatprep.subr.bf16.mxu0 0
        %4805 = vmatpush1.bf16.msra.mxu0 0
        %4806 = vmatprep.subr.bf16.mxu0 0
        %4807 = vmatpush1.bf16.msra.mxu0 0
        %4808 = vmatprep.subr.bf16.mxu0 0
        %4809 = vmatpush1.bf16.msra.mxu0 0
        %4810 = vmatprep.subr.bf16.mxu0 0
        %4811 = vmatpush1.bf16.msra.mxu0 0
        %4812 = vmatprep.subr.bf16.mxu0 0
        %4813 = vmatpush1.bf16.msra.mxu0 0
        %4814 = vmatprep.mubr.bf16.mxu0 0
        %4815 = vmatmul.mubr.bf16.gmra.mrb[0].mxu0 %v4777
        %v4816 = vpop.f32.mrb[0].mxu0
        %v4817 = vadd.f32 0.0, %v4816
        %v4818 = vpop.f32.mrb[0].mxu0
        %v4819 = vadd.f32 0.0, %v4818
        %v4820 = vpop.f32.mrb[0].mxu0
        %v4821 = vadd.f32 0.0, %v4820
        %v4822 = vpop.f32.mrb[0].mxu0
        %v4823 = vadd.f32 0.0, %v4822
        %4824 = vmatprep.mubr.bf16.mxu0 0
        %4825 = vmatmul.mubr.bf16.gmra.mrb[0].mxu0 %v4780
        %v4826 = vpop.f32.mrb[0].mxu0
        %v4827 = vadd.f32 0.0, %v4826
        %v4828 = vpop.f32.mrb[0].mxu0
        %v4829 = vadd.f32 0.0, %v4828
        %v4830 = vpop.f32.mrb[0].mxu0
        %v4831 = vadd.f32 0.0, %v4830
        %v4832 = vpop.f32.mrb[0].mxu0
        %v4833 = vadd.f32 0.0, %v4832
        %4834 = vdwg.mxu0
        %v4839 = vunpack.c.l.b16 %v4731
        %v4840 = vunpack.c.l.b16 %v4732
        %v4841 = vunpack.c.l.b16 %v4733
        %v4842 = vunpack.c.l.b16 %v4734
        %v4843 = vpack.c.b16 %v4840, %v4839
        %v4844 = vpack.c.b16 %v4842, %v4841
        %4845 = vrot.lane.b32.xlu0 %v4724, 67
        %v4846 = vpop.permute.xlu0 %4845
        %4847 = vrot.lane.b32.xlu0 %v4725, 67
        %v4848 = vpop.permute.xlu0 %4847
        %4849 = vrot.lane.b32.xlu0 %v4726, 67
        %v4850 = vpop.permute.xlu0 %4849
        %4851 = vrot.lane.b32.xlu0 %v4727, 67
        %v4852 = vpop.permute.xlu0 %4851
        %4853 = vrot.lane.b32.xlu0 %v4728, 67
        %v4854 = vpop.permute.xlu0 %4853
        %4855 = vrot.lane.b32.xlu0 %v4729, 67
        %v4856 = vpop.permute.xlu0 %4855
        %v4857 = vsel %vm2953, %v4846, %v4848
        %v4858 = vsel %vm2953, %v4848, %v4850
        %v4859 = vsel %vm2953, %v4852, %v4854
        %v4860 = vsel %vm2953, %v4854, %v4856
        %v4866 = vsel %vm2049, %v4843, 0
        %v4869 = vsel %vm2049, %v4844, 0
        %4871 = vmatprep.subr.bf16.mxu0 %v4858
        %4872 = vmatpush1.bf16.msra.mxu0 %v4857
        %4873 = vmatprep.subr.bf16.mxu0 %v4860
        %4874 = vmatpush1.bf16.msra.mxu0 %v4859
        %4875 = vmatprep.subr.bf16.mxu0 0
        %4876 = vmatpush1.bf16.msra.mxu0 0
        %4877 = vmatprep.subr.bf16.mxu0 0
        %4878 = vmatpush1.bf16.msra.mxu0 0
        %4879 = vmatprep.subr.bf16.mxu0 0
        %4880 = vmatpush1.bf16.msra.mxu0 0
        %4881 = vmatprep.subr.bf16.mxu0 0
        %4882 = vmatpush1.bf16.msra.mxu0 0
        %4883 = vmatprep.subr.bf16.mxu0 0
        %4884 = vmatpush1.bf16.msra.mxu0 0
        %4885 = vmatprep.subr.bf16.mxu0 0
        %4886 = vmatpush1.bf16.msra.mxu0 0
        %4887 = vmatprep.subr.bf16.mxu0 0
        %4888 = vmatpush1.bf16.msra.mxu0 0
        %4889 = vmatprep.subr.bf16.mxu0 0
        %4890 = vmatpush1.bf16.msra.mxu0 0
        %4891 = vmatprep.subr.bf16.mxu0 0
        %4892 = vmatpush1.bf16.msra.mxu0 0
        %4893 = vmatprep.subr.bf16.mxu0 0
        %4894 = vmatpush1.bf16.msra.mxu0 0
        %4895 = vmatprep.subr.bf16.mxu0 0
        %4896 = vmatpush1.bf16.msra.mxu0 0
        %4897 = vmatprep.subr.bf16.mxu0 0
        %4898 = vmatpush1.bf16.msra.mxu0 0
        %4899 = vmatprep.subr.bf16.mxu0 0
        %4900 = vmatpush1.bf16.msra.mxu0 0
        %4901 = vmatprep.subr.bf16.mxu0 0
        %4902 = vmatpush1.bf16.msra.mxu0 0
        %4903 = vmatprep.mubr.bf16.mxu0 0
        %4904 = vmatmul.mubr.bf16.gmra.mrb[0].mxu0 %v4866
        %v4905 = vpop.f32.mrb[0].mxu0
        %v4906 = vadd.f32 %v4817, %v4905
        %v4907 = vpop.f32.mrb[0].mxu0
        %v4908 = vadd.f32 %v4819, %v4907
        %v4909 = vpop.f32.mrb[0].mxu0
        %v4910 = vadd.f32 %v4821, %v4909
        %v4911 = vpop.f32.mrb[0].mxu0
        %v4912 = vadd.f32 %v4823, %v4911
        %4913 = vmatprep.mubr.bf16.mxu0 0
        %4914 = vmatmul.mubr.bf16.gmra.mrb[0].mxu0 %v4869
        %v4915 = vpop.f32.mrb[0].mxu0
        %v4916 = vadd.f32 %v4827, %v4915
        %v4917 = vpop.f32.mrb[0].mxu0
        %v4918 = vadd.f32 %v4829, %v4917
        %v4919 = vpop.f32.mrb[0].mxu0
        %v4920 = vadd.f32 %v4831, %v4919
        %v4921 = vpop.f32.mrb[0].mxu0
        %v4922 = vadd.f32 %v4833, %v4921
        %4923 = vdwg.mxu0
        %s4924 = scalar_lea.vmem [#allocation4], 320
        %v4925 = vld [vmem:[%s4924] sm:$0xf]
        %v4926 = vld [vmem:[%s4924 + $0x4] sm:$0xf]
        %v4927 = vld [vmem:[%s4924 + $0x8] sm:$0xf]
        %v4928 = vld [vmem:[%s4924 + $0xc] sm:$0xf]
        %v4933 = vunpack.c.l.b16 %v4925
        %v4934 = vunpack.c.l.b16 %v4926
        %v4935 = vunpack.c.l.b16 %v4927
        %v4936 = vunpack.c.l.b16 %v4928
        %v4937 = vpack.c.b16 %v4934, %v4933
        %v4938 = vpack.c.b16 %v4936, %v4935
        %4939 = vrot.lane.b32.xlu0 %v4724, 65
        %v4940 = vpop.permute.xlu0 %4939
        %4941 = vrot.lane.b32.xlu0 %v4725, 65
        %v4942 = vpop.permute.xlu0 %4941
        %4943 = vrot.lane.b32.xlu0 %v4726, 65
        %v4944 = vpop.permute.xlu0 %4943
        %4945 = vrot.lane.b32.xlu0 %v4727, 65
        %v4946 = vpop.permute.xlu0 %4945
        %4947 = vrot.lane.b32.xlu0 %v4728, 65
        %v4948 = vpop.permute.xlu0 %4947
        %4949 = vrot.lane.b32.xlu0 %v4729, 65
        %v4950 = vpop.permute.xlu0 %4949
        %v4951 = vsel %vm3269, %v4940, %v4942
        %v4952 = vsel %vm3269, %v4942, %v4944
        %v4953 = vsel %vm3269, %v4946, %v4948
        %v4954 = vsel %vm3269, %v4948, %v4950
        %v4960 = vsel %vm2049, %v4937, 0
        %v4963 = vsel %vm2049, %v4938, 0
        %4965 = vmatprep.subr.bf16.mxu0 %v4952
        %4966 = vmatpush1.bf16.msra.mxu0 %v4951
        %4967 = vmatprep.subr.bf16.mxu0 %v4954
        %4968 = vmatpush1.bf16.msra.mxu0 %v4953
        %4969 = vmatprep.subr.bf16.mxu0 0
        %4970 = vmatpush1.bf16.msra.mxu0 0
        %4971 = vmatprep.subr.bf16.mxu0 0
        %4972 = vmatpush1.bf16.msra.mxu0 0
        %4973 = vmatprep.subr.bf16.mxu0 0
        %4974 = vmatpush1.bf16.msra.mxu0 0
        %4975 = vmatprep.subr.bf16.mxu0 0
        %4976 = vmatpush1.bf16.msra.mxu0 0
        %4977 = vmatprep.subr.bf16.mxu0 0
        %4978 = vmatpush1.bf16.msra.mxu0 0
        %4979 = vmatprep.subr.bf16.mxu0 0
        %4980 = vmatpush1.bf16.msra.mxu0 0
        %4981 = vmatprep.subr.bf16.mxu0 0
        %4982 = vmatpush1.bf16.msra.mxu0 0
        %4983 = vmatprep.subr.bf16.mxu0 0
        %4984 = vmatpush1.bf16.msra.mxu0 0
        %4985 = vmatprep.subr.bf16.mxu0 0
        %4986 = vmatpush1.bf16.msra.mxu0 0
        %4987 = vmatprep.subr.bf16.mxu0 0
        %4988 = vmatpush1.bf16.msra.mxu0 0
        %4989 = vmatprep.subr.bf16.mxu0 0
        %4990 = vmatpush1.bf16.msra.mxu0 0
        %4991 = vmatprep.subr.bf16.mxu0 0
        %4992 = vmatpush1.bf16.msra.mxu0 0
        %4993 = vmatprep.subr.bf16.mxu0 0
        %4994 = vmatpush1.bf16.msra.mxu0 0
        %4995 = vmatprep.subr.bf16.mxu0 0
        %4996 = vmatpush1.bf16.msra.mxu0 0
        %4997 = vmatprep.mubr.bf16.mxu0 0
        %4998 = vmatmul.mubr.bf16.gmra.mrb[0].mxu0 %v4960
        %v4999 = vpop.f32.mrb[0].mxu0
        %v5000 = vadd.f32 0.0, %v4999
        %v5001 = vpop.f32.mrb[0].mxu0
        %v5002 = vadd.f32 0.0, %v5001
        %v5003 = vpop.f32.mrb[0].mxu0
        %v5004 = vadd.f32 0.0, %v5003
        %v5005 = vpop.f32.mrb[0].mxu0
        %v5006 = vadd.f32 0.0, %v5005
        %5007 = vmatprep.mubr.bf16.mxu0 0
        %5008 = vmatmul.mubr.bf16.gmra.mrb[0].mxu0 %v4963
        %v5009 = vpop.f32.mrb[0].mxu0
        %v5010 = vadd.f32 0.0, %v5009
        %v5011 = vpop.f32.mrb[0].mxu0
        %v5012 = vadd.f32 0.0, %v5011
        %v5013 = vpop.f32.mrb[0].mxu0
        %v5014 = vadd.f32 0.0, %v5013
        %v5015 = vpop.f32.mrb[0].mxu0
        %v5016 = vadd.f32 0.0, %v5015
        %5017 = vdwg.mxu0
        %v5018 = vadd.f32 %v4906, %v5000
        %v5019 = vadd.f32 %v4908, %v5002
        %v5020 = vadd.f32 %v4910, %v5004
        %v5021 = vadd.f32 %v4912, %v5006
        %v5022 = vadd.f32 %v4916, %v5010
        %v5023 = vadd.f32 %v4918, %v5012
        %v5024 = vadd.f32 %v4920, %v5014
        %v5025 = vadd.f32 %v4922, %v5016
        %s5026 = scalar_lea.vmem [#allocation4], 336
        %v5027 = vld [vmem:[%s5026] sm:$0xf]
        %v5028 = vld [vmem:[%s5026 + $0x4] sm:$0xf]
        %v5029 = vld [vmem:[%s5026 + $0x8] sm:$0xf]
        %v5030 = vld [vmem:[%s5026 + $0xc] sm:$0xf]
        %v5035 = vunpack.c.l.b16 %v5027
        %v5036 = vunpack.c.l.b16 %v5028
        %v5037 = vunpack.c.l.b16 %v5029
        %v5038 = vunpack.c.l.b16 %v5030
        %v5039 = vpack.c.b16 %v5036, %v5035
        %v5040 = vpack.c.b16 %v5038, %v5037
        %5041 = vrot.lane.b32.xlu0 %v4724, 49
        %v5042 = vpop.permute.xlu0 %5041
        %5043 = vrot.lane.b32.xlu0 %v4725, 49
        %v5044 = vpop.permute.xlu0 %5043
        %5045 = vrot.lane.b32.xlu0 %v4726, 49
        %v5046 = vpop.permute.xlu0 %5045
        %5047 = vrot.lane.b32.xlu0 %v4727, 49
        %v5048 = vpop.permute.xlu0 %5047
        %5049 = vrot.lane.b32.xlu0 %v4728, 49
        %v5050 = vpop.permute.xlu0 %5049
        %5051 = vrot.lane.b32.xlu0 %v4729, 49
        %v5052 = vpop.permute.xlu0 %5051
        %v5053 = vsel %vm4216, %v5042, %v5044
        %v5054 = vsel %vm4216, %v5044, %v5046
        %v5055 = vsel %vm4216, %v5048, %v5050
        %v5056 = vsel %vm4216, %v5050, %v5052
        %v5062 = vsel %vm2049, %v5039, 0
        %v5065 = vsel %vm2049, %v5040, 0
        %5067 = vmatprep.subr.bf16.mxu0 %v5054
        %5068 = vmatpush1.bf16.msra.mxu0 %v5053
        %5069 = vmatprep.subr.bf16.mxu0 %v5056
        %5070 = vmatpush1.bf16.msra.mxu0 %v5055
        %5071 = vmatprep.subr.bf16.mxu0 0
        %5072 = vmatpush1.bf16.msra.mxu0 0
        %5073 = vmatprep.subr.bf16.mxu0 0
        %5074 = vmatpush1.bf16.msra.mxu0 0
        %5075 = vmatprep.subr.bf16.mxu0 0
        %5076 = vmatpush1.bf16.msra.mxu0 0
        %5077 = vmatprep.subr.bf16.mxu0 0
        %5078 = vmatpush1.bf16.msra.mxu0 0
        %5079 = vmatprep.subr.bf16.mxu0 0
        %5080 = vmatpush1.bf16.msra.mxu0 0
        %5081 = vmatprep.subr.bf16.mxu0 0
        %5082 = vmatpush1.bf16.msra.mxu0 0
        %5083 = vmatprep.subr.bf16.mxu0 0
        %5084 = vmatpush1.bf16.msra.mxu0 0
        %5085 = vmatprep.subr.bf16.mxu0 0
        %5086 = vmatpush1.bf16.msra.mxu0 0
        %5087 = vmatprep.subr.bf16.mxu0 0
        %5088 = vmatpush1.bf16.msra.mxu0 0
        %5089 = vmatprep.subr.bf16.mxu0 0
        %5090 = vmatpush1.bf16.msra.mxu0 0
        %5091 = vmatprep.subr.bf16.mxu0 0
        %5092 = vmatpush1.bf16.msra.mxu0 0
        %5093 = vmatprep.subr.bf16.mxu0 0
        %5094 = vmatpush1.bf16.msra.mxu0 0
        %5095 = vmatprep.subr.bf16.mxu0 0
        %5096 = vmatpush1.bf16.msra.mxu0 0
        %5097 = vmatprep.subr.bf16.mxu0 0
        %5098 = vmatpush1.bf16.msra.mxu0 0
        %5099 = vmatprep.mubr.bf16.mxu0 0
        %5100 = vmatmul.mubr.bf16.gmra.mrb[0].mxu0 %v5062
        %v5101 = vpop.f32.mrb[0].mxu0
        %v5102 = vadd.f32 0.0, %v5101
        %v5103 = vpop.f32.mrb[0].mxu0
        %v5104 = vadd.f32 0.0, %v5103
        %v5105 = vpop.f32.mrb[0].mxu0
        %v5106 = vadd.f32 0.0, %v5105
        %v5107 = vpop.f32.mrb[0].mxu0
        %v5108 = vadd.f32 0.0, %v5107
        %5109 = vmatprep.mubr.bf16.mxu0 0
        %5110 = vmatmul.mubr.bf16.gmra.mrb[0].mxu0 %v5065
        %v5111 = vpop.f32.mrb[0].mxu0
        %v5112 = vadd.f32 0.0, %v5111
        %v5113 = vpop.f32.mrb[0].mxu0
        %v5114 = vadd.f32 0.0, %v5113
        %v5115 = vpop.f32.mrb[0].mxu0
        %v5116 = vadd.f32 0.0, %v5115
        %v5117 = vpop.f32.mrb[0].mxu0
        %v5118 = vadd.f32 0.0, %v5117
        %5119 = vdwg.mxu0
        %v5120 = vadd.f32 %v5018, %v5102
        %v5121 = vadd.f32 %v5019, %v5104
        %v5122 = vadd.f32 %v5020, %v5106
        %v5123 = vadd.f32 %v5021, %v5108
        %v5124 = vadd.f32 %v5022, %v5112
        %v5125 = vadd.f32 %v5023, %v5114
        %v5126 = vadd.f32 %v5024, %v5116
        %v5127 = vadd.f32 %v5025, %v5118
        %s5128 = scalar_lea.vmem [#allocation4], 352
        %v5129 = vld [vmem:[%s5128] sm:$0xf]
        %v5130 = vld [vmem:[%s5128 + $0x4] sm:$0xf]
        %v5131 = vld [vmem:[%s5128 + $0x8] sm:$0xf]
        %v5132 = vld [vmem:[%s5128 + $0xc] sm:$0xf]
        %v5137 = vunpack.c.l.b16 %v5129
        %v5138 = vunpack.c.l.b16 %v5130
        %v5139 = vunpack.c.l.b16 %v5131
        %v5140 = vunpack.c.l.b16 %v5132
        %v5141 = vpack.c.b16 %v5138, %v5137
        %v5142 = vpack.c.b16 %v5140, %v5139
        %5143 = vrot.lane.b32.xlu0 %v4724, 48
        %v5144 = vpop.permute.xlu0 %5143
        %5145 = vrot.lane.b32.xlu0 %v4725, 48
        %v5146 = vpop.permute.xlu0 %5145
        %5147 = vrot.lane.b32.xlu0 %v4726, 48
        %v5148 = vpop.permute.xlu0 %5147
        %5149 = vrot.lane.b32.xlu0 %v4727, 48
        %v5150 = vpop.permute.xlu0 %5149
        %5151 = vrot.lane.b32.xlu0 %v4728, 48
        %v5152 = vpop.permute.xlu0 %5151
        %5153 = vrot.lane.b32.xlu0 %v4729, 48
        %v5154 = vpop.permute.xlu0 %5153
        %v5155 = vsel %vm4319, %v5144, %v5146
        %v5156 = vsel %vm4319, %v5146, %v5148
        %v5157 = vsel %vm4319, %v5150, %v5152
        %v5158 = vsel %vm4319, %v5152, %v5154
        %v5164 = vsel %vm2049, %v5141, 0
        %v5167 = vsel %vm2049, %v5142, 0
        %5169 = vmatprep.subr.bf16.mxu0 %v5156
        %5170 = vmatpush1.bf16.msra.mxu0 %v5155
        %5171 = vmatprep.subr.bf16.mxu0 %v5158
        %5172 = vmatpush1.bf16.msra.mxu0 %v5157
        %5173 = vmatprep.subr.bf16.mxu0 0
        %5174 = vmatpush1.bf16.msra.mxu0 0
        %5175 = vmatprep.subr.bf16.mxu0 0
        %5176 = vmatpush1.bf16.msra.mxu0 0
        %5177 = vmatprep.subr.bf16.mxu0 0
        %5178 = vmatpush1.bf16.msra.mxu0 0
        %5179 = vmatprep.subr.bf16.mxu0 0
        %5180 = vmatpush1.bf16.msra.mxu0 0
        %5181 = vmatprep.subr.bf16.mxu0 0
        %5182 = vmatpush1.bf16.msra.mxu0 0
        %5183 = vmatprep.subr.bf16.mxu0 0
        %5184 = vmatpush1.bf16.msra.mxu0 0
        %5185 = vmatprep.subr.bf16.mxu0 0
        %5186 = vmatpush1.bf16.msra.mxu0 0
        %5187 = vmatprep.subr.bf16.mxu0 0
        %5188 = vmatpush1.bf16.msra.mxu0 0
        %5189 = vmatprep.subr.bf16.mxu0 0
        %5190 = vmatpush1.bf16.msra.mxu0 0
        %5191 = vmatprep.subr.bf16.mxu0 0
        %5192 = vmatpush1.bf16.msra.mxu0 0
        %5193 = vmatprep.subr.bf16.mxu0 0
        %5194 = vmatpush1.bf16.msra.mxu0 0
        %5195 = vmatprep.subr.bf16.mxu0 0
        %5196 = vmatpush1.bf16.msra.mxu0 0
        %5197 = vmatprep.subr.bf16.mxu0 0
        %5198 = vmatpush1.bf16.msra.mxu0 0
        %5199 = vmatprep.subr.bf16.mxu0 0
        %5200 = vmatpush1.bf16.msra.mxu0 0
        %5201 = vmatprep.mubr.bf16.mxu0 0
        %5202 = vmatmul.mubr.bf16.gmra.mrb[0].mxu0 %v5164
        %v5203 = vpop.f32.mrb[0].mxu0
        %v5204 = vadd.f32 0.0, %v5203
        %v5205 = vpop.f32.mrb[0].mxu0
        %v5206 = vadd.f32 0.0, %v5205
        %v5207 = vpop.f32.mrb[0].mxu0
        %v5208 = vadd.f32 0.0, %v5207
        %v5209 = vpop.f32.mrb[0].mxu0
        %v5210 = vadd.f32 0.0, %v5209
        %5211 = vmatprep.mubr.bf16.mxu0 0
        %5212 = vmatmul.mubr.bf16.gmra.mrb[0].mxu0 %v5167
        %v5213 = vpop.f32.mrb[0].mxu0
        %v5214 = vadd.f32 0.0, %v5213
        %v5215 = vpop.f32.mrb[0].mxu0
        %v5216 = vadd.f32 0.0, %v5215
        %v5217 = vpop.f32.mrb[0].mxu0
        %v5218 = vadd.f32 0.0, %v5217
        %v5219 = vpop.f32.mrb[0].mxu0
        %v5220 = vadd.f32 0.0, %v5219
        %5221 = vdwg.mxu0
        %v5222 = vadd.f32 %v5120, %v5204
        %v5223 = vadd.f32 %v5121, %v5206
        %v5224 = vadd.f32 %v5122, %v5208
        %v5225 = vadd.f32 %v5123, %v5210
        %v5226 = vadd.f32 %v5124, %v5214
        %v5227 = vadd.f32 %v5125, %v5216
        %v5228 = vadd.f32 %v5126, %v5218
        %v5229 = vadd.f32 %v5127, %v5220
        %s5230 = scalar_lea.vmem [#allocation4], 368
        %v5231 = vld [vmem:[%s5230] sm:$0xf]
        %v5232 = vld [vmem:[%s5230 + $0x4] sm:$0xf]
        %v5233 = vld [vmem:[%s5230 + $0x8] sm:$0xf]
        %v5234 = vld [vmem:[%s5230 + $0xc] sm:$0xf]
        %v5239 = vunpack.c.l.b16 %v5231
        %v5240 = vunpack.c.l.b16 %v5232
        %v5241 = vunpack.c.l.b16 %v5233
        %v5242 = vunpack.c.l.b16 %v5234
        %v5243 = vpack.c.b16 %v5240, %v5239
        %v5244 = vpack.c.b16 %v5242, %v5241
        %5245 = vrot.lane.b32.xlu0 %v4724, 47
        %v5246 = vpop.permute.xlu0 %5245
        %5247 = vrot.lane.b32.xlu0 %v4725, 47
        %v5248 = vpop.permute.xlu0 %5247
        %5249 = vrot.lane.b32.xlu0 %v4726, 47
        %v5250 = vpop.permute.xlu0 %5249
        %5251 = vrot.lane.b32.xlu0 %v4727, 47
        %v5252 = vpop.permute.xlu0 %5251
        %5253 = vrot.lane.b32.xlu0 %v4728, 47
        %v5254 = vpop.permute.xlu0 %5253
        %5255 = vrot.lane.b32.xlu0 %v4729, 47
        %v5256 = vpop.permute.xlu0 %5255
        %v5257 = vsel %vm4422, %v5246, %v5248
        %v5258 = vsel %vm4422, %v5248, %v5250
        %v5259 = vsel %vm4422, %v5252, %v5254
        %v5260 = vsel %vm4422, %v5254, %v5256
        %v5266 = vsel %vm2049, %v5243, 0
        %v5269 = vsel %vm2049, %v5244, 0
        %5271 = vmatprep.subr.bf16.mxu0 %v5258
        %5272 = vmatpush1.bf16.msra.mxu0 %v5257
        %5273 = vmatprep.subr.bf16.mxu0 %v5260
        %5274 = vmatpush1.bf16.msra.mxu0 %v5259
        %5275 = vmatprep.subr.bf16.mxu0 0
        %5276 = vmatpush1.bf16.msra.mxu0 0
        %5277 = vmatprep.subr.bf16.mxu0 0
        %5278 = vmatpush1.bf16.msra.mxu0 0
        %5279 = vmatprep.subr.bf16.mxu0 0
        %5280 = vmatpush1.bf16.msra.mxu0 0
        %5281 = vmatprep.subr.bf16.mxu0 0
        %5282 = vmatpush1.bf16.msra.mxu0 0
        %5283 = vmatprep.subr.bf16.mxu0 0
        %5284 = vmatpush1.bf16.msra.mxu0 0
        %5285 = vmatprep.subr.bf16.mxu0 0
        %5286 = vmatpush1.bf16.msra.mxu0 0
        %5287 = vmatprep.subr.bf16.mxu0 0
        %5288 = vmatpush1.bf16.msra.mxu0 0
        %5289 = vmatprep.subr.bf16.mxu0 0
        %5290 = vmatpush1.bf16.msra.mxu0 0
        %5291 = vmatprep.subr.bf16.mxu0 0
        %5292 = vmatpush1.bf16.msra.mxu0 0
        %5293 = vmatprep.subr.bf16.mxu0 0
        %5294 = vmatpush1.bf16.msra.mxu0 0
        %5295 = vmatprep.subr.bf16.mxu0 0
        %5296 = vmatpush1.bf16.msra.mxu0 0
        %5297 = vmatprep.subr.bf16.mxu0 0
        %5298 = vmatpush1.bf16.msra.mxu0 0
        %5299 = vmatprep.subr.bf16.mxu0 0
        %5300 = vmatpush1.bf16.msra.mxu0 0
        %5301 = vmatprep.subr.bf16.mxu0 0
        %5302 = vmatpush1.bf16.msra.mxu0 0
        %5303 = vmatprep.mubr.bf16.mxu0 0
        %5304 = vmatmul.mubr.bf16.gmra.mrb[0].mxu0 %v5266
        %v5305 = vpop.f32.mrb[0].mxu0
        %v5306 = vadd.f32 0.0, %v5305
        %v5307 = vpop.f32.mrb[0].mxu0
        %v5308 = vadd.f32 0.0, %v5307
        %v5309 = vpop.f32.mrb[0].mxu0
        %v5310 = vadd.f32 0.0, %v5309
        %v5311 = vpop.f32.mrb[0].mxu0
        %v5312 = vadd.f32 0.0, %v5311
        %5313 = vmatprep.mubr.bf16.mxu0 0
        %5314 = vmatmul.mubr.bf16.gmra.mrb[0].mxu0 %v5269
        %v5315 = vpop.f32.mrb[0].mxu0
        %v5316 = vadd.f32 0.0, %v5315
        %v5317 = vpop.f32.mrb[0].mxu0
        %v5318 = vadd.f32 0.0, %v5317
        %v5319 = vpop.f32.mrb[0].mxu0
        %v5320 = vadd.f32 0.0, %v5319
        %v5321 = vpop.f32.mrb[0].mxu0
        %v5322 = vadd.f32 0.0, %v5321
        %5323 = vdwg.mxu0
        %v5324 = vadd.f32 %v5222, %v5306
        %v5325 = vadd.f32 %v5223, %v5308
        %v5326 = vadd.f32 %v5224, %v5310
        %v5327 = vadd.f32 %v5225, %v5312
        %v5328 = vadd.f32 %v5226, %v5316
        %v5329 = vadd.f32 %v5227, %v5318
        %v5330 = vadd.f32 %v5228, %v5320
        %v5331 = vadd.f32 %v5229, %v5322
        %s5332 = scalar_lea.vmem [#allocation4], 384
        %v5333 = vld [vmem:[%s5332] sm:$0xf]
        %v5334 = vld [vmem:[%s5332 + $0x4] sm:$0xf]
        %v5335 = vld [vmem:[%s5332 + $0x8] sm:$0xf]
        %v5336 = vld [vmem:[%s5332 + $0xc] sm:$0xf]
        %v5341 = vunpack.c.l.b16 %v5333
        %v5342 = vunpack.c.l.b16 %v5334
        %v5343 = vunpack.c.l.b16 %v5335
        %v5344 = vunpack.c.l.b16 %v5336
        %v5345 = vpack.c.b16 %v5342, %v5341
        %v5346 = vpack.c.b16 %v5344, %v5343
        %5347 = vrot.lane.b32.xlu0 %v4724, 31
        %v5348 = vpop.permute.xlu0 %5347
        %5349 = vrot.lane.b32.xlu0 %v4725, 31
        %v5350 = vpop.permute.xlu0 %5349
        %5351 = vrot.lane.b32.xlu0 %v4726, 31
        %v5352 = vpop.permute.xlu0 %5351
        %5353 = vrot.lane.b32.xlu0 %v4727, 31
        %v5354 = vpop.permute.xlu0 %5353
        %5355 = vrot.lane.b32.xlu0 %v4728, 31
        %v5356 = vpop.permute.xlu0 %5355
        %5357 = vrot.lane.b32.xlu0 %v4729, 31
        %v5358 = vpop.permute.xlu0 %5357
        %vm5359 = vcmask 252928
        %v5360 = vsel %vm5359, %v5348, %v5350
        %v5361 = vsel %vm5359, %v5350, %v5352
        %v5362 = vsel %vm5359, %v5354, %v5356
        %v5363 = vsel %vm5359, %v5356, %v5358
        %v5369 = vsel %vm2049, %v5345, 0
        %v5372 = vsel %vm2049, %v5346, 0
        %5374 = vmatprep.subr.bf16.mxu0 %v5361
        %5375 = vmatpush1.bf16.msra.mxu0 %v5360
        %5376 = vmatprep.subr.bf16.mxu0 %v5363
        %5377 = vmatpush1.bf16.msra.mxu0 %v5362
        %5378 = vmatprep.subr.bf16.mxu0 0
        %5379 = vmatpush1.bf16.msra.mxu0 0
        %5380 = vmatprep.subr.bf16.mxu0 0
        %5381 = vmatpush1.bf16.msra.mxu0 0
        %5382 = vmatprep.subr.bf16.mxu0 0
        %5383 = vmatpush1.bf16.msra.mxu0 0
        %5384 = vmatprep.subr.bf16.mxu0 0
        %5385 = vmatpush1.bf16.msra.mxu0 0
        %5386 = vmatprep.subr.bf16.mxu0 0
        %5387 = vmatpush1.bf16.msra.mxu0 0
        %5388 = vmatprep.subr.bf16.mxu0 0
        %5389 = vmatpush1.bf16.msra.mxu0 0
        %5390 = vmatprep.subr.bf16.mxu0 0
        %5391 = vmatpush1.bf16.msra.mxu0 0
        %5392 = vmatprep.subr.bf16.mxu0 0
        %5393 = vmatpush1.bf16.msra.mxu0 0
        %5394 = vmatprep.subr.bf16.mxu0 0
        %5395 = vmatpush1.bf16.msra.mxu0 0
        %5396 = vmatprep.subr.bf16.mxu0 0
        %5397 = vmatpush1.bf16.msra.mxu0 0
        %5398 = vmatprep.subr.bf16.mxu0 0
        %5399 = vmatpush1.bf16.msra.mxu0 0
        %5400 = vmatprep.subr.bf16.mxu0 0
        %5401 = vmatpush1.bf16.msra.mxu0 0
        %5402 = vmatprep.subr.bf16.mxu0 0
        %5403 = vmatpush1.bf16.msra.mxu0 0
        %5404 = vmatprep.subr.bf16.mxu0 0
        %5405 = vmatpush1.bf16.msra.mxu0 0
        %5406 = vmatprep.mubr.bf16.mxu0 0
        %5407 = vmatmul.mubr.bf16.gmra.mrb[0].mxu0 %v5369
        %v5408 = vpop.f32.mrb[0].mxu0
        %v5409 = vadd.f32 0.0, %v5408
        %v5410 = vpop.f32.mrb[0].mxu0
        %v5411 = vadd.f32 0.0, %v5410
        %v5412 = vpop.f32.mrb[0].mxu0
        %v5413 = vadd.f32 0.0, %v5412
        %v5414 = vpop.f32.mrb[0].mxu0
        %v5415 = vadd.f32 0.0, %v5414
        %5416 = vmatprep.mubr.bf16.mxu0 0
        %5417 = vmatmul.mubr.bf16.gmra.mrb[0].mxu0 %v5372
        %v5418 = vpop.f32.mrb[0].mxu0
        %v5419 = vadd.f32 0.0, %v5418
        %v5420 = vpop.f32.mrb[0].mxu0
        %v5421 = vadd.f32 0.0, %v5420
        %v5422 = vpop.f32.mrb[0].mxu0
        %v5423 = vadd.f32 0.0, %v5422
        %v5424 = vpop.f32.mrb[0].mxu0
        %v5425 = vadd.f32 0.0, %v5424
        %5426 = vdwg.mxu0
        %v5427 = vadd.f32 %v5324, %v5409
        %v5428 = vadd.f32 %v5325, %v5411
        %v5429 = vadd.f32 %v5326, %v5413
        %v5430 = vadd.f32 %v5327, %v5415
        %v5431 = vadd.f32 %v5328, %v5419
        %v5432 = vadd.f32 %v5329, %v5421
        %v5433 = vadd.f32 %v5330, %v5423
        %v5434 = vadd.f32 %v5331, %v5425
        %s5435 = scalar_lea.vmem [#allocation4], 400
        %v5436 = vld [vmem:[%s5435] sm:$0xf]
        %v5437 = vld [vmem:[%s5435 + $0x4] sm:$0xf]
        %v5438 = vld [vmem:[%s5435 + $0x8] sm:$0xf]
        %v5439 = vld [vmem:[%s5435 + $0xc] sm:$0xf]
        %v5444 = vunpack.c.l.b16 %v5436
        %v5445 = vunpack.c.l.b16 %v5437
        %v5446 = vunpack.c.l.b16 %v5438
        %v5447 = vunpack.c.l.b16 %v5439
        %v5448 = vpack.c.b16 %v5445, %v5444
        %v5449 = vpack.c.b16 %v5447, %v5446
        %5450 = vrot.lane.b32.xlu0 %v4724, 30
        %v5451 = vpop.permute.xlu0 %5450
        %5452 = vrot.lane.b32.xlu0 %v4725, 30
        %v5453 = vpop.permute.xlu0 %5452
        %5454 = vrot.lane.b32.xlu0 %v4726, 30
        %v5455 = vpop.permute.xlu0 %5454
        %5456 = vrot.lane.b32.xlu0 %v4727, 30
        %v5457 = vpop.permute.xlu0 %5456
        %5458 = vrot.lane.b32.xlu0 %v4728, 30
        %v5459 = vpop.permute.xlu0 %5458
        %5460 = vrot.lane.b32.xlu0 %v4729, 30
        %v5461 = vpop.permute.xlu0 %5460
        %vm5462 = vcmask 244736
        %v5463 = vsel %vm5462, %v5451, %v5453
        %v5464 = vsel %vm5462, %v5453, %v5455
        %v5465 = vsel %vm5462, %v5457, %v5459
        %v5466 = vsel %vm5462, %v5459, %v5461
        %v5472 = vsel %vm2049, %v5448, 0
        %v5475 = vsel %vm2049, %v5449, 0
        %5477 = vmatprep.subr.bf16.mxu0 %v5464
        %5478 = vmatpush1.bf16.msra.mxu0 %v5463
        %5479 = vmatprep.subr.bf16.mxu0 %v5466
        %5480 = vmatpush1.bf16.msra.mxu0 %v5465
        %5481 = vmatprep.subr.bf16.mxu0 0
        %5482 = vmatpush1.bf16.msra.mxu0 0
        %5483 = vmatprep.subr.bf16.mxu0 0
        %5484 = vmatpush1.bf16.msra.mxu0 0
        %5485 = vmatprep.subr.bf16.mxu0 0
        %5486 = vmatpush1.bf16.msra.mxu0 0
        %5487 = vmatprep.subr.bf16.mxu0 0
        %5488 = vmatpush1.bf16.msra.mxu0 0
        %5489 = vmatprep.subr.bf16.mxu0 0
        %5490 = vmatpush1.bf16.msra.mxu0 0
        %5491 = vmatprep.subr.bf16.mxu0 0
        %5492 = vmatpush1.bf16.msra.mxu0 0
        %5493 = vmatprep.subr.bf16.mxu0 0
        %5494 = vmatpush1.bf16.msra.mxu0 0
        %5495 = vmatprep.subr.bf16.mxu0 0
        %5496 = vmatpush1.bf16.msra.mxu0 0
        %5497 = vmatprep.subr.bf16.mxu0 0
        %5498 = vmatpush1.bf16.msra.mxu0 0
        %5499 = vmatprep.subr.bf16.mxu0 0
        %5500 = vmatpush1.bf16.msra.mxu0 0
        %5501 = vmatprep.subr.bf16.mxu0 0
        %5502 = vmatpush1.bf16.msra.mxu0 0
        %5503 = vmatprep.subr.bf16.mxu0 0
        %5504 = vmatpush1.bf16.msra.mxu0 0
        %5505 = vmatprep.subr.bf16.mxu0 0
        %5506 = vmatpush1.bf16.msra.mxu0 0
        %5507 = vmatprep.subr.bf16.mxu0 0
        %5508 = vmatpush1.bf16.msra.mxu0 0
        %5509 = vmatprep.mubr.bf16.mxu0 0
        %5510 = vmatmul.mubr.bf16.gmra.mrb[0].mxu0 %v5472
        %v5511 = vpop.f32.mrb[0].mxu0
        %v5512 = vadd.f32 0.0, %v5511
        %v5513 = vpop.f32.mrb[0].mxu0
        %v5514 = vadd.f32 0.0, %v5513
        %v5515 = vpop.f32.mrb[0].mxu0
        %v5516 = vadd.f32 0.0, %v5515
        %v5517 = vpop.f32.mrb[0].mxu0
        %v5518 = vadd.f32 0.0, %v5517
        %5519 = vmatprep.mubr.bf16.mxu0 0
        %5520 = vmatmul.mubr.bf16.gmra.mrb[0].mxu0 %v5475
        %v5521 = vpop.f32.mrb[0].mxu0
        %v5522 = vadd.f32 0.0, %v5521
        %v5523 = vpop.f32.mrb[0].mxu0
        %v5524 = vadd.f32 0.0, %v5523
        %v5525 = vpop.f32.mrb[0].mxu0
        %v5526 = vadd.f32 0.0, %v5525
        %v5527 = vpop.f32.mrb[0].mxu0
        %v5528 = vadd.f32 0.0, %v5527
        %5529 = vdwg.mxu0
        %v5530 = vadd.f32 %v5427, %v5512
        %v5531 = vadd.f32 %v5428, %v5514
        %v5532 = vadd.f32 %v5429, %v5516
        %v5533 = vadd.f32 %v5430, %v5518
        %v5534 = vadd.f32 %v5431, %v5522
        %v5535 = vadd.f32 %v5432, %v5524
        %v5536 = vadd.f32 %v5433, %v5526
        %v5537 = vadd.f32 %v5434, %v5528
        %s5538 = scalar_lea.vmem [#allocation4], 416
        %v5539 = vld [vmem:[%s5538] sm:$0xf]
        %v5540 = vld [vmem:[%s5538 + $0x4] sm:$0xf]
        %v5541 = vld [vmem:[%s5538 + $0x8] sm:$0xf]
        %v5542 = vld [vmem:[%s5538 + $0xc] sm:$0xf]
        %v5547 = vunpack.c.l.b16 %v5539
        %v5548 = vunpack.c.l.b16 %v5540
        %v5549 = vunpack.c.l.b16 %v5541
        %v5550 = vunpack.c.l.b16 %v5542
        %v5551 = vpack.c.b16 %v5548, %v5547
        %v5552 = vpack.c.b16 %v5550, %v5549
        %5553 = vrot.lane.b32.xlu0 %v4724, 29
        %v5554 = vpop.permute.xlu0 %5553
        %5555 = vrot.lane.b32.xlu0 %v4725, 29
        %v5556 = vpop.permute.xlu0 %5555
        %5557 = vrot.lane.b32.xlu0 %v4726, 29
        %v5558 = vpop.permute.xlu0 %5557
        %5559 = vrot.lane.b32.xlu0 %v4727, 29
        %v5560 = vpop.permute.xlu0 %5559
        %5561 = vrot.lane.b32.xlu0 %v4728, 29
        %v5562 = vpop.permute.xlu0 %5561
        %5563 = vrot.lane.b32.xlu0 %v4729, 29
        %v5564 = vpop.permute.xlu0 %5563
        %vm5565 = vcmask 236544
        %v5566 = vsel %vm5565, %v5554, %v5556
        %v5567 = vsel %vm5565, %v5556, %v5558
        %v5568 = vsel %vm5565, %v5560, %v5562
        %v5569 = vsel %vm5565, %v5562, %v5564
        %v5575 = vsel %vm2049, %v5551, 0
        %v5578 = vsel %vm2049, %v5552, 0
        %5580 = vmatprep.subr.bf16.mxu0 %v5567
        %5581 = vmatpush1.bf16.msra.mxu0 %v5566
        %5582 = vmatprep.subr.bf16.mxu0 %v5569
        %5583 = vmatpush1.bf16.msra.mxu0 %v5568
        %5584 = vmatprep.subr.bf16.mxu0 0
        %5585 = vmatpush1.bf16.msra.mxu0 0
        %5586 = vmatprep.subr.bf16.mxu0 0
        %5587 = vmatpush1.bf16.msra.mxu0 0
        %5588 = vmatprep.subr.bf16.mxu0 0
        %5589 = vmatpush1.bf16.msra.mxu0 0
        %5590 = vmatprep.subr.bf16.mxu0 0
        %5591 = vmatpush1.bf16.msra.mxu0 0
        %5592 = vmatprep.subr.bf16.mxu0 0
        %5593 = vmatpush1.bf16.msra.mxu0 0
        %5594 = vmatprep.subr.bf16.mxu0 0
        %5595 = vmatpush1.bf16.msra.mxu0 0
        %5596 = vmatprep.subr.bf16.mxu0 0
        %5597 = vmatpush1.bf16.msra.mxu0 0
        %5598 = vmatprep.subr.bf16.mxu0 0
        %5599 = vmatpush1.bf16.msra.mxu0 0
        %5600 = vmatprep.subr.bf16.mxu0 0
        %5601 = vmatpush1.bf16.msra.mxu0 0
        %5602 = vmatprep.subr.bf16.mxu0 0
        %5603 = vmatpush1.bf16.msra.mxu0 0
        %5604 = vmatprep.subr.bf16.mxu0 0
        %5605 = vmatpush1.bf16.msra.mxu0 0
        %5606 = vmatprep.subr.bf16.mxu0 0
        %5607 = vmatpush1.bf16.msra.mxu0 0
        %5608 = vmatprep.subr.bf16.mxu0 0
        %5609 = vmatpush1.bf16.msra.mxu0 0
        %5610 = vmatprep.subr.bf16.mxu0 0
        %5611 = vmatpush1.bf16.msra.mxu0 0
        %5612 = vmatprep.mubr.bf16.mxu0 0
        %5613 = vmatmul.mubr.bf16.gmra.mrb[0].mxu0 %v5575
        %v5614 = vpop.f32.mrb[0].mxu0
        %v5615 = vadd.f32 0.0, %v5614
        %v5616 = vpop.f32.mrb[0].mxu0
        %v5617 = vadd.f32 0.0, %v5616
        %v5618 = vpop.f32.mrb[0].mxu0
        %v5619 = vadd.f32 0.0, %v5618
        %v5620 = vpop.f32.mrb[0].mxu0
        %v5621 = vadd.f32 0.0, %v5620
        %5622 = vmatprep.mubr.bf16.mxu0 0
        %5623 = vmatmul.mubr.bf16.gmra.mrb[0].mxu0 %v5578
        %v5624 = vpop.f32.mrb[0].mxu0
        %v5625 = vadd.f32 0.0, %v5624
        %v5626 = vpop.f32.mrb[0].mxu0
        %v5627 = vadd.f32 0.0, %v5626
        %v5628 = vpop.f32.mrb[0].mxu0
        %v5629 = vadd.f32 0.0, %v5628
        %v5630 = vpop.f32.mrb[0].mxu0
        %v5631 = vadd.f32 0.0, %v5630
        %5632 = vdwg.mxu0
        %v5633 = vadd.f32 %v5530, %v5615
        %v5634 = vadd.f32 %v5531, %v5617
        %v5635 = vadd.f32 %v5532, %v5619
        %v5636 = vadd.f32 %v5533, %v5621
        %v5637 = vadd.f32 %v5534, %v5625
        %v5638 = vadd.f32 %v5535, %v5627
        %v5639 = vadd.f32 %v5536, %v5629
        %v5640 = vadd.f32 %v5537, %v5631
        %v5641 = vmax.f32 %v5633, 0.0
        %v5642 = vmax.f32 %v5634, 0.0
        %v5643 = vmax.f32 %v5635, 0.0
        %v5644 = vmax.f32 %v5636, 0.0
        %v5645 = vmax.f32 %v5637, 0.0
        %v5646 = vmax.f32 %v5638, 0.0
        %v5647 = vmax.f32 %v5639, 0.0
        %v5648 = vmax.f32 %v5640, 0.0
        %v5649 = vld [vmem:[%s250] sm:$0x7]
        %vm5650 = vcmp.gt.f32.partialorder %v5649, 0.0
        %v5651 = vsel %vm5650, 1, 0
        %v5652 = vlaneseq
        %v5653 = vshrl.u32 %v5652, 7
        %v5654 = vsub.s32 0, %v5653
        %v5655 = vrot.slane %v5651, %v5654
        %v5656 = vlaneseq
        %v5657 = vshrl.u32 %v5656, 7
        %v5658 = vsub.s32 1, %v5657
        %v5659 = vrot.slane %v5651, %v5658
        %v5660 = vlaneseq
        %v5661 = vshrl.u32 %v5660, 7
        %v5662 = vsub.s32 2, %v5661
        %v5663 = vrot.slane %v5651, %v5662
        %vm5664 = vcmp.eq.s32.totalorder %v5655, 1
        %vm5665 = vcmp.eq.s32.totalorder %v5659, 1
        %vm5666 = vcmp.eq.s32.totalorder %v5663, 1
        %5675 = vrot.lane.b32.xlu0 %v5641, 72
        %v5676 = vpop.permute.xlu0 %5675
        %5677 = vrot.lane.b32.xlu0 %v5642, 72
        %v5678 = vpop.permute.xlu0 %5677
        %5679 = vrot.lane.b32.xlu0 %v5643, 72
        %v5680 = vpop.permute.xlu0 %5679
        %5681 = vrot.lane.b32.xlu0 %v5644, 72
        %v5682 = vpop.permute.xlu0 %5681
        %5683 = vrot.lane.b32.xlu0 %v5645, 72
        %v5684 = vpop.permute.xlu0 %5683
        %5685 = vrot.lane.b32.xlu0 %v5646, 72
        %v5686 = vpop.permute.xlu0 %5685
        %5687 = vrot.lane.b32.xlu0 %v5647, 72
        %v5688 = vpop.permute.xlu0 %5687
        %5689 = vrot.lane.b32.xlu0 %v5648, 72
        %v5690 = vpop.permute.xlu0 %5689
        %vm5691 = vcmask 588800
        %v5692 = vsel %vm5691, %v5676, %v5678
        %v5693 = vsel %vm5691, %v5680, %v5682
        %v5694 = vsel %vm5691, %v5684, %v5686
        %v5695 = vsel %vm5691, %v5688, %v5690
        %v5708 = vsel %vm5664, %v5676, 0.0
        %v5709 = vsel %vm5665, %v5692, 0.0
        %v5710 = vsel %vm5666, %v5678, 0.0
        %v5711 = vsel %vm5664, %v5680, 0.0
        %v5712 = vsel %vm5665, %v5693, 0.0
        %v5713 = vsel %vm5666, %v5682, 0.0
        %v5714 = vsel %vm5664, %v5684, 0.0
        %v5715 = vsel %vm5665, %v5694, 0.0
        %v5716 = vsel %vm5666, %v5686, 0.0
        %v5717 = vsel %vm5664, %v5688, 0.0
        %v5718 = vsel %vm5665, %v5695, 0.0
        %v5719 = vsel %vm5666, %v5690, 0.0
        %5732 = vrot.lane.b32.xlu0 %v5708, 8
        %v5733 = vpop.permute.xlu0 %5732
        %5734 = vrot.lane.b32.xlu0 %v5709, 8
        %v5735 = vpop.permute.xlu0 %5734
        %5736 = vrot.lane.b32.xlu0 %v5710, 8
        %v5737 = vpop.permute.xlu0 %5736
        %5738 = vrot.lane.b32.xlu0 %v5711, 8
        %v5739 = vpop.permute.xlu0 %5738
        %5740 = vrot.lane.b32.xlu0 %v5712, 8
        %v5741 = vpop.permute.xlu0 %5740
        %5742 = vrot.lane.b32.xlu0 %v5713, 8
        %v5743 = vpop.permute.xlu0 %5742
        %5744 = vrot.lane.b32.xlu0 %v5714, 8
        %v5745 = vpop.permute.xlu0 %5744
        %5746 = vrot.lane.b32.xlu0 %v5715, 8
        %v5747 = vpop.permute.xlu0 %5746
        %5748 = vrot.lane.b32.xlu0 %v5716, 8
        %v5749 = vpop.permute.xlu0 %5748
        %5750 = vrot.lane.b32.xlu0 %v5717, 8
        %v5751 = vpop.permute.xlu0 %5750
        %5752 = vrot.lane.b32.xlu0 %v5718, 8
        %v5753 = vpop.permute.xlu0 %5752
        %5754 = vrot.lane.b32.xlu0 %v5719, 8
        %v5755 = vpop.permute.xlu0 %5754
        %v5756 = vsel %vm1949, %v5733, %v5735
        %v5757 = vsel %vm1949, %v5735, %v5737
        %v5758 = vsel %vm1949, %v5739, %v5741
        %v5759 = vsel %vm1949, %v5741, %v5743
        %v5760 = vsel %vm1949, %v5745, %v5747
        %v5761 = vsel %vm1949, %v5747, %v5749
        %v5762 = vsel %vm1949, %v5751, %v5753
        %v5763 = vsel %vm1949, %v5753, %v5755
        %vm5776 = vcmask 1048192
        %5777 = vst.msk [vmem:[#allocation3] sm:$0xff] %vm5776, %v5733
        %5778 = vst [vmem:[#allocation3 + $0x8] sm:$0xff] %v5756
        %vm5779 = vcmask 326656
        %5780 = vst.msk [vmem:[#allocation3 + $0x10] sm:$0xff] %vm5779, %v5757
        %5781 = vst.msk [vmem:[#allocation3 + $0x18] sm:$0xff] %vm5776, %v5739
        %5782 = vst [vmem:[#allocation3 + $0x20] sm:$0xff] %v5758
        %5783 = vst.msk [vmem:[#allocation3 + $0x28] sm:$0xff] %vm5779, %v5759
        %5784 = vst.msk [vmem:[#allocation3 + $0x30] sm:$0xff] %vm5776, %v5745
        %5785 = vst [vmem:[#allocation3 + $0x38] sm:$0xff] %v5760
        %5786 = vst.msk [vmem:[#allocation3 + $0x40] sm:$0xff] %vm5779, %v5761
        %5787 = vst.msk [vmem:[#allocation3 + $0x48] sm:$0xff] %vm5776, %v5751
        %5788 = vst [vmem:[#allocation3 + $0x50] sm:$0xff] %v5762
        %5789 = vst.msk [vmem:[#allocation3 + $0x58] sm:$0xff] %vm5779, %v5763
        %v5790 = vld [vmem:[#allocation3] sm:$0xff]
        %v5791 = vld [vmem:[#allocation3 + $0x8] sm:$0xff]
        %v5792 = vld [vmem:[#allocation3 + $0x10] sm:$0xff]
        %v5793 = vld [vmem:[#allocation3 + $0x18] sm:$0xff]
        %v5794 = vld [vmem:[#allocation3 + $0x20] sm:$0xff]
        %v5795 = vld [vmem:[#allocation3 + $0x28] sm:$0xff]
        %v5796 = vld [vmem:[#allocation3 + $0x30] sm:$0xff]
        %v5797 = vld [vmem:[#allocation3 + $0x38] sm:$0xff]
        %v5798 = vld [vmem:[#allocation3 + $0x40] sm:$0xff]
        %v5799 = vld [vmem:[#allocation3 + $0x48] sm:$0xff]
        %v5800 = vld [vmem:[#allocation3 + $0x50] sm:$0xff]
        %v5801 = vld [vmem:[#allocation3 + $0x58] sm:$0xff]
        %v5802 = vpack.c.bf16 %v5793, %v5790
        %v5803 = vpack.c.bf16 %v5794, %v5791
        %v5804 = vpack.c.bf16 %v5795, %v5792
        %v5805 = vpack.c.bf16 %v5799, %v5796
        %v5806 = vpack.c.bf16 %v5800, %v5797
        %v5807 = vpack.c.bf16 %v5801, %v5798
        %s5808 = scalar_lea.vmem [#allocation4], 432
        %v5809 = vld [vmem:[%s5808] sm:$0xf]
        %v5810 = vld [vmem:[%s5808 + $0x4] sm:$0xf]
        %v5811 = vld [vmem:[%s5808 + $0x8] sm:$0xf]
        %v5812 = vld [vmem:[%s5808 + $0xc] sm:$0xf]
        %s5813 = scalar_lea.vmem [#allocation4], 448
        %v5814 = vld [vmem:[%s5813] sm:$0xf]
        %v5815 = vld [vmem:[%s5813 + $0x4] sm:$0xf]
        %v5816 = vld [vmem:[%s5813 + $0x8] sm:$0xf]
        %v5817 = vld [vmem:[%s5813 + $0xc] sm:$0xf]
        %v5822 = vunpack.c.l.b16 %v5814
        %v5823 = vunpack.c.l.b16 %v5815
        %v5824 = vunpack.c.l.b16 %v5816
        %v5825 = vunpack.c.l.b16 %v5817
        %v5826 = vpack.c.b16 %v5823, %v5822
        %v5827 = vpack.c.b16 %v5825, %v5824
        %5834 = vrot.lane.b32.xlu0 %v5802, 48
        %v5835 = vpop.permute.xlu0 %5834
        %5836 = vrot.lane.b32.xlu0 %v5803, 48
        %v5837 = vpop.permute.xlu0 %5836
        %5838 = vrot.lane.b32.xlu0 %v5804, 48
        %v5839 = vpop.permute.xlu0 %5838
        %5840 = vrot.lane.b32.xlu0 %v5805, 48
        %v5841 = vpop.permute.xlu0 %5840
        %5842 = vrot.lane.b32.xlu0 %v5806, 48
        %v5843 = vpop.permute.xlu0 %5842
        %5844 = vrot.lane.b32.xlu0 %v5807, 48
        %v5845 = vpop.permute.xlu0 %5844
        %v5846 = vsel %vm4319, %v5835, %v5837
        %v5847 = vsel %vm4319, %v5837, %v5839
        %v5848 = vsel %vm4319, %v5841, %v5843
        %v5849 = vsel %vm4319, %v5843, %v5845
        %v5855 = vsel %vm2049, %v5826, 0
        %v5858 = vsel %vm2049, %v5827, 0
        %5860 = vmatprep.subr.bf16.mxu0 %v5847
        %5861 = vmatpush1.bf16.msra.mxu0 %v5846
        %5862 = vmatprep.subr.bf16.mxu0 %v5849
        %5863 = vmatpush1.bf16.msra.mxu0 %v5848
        %5864 = vmatprep.subr.bf16.mxu0 0
        %5865 = vmatpush1.bf16.msra.mxu0 0
        %5866 = vmatprep.subr.bf16.mxu0 0
        %5867 = vmatpush1.bf16.msra.mxu0 0
        %5868 = vmatprep.subr.bf16.mxu0 0
        %5869 = vmatpush1.bf16.msra.mxu0 0
        %5870 = vmatprep.subr.bf16.mxu0 0
        %5871 = vmatpush1.bf16.msra.mxu0 0
        %5872 = vmatprep.subr.bf16.mxu0 0
        %5873 = vmatpush1.bf16.msra.mxu0 0
        %5874 = vmatprep.subr.bf16.mxu0 0
        %5875 = vmatpush1.bf16.msra.mxu0 0
        %5876 = vmatprep.subr.bf16.mxu0 0
        %5877 = vmatpush1.bf16.msra.mxu0 0
        %5878 = vmatprep.subr.bf16.mxu0 0
        %5879 = vmatpush1.bf16.msra.mxu0 0
        %5880 = vmatprep.subr.bf16.mxu0 0
        %5881 = vmatpush1.bf16.msra.mxu0 0
        %5882 = vmatprep.subr.bf16.mxu0 0
        %5883 = vmatpush1.bf16.msra.mxu0 0
        %5884 = vmatprep.subr.bf16.mxu0 0
        %5885 = vmatpush1.bf16.msra.mxu0 0
        %5886 = vmatprep.subr.bf16.mxu0 0
        %5887 = vmatpush1.bf16.msra.mxu0 0
        %5888 = vmatprep.subr.bf16.mxu0 0
        %5889 = vmatpush1.bf16.msra.mxu0 0
        %5890 = vmatprep.subr.bf16.mxu0 0
        %5891 = vmatpush1.bf16.msra.mxu0 0
        %5892 = vmatprep.mubr.bf16.mxu0 0
        %5893 = vmatmul.mubr.bf16.gmra.mrb[0].mxu0 %v5855
        %v5894 = vpop.f32.mrb[0].mxu0
        %v5895 = vadd.f32 0.0, %v5894
        %v5896 = vpop.f32.mrb[0].mxu0
        %v5897 = vadd.f32 0.0, %v5896
        %v5898 = vpop.f32.mrb[0].mxu0
        %v5899 = vadd.f32 0.0, %v5898
        %v5900 = vpop.f32.mrb[0].mxu0
        %v5901 = vadd.f32 0.0, %v5900
        %5902 = vmatprep.mubr.bf16.mxu0 0
        %5903 = vmatmul.mubr.bf16.gmra.mrb[0].mxu0 %v5858
        %v5904 = vpop.f32.mrb[0].mxu0
        %v5905 = vadd.f32 0.0, %v5904
        %v5906 = vpop.f32.mrb[0].mxu0
        %v5907 = vadd.f32 0.0, %v5906
        %v5908 = vpop.f32.mrb[0].mxu0
        %v5909 = vadd.f32 0.0, %v5908
        %v5910 = vpop.f32.mrb[0].mxu0
        %v5911 = vadd.f32 0.0, %v5910
        %5912 = vdwg.mxu0
        %v5917 = vunpack.c.l.b16 %v5809
        %v5918 = vunpack.c.l.b16 %v5810
        %v5919 = vunpack.c.l.b16 %v5811
        %v5920 = vunpack.c.l.b16 %v5812
        %v5921 = vpack.c.b16 %v5918, %v5917
        %v5922 = vpack.c.b16 %v5920, %v5919
        %5923 = vrot.lane.b32.xlu0 %v5802, 49
        %v5924 = vpop.permute.xlu0 %5923
        %5925 = vrot.lane.b32.xlu0 %v5803, 49
        %v5926 = vpop.permute.xlu0 %5925
        %5927 = vrot.lane.b32.xlu0 %v5804, 49
        %v5928 = vpop.permute.xlu0 %5927
        %5929 = vrot.lane.b32.xlu0 %v5805, 49
        %v5930 = vpop.permute.xlu0 %5929
        %5931 = vrot.lane.b32.xlu0 %v5806, 49
        %v5932 = vpop.permute.xlu0 %5931
        %5933 = vrot.lane.b32.xlu0 %v5807, 49
        %v5934 = vpop.permute.xlu0 %5933
        %v5935 = vsel %vm4216, %v5924, %v5926
        %v5936 = vsel %vm4216, %v5926, %v5928
        %v5937 = vsel %vm4216, %v5930, %v5932
        %v5938 = vsel %vm4216, %v5932, %v5934
        %v5944 = vsel %vm2049, %v5921, 0
        %v5947 = vsel %vm2049, %v5922, 0
        %5949 = vmatprep.subr.bf16.mxu0 %v5936
        %5950 = vmatpush1.bf16.msra.mxu0 %v5935
        %5951 = vmatprep.subr.bf16.mxu0 %v5938
        %5952 = vmatpush1.bf16.msra.mxu0 %v5937
        %5953 = vmatprep.subr.bf16.mxu0 0
        %5954 = vmatpush1.bf16.msra.mxu0 0
        %5955 = vmatprep.subr.bf16.mxu0 0
        %5956 = vmatpush1.bf16.msra.mxu0 0
        %5957 = vmatprep.subr.bf16.mxu0 0
        %5958 = vmatpush1.bf16.msra.mxu0 0
        %5959 = vmatprep.subr.bf16.mxu0 0
        %5960 = vmatpush1.bf16.msra.mxu0 0
        %5961 = vmatprep.subr.bf16.mxu0 0
        %5962 = vmatpush1.bf16.msra.mxu0 0
        %5963 = vmatprep.subr.bf16.mxu0 0
        %5964 = vmatpush1.bf16.msra.mxu0 0
        %5965 = vmatprep.subr.bf16.mxu0 0
        %5966 = vmatpush1.bf16.msra.mxu0 0
        %5967 = vmatprep.subr.bf16.mxu0 0
        %5968 = vmatpush1.bf16.msra.mxu0 0
        %5969 = vmatprep.subr.bf16.mxu0 0
        %5970 = vmatpush1.bf16.msra.mxu0 0
        %5971 = vmatprep.subr.bf16.mxu0 0
        %5972 = vmatpush1.bf16.msra.mxu0 0
        %5973 = vmatprep.subr.bf16.mxu0 0
        %5974 = vmatpush1.bf16.msra.mxu0 0
        %5975 = vmatprep.subr.bf16.mxu0 0
        %5976 = vmatpush1.bf16.msra.mxu0 0
        %5977 = vmatprep.subr.bf16.mxu0 0
        %5978 = vmatpush1.bf16.msra.mxu0 0
        %5979 = vmatprep.subr.bf16.mxu0 0
        %5980 = vmatpush1.bf16.msra.mxu0 0
        %5981 = vmatprep.mubr.bf16.mxu0 0
        %5982 = vmatmul.mubr.bf16.gmra.mrb[0].mxu0 %v5944
        %v5983 = vpop.f32.mrb[0].mxu0
        %v5984 = vadd.f32 %v5895, %v5983
        %v5985 = vpop.f32.mrb[0].mxu0
        %v5986 = vadd.f32 %v5897, %v5985
        %v5987 = vpop.f32.mrb[0].mxu0
        %v5988 = vadd.f32 %v5899, %v5987
        %v5989 = vpop.f32.mrb[0].mxu0
        %v5990 = vadd.f32 %v5901, %v5989
        %5991 = vmatprep.mubr.bf16.mxu0 0
        %5992 = vmatmul.mubr.bf16.gmra.mrb[0].mxu0 %v5947
        %v5993 = vpop.f32.mrb[0].mxu0
        %v5994 = vadd.f32 %v5905, %v5993
        %v5995 = vpop.f32.mrb[0].mxu0
        %v5996 = vadd.f32 %v5907, %v5995
        %v5997 = vpop.f32.mrb[0].mxu0
        %v5998 = vadd.f32 %v5909, %v5997
        %v5999 = vpop.f32.mrb[0].mxu0
        %v6000 = vadd.f32 %v5911, %v5999
        %6001 = vdwg.mxu0
        %s6002 = scalar_lea.vmem [#allocation4], 464
        %v6003 = vld [vmem:[%s6002] sm:$0xf]
        %v6004 = vld [vmem:[%s6002 + $0x4] sm:$0xf]
        %v6005 = vld [vmem:[%s6002 + $0x8] sm:$0xf]
        %v6006 = vld [vmem:[%s6002 + $0xc] sm:$0xf]
        %v6011 = vunpack.c.l.b16 %v6003
        %v6012 = vunpack.c.l.b16 %v6004
        %v6013 = vunpack.c.l.b16 %v6005
        %v6014 = vunpack.c.l.b16 %v6006
        %v6015 = vpack.c.b16 %v6012, %v6011
        %v6016 = vpack.c.b16 %v6014, %v6013
        %6017 = vrot.lane.b32.xlu0 %v5802, 47
        %v6018 = vpop.permute.xlu0 %6017
        %6019 = vrot.lane.b32.xlu0 %v5803, 47
        %v6020 = vpop.permute.xlu0 %6019
        %6021 = vrot.lane.b32.xlu0 %v5804, 47
        %v6022 = vpop.permute.xlu0 %6021
        %6023 = vrot.lane.b32.xlu0 %v5805, 47
        %v6024 = vpop.permute.xlu0 %6023
        %6025 = vrot.lane.b32.xlu0 %v5806, 47
        %v6026 = vpop.permute.xlu0 %6025
        %6027 = vrot.lane.b32.xlu0 %v5807, 47
        %v6028 = vpop.permute.xlu0 %6027
        %v6029 = vsel %vm4422, %v6018, %v6020
        %v6030 = vsel %vm4422, %v6020, %v6022
        %v6031 = vsel %vm4422, %v6024, %v6026
        %v6032 = vsel %vm4422, %v6026, %v6028
        %v6038 = vsel %vm2049, %v6015, 0
        %v6041 = vsel %vm2049, %v6016, 0
        %6043 = vmatprep.subr.bf16.mxu0 %v6030
        %6044 = vmatpush1.bf16.msra.mxu0 %v6029
        %6045 = vmatprep.subr.bf16.mxu0 %v6032
        %6046 = vmatpush1.bf16.msra.mxu0 %v6031
        %6047 = vmatprep.subr.bf16.mxu0 0
        %6048 = vmatpush1.bf16.msra.mxu0 0
        %6049 = vmatprep.subr.bf16.mxu0 0
        %6050 = vmatpush1.bf16.msra.mxu0 0
        %6051 = vmatprep.subr.bf16.mxu0 0
        %6052 = vmatpush1.bf16.msra.mxu0 0
        %6053 = vmatprep.subr.bf16.mxu0 0
        %6054 = vmatpush1.bf16.msra.mxu0 0
        %6055 = vmatprep.subr.bf16.mxu0 0
        %6056 = vmatpush1.bf16.msra.mxu0 0
        %6057 = vmatprep.subr.bf16.mxu0 0
        %6058 = vmatpush1.bf16.msra.mxu0 0
        %6059 = vmatprep.subr.bf16.mxu0 0
        %6060 = vmatpush1.bf16.msra.mxu0 0
        %6061 = vmatprep.subr.bf16.mxu0 0
        %6062 = vmatpush1.bf16.msra.mxu0 0
        %6063 = vmatprep.subr.bf16.mxu0 0
        %6064 = vmatpush1.bf16.msra.mxu0 0
        %6065 = vmatprep.subr.bf16.mxu0 0
        %6066 = vmatpush1.bf16.msra.mxu0 0
        %6067 = vmatprep.subr.bf16.mxu0 0
        %6068 = vmatpush1.bf16.msra.mxu0 0
        %6069 = vmatprep.subr.bf16.mxu0 0
        %6070 = vmatpush1.bf16.msra.mxu0 0
        %6071 = vmatprep.subr.bf16.mxu0 0
        %6072 = vmatpush1.bf16.msra.mxu0 0
        %6073 = vmatprep.subr.bf16.mxu0 0
        %6074 = vmatpush1.bf16.msra.mxu0 0
        %6075 = vmatprep.mubr.bf16.mxu0 0
        %6076 = vmatmul.mubr.bf16.gmra.mrb[0].mxu0 %v6038
        %v6077 = vpop.f32.mrb[0].mxu0
        %v6078 = vadd.f32 0.0, %v6077
        %v6079 = vpop.f32.mrb[0].mxu0
        %v6080 = vadd.f32 0.0, %v6079
        %v6081 = vpop.f32.mrb[0].mxu0
        %v6082 = vadd.f32 0.0, %v6081
        %v6083 = vpop.f32.mrb[0].mxu0
        %v6084 = vadd.f32 0.0, %v6083
        %6085 = vmatprep.mubr.bf16.mxu0 0
        %6086 = vmatmul.mubr.bf16.gmra.mrb[0].mxu0 %v6041
        %v6087 = vpop.f32.mrb[0].mxu0
        %v6088 = vadd.f32 0.0, %v6087
        %v6089 = vpop.f32.mrb[0].mxu0
        %v6090 = vadd.f32 0.0, %v6089
        %v6091 = vpop.f32.mrb[0].mxu0
        %v6092 = vadd.f32 0.0, %v6091
        %v6093 = vpop.f32.mrb[0].mxu0
        %v6094 = vadd.f32 0.0, %v6093
        %6095 = vdwg.mxu0
        %v6096 = vadd.f32 %v5984, %v6078
        %v6097 = vadd.f32 %v5986, %v6080
        %v6098 = vadd.f32 %v5988, %v6082
        %v6099 = vadd.f32 %v5990, %v6084
        %v6100 = vadd.f32 %v5994, %v6088
        %v6101 = vadd.f32 %v5996, %v6090
        %v6102 = vadd.f32 %v5998, %v6092
        %v6103 = vadd.f32 %v6000, %v6094
        %s6104 = scalar_lea.vmem [#allocation4], 480
        %v6105 = vld [vmem:[%s6104] sm:$0xf]
        %v6106 = vld [vmem:[%s6104 + $0x4] sm:$0xf]
        %v6107 = vld [vmem:[%s6104 + $0x8] sm:$0xf]
        %v6108 = vld [vmem:[%s6104 + $0xc] sm:$0xf]
        %v6113 = vunpack.c.l.b16 %v6105
        %v6114 = vunpack.c.l.b16 %v6106
        %v6115 = vunpack.c.l.b16 %v6107
        %v6116 = vunpack.c.l.b16 %v6108
        %v6117 = vpack.c.b16 %v6114, %v6113
        %v6118 = vpack.c.b16 %v6116, %v6115
        %6119 = vrot.lane.b32.xlu0 %v5802, 31
        %v6120 = vpop.permute.xlu0 %6119
        %6121 = vrot.lane.b32.xlu0 %v5803, 31
        %v6122 = vpop.permute.xlu0 %6121
        %6123 = vrot.lane.b32.xlu0 %v5804, 31
        %v6124 = vpop.permute.xlu0 %6123
        %6125 = vrot.lane.b32.xlu0 %v5805, 31
        %v6126 = vpop.permute.xlu0 %6125
        %6127 = vrot.lane.b32.xlu0 %v5806, 31
        %v6128 = vpop.permute.xlu0 %6127
        %6129 = vrot.lane.b32.xlu0 %v5807, 31
        %v6130 = vpop.permute.xlu0 %6129
        %v6131 = vsel %vm5359, %v6120, %v6122
        %v6132 = vsel %vm5359, %v6122, %v6124
        %v6133 = vsel %vm5359, %v6126, %v6128
        %v6134 = vsel %vm5359, %v6128, %v6130
        %v6140 = vsel %vm2049, %v6117, 0
        %v6143 = vsel %vm2049, %v6118, 0
        %6145 = vmatprep.subr.bf16.mxu0 %v6132
        %6146 = vmatpush1.bf16.msra.mxu0 %v6131
        %6147 = vmatprep.subr.bf16.mxu0 %v6134
        %6148 = vmatpush1.bf16.msra.mxu0 %v6133
        %6149 = vmatprep.subr.bf16.mxu0 0
        %6150 = vmatpush1.bf16.msra.mxu0 0
        %6151 = vmatprep.subr.bf16.mxu0 0
        %6152 = vmatpush1.bf16.msra.mxu0 0
        %6153 = vmatprep.subr.bf16.mxu0 0
        %6154 = vmatpush1.bf16.msra.mxu0 0
        %6155 = vmatprep.subr.bf16.mxu0 0
        %6156 = vmatpush1.bf16.msra.mxu0 0
        %6157 = vmatprep.subr.bf16.mxu0 0
        %6158 = vmatpush1.bf16.msra.mxu0 0
        %6159 = vmatprep.subr.bf16.mxu0 0
        %6160 = vmatpush1.bf16.msra.mxu0 0
        %6161 = vmatprep.subr.bf16.mxu0 0
        %6162 = vmatpush1.bf16.msra.mxu0 0
        %6163 = vmatprep.subr.bf16.mxu0 0
        %6164 = vmatpush1.bf16.msra.mxu0 0
        %6165 = vmatprep.subr.bf16.mxu0 0
        %6166 = vmatpush1.bf16.msra.mxu0 0
        %6167 = vmatprep.subr.bf16.mxu0 0
        %6168 = vmatpush1.bf16.msra.mxu0 0
        %6169 = vmatprep.subr.bf16.mxu0 0
        %6170 = vmatpush1.bf16.msra.mxu0 0
        %6171 = vmatprep.subr.bf16.mxu0 0
        %6172 = vmatpush1.bf16.msra.mxu0 0
        %6173 = vmatprep.subr.bf16.mxu0 0
        %6174 = vmatpush1.bf16.msra.mxu0 0
        %6175 = vmatprep.subr.bf16.mxu0 0
        %6176 = vmatpush1.bf16.msra.mxu0 0
        %6177 = vmatprep.mubr.bf16.mxu0 0
        %6178 = vmatmul.mubr.bf16.gmra.mrb[0].mxu0 %v6140
        %v6179 = vpop.f32.mrb[0].mxu0
        %v6180 = vadd.f32 0.0, %v6179
        %v6181 = vpop.f32.mrb[0].mxu0
        %v6182 = vadd.f32 0.0, %v6181
        %v6183 = vpop.f32.mrb[0].mxu0
        %v6184 = vadd.f32 0.0, %v6183
        %v6185 = vpop.f32.mrb[0].mxu0
        %v6186 = vadd.f32 0.0, %v6185
        %6187 = vmatprep.mubr.bf16.mxu0 0
        %6188 = vmatmul.mubr.bf16.gmra.mrb[0].mxu0 %v6143
        %v6189 = vpop.f32.mrb[0].mxu0
        %v6190 = vadd.f32 0.0, %v6189
        %v6191 = vpop.f32.mrb[0].mxu0
        %v6192 = vadd.f32 0.0, %v6191
        %v6193 = vpop.f32.mrb[0].mxu0
        %v6194 = vadd.f32 0.0, %v6193
        %v6195 = vpop.f32.mrb[0].mxu0
        %v6196 = vadd.f32 0.0, %v6195
        %6197 = vdwg.mxu0
        %v6198 = vadd.f32 %v6096, %v6180
        %v6199 = vadd.f32 %v6097, %v6182
        %v6200 = vadd.f32 %v6098, %v6184
        %v6201 = vadd.f32 %v6099, %v6186
        %v6202 = vadd.f32 %v6100, %v6190
        %v6203 = vadd.f32 %v6101, %v6192
        %v6204 = vadd.f32 %v6102, %v6194
        %v6205 = vadd.f32 %v6103, %v6196
        %s6206 = scalar_lea.vmem [#allocation4], 496
        %v6207 = vld [vmem:[%s6206] sm:$0xf]
        %v6208 = vld [vmem:[%s6206 + $0x4] sm:$0xf]
        %v6209 = vld [vmem:[%s6206 + $0x8] sm:$0xf]
        %v6210 = vld [vmem:[%s6206 + $0xc] sm:$0xf]
        %v6215 = vunpack.c.l.b16 %v6207
        %v6216 = vunpack.c.l.b16 %v6208
        %v6217 = vunpack.c.l.b16 %v6209
        %v6218 = vunpack.c.l.b16 %v6210
        %v6219 = vpack.c.b16 %v6216, %v6215
        %v6220 = vpack.c.b16 %v6218, %v6217
        %6221 = vrot.lane.b32.xlu0 %v5802, 30
        %v6222 = vpop.permute.xlu0 %6221
        %6223 = vrot.lane.b32.xlu0 %v5803, 30
        %v6224 = vpop.permute.xlu0 %6223
        %6225 = vrot.lane.b32.xlu0 %v5804, 30
        %v6226 = vpop.permute.xlu0 %6225
        %6227 = vrot.lane.b32.xlu0 %v5805, 30
        %v6228 = vpop.permute.xlu0 %6227
        %6229 = vrot.lane.b32.xlu0 %v5806, 30
        %v6230 = vpop.permute.xlu0 %6229
        %6231 = vrot.lane.b32.xlu0 %v5807, 30
        %v6232 = vpop.permute.xlu0 %6231
        %v6233 = vsel %vm5462, %v6222, %v6224
        %v6234 = vsel %vm5462, %v6224, %v6226
        %v6235 = vsel %vm5462, %v6228, %v6230
        %v6236 = vsel %vm5462, %v6230, %v6232
        %v6242 = vsel %vm2049, %v6219, 0
        %v6245 = vsel %vm2049, %v6220, 0
        %6247 = vmatprep.subr.bf16.mxu0 %v6234
        %6248 = vmatpush1.bf16.msra.mxu0 %v6233
        %6249 = vmatprep.subr.bf16.mxu0 %v6236
        %6250 = vmatpush1.bf16.msra.mxu0 %v6235
        %6251 = vmatprep.subr.bf16.mxu0 0
        %6252 = vmatpush1.bf16.msra.mxu0 0
        %6253 = vmatprep.subr.bf16.mxu0 0
        %6254 = vmatpush1.bf16.msra.mxu0 0
        %6255 = vmatprep.subr.bf16.mxu0 0
        %6256 = vmatpush1.bf16.msra.mxu0 0
        %6257 = vmatprep.subr.bf16.mxu0 0
        %6258 = vmatpush1.bf16.msra.mxu0 0
        %6259 = vmatprep.subr.bf16.mxu0 0
        %6260 = vmatpush1.bf16.msra.mxu0 0
        %6261 = vmatprep.subr.bf16.mxu0 0
        %6262 = vmatpush1.bf16.msra.mxu0 0
        %6263 = vmatprep.subr.bf16.mxu0 0
        %6264 = vmatpush1.bf16.msra.mxu0 0
        %6265 = vmatprep.subr.bf16.mxu0 0
        %6266 = vmatpush1.bf16.msra.mxu0 0
        %6267 = vmatprep.subr.bf16.mxu0 0
        %6268 = vmatpush1.bf16.msra.mxu0 0
        %6269 = vmatprep.subr.bf16.mxu0 0
        %6270 = vmatpush1.bf16.msra.mxu0 0
        %6271 = vmatprep.subr.bf16.mxu0 0
        %6272 = vmatpush1.bf16.msra.mxu0 0
        %6273 = vmatprep.subr.bf16.mxu0 0
        %6274 = vmatpush1.bf16.msra.mxu0 0
        %6275 = vmatprep.subr.bf16.mxu0 0
        %6276 = vmatpush1.bf16.msra.mxu0 0
        %6277 = vmatprep.subr.bf16.mxu0 0
        %6278 = vmatpush1.bf16.msra.mxu0 0
        %6279 = vmatprep.mubr.bf16.mxu0 0
        %6280 = vmatmul.mubr.bf16.gmra.mrb[0].mxu0 %v6242
        %v6281 = vpop.f32.mrb[0].mxu0
        %v6282 = vadd.f32 0.0, %v6281
        %v6283 = vpop.f32.mrb[0].mxu0
        %v6284 = vadd.f32 0.0, %v6283
        %v6285 = vpop.f32.mrb[0].mxu0
        %v6286 = vadd.f32 0.0, %v6285
        %v6287 = vpop.f32.mrb[0].mxu0
        %v6288 = vadd.f32 0.0, %v6287
        %6289 = vmatprep.mubr.bf16.mxu0 0
        %6290 = vmatmul.mubr.bf16.gmra.mrb[0].mxu0 %v6245
        %v6291 = vpop.f32.mrb[0].mxu0
        %v6292 = vadd.f32 0.0, %v6291
        %v6293 = vpop.f32.mrb[0].mxu0
        %v6294 = vadd.f32 0.0, %v6293
        %v6295 = vpop.f32.mrb[0].mxu0
        %v6296 = vadd.f32 0.0, %v6295
        %v6297 = vpop.f32.mrb[0].mxu0
        %v6298 = vadd.f32 0.0, %v6297
        %6299 = vdwg.mxu0
        %v6300 = vadd.f32 %v6198, %v6282
        %v6301 = vadd.f32 %v6199, %v6284
        %v6302 = vadd.f32 %v6200, %v6286
        %v6303 = vadd.f32 %v6201, %v6288
        %v6304 = vadd.f32 %v6202, %v6292
        %v6305 = vadd.f32 %v6203, %v6294
        %v6306 = vadd.f32 %v6204, %v6296
        %v6307 = vadd.f32 %v6205, %v6298
        %s6308 = scalar_lea.vmem [#allocation4], 512
        %v6309 = vld [vmem:[%s6308] sm:$0xf]
        %v6310 = vld [vmem:[%s6308 + $0x4] sm:$0xf]
        %v6311 = vld [vmem:[%s6308 + $0x8] sm:$0xf]
        %v6312 = vld [vmem:[%s6308 + $0xc] sm:$0xf]
        %v6317 = vunpack.c.l.b16 %v6309
        %v6318 = vunpack.c.l.b16 %v6310
        %v6319 = vunpack.c.l.b16 %v6311
        %v6320 = vunpack.c.l.b16 %v6312
        %v6321 = vpack.c.b16 %v6318, %v6317
        %v6322 = vpack.c.b16 %v6320, %v6319
        %6323 = vrot.lane.b32.xlu0 %v5802, 29
        %v6324 = vpop.permute.xlu0 %6323
        %6325 = vrot.lane.b32.xlu0 %v5803, 29
        %v6326 = vpop.permute.xlu0 %6325
        %6327 = vrot.lane.b32.xlu0 %v5804, 29
        %v6328 = vpop.permute.xlu0 %6327
        %6329 = vrot.lane.b32.xlu0 %v5805, 29
        %v6330 = vpop.permute.xlu0 %6329
        %6331 = vrot.lane.b32.xlu0 %v5806, 29
        %v6332 = vpop.permute.xlu0 %6331
        %6333 = vrot.lane.b32.xlu0 %v5807, 29
        %v6334 = vpop.permute.xlu0 %6333
        %v6335 = vsel %vm5565, %v6324, %v6326
        %v6336 = vsel %vm5565, %v6326, %v6328
        %v6337 = vsel %vm5565, %v6330, %v6332
        %v6338 = vsel %vm5565, %v6332, %v6334
        %v6344 = vsel %vm2049, %v6321, 0
        %v6347 = vsel %vm2049, %v6322, 0
        %6349 = vmatprep.subr.bf16.mxu0 %v6336
        %6350 = vmatpush1.bf16.msra.mxu0 %v6335
        %6351 = vmatprep.subr.bf16.mxu0 %v6338
        %6352 = vmatpush1.bf16.msra.mxu0 %v6337
        %6353 = vmatprep.subr.bf16.mxu0 0
        %6354 = vmatpush1.bf16.msra.mxu0 0
        %6355 = vmatprep.subr.bf16.mxu0 0
        %6356 = vmatpush1.bf16.msra.mxu0 0
        %6357 = vmatprep.subr.bf16.mxu0 0
        %6358 = vmatpush1.bf16.msra.mxu0 0
        %6359 = vmatprep.subr.bf16.mxu0 0
        %6360 = vmatpush1.bf16.msra.mxu0 0
        %6361 = vmatprep.subr.bf16.mxu0 0
        %6362 = vmatpush1.bf16.msra.mxu0 0
        %6363 = vmatprep.subr.bf16.mxu0 0
        %6364 = vmatpush1.bf16.msra.mxu0 0
        %6365 = vmatprep.subr.bf16.mxu0 0
        %6366 = vmatpush1.bf16.msra.mxu0 0
        %6367 = vmatprep.subr.bf16.mxu0 0
        %6368 = vmatpush1.bf16.msra.mxu0 0
        %6369 = vmatprep.subr.bf16.mxu0 0
        %6370 = vmatpush1.bf16.msra.mxu0 0
        %6371 = vmatprep.subr.bf16.mxu0 0
        %6372 = vmatpush1.bf16.msra.mxu0 0
        %6373 = vmatprep.subr.bf16.mxu0 0
        %6374 = vmatpush1.bf16.msra.mxu0 0
        %6375 = vmatprep.subr.bf16.mxu0 0
        %6376 = vmatpush1.bf16.msra.mxu0 0
        %6377 = vmatprep.subr.bf16.mxu0 0
        %6378 = vmatpush1.bf16.msra.mxu0 0
        %6379 = vmatprep.subr.bf16.mxu0 0
        %6380 = vmatpush1.bf16.msra.mxu0 0
        %6381 = vmatprep.mubr.bf16.mxu0 0
        %6382 = vmatmul.mubr.bf16.gmra.mrb[0].mxu0 %v6344
        %v6383 = vpop.f32.mrb[0].mxu0
        %v6384 = vadd.f32 0.0, %v6383
        %v6385 = vpop.f32.mrb[0].mxu0
        %v6386 = vadd.f32 0.0, %v6385
        %v6387 = vpop.f32.mrb[0].mxu0
        %v6388 = vadd.f32 0.0, %v6387
        %v6389 = vpop.f32.mrb[0].mxu0
        %v6390 = vadd.f32 0.0, %v6389
        %6391 = vmatprep.mubr.bf16.mxu0 0
        %6392 = vmatmul.mubr.bf16.gmra.mrb[0].mxu0 %v6347
        %v6393 = vpop.f32.mrb[0].mxu0
        %v6394 = vadd.f32 0.0, %v6393
        %v6395 = vpop.f32.mrb[0].mxu0
        %v6396 = vadd.f32 0.0, %v6395
        %v6397 = vpop.f32.mrb[0].mxu0
        %v6398 = vadd.f32 0.0, %v6397
        %v6399 = vpop.f32.mrb[0].mxu0
        %v6400 = vadd.f32 0.0, %v6399
        %6401 = vdwg.mxu0
        %v6402 = vadd.f32 %v6300, %v6384
        %v6403 = vadd.f32 %v6301, %v6386
        %v6404 = vadd.f32 %v6302, %v6388
        %v6405 = vadd.f32 %v6303, %v6390
        %v6406 = vadd.f32 %v6304, %v6394
        %v6407 = vadd.f32 %v6305, %v6396
        %v6408 = vadd.f32 %v6306, %v6398
        %v6409 = vadd.f32 %v6307, %v6400
        %s6410 = scalar_lea.vmem [#allocation4], 528
        %v6411 = vld [vmem:[%s6410] sm:$0xf]
        %v6412 = vld [vmem:[%s6410 + $0x4] sm:$0xf]
        %v6413 = vld [vmem:[%s6410 + $0x8] sm:$0xf]
        %v6414 = vld [vmem:[%s6410 + $0xc] sm:$0xf]
        %v6419 = vunpack.c.l.b16 %v6411
        %v6420 = vunpack.c.l.b16 %v6412
        %v6421 = vunpack.c.l.b16 %v6413
        %v6422 = vunpack.c.l.b16 %v6414
        %v6423 = vpack.c.b16 %v6420, %v6419
        %v6424 = vpack.c.b16 %v6422, %v6421
        %6425 = vrot.lane.b32.xlu0 %v5802, 13
        %v6426 = vpop.permute.xlu0 %6425
        %6427 = vrot.lane.b32.xlu0 %v5803, 13
        %v6428 = vpop.permute.xlu0 %6427
        %6429 = vrot.lane.b32.xlu0 %v5804, 13
        %v6430 = vpop.permute.xlu0 %6429
        %6431 = vrot.lane.b32.xlu0 %v5805, 13
        %v6432 = vpop.permute.xlu0 %6431
        %6433 = vrot.lane.b32.xlu0 %v5806, 13
        %v6434 = vpop.permute.xlu0 %6433
        %6435 = vrot.lane.b32.xlu0 %v5807, 13
        %v6436 = vpop.permute.xlu0 %6435
        %vm6437 = vcmask 105472
        %v6438 = vsel %vm6437, %v6426, %v6428
        %v6439 = vsel %vm6437, %v6428, %v6430
        %v6440 = vsel %vm6437, %v6432, %v6434
        %v6441 = vsel %vm6437, %v6434, %v6436
        %v6447 = vsel %vm2049, %v6423, 0
        %v6450 = vsel %vm2049, %v6424, 0
        %6452 = vmatprep.subr.bf16.mxu0 %v6439
        %6453 = vmatpush1.bf16.msra.mxu0 %v6438
        %6454 = vmatprep.subr.bf16.mxu0 %v6441
        %6455 = vmatpush1.bf16.msra.mxu0 %v6440
        %6456 = vmatprep.subr.bf16.mxu0 0
        %6457 = vmatpush1.bf16.msra.mxu0 0
        %6458 = vmatprep.subr.bf16.mxu0 0
        %6459 = vmatpush1.bf16.msra.mxu0 0
        %6460 = vmatprep.subr.bf16.mxu0 0
        %6461 = vmatpush1.bf16.msra.mxu0 0
        %6462 = vmatprep.subr.bf16.mxu0 0
        %6463 = vmatpush1.bf16.msra.mxu0 0
        %6464 = vmatprep.subr.bf16.mxu0 0
        %6465 = vmatpush1.bf16.msra.mxu0 0
        %6466 = vmatprep.subr.bf16.mxu0 0
        %6467 = vmatpush1.bf16.msra.mxu0 0
        %6468 = vmatprep.subr.bf16.mxu0 0
        %6469 = vmatpush1.bf16.msra.mxu0 0
        %6470 = vmatprep.subr.bf16.mxu0 0
        %6471 = vmatpush1.bf16.msra.mxu0 0
        %6472 = vmatprep.subr.bf16.mxu0 0
        %6473 = vmatpush1.bf16.msra.mxu0 0
        %6474 = vmatprep.subr.bf16.mxu0 0
        %6475 = vmatpush1.bf16.msra.mxu0 0
        %6476 = vmatprep.subr.bf16.mxu0 0
        %6477 = vmatpush1.bf16.msra.mxu0 0
        %6478 = vmatprep.subr.bf16.mxu0 0
        %6479 = vmatpush1.bf16.msra.mxu0 0
        %6480 = vmatprep.subr.bf16.mxu0 0
        %6481 = vmatpush1.bf16.msra.mxu0 0
        %6482 = vmatprep.subr.bf16.mxu0 0
        %6483 = vmatpush1.bf16.msra.mxu0 0
        %6484 = vmatprep.mubr.bf16.mxu0 0
        %6485 = vmatmul.mubr.bf16.gmra.mrb[0].mxu0 %v6447
        %v6486 = vpop.f32.mrb[0].mxu0
        %v6487 = vadd.f32 0.0, %v6486
        %v6488 = vpop.f32.mrb[0].mxu0
        %v6489 = vadd.f32 0.0, %v6488
        %v6490 = vpop.f32.mrb[0].mxu0
        %v6491 = vadd.f32 0.0, %v6490
        %v6492 = vpop.f32.mrb[0].mxu0
        %v6493 = vadd.f32 0.0, %v6492
        %6494 = vmatprep.mubr.bf16.mxu0 0
        %6495 = vmatmul.mubr.bf16.gmra.mrb[0].mxu0 %v6450
        %v6496 = vpop.f32.mrb[0].mxu0
        %v6497 = vadd.f32 0.0, %v6496
        %v6498 = vpop.f32.mrb[0].mxu0
        %v6499 = vadd.f32 0.0, %v6498
        %v6500 = vpop.f32.mrb[0].mxu0
        %v6501 = vadd.f32 0.0, %v6500
        %v6502 = vpop.f32.mrb[0].mxu0
        %v6503 = vadd.f32 0.0, %v6502
        %6504 = vdwg.mxu0
        %v6505 = vadd.f32 %v6402, %v6487
        %v6506 = vadd.f32 %v6403, %v6489
        %v6507 = vadd.f32 %v6404, %v6491
        %v6508 = vadd.f32 %v6405, %v6493
        %v6509 = vadd.f32 %v6406, %v6497
        %v6510 = vadd.f32 %v6407, %v6499
        %v6511 = vadd.f32 %v6408, %v6501
        %v6512 = vadd.f32 %v6409, %v6503
        %s6513 = scalar_lea.vmem [#allocation4], 544
        %v6514 = vld [vmem:[%s6513] sm:$0xf]
        %v6515 = vld [vmem:[%s6513 + $0x4] sm:$0xf]
        %v6516 = vld [vmem:[%s6513 + $0x8] sm:$0xf]
        %v6517 = vld [vmem:[%s6513 + $0xc] sm:$0xf]
        %v6522 = vunpack.c.l.b16 %v6514
        %v6523 = vunpack.c.l.b16 %v6515
        %v6524 = vunpack.c.l.b16 %v6516
        %v6525 = vunpack.c.l.b16 %v6517
        %v6526 = vpack.c.b16 %v6523, %v6522
        %v6527 = vpack.c.b16 %v6525, %v6524
        %6528 = vrot.lane.b32.xlu0 %v5802, 12
        %v6529 = vpop.permute.xlu0 %6528
        %6530 = vrot.lane.b32.xlu0 %v5803, 12
        %v6531 = vpop.permute.xlu0 %6530
        %6532 = vrot.lane.b32.xlu0 %v5804, 12
        %v6533 = vpop.permute.xlu0 %6532
        %6534 = vrot.lane.b32.xlu0 %v5805, 12
        %v6535 = vpop.permute.xlu0 %6534
        %6536 = vrot.lane.b32.xlu0 %v5806, 12
        %v6537 = vpop.permute.xlu0 %6536
        %6538 = vrot.lane.b32.xlu0 %v5807, 12
        %v6539 = vpop.permute.xlu0 %6538
        %vm6540 = vcmask 97280
        %v6541 = vsel %vm6540, %v6529, %v6531
        %v6542 = vsel %vm6540, %v6531, %v6533
        %v6543 = vsel %vm6540, %v6535, %v6537
        %v6544 = vsel %vm6540, %v6537, %v6539
        %v6550 = vsel %vm2049, %v6526, 0
        %v6553 = vsel %vm2049, %v6527, 0
        %6555 = vmatprep.subr.bf16.mxu0 %v6542
        %6556 = vmatpush1.bf16.msra.mxu0 %v6541
        %6557 = vmatprep.subr.bf16.mxu0 %v6544
        %6558 = vmatpush1.bf16.msra.mxu0 %v6543
        %6559 = vmatprep.subr.bf16.mxu0 0
        %6560 = vmatpush1.bf16.msra.mxu0 0
        %6561 = vmatprep.subr.bf16.mxu0 0
        %6562 = vmatpush1.bf16.msra.mxu0 0
        %6563 = vmatprep.subr.bf16.mxu0 0
        %6564 = vmatpush1.bf16.msra.mxu0 0
        %6565 = vmatprep.subr.bf16.mxu0 0
        %6566 = vmatpush1.bf16.msra.mxu0 0
        %6567 = vmatprep.subr.bf16.mxu0 0
        %6568 = vmatpush1.bf16.msra.mxu0 0
        %6569 = vmatprep.subr.bf16.mxu0 0
        %6570 = vmatpush1.bf16.msra.mxu0 0
        %6571 = vmatprep.subr.bf16.mxu0 0
        %6572 = vmatpush1.bf16.msra.mxu0 0
        %6573 = vmatprep.subr.bf16.mxu0 0
        %6574 = vmatpush1.bf16.msra.mxu0 0
        %6575 = vmatprep.subr.bf16.mxu0 0
        %6576 = vmatpush1.bf16.msra.mxu0 0
        %6577 = vmatprep.subr.bf16.mxu0 0
        %6578 = vmatpush1.bf16.msra.mxu0 0
        %6579 = vmatprep.subr.bf16.mxu0 0
        %6580 = vmatpush1.bf16.msra.mxu0 0
        %6581 = vmatprep.subr.bf16.mxu0 0
        %6582 = vmatpush1.bf16.msra.mxu0 0
        %6583 = vmatprep.subr.bf16.mxu0 0
        %6584 = vmatpush1.bf16.msra.mxu0 0
        %6585 = vmatprep.subr.bf16.mxu0 0
        %6586 = vmatpush1.bf16.msra.mxu0 0
        %6587 = vmatprep.mubr.bf16.mxu0 0
        %6588 = vmatmul.mubr.bf16.gmra.mrb[0].mxu0 %v6550
        %v6589 = vpop.f32.mrb[0].mxu0
        %v6590 = vadd.f32 0.0, %v6589
        %v6591 = vpop.f32.mrb[0].mxu0
        %v6592 = vadd.f32 0.0, %v6591
        %v6593 = vpop.f32.mrb[0].mxu0
        %v6594 = vadd.f32 0.0, %v6593
        %v6595 = vpop.f32.mrb[0].mxu0
        %v6596 = vadd.f32 0.0, %v6595
        %6597 = vmatprep.mubr.bf16.mxu0 0
        %6598 = vmatmul.mubr.bf16.gmra.mrb[0].mxu0 %v6553
        %v6599 = vpop.f32.mrb[0].mxu0
        %v6600 = vadd.f32 0.0, %v6599
        %v6601 = vpop.f32.mrb[0].mxu0
        %v6602 = vadd.f32 0.0, %v6601
        %v6603 = vpop.f32.mrb[0].mxu0
        %v6604 = vadd.f32 0.0, %v6603
        %v6605 = vpop.f32.mrb[0].mxu0
        %v6606 = vadd.f32 0.0, %v6605
        %6607 = vdwg.mxu0
        %v6608 = vadd.f32 %v6505, %v6590
        %v6609 = vadd.f32 %v6506, %v6592
        %v6610 = vadd.f32 %v6507, %v6594
        %v6611 = vadd.f32 %v6508, %v6596
        %v6612 = vadd.f32 %v6509, %v6600
        %v6613 = vadd.f32 %v6510, %v6602
        %v6614 = vadd.f32 %v6511, %v6604
        %v6615 = vadd.f32 %v6512, %v6606
        %s6616 = scalar_lea.vmem [#allocation4], 560
        %v6617 = vld [vmem:[%s6616] sm:$0xf]
        %v6618 = vld [vmem:[%s6616 + $0x4] sm:$0xf]
        %v6619 = vld [vmem:[%s6616 + $0x8] sm:$0xf]
        %v6620 = vld [vmem:[%s6616 + $0xc] sm:$0xf]
        %v6625 = vunpack.c.l.b16 %v6617
        %v6626 = vunpack.c.l.b16 %v6618
        %v6627 = vunpack.c.l.b16 %v6619
        %v6628 = vunpack.c.l.b16 %v6620
        %v6629 = vpack.c.b16 %v6626, %v6625
        %v6630 = vpack.c.b16 %v6628, %v6627
        %6631 = vrot.lane.b32.xlu0 %v5802, 11
        %v6632 = vpop.permute.xlu0 %6631
        %6633 = vrot.lane.b32.xlu0 %v5803, 11
        %v6634 = vpop.permute.xlu0 %6633
        %6635 = vrot.lane.b32.xlu0 %v5804, 11
        %v6636 = vpop.permute.xlu0 %6635
        %6637 = vrot.lane.b32.xlu0 %v5805, 11
        %v6638 = vpop.permute.xlu0 %6637
        %6639 = vrot.lane.b32.xlu0 %v5806, 11
        %v6640 = vpop.permute.xlu0 %6639
        %6641 = vrot.lane.b32.xlu0 %v5807, 11
        %v6642 = vpop.permute.xlu0 %6641
        %vm6643 = vcmask 89088
        %v6644 = vsel %vm6643, %v6632, %v6634
        %v6645 = vsel %vm6643, %v6634, %v6636
        %v6646 = vsel %vm6643, %v6638, %v6640
        %v6647 = vsel %vm6643, %v6640, %v6642
        %v6653 = vsel %vm2049, %v6629, 0
        %v6656 = vsel %vm2049, %v6630, 0
        %6658 = vmatprep.subr.bf16.mxu0 %v6645
        %6659 = vmatpush1.bf16.msra.mxu0 %v6644
        %6660 = vmatprep.subr.bf16.mxu0 %v6647
        %6661 = vmatpush1.bf16.msra.mxu0 %v6646
        %6662 = vmatprep.subr.bf16.mxu0 0
        %6663 = vmatpush1.bf16.msra.mxu0 0
        %6664 = vmatprep.subr.bf16.mxu0 0
        %6665 = vmatpush1.bf16.msra.mxu0 0
        %6666 = vmatprep.subr.bf16.mxu0 0
        %6667 = vmatpush1.bf16.msra.mxu0 0
        %6668 = vmatprep.subr.bf16.mxu0 0
        %6669 = vmatpush1.bf16.msra.mxu0 0
        %6670 = vmatprep.subr.bf16.mxu0 0
        %6671 = vmatpush1.bf16.msra.mxu0 0
        %6672 = vmatprep.subr.bf16.mxu0 0
        %6673 = vmatpush1.bf16.msra.mxu0 0
        %6674 = vmatprep.subr.bf16.mxu0 0
        %6675 = vmatpush1.bf16.msra.mxu0 0
        %6676 = vmatprep.subr.bf16.mxu0 0
        %6677 = vmatpush1.bf16.msra.mxu0 0
        %6678 = vmatprep.subr.bf16.mxu0 0
        %6679 = vmatpush1.bf16.msra.mxu0 0
        %6680 = vmatprep.subr.bf16.mxu0 0
        %6681 = vmatpush1.bf16.msra.mxu0 0
        %6682 = vmatprep.subr.bf16.mxu0 0
        %6683 = vmatpush1.bf16.msra.mxu0 0
        %6684 = vmatprep.subr.bf16.mxu0 0
        %6685 = vmatpush1.bf16.msra.mxu0 0
        %6686 = vmatprep.subr.bf16.mxu0 0
        %6687 = vmatpush1.bf16.msra.mxu0 0
        %6688 = vmatprep.subr.bf16.mxu0 0
        %6689 = vmatpush1.bf16.msra.mxu0 0
        %6690 = vmatprep.mubr.bf16.mxu0 0
        %6691 = vmatmul.mubr.bf16.gmra.mrb[0].mxu0 %v6653
        %v6692 = vpop.f32.mrb[0].mxu0
        %v6693 = vadd.f32 0.0, %v6692
        %v6694 = vpop.f32.mrb[0].mxu0
        %v6695 = vadd.f32 0.0, %v6694
        %v6696 = vpop.f32.mrb[0].mxu0
        %v6697 = vadd.f32 0.0, %v6696
        %v6698 = vpop.f32.mrb[0].mxu0
        %v6699 = vadd.f32 0.0, %v6698
        %6700 = vmatprep.mubr.bf16.mxu0 0
        %6701 = vmatmul.mubr.bf16.gmra.mrb[0].mxu0 %v6656
        %v6702 = vpop.f32.mrb[0].mxu0
        %v6703 = vadd.f32 0.0, %v6702
        %v6704 = vpop.f32.mrb[0].mxu0
        %v6705 = vadd.f32 0.0, %v6704
        %v6706 = vpop.f32.mrb[0].mxu0
        %v6707 = vadd.f32 0.0, %v6706
        %v6708 = vpop.f32.mrb[0].mxu0
        %v6709 = vadd.f32 0.0, %v6708
        %6710 = vdwg.mxu0
        %v6711 = vadd.f32 %v6608, %v6693
        %v6712 = vadd.f32 %v6609, %v6695
        %v6713 = vadd.f32 %v6610, %v6697
        %v6714 = vadd.f32 %v6611, %v6699
        %v6715 = vadd.f32 %v6612, %v6703
        %v6716 = vadd.f32 %v6613, %v6705
        %v6717 = vadd.f32 %v6614, %v6707
        %v6718 = vadd.f32 %v6615, %v6709
        %v6719 = vld [vmem:[#allocation2] sm:$0xff]
        %v6720 = vld [vmem:[#allocation2 + $0x8] sm:$0xff]
        %v6721 = vld [vmem:[#allocation2 + $0x10] sm:$0xff]
        %v6722 = vld [vmem:[#allocation2 + $0x18] sm:$0xff]
        %v6723 = vld [vmem:[#allocation2 + $0x20] sm:$0xff]
        %v6724 = vld [vmem:[#allocation2 + $0x28] sm:$0xff]
        %v6725 = vld [vmem:[#allocation2 + $0x30] sm:$0xff]
        %v6726 = vld [vmem:[#allocation2 + $0x38] sm:$0xff]
        %v6727 = vld [vmem:[#allocation2 + $0x40] sm:$0xff]
        %v6728 = vld [vmem:[#allocation2 + $0x48] sm:$0xff]
        %v6729 = vld [vmem:[#allocation2 + $0x50] sm:$0xff]
        %v6730 = vld [vmem:[#allocation2 + $0x58] sm:$0xff]
        %6743 = vrot.lane.b32.xlu0 %v6719, 30
        %v6744 = vpop.permute.xlu0 %6743
        %6745 = vrot.lane.b32.xlu0 %v6720, 30
        %v6746 = vpop.permute.xlu0 %6745
        %6747 = vrot.lane.b32.xlu0 %v6721, 30
        %v6748 = vpop.permute.xlu0 %6747
        %6749 = vrot.lane.b32.xlu0 %v6722, 30
        %v6750 = vpop.permute.xlu0 %6749
        %6751 = vrot.lane.b32.xlu0 %v6723, 30
        %v6752 = vpop.permute.xlu0 %6751
        %6753 = vrot.lane.b32.xlu0 %v6724, 30
        %v6754 = vpop.permute.xlu0 %6753
        %6755 = vrot.lane.b32.xlu0 %v6725, 30
        %v6756 = vpop.permute.xlu0 %6755
        %6757 = vrot.lane.b32.xlu0 %v6726, 30
        %v6758 = vpop.permute.xlu0 %6757
        %6759 = vrot.lane.b32.xlu0 %v6727, 30
        %v6760 = vpop.permute.xlu0 %6759
        %6761 = vrot.lane.b32.xlu0 %v6728, 30
        %v6762 = vpop.permute.xlu0 %6761
        %6763 = vrot.lane.b32.xlu0 %v6729, 30
        %v6764 = vpop.permute.xlu0 %6763
        %6765 = vrot.lane.b32.xlu0 %v6730, 30
        %v6766 = vpop.permute.xlu0 %6765
        %vm6767 = vcmask 244736
        %v6768 = vsel %vm6767, %v6744, %v6746
        %v6769 = vsel %vm6767, %v6746, %v6748
        %v6770 = vsel %vm6767, %v6750, %v6752
        %v6771 = vsel %vm6767, %v6752, %v6754
        %v6772 = vsel %vm6767, %v6756, %v6758
        %v6773 = vsel %vm6767, %v6758, %v6760
        %v6774 = vsel %vm6767, %v6762, %v6764
        %v6775 = vsel %vm6767, %v6764, %v6766
        %v6784 = vadd.f32 %v6711, %v6768
        %v6785 = vadd.f32 %v6712, %v6769
        %v6786 = vadd.f32 %v6713, %v6770
        %v6787 = vadd.f32 %v6714, %v6771
        %v6788 = vadd.f32 %v6715, %v6772
        %v6789 = vadd.f32 %v6716, %v6773
        %v6790 = vadd.f32 %v6717, %v6774
        %v6791 = vadd.f32 %v6718, %v6775
        %v6792 = vld [vmem:[%s250] sm:$0x7]
        %vm6793 = vcmp.gt.f32.partialorder %v6792, 0.0
        %v6794 = vsel %vm6793, 1, 0
        %v6795 = vlaneseq
        %v6796 = vshrl.u32 %v6795, 7
        %v6797 = vsub.s32 0, %v6796
        %v6798 = vrot.slane %v6794, %v6797
        %v6799 = vlaneseq
        %v6800 = vshrl.u32 %v6799, 7
        %v6801 = vsub.s32 1, %v6800
        %v6802 = vrot.slane %v6794, %v6801
        %v6803 = vlaneseq
        %v6804 = vshrl.u32 %v6803, 7
        %v6805 = vsub.s32 2, %v6804
        %v6806 = vrot.slane %v6794, %v6805
        %vm6807 = vcmp.eq.s32.totalorder %v6798, 1
        %vm6808 = vcmp.eq.s32.totalorder %v6802, 1
        %vm6809 = vcmp.eq.s32.totalorder %v6806, 1
        %6818 = vrot.lane.b32.xlu0 %v6784, 90
        %v6819 = vpop.permute.xlu0 %6818
        %6820 = vrot.lane.b32.xlu0 %v6785, 90
        %v6821 = vpop.permute.xlu0 %6820
        %6822 = vrot.lane.b32.xlu0 %v6786, 90
        %v6823 = vpop.permute.xlu0 %6822
        %6824 = vrot.lane.b32.xlu0 %v6787, 90
        %v6825 = vpop.permute.xlu0 %6824
        %6826 = vrot.lane.b32.xlu0 %v6788, 90
        %v6827 = vpop.permute.xlu0 %6826
        %6828 = vrot.lane.b32.xlu0 %v6789, 90
        %v6829 = vpop.permute.xlu0 %6828
        %6830 = vrot.lane.b32.xlu0 %v6790, 90
        %v6831 = vpop.permute.xlu0 %6830
        %6832 = vrot.lane.b32.xlu0 %v6791, 90
        %v6833 = vpop.permute.xlu0 %6832
        %vm6834 = vcmask 736256
        %v6835 = vsel %vm6834, %v6819, %v6821
        %v6836 = vsel %vm6834, %v6823, %v6825
        %v6837 = vsel %vm6834, %v6827, %v6829
        %v6838 = vsel %vm6834, %v6831, %v6833
        %v6851 = vsel %vm6807, %v6819, 0.0
        %v6852 = vsel %vm6808, %v6835, 0.0
        %v6853 = vsel %vm6809, %v6821, 0.0
        %v6854 = vsel %vm6807, %v6823, 0.0
        %v6855 = vsel %vm6808, %v6836, 0.0
        %v6856 = vsel %vm6809, %v6825, 0.0
        %v6857 = vsel %vm6807, %v6827, 0.0
        %v6858 = vsel %vm6808, %v6837, 0.0
        %v6859 = vsel %vm6809, %v6829, 0.0
        %v6860 = vsel %vm6807, %v6831, 0.0
        %v6861 = vsel %vm6808, %v6838, 0.0
        %v6862 = vsel %vm6809, %v6833, 0.0
        %6875 = vrot.lane.b32.xlu0 %v6851, 8
        %v6876 = vpop.permute.xlu0 %6875
        %6877 = vrot.lane.b32.xlu0 %v6852, 8
        %v6878 = vpop.permute.xlu0 %6877
        %6879 = vrot.lane.b32.xlu0 %v6853, 8
        %v6880 = vpop.permute.xlu0 %6879
        %6881 = vrot.lane.b32.xlu0 %v6854, 8
        %v6882 = vpop.permute.xlu0 %6881
        %6883 = vrot.lane.b32.xlu0 %v6855, 8
        %v6884 = vpop.permute.xlu0 %6883
        %6885 = vrot.lane.b32.xlu0 %v6856, 8
        %v6886 = vpop.permute.xlu0 %6885
        %6887 = vrot.lane.b32.xlu0 %v6857, 8
        %v6888 = vpop.permute.xlu0 %6887
        %6889 = vrot.lane.b32.xlu0 %v6858, 8
        %v6890 = vpop.permute.xlu0 %6889
        %6891 = vrot.lane.b32.xlu0 %v6859, 8
        %v6892 = vpop.permute.xlu0 %6891
        %6893 = vrot.lane.b32.xlu0 %v6860, 8
        %v6894 = vpop.permute.xlu0 %6893
        %6895 = vrot.lane.b32.xlu0 %v6861, 8
        %v6896 = vpop.permute.xlu0 %6895
        %6897 = vrot.lane.b32.xlu0 %v6862, 8
        %v6898 = vpop.permute.xlu0 %6897
        %v6899 = vsel %vm1949, %v6876, %v6878
        %v6900 = vsel %vm1949, %v6878, %v6880
        %v6901 = vsel %vm1949, %v6882, %v6884
        %v6902 = vsel %vm1949, %v6884, %v6886
        %v6903 = vsel %vm1949, %v6888, %v6890
        %v6904 = vsel %vm1949, %v6890, %v6892
        %v6905 = vsel %vm1949, %v6894, %v6896
        %v6906 = vsel %vm1949, %v6896, %v6898
        %vm6919 = vcmask 1048336
        %6920 = vst.msk [vmem:[#allocation2] sm:$0xff] %vm6919, %v6876
        %6921 = vst [vmem:[#allocation2 + $0x8] sm:$0xff] %v6899
        %vm6922 = vcmask 179200
        %6923 = vst.msk [vmem:[#allocation2 + $0x10] sm:$0xff] %vm6922, %v6900
        %6924 = vst.msk [vmem:[#allocation2 + $0x18] sm:$0xff] %vm6919, %v6882
        %6925 = vst [vmem:[#allocation2 + $0x20] sm:$0xff] %v6901
        %6926 = vst.msk [vmem:[#allocation2 + $0x28] sm:$0xff] %vm6922, %v6902
        %6927 = vst.msk [vmem:[#allocation2 + $0x30] sm:$0xff] %vm6919, %v6888
        %6928 = vst [vmem:[#allocation2 + $0x38] sm:$0xff] %v6903
        %6929 = vst.msk [vmem:[#allocation2 + $0x40] sm:$0xff] %vm6922, %v6904
        %6930 = vst.msk [vmem:[#allocation2 + $0x48] sm:$0xff] %vm6919, %v6894
        %6931 = vst [vmem:[#allocation2 + $0x50] sm:$0xff] %v6905
        %6932 = vst.msk [vmem:[#allocation2 + $0x58] sm:$0xff] %vm6922, %v6906
        %v6933 = vld [vmem:[#allocation2] sm:$0xff]
        %v6934 = vld [vmem:[#allocation2 + $0x8] sm:$0xff]
        %v6935 = vld [vmem:[#allocation2 + $0x18] sm:$0xff]
        %v6936 = vld [vmem:[#allocation2 + $0x20] sm:$0xff]
        %v6937 = vld [vmem:[#allocation2 + $0x30] sm:$0xff]
        %v6938 = vld [vmem:[#allocation2 + $0x38] sm:$0xff]
        %v6939 = vld [vmem:[#allocation2 + $0x48] sm:$0xff]
        %v6940 = vld [vmem:[#allocation2 + $0x50] sm:$0xff]
        %v6941 = vpack.c.bf16 %v6935, %v6933
        %v6942 = vpack.c.bf16 %v6936, %v6934
        %v6943 = vpack.c.bf16 %v6939, %v6937
        %v6944 = vpack.c.bf16 %v6940, %v6938
        %v6945 = vld [vmem:[%s4] sm:$0x1]
        %s6946 = scalar_lea.vmem %s4, 1
        %v6947 = vld [vmem:[%s6946] sm:$0x1]
        %6952 = vrot.lane.b32.xlu0 %v6941, 30
        %v6953 = vpop.permute.xlu0 %6952
        %6954 = vrot.lane.b32.xlu0 %v6942, 30
        %v6955 = vpop.permute.xlu0 %6954
        %6956 = vrot.lane.b32.xlu0 %v6943, 30
        %v6957 = vpop.permute.xlu0 %6956
        %6958 = vrot.lane.b32.xlu0 %v6944, 30
        %v6959 = vpop.permute.xlu0 %6958
        %v6960 = vsel %vm5462, %v6953, %v6955
        %v6961 = vsel %vm5462, %v6957, %v6959
        %v6967 = vsel %vm2049, %v6947, 0
        %6969 = vmatprep.subr.bf16.mxu0 %v6955
        %6970 = vmatpush1.bf16.msra.mxu0 %v6960
        %6971 = vmatprep.subr.bf16.mxu0 %v6959
        %6972 = vmatpush1.bf16.msra.mxu0 %v6961
        %6973 = vmatprep.subr.bf16.mxu0 0
        %6974 = vmatpush1.bf16.msra.mxu0 0
        %6975 = vmatprep.subr.bf16.mxu0 0
        %6976 = vmatpush1.bf16.msra.mxu0 0
        %6977 = vmatprep.subr.bf16.mxu0 0
        %6978 = vmatpush1.bf16.msra.mxu0 0
        %6979 = vmatprep.subr.bf16.mxu0 0
        %6980 = vmatpush1.bf16.msra.mxu0 0
        %6981 = vmatprep.subr.bf16.mxu0 0
        %6982 = vmatpush1.bf16.msra.mxu0 0
        %6983 = vmatprep.subr.bf16.mxu0 0
        %6984 = vmatpush1.bf16.msra.mxu0 0
        %6985 = vmatprep.subr.bf16.mxu0 0
        %6986 = vmatpush1.bf16.msra.mxu0 0
        %6987 = vmatprep.subr.bf16.mxu0 0
        %6988 = vmatpush1.bf16.msra.mxu0 0
        %6989 = vmatprep.subr.bf16.mxu0 0
        %6990 = vmatpush1.bf16.msra.mxu0 0
        %6991 = vmatprep.subr.bf16.mxu0 0
        %6992 = vmatpush1.bf16.msra.mxu0 0
        %6993 = vmatprep.subr.bf16.mxu0 0
        %6994 = vmatpush1.bf16.msra.mxu0 0
        %6995 = vmatprep.subr.bf16.mxu0 0
        %6996 = vmatpush1.bf16.msra.mxu0 0
        %6997 = vmatprep.subr.bf16.mxu0 0
        %6998 = vmatpush1.bf16.msra.mxu0 0
        %6999 = vmatprep.subr.bf16.mxu0 0
        %7000 = vmatpush1.bf16.msra.mxu0 0
        %7001 = vmatprep.mubr.bf16.mxu0 0
        %7002 = vmatmul.mubr.bf16.gmra.mrb[0].mxu0 %v6967
        %v7003 = vpop.f32.mrb[0].mxu0
        %v7004 = vadd.f32 0.0, %v7003
        %v7005 = vpop.f32.mrb[0].mxu0
        %v7006 = vadd.f32 0.0, %v7005
        %v7007 = vpop.f32.mrb[0].mxu0
        %v7008 = vpop.f32.mrb[0].mxu0
        %7009 = vdwg.mxu0
        %7010 = vrot.lane.b32.xlu0 %v6941, 31
        %v7011 = vpop.permute.xlu0 %7010
        %7012 = vrot.lane.b32.xlu0 %v6942, 31
        %v7013 = vpop.permute.xlu0 %7012
        %7014 = vrot.lane.b32.xlu0 %v6943, 31
        %v7015 = vpop.permute.xlu0 %7014
        %7016 = vrot.lane.b32.xlu0 %v6944, 31
        %v7017 = vpop.permute.xlu0 %7016
        %v7018 = vsel %vm5359, %v7011, %v7013
        %v7019 = vsel %vm5359, %v7015, %v7017
        %v7025 = vsel %vm2049, %v6945, 0
        %7027 = vmatprep.subr.bf16.mxu0 %v7013
        %7028 = vmatpush1.bf16.msra.mxu0 %v7018
        %7029 = vmatprep.subr.bf16.mxu0 %v7017
        %7030 = vmatpush1.bf16.msra.mxu0 %v7019
        %7031 = vmatprep.subr.bf16.mxu0 0
        %7032 = vmatpush1.bf16.msra.mxu0 0
        %7033 = vmatprep.subr.bf16.mxu0 0
        %7034 = vmatpush1.bf16.msra.mxu0 0
        %7035 = vmatprep.subr.bf16.mxu0 0
        %7036 = vmatpush1.bf16.msra.mxu0 0
        %7037 = vmatprep.subr.bf16.mxu0 0
        %7038 = vmatpush1.bf16.msra.mxu0 0
        %7039 = vmatprep.subr.bf16.mxu0 0
        %7040 = vmatpush1.bf16.msra.mxu0 0
        %7041 = vmatprep.subr.bf16.mxu0 0
        %7042 = vmatpush1.bf16.msra.mxu0 0
        %7043 = vmatprep.subr.bf16.mxu0 0
        %7044 = vmatpush1.bf16.msra.mxu0 0
        %7045 = vmatprep.subr.bf16.mxu0 0
        %7046 = vmatpush1.bf16.msra.mxu0 0
        %7047 = vmatprep.subr.bf16.mxu0 0
        %7048 = vmatpush1.bf16.msra.mxu0 0
        %7049 = vmatprep.subr.bf16.mxu0 0
        %7050 = vmatpush1.bf16.msra.mxu0 0
        %7051 = vmatprep.subr.bf16.mxu0 0
        %7052 = vmatpush1.bf16.msra.mxu0 0
        %7053 = vmatprep.subr.bf16.mxu0 0
        %7054 = vmatpush1.bf16.msra.mxu0 0
        %7055 = vmatprep.subr.bf16.mxu0 0
        %7056 = vmatpush1.bf16.msra.mxu0 0
        %7057 = vmatprep.subr.bf16.mxu0 0
        %7058 = vmatpush1.bf16.msra.mxu0 0
        %7059 = vmatprep.mubr.bf16.mxu0 0
        %7060 = vmatmul.mubr.bf16.gmra.mrb[0].mxu0 %v7025
        %v7061 = vpop.f32.mrb[0].mxu0
        %v7062 = vadd.f32 %v7004, %v7061
        %v7063 = vpop.f32.mrb[0].mxu0
        %v7064 = vadd.f32 %v7006, %v7063
        %v7065 = vpop.f32.mrb[0].mxu0
        %v7066 = vpop.f32.mrb[0].mxu0
        %7067 = vdwg.mxu0
        %s7068 = scalar_lea.vmem %s4, 2
        %v7069 = vld [vmem:[%s7068] sm:$0x1]
        %7070 = vrot.lane.b32.xlu0 %v6941, 29
        %v7071 = vpop.permute.xlu0 %7070
        %7072 = vrot.lane.b32.xlu0 %v6942, 29
        %v7073 = vpop.permute.xlu0 %7072
        %7074 = vrot.lane.b32.xlu0 %v6943, 29
        %v7075 = vpop.permute.xlu0 %7074
        %7076 = vrot.lane.b32.xlu0 %v6944, 29
        %v7077 = vpop.permute.xlu0 %7076
        %v7078 = vsel %vm5565, %v7071, %v7073
        %v7079 = vsel %vm5565, %v7075, %v7077
        %v7085 = vsel %vm2049, %v7069, 0
        %7087 = vmatprep.subr.bf16.mxu0 %v7073
        %7088 = vmatpush1.bf16.msra.mxu0 %v7078
        %7089 = vmatprep.subr.bf16.mxu0 %v7077
        %7090 = vmatpush1.bf16.msra.mxu0 %v7079
        %7091 = vmatprep.subr.bf16.mxu0 0
        %7092 = vmatpush1.bf16.msra.mxu0 0
        %7093 = vmatprep.subr.bf16.mxu0 0
        %7094 = vmatpush1.bf16.msra.mxu0 0
        %7095 = vmatprep.subr.bf16.mxu0 0
        %7096 = vmatpush1.bf16.msra.mxu0 0
        %7097 = vmatprep.subr.bf16.mxu0 0
        %7098 = vmatpush1.bf16.msra.mxu0 0
        %7099 = vmatprep.subr.bf16.mxu0 0
        %7100 = vmatpush1.bf16.msra.mxu0 0
        %7101 = vmatprep.subr.bf16.mxu0 0
        %7102 = vmatpush1.bf16.msra.mxu0 0
        %7103 = vmatprep.subr.bf16.mxu0 0
        %7104 = vmatpush1.bf16.msra.mxu0 0
        %7105 = vmatprep.subr.bf16.mxu0 0
        %7106 = vmatpush1.bf16.msra.mxu0 0
        %7107 = vmatprep.subr.bf16.mxu0 0
        %7108 = vmatpush1.bf16.msra.mxu0 0
        %7109 = vmatprep.subr.bf16.mxu0 0
        %7110 = vmatpush1.bf16.msra.mxu0 0
        %7111 = vmatprep.subr.bf16.mxu0 0
        %7112 = vmatpush1.bf16.msra.mxu0 0
        %7113 = vmatprep.subr.bf16.mxu0 0
        %7114 = vmatpush1.bf16.msra.mxu0 0
        %7115 = vmatprep.subr.bf16.mxu0 0
        %7116 = vmatpush1.bf16.msra.mxu0 0
        %7117 = vmatprep.subr.bf16.mxu0 0
        %7118 = vmatpush1.bf16.msra.mxu0 0
        %7119 = vmatprep.mubr.bf16.mxu0 0
        %7120 = vmatmul.mubr.bf16.gmra.mrb[0].mxu0 %v7085
        %v7121 = vpop.f32.mrb[0].mxu0
        %v7122 = vadd.f32 0.0, %v7121
        %v7123 = vpop.f32.mrb[0].mxu0
        %v7124 = vadd.f32 0.0, %v7123
        %v7125 = vpop.f32.mrb[0].mxu0
        %v7126 = vpop.f32.mrb[0].mxu0
        %7127 = vdwg.mxu0
        %v7128 = vadd.f32 %v7062, %v7122
        %v7129 = vadd.f32 %v7064, %v7124
        %v7130 = vld [vmem:[#allocation2] sm:$0xff]
        %v7131 = vld [vmem:[#allocation2 + $0x8] sm:$0xff]
        %v7132 = vld [vmem:[#allocation2 + $0x10] sm:$0xff]
        %v7133 = vld [vmem:[#allocation2 + $0x18] sm:$0xff]
        %v7134 = vld [vmem:[#allocation2 + $0x20] sm:$0xff]
        %v7135 = vld [vmem:[#allocation2 + $0x28] sm:$0xff]
        %v7136 = vld [vmem:[#allocation2 + $0x30] sm:$0xff]
        %v7137 = vld [vmem:[#allocation2 + $0x38] sm:$0xff]
        %v7138 = vld [vmem:[#allocation2 + $0x40] sm:$0xff]
        %v7139 = vld [vmem:[#allocation2 + $0x48] sm:$0xff]
        %v7140 = vld [vmem:[#allocation2 + $0x50] sm:$0xff]
        %v7141 = vld [vmem:[#allocation2 + $0x58] sm:$0xff]
        %v7142 = vpack.c.bf16 %v7133, %v7130
        %v7143 = vpack.c.bf16 %v7134, %v7131
        %v7144 = vpack.c.bf16 %v7135, %v7132
        %v7145 = vpack.c.bf16 %v7139, %v7136
        %v7146 = vpack.c.bf16 %v7140, %v7137
        %v7147 = vpack.c.bf16 %v7141, %v7138
        %s7148 = scalar_lea.vmem %s4, 3
        %v7149 = vld [vmem:[%s7148] sm:$0x1]
        %7156 = vrot.lane.b32.xlu0 %v7142, 13
        %v7157 = vpop.permute.xlu0 %7156
        %7158 = vrot.lane.b32.xlu0 %v7143, 13
        %v7159 = vpop.permute.xlu0 %7158
        %7160 = vrot.lane.b32.xlu0 %v7144, 13
        %v7161 = vpop.permute.xlu0 %7160
        %7162 = vrot.lane.b32.xlu0 %v7145, 13
        %v7163 = vpop.permute.xlu0 %7162
        %7164 = vrot.lane.b32.xlu0 %v7146, 13
        %v7165 = vpop.permute.xlu0 %7164
        %7166 = vrot.lane.b32.xlu0 %v7147, 13
        %v7167 = vpop.permute.xlu0 %7166
        %v7168 = vsel %vm6437, %v7157, %v7159
        %v7169 = vsel %vm6437, %v7159, %v7161
        %v7170 = vsel %vm6437, %v7163, %v7165
        %v7171 = vsel %vm6437, %v7165, %v7167
        %v7177 = vsel %vm2049, %v7149, 0
        %7179 = vmatprep.subr.bf16.mxu0 %v7169
        %7180 = vmatpush1.bf16.msra.mxu0 %v7168
        %7181 = vmatprep.subr.bf16.mxu0 %v7171
        %7182 = vmatpush1.bf16.msra.mxu0 %v7170
        %7183 = vmatprep.subr.bf16.mxu0 0
        %7184 = vmatpush1.bf16.msra.mxu0 0
        %7185 = vmatprep.subr.bf16.mxu0 0
        %7186 = vmatpush1.bf16.msra.mxu0 0
        %7187 = vmatprep.subr.bf16.mxu0 0
        %7188 = vmatpush1.bf16.msra.mxu0 0
        %7189 = vmatprep.subr.bf16.mxu0 0
        %7190 = vmatpush1.bf16.msra.mxu0 0
        %7191 = vmatprep.subr.bf16.mxu0 0
        %7192 = vmatpush1.bf16.msra.mxu0 0
        %7193 = vmatprep.subr.bf16.mxu0 0
        %7194 = vmatpush1.bf16.msra.mxu0 0
        %7195 = vmatprep.subr.bf16.mxu0 0
        %7196 = vmatpush1.bf16.msra.mxu0 0
        %7197 = vmatprep.subr.bf16.mxu0 0
        %7198 = vmatpush1.bf16.msra.mxu0 0
        %7199 = vmatprep.subr.bf16.mxu0 0
        %7200 = vmatpush1.bf16.msra.mxu0 0
        %7201 = vmatprep.subr.bf16.mxu0 0
        %7202 = vmatpush1.bf16.msra.mxu0 0
        %7203 = vmatprep.subr.bf16.mxu0 0
        %7204 = vmatpush1.bf16.msra.mxu0 0
        %7205 = vmatprep.subr.bf16.mxu0 0
        %7206 = vmatpush1.bf16.msra.mxu0 0
        %7207 = vmatprep.subr.bf16.mxu0 0
        %7208 = vmatpush1.bf16.msra.mxu0 0
        %7209 = vmatprep.subr.bf16.mxu0 0
        %7210 = vmatpush1.bf16.msra.mxu0 0
        %7211 = vmatprep.mubr.bf16.mxu0 0
        %7212 = vmatmul.mubr.bf16.gmra.mrb[0].mxu0 %v7177
        %v7213 = vpop.f32.mrb[0].mxu0
        %v7214 = vadd.f32 0.0, %v7213
        %v7215 = vpop.f32.mrb[0].mxu0
        %v7216 = vadd.f32 0.0, %v7215
        %v7217 = vpop.f32.mrb[0].mxu0
        %v7218 = vpop.f32.mrb[0].mxu0
        %7219 = vdwg.mxu0
        %v7220 = vadd.f32 %v7128, %v7214
        %v7221 = vadd.f32 %v7129, %v7216
        %s7222 = scalar_lea.vmem %s4, 4
        %v7223 = vld [vmem:[%s7222] sm:$0x1]
        %7224 = vrot.lane.b32.xlu0 %v7142, 12
        %v7225 = vpop.permute.xlu0 %7224
        %7226 = vrot.lane.b32.xlu0 %v7143, 12
        %v7227 = vpop.permute.xlu0 %7226
        %7228 = vrot.lane.b32.xlu0 %v7144, 12
        %v7229 = vpop.permute.xlu0 %7228
        %7230 = vrot.lane.b32.xlu0 %v7145, 12
        %v7231 = vpop.permute.xlu0 %7230
        %7232 = vrot.lane.b32.xlu0 %v7146, 12
        %v7233 = vpop.permute.xlu0 %7232
        %7234 = vrot.lane.b32.xlu0 %v7147, 12
        %v7235 = vpop.permute.xlu0 %7234
        %v7236 = vsel %vm6540, %v7225, %v7227
        %v7237 = vsel %vm6540, %v7227, %v7229
        %v7238 = vsel %vm6540, %v7231, %v7233
        %v7239 = vsel %vm6540, %v7233, %v7235
        %v7245 = vsel %vm2049, %v7223, 0
        %7247 = vmatprep.subr.bf16.mxu0 %v7237
        %7248 = vmatpush1.bf16.msra.mxu0 %v7236
        %7249 = vmatprep.subr.bf16.mxu0 %v7239
        %7250 = vmatpush1.bf16.msra.mxu0 %v7238
        %7251 = vmatprep.subr.bf16.mxu0 0
        %7252 = vmatpush1.bf16.msra.mxu0 0
        %7253 = vmatprep.subr.bf16.mxu0 0
        %7254 = vmatpush1.bf16.msra.mxu0 0
        %7255 = vmatprep.subr.bf16.mxu0 0
        %7256 = vmatpush1.bf16.msra.mxu0 0
        %7257 = vmatprep.subr.bf16.mxu0 0
        %7258 = vmatpush1.bf16.msra.mxu0 0
        %7259 = vmatprep.subr.bf16.mxu0 0
        %7260 = vmatpush1.bf16.msra.mxu0 0
        %7261 = vmatprep.subr.bf16.mxu0 0
        %7262 = vmatpush1.bf16.msra.mxu0 0
        %7263 = vmatprep.subr.bf16.mxu0 0
        %7264 = vmatpush1.bf16.msra.mxu0 0
        %7265 = vmatprep.subr.bf16.mxu0 0
        %7266 = vmatpush1.bf16.msra.mxu0 0
        %7267 = vmatprep.subr.bf16.mxu0 0
        %7268 = vmatpush1.bf16.msra.mxu0 0
        %7269 = vmatprep.subr.bf16.mxu0 0
        %7270 = vmatpush1.bf16.msra.mxu0 0
        %7271 = vmatprep.subr.bf16.mxu0 0
        %7272 = vmatpush1.bf16.msra.mxu0 0
        %7273 = vmatprep.subr.bf16.mxu0 0
        %7274 = vmatpush1.bf16.msra.mxu0 0
        %7275 = vmatprep.subr.bf16.mxu0 0
        %7276 = vmatpush1.bf16.msra.mxu0 0
        %7277 = vmatprep.subr.bf16.mxu0 0
        %7278 = vmatpush1.bf16.msra.mxu0 0
        %7279 = vmatprep.mubr.bf16.mxu0 0
        %7280 = vmatmul.mubr.bf16.gmra.mrb[0].mxu0 %v7245
        %v7281 = vpop.f32.mrb[0].mxu0
        %v7282 = vadd.f32 0.0, %v7281
        %v7283 = vpop.f32.mrb[0].mxu0
        %v7284 = vadd.f32 0.0, %v7283
        %v7285 = vpop.f32.mrb[0].mxu0
        %v7286 = vpop.f32.mrb[0].mxu0
        %7287 = vdwg.mxu0
        %v7288 = vadd.f32 %v7220, %v7282
        %v7289 = vadd.f32 %v7221, %v7284
        %s7290 = scalar_lea.vmem %s4, 5
        %v7291 = vld [vmem:[%s7290] sm:$0x1]
        %7292 = vrot.lane.b32.xlu0 %v7142, 11
        %v7293 = vpop.permute.xlu0 %7292
        %7294 = vrot.lane.b32.xlu0 %v7143, 11
        %v7295 = vpop.permute.xlu0 %7294
        %7296 = vrot.lane.b32.xlu0 %v7144, 11
        %v7297 = vpop.permute.xlu0 %7296
        %7298 = vrot.lane.b32.xlu0 %v7145, 11
        %v7299 = vpop.permute.xlu0 %7298
        %7300 = vrot.lane.b32.xlu0 %v7146, 11
        %v7301 = vpop.permute.xlu0 %7300
        %7302 = vrot.lane.b32.xlu0 %v7147, 11
        %v7303 = vpop.permute.xlu0 %7302
        %v7304 = vsel %vm6643, %v7293, %v7295
        %v7305 = vsel %vm6643, %v7295, %v7297
        %v7306 = vsel %vm6643, %v7299, %v7301
        %v7307 = vsel %vm6643, %v7301, %v7303
        %v7313 = vsel %vm2049, %v7291, 0
        %7315 = vmatprep.subr.bf16.mxu0 %v7305
        %7316 = vmatpush1.bf16.msra.mxu0 %v7304
        %7317 = vmatprep.subr.bf16.mxu0 %v7307
        %7318 = vmatpush1.bf16.msra.mxu0 %v7306
        %7319 = vmatprep.subr.bf16.mxu0 0
        %7320 = vmatpush1.bf16.msra.mxu0 0
        %7321 = vmatprep.subr.bf16.mxu0 0
        %7322 = vmatpush1.bf16.msra.mxu0 0
        %7323 = vmatprep.subr.bf16.mxu0 0
        %7324 = vmatpush1.bf16.msra.mxu0 0
        %7325 = vmatprep.subr.bf16.mxu0 0
        %7326 = vmatpush1.bf16.msra.mxu0 0
        %7327 = vmatprep.subr.bf16.mxu0 0
        %7328 = vmatpush1.bf16.msra.mxu0 0
        %7329 = vmatprep.subr.bf16.mxu0 0
        %7330 = vmatpush1.bf16.msra.mxu0 0
        %7331 = vmatprep.subr.bf16.mxu0 0
        %7332 = vmatpush1.bf16.msra.mxu0 0
        %7333 = vmatprep.subr.bf16.mxu0 0
        %7334 = vmatpush1.bf16.msra.mxu0 0
        %7335 = vmatprep.subr.bf16.mxu0 0
        %7336 = vmatpush1.bf16.msra.mxu0 0
        %7337 = vmatprep.subr.bf16.mxu0 0
        %7338 = vmatpush1.bf16.msra.mxu0 0
        %7339 = vmatprep.subr.bf16.mxu0 0
        %7340 = vmatpush1.bf16.msra.mxu0 0
        %7341 = vmatprep.subr.bf16.mxu0 0
        %7342 = vmatpush1.bf16.msra.mxu0 0
        %7343 = vmatprep.subr.bf16.mxu0 0
        %7344 = vmatpush1.bf16.msra.mxu0 0
        %7345 = vmatprep.subr.bf16.mxu0 0
        %7346 = vmatpush1.bf16.msra.mxu0 0
        %7347 = vmatprep.mubr.bf16.mxu0 0
        %7348 = vmatmul.mubr.bf16.gmra.mrb[0].mxu0 %v7313
        %v7349 = vpop.f32.mrb[0].mxu0
        %v7350 = vadd.f32 0.0, %v7349
        %v7351 = vpop.f32.mrb[0].mxu0
        %v7352 = vadd.f32 0.0, %v7351
        %v7353 = vpop.f32.mrb[0].mxu0
        %v7354 = vpop.f32.mrb[0].mxu0
        %7355 = vdwg.mxu0
        %v7356 = vadd.f32 %v7288, %v7350
        %v7357 = vadd.f32 %v7289, %v7352
        %s7358 = scalar_lea.vmem %s4, 6
        %v7359 = vld [vmem:[%s7358] sm:$0x1]
        %7360 = vrot.lane.b32.xlu0 %v7143, 123
        %v7361 = vpop.permute.xlu0 %7360
        %7362 = vrot.lane.b32.xlu0 %v7144, 123
        %v7363 = vpop.permute.xlu0 %7362
        %7364 = vrot.lane.b32.xlu0 %v7146, 123
        %v7365 = vpop.permute.xlu0 %7364
        %7366 = vrot.lane.b32.xlu0 %v7147, 123
        %v7367 = vpop.permute.xlu0 %7366
        %vm7368 = vcmask 1006592
        %v7369 = vsel %vm7368, %v7361, %v7363
        %v7370 = vsel %vm7368, %v7365, %v7367
        %v7376 = vsel %vm2049, %v7359, 0
        %7378 = vmatprep.subr.bf16.mxu0 %v7363
        %7379 = vmatpush1.bf16.msra.mxu0 %v7369
        %7380 = vmatprep.subr.bf16.mxu0 %v7367
        %7381 = vmatpush1.bf16.msra.mxu0 %v7370
        %7382 = vmatprep.subr.bf16.mxu0 0
        %7383 = vmatpush1.bf16.msra.mxu0 0
        %7384 = vmatprep.subr.bf16.mxu0 0
        %7385 = vmatpush1.bf16.msra.mxu0 0
        %7386 = vmatprep.subr.bf16.mxu0 0
        %7387 = vmatpush1.bf16.msra.mxu0 0
        %7388 = vmatprep.subr.bf16.mxu0 0
        %7389 = vmatpush1.bf16.msra.mxu0 0
        %7390 = vmatprep.subr.bf16.mxu0 0
        %7391 = vmatpush1.bf16.msra.mxu0 0
        %7392 = vmatprep.subr.bf16.mxu0 0
        %7393 = vmatpush1.bf16.msra.mxu0 0
        %7394 = vmatprep.subr.bf16.mxu0 0
        %7395 = vmatpush1.bf16.msra.mxu0 0
        %7396 = vmatprep.subr.bf16.mxu0 0
        %7397 = vmatpush1.bf16.msra.mxu0 0
        %7398 = vmatprep.subr.bf16.mxu0 0
        %7399 = vmatpush1.bf16.msra.mxu0 0
        %7400 = vmatprep.subr.bf16.mxu0 0
        %7401 = vmatpush1.bf16.msra.mxu0 0
        %7402 = vmatprep.subr.bf16.mxu0 0
        %7403 = vmatpush1.bf16.msra.mxu0 0
        %7404 = vmatprep.subr.bf16.mxu0 0
        %7405 = vmatpush1.bf16.msra.mxu0 0
        %7406 = vmatprep.subr.bf16.mxu0 0
        %7407 = vmatpush1.bf16.msra.mxu0 0
        %7408 = vmatprep.subr.bf16.mxu0 0
        %7409 = vmatpush1.bf16.msra.mxu0 0
        %7410 = vmatprep.mubr.bf16.mxu0 0
        %7411 = vmatmul.mubr.bf16.gmra.mrb[0].mxu0 %v7376
        %v7412 = vpop.f32.mrb[0].mxu0
        %v7413 = vadd.f32 0.0, %v7412
        %v7414 = vpop.f32.mrb[0].mxu0
        %v7415 = vadd.f32 0.0, %v7414
        %v7416 = vpop.f32.mrb[0].mxu0
        %v7417 = vpop.f32.mrb[0].mxu0
        %7418 = vdwg.mxu0
        %v7419 = vadd.f32 %v7356, %v7413
        %v7420 = vadd.f32 %v7357, %v7415
        %s7421 = scalar_lea.vmem %s4, 7
        %v7422 = vld [vmem:[%s7421] sm:$0x1]
        %7423 = vrot.lane.b32.xlu0 %v7143, 122
        %v7424 = vpop.permute.xlu0 %7423
        %7425 = vrot.lane.b32.xlu0 %v7144, 122
        %v7426 = vpop.permute.xlu0 %7425
        %7427 = vrot.lane.b32.xlu0 %v7146, 122
        %v7428 = vpop.permute.xlu0 %7427
        %7429 = vrot.lane.b32.xlu0 %v7147, 122
        %v7430 = vpop.permute.xlu0 %7429
        %vm7431 = vcmask 998400
        %v7432 = vsel %vm7431, %v7424, %v7426
        %v7433 = vsel %vm7431, %v7428, %v7430
        %v7439 = vsel %vm2049, %v7422, 0
        %7441 = vmatprep.subr.bf16.mxu0 %v7426
        %7442 = vmatpush1.bf16.msra.mxu0 %v7432
        %7443 = vmatprep.subr.bf16.mxu0 %v7430
        %7444 = vmatpush1.bf16.msra.mxu0 %v7433
        %7445 = vmatprep.subr.bf16.mxu0 0
        %7446 = vmatpush1.bf16.msra.mxu0 0
        %7447 = vmatprep.subr.bf16.mxu0 0
        %7448 = vmatpush1.bf16.msra.mxu0 0
        %7449 = vmatprep.subr.bf16.mxu0 0
        %7450 = vmatpush1.bf16.msra.mxu0 0
        %7451 = vmatprep.subr.bf16.mxu0 0
        %7452 = vmatpush1.bf16.msra.mxu0 0
        %7453 = vmatprep.subr.bf16.mxu0 0
        %7454 = vmatpush1.bf16.msra.mxu0 0
        %7455 = vmatprep.subr.bf16.mxu0 0
        %7456 = vmatpush1.bf16.msra.mxu0 0
        %7457 = vmatprep.subr.bf16.mxu0 0
        %7458 = vmatpush1.bf16.msra.mxu0 0
        %7459 = vmatprep.subr.bf16.mxu0 0
        %7460 = vmatpush1.bf16.msra.mxu0 0
        %7461 = vmatprep.subr.bf16.mxu0 0
        %7462 = vmatpush1.bf16.msra.mxu0 0
        %7463 = vmatprep.subr.bf16.mxu0 0
        %7464 = vmatpush1.bf16.msra.mxu0 0
        %7465 = vmatprep.subr.bf16.mxu0 0
        %7466 = vmatpush1.bf16.msra.mxu0 0
        %7467 = vmatprep.subr.bf16.mxu0 0
        %7468 = vmatpush1.bf16.msra.mxu0 0
        %7469 = vmatprep.subr.bf16.mxu0 0
        %7470 = vmatpush1.bf16.msra.mxu0 0
        %7471 = vmatprep.subr.bf16.mxu0 0
        %7472 = vmatpush1.bf16.msra.mxu0 0
        %7473 = vmatprep.mubr.bf16.mxu0 0
        %7474 = vmatmul.mubr.bf16.gmra.mrb[0].mxu0 %v7439
        %v7475 = vpop.f32.mrb[0].mxu0
        %v7476 = vadd.f32 0.0, %v7475
        %v7477 = vpop.f32.mrb[0].mxu0
        %v7478 = vadd.f32 0.0, %v7477
        %v7479 = vpop.f32.mrb[0].mxu0
        %v7480 = vpop.f32.mrb[0].mxu0
        %7481 = vdwg.mxu0
        %v7482 = vadd.f32 %v7419, %v7476
        %v7483 = vadd.f32 %v7420, %v7478
        %s7484 = scalar_lea.vmem %s4, 8
        %v7485 = vld [vmem:[%s7484] sm:$0x1]
        %7486 = vrot.lane.b32.xlu0 %v7143, 121
        %v7487 = vpop.permute.xlu0 %7486
        %7488 = vrot.lane.b32.xlu0 %v7144, 121
        %v7489 = vpop.permute.xlu0 %7488
        %7490 = vrot.lane.b32.xlu0 %v7146, 121
        %v7491 = vpop.permute.xlu0 %7490
        %7492 = vrot.lane.b32.xlu0 %v7147, 121
        %v7493 = vpop.permute.xlu0 %7492
        %v7494 = vsel %vm446, %v7487, %v7489
        %v7495 = vsel %vm446, %v7491, %v7493
        %v7501 = vsel %vm2049, %v7485, 0
        %7503 = vmatprep.subr.bf16.mxu0 %v7489
        %7504 = vmatpush1.bf16.msra.mxu0 %v7494
        %7505 = vmatprep.subr.bf16.mxu0 %v7493
        %7506 = vmatpush1.bf16.msra.mxu0 %v7495
        %7507 = vmatprep.subr.bf16.mxu0 0
        %7508 = vmatpush1.bf16.msra.mxu0 0
        %7509 = vmatprep.subr.bf16.mxu0 0
        %7510 = vmatpush1.bf16.msra.mxu0 0
        %7511 = vmatprep.subr.bf16.mxu0 0
        %7512 = vmatpush1.bf16.msra.mxu0 0
        %7513 = vmatprep.subr.bf16.mxu0 0
        %7514 = vmatpush1.bf16.msra.mxu0 0
        %7515 = vmatprep.subr.bf16.mxu0 0
        %7516 = vmatpush1.bf16.msra.mxu0 0
        %7517 = vmatprep.subr.bf16.mxu0 0
        %7518 = vmatpush1.bf16.msra.mxu0 0
        %7519 = vmatprep.subr.bf16.mxu0 0
        %7520 = vmatpush1.bf16.msra.mxu0 0
        %7521 = vmatprep.subr.bf16.mxu0 0
        %7522 = vmatpush1.bf16.msra.mxu0 0
        %7523 = vmatprep.subr.bf16.mxu0 0
        %7524 = vmatpush1.bf16.msra.mxu0 0
        %7525 = vmatprep.subr.bf16.mxu0 0
        %7526 = vmatpush1.bf16.msra.mxu0 0
        %7527 = vmatprep.subr.bf16.mxu0 0
        %7528 = vmatpush1.bf16.msra.mxu0 0
        %7529 = vmatprep.subr.bf16.mxu0 0
        %7530 = vmatpush1.bf16.msra.mxu0 0
        %7531 = vmatprep.subr.bf16.mxu0 0
        %7532 = vmatpush1.bf16.msra.mxu0 0
        %7533 = vmatprep.subr.bf16.mxu0 0
        %7534 = vmatpush1.bf16.msra.mxu0 0
        %7535 = vmatprep.mubr.bf16.mxu0 0
        %7536 = vmatmul.mubr.bf16.gmra.mrb[0].mxu0 %v7501
        %v7537 = vpop.f32.mrb[0].mxu0
        %v7538 = vadd.f32 0.0, %v7537
        %v7539 = vpop.f32.mrb[0].mxu0
        %v7540 = vadd.f32 0.0, %v7539
        %v7541 = vpop.f32.mrb[0].mxu0
        %v7542 = vpop.f32.mrb[0].mxu0
        %7543 = vdwg.mxu0
        %v7544 = vadd.f32 %v7482, %v7538
        %v7545 = vadd.f32 %v7483, %v7540
        %v7546 = vld [vmem:[%s250] sm:$0x3]
        %vm7547 = vcmp.gt.f32.partialorder %v7546, 0.0
        %v7550 = vcombine.low %v7544, %v7545
        %v7552 = vunpack.c.l.s4 1966171168
        %v7553 = vunpack.c.0.s8 %v7552
        %v7554 = vlaneseq
        %v7555 = vshrl.u32 %v7554, 7
        %v7556 = vsub.s32 %v7553, %v7555
        %v7557 = vrot.slane %v7550, %v7556
        %v7559 = vunpack.c.l.s4 1966171168
        %v7560 = vunpack.c.0.s8 %v7559
        %v7561 = vlaneseq
        %v7562 = vshrl.u32 %v7561, 7
        %v7563 = vsub.s32 %v7560, %v7562
        %v7564 = vrot.slane %v7557, %v7563
        %7565 = vrot.lane.b32.xlu0 %v7564, 108
        %v7566 = vpop.permute.xlu0 %7565
        %v7567 = vrot.slane %v7566, 7
        %vm7568 = vcmask 883712
        %v7569 = vsel %vm7568, %v7567, %v7566
        %v7571 = vsel %vm7547, %v7569, 0.0
        %7573 = vrot.lane.b32.xlu0 %v7571, 20
        %v7574 = vpop.permute.xlu0 %7573
        %v7575 = vrot.slane %v7574, 1
        %vm7576 = vcmask 162816
        %v7577 = vsel %vm7576, %v7574, %v7575
        %v7579 = vlaneseq
        %vm7580 = vcmp.ge.s32.totalorder %v7579, 0
        %vm7581 = vcmp.lt.s32.totalorder %v7579, 144
        %vm7582 = vmand %vm7580, %vm7581
        %7583 = vst.msk [vmem:[%s254] sm:$0x3] %vm7582, %v7577
        %p7584 = scmp.lt.s32.totalorder %s17, 1
        %s7585 = scalar_select %p7584, %s17, 1
        %s7586 = smul.addr %s7585, 2
        %s7587 = scalar_lea.vmem %s5, %s7586
        // Predicated region
        $region45: #{_lambda_.1} parent=39 // pred_check
          %p7588 = pneg %p150
        $region46: #{_lambda_.1} parent=39 // pred_check_branch
          %7590 = sbr.rel (%p7588) target = $region48
        $region47: #{_lambda_.1} parent=39 // pred_region
          _
        $region48: #{_lambda_.1} parent=39 // pred_fallthru
          _
      $region40: #{_lambda_.1} parent=5 // pred_fallthru
        _
      %p7591 = scmp.le.s32.totalorder 2, %s12
      // Predicated region
      $region49: #{_lambda_.1} parent=5 // pred_check
        %p7592 = pneg %p7591
      $region50: #{_lambda_.1} parent=5 // pred_check_branch
        %7594 = sbr.rel (%p7592) target = $region52
      $region51: #{_lambda_.1} parent=5 // pred_region
        %s7595 = ssub.s32 %s12, 2
        // Predicated region
        $region53: #{_lambda_.1} parent=51 // pred_check
          %p7596 = pneg %p156
        $region54: #{_lambda_.1} parent=51 // pred_check_branch
          %7598 = sbr.rel (%p7596) target = $region56
        $region55: #{_lambda_.1} parent=51 // pred_region
          %p7599 = scmp.lt.s32.totalorder %s18, 1
          %s7600 = scalar_select %p7599, %s18, 1
          %s7601 = smul.addr %s7600, 2
          %s7602 = scalar_lea.vmem %s5, %s7601
        $region56: #{_lambda_.1} parent=51 // pred_fallthru
          _
      $region52: #{_lambda_.1} parent=5 // pred_fallthru
        _
    $region6: #{_lambda_.1} parent=1 // loop_footer
      %s16 = sadd.s32 1, %s12
    $region7: #{_lambda_.1} parent=1 // loop_footer_branch
      %11 = sbr.rel target = $region3
    $region8: #{_lambda_.1} parent=1 // loop_exit
      _
    %7603 = vsyncpa [#allocation5], 1
    %s7604 = scalar_lea.sflag [#allocation5], 1
    %7605 = vsyncpa %s7604, 1

</llo_original>
